<compile_context>
chip_gen: v5e
topology: v5e:2x2
jax: 0.10.0
libtpu: 0.0.40
codegen_flags: <defaults>
</compile_context>

<pallas_src>
import functools
import numpy as np
import jax
import jax.numpy as jnp
from jax.experimental import pallas as pl
from jax.experimental.pallas import tpu as pltpu

EPS = 1e-5


# ------------------------------ fused kernel ------------------------------------
def _bottleneck_kernel(x_ref, mask_ref,
                       w1_ref, b1_ref,
                       w2_ref, b2_ref,
                       w3_ref, b3_ref,
                       filtw_ref, filtc_ref,
                       wfc1_ref, wfc2_ref,
                       wba_ref, bba_ref, wgen_ref,
                       o_ref,
                       acc_ref,
                       *, padded_w):
    bblk, S, cin = x_ref.shape              # S = (H+2)*(W+2) padded pixels / image
    width = w1_ref.shape[1]
    c4 = w3_ref.shape[1]
    R = bblk * S                            # rows processed per grid step

    x3 = x_ref[...]                         # (bblk, S, cin) f32 -- also the residual
    x2 = x3.reshape(R, cin)

    # ---- conv1 (1x1, BN1 folded) + bias + ReLU; zero the pad ring (== conv2 padding)
    o1 = jnp.dot(x2.astype(jnp.bfloat16), w1_ref[...],
                 preferred_element_type=jnp.float32) + b1_ref[...]
    o1 = jnp.maximum(o1, 0.0)
    o1_3d = o1.reshape(bblk, S, width) * mask_ref[...][None]      # masked, per-image
    d1 = jnp.sum(o1_3d * filtw_ref[...][None], axis=1)            # (bblk, width)
    o1m = o1_3d.reshape(R, width)

    # ---- conv2: grouped 3x3 as 9 rolled taps, per-tap bf16 matmul, f32 VMEM accum.
    # Rolls are over the flat padded layout; only pad-ring rows (discarded) see wrap.
    shifts = [dh * padded_w + dw for dh in (-1, 0, 1) for dw in (-1, 0, 1)]
    for t, s in enumerate(shifts):
        tap = o1m if s == 0 else pltpu.roll(o1m, shift=(-s) % R, axis=0)
        part = jnp.dot(tap.astype(jnp.bfloat16), w2_ref[t],
                       preferred_element_type=jnp.float32)
        if t == 0:
            acc_ref[...] = part
        else:
            acc_ref[...] += part
    o2 = jnp.maximum(acc_ref[...] + b2_ref[...], 0.0)
    o2_3d = o2.reshape(bblk, S, width)
    d2 = jnp.sum(o2_3d * filtw_ref[...][None], axis=1)            # (bblk, width)

    # ---- conv3 (1x1, BN3 folded), no ReLU ------------------------------------------
    o3 = jnp.dot(o2.astype(jnp.bfloat16), w3_ref[...],
                 preferred_element_type=jnp.float32) + b3_ref[...]
    o3_3d = o3.reshape(bblk, S, c4)
    d3 = jnp.sum(o3_3d * filtc_ref[...][None], axis=1)            # (bblk, c4)

    # ---- F1/F2/F3 FC layers collapsed into 2 block-diagonal matmuls ----------------
    d = jnp.concatenate([d1, d2, d3], axis=1)                     # (bblk, 2*width+c4)
    h = jnp.maximum(jnp.dot(d, wfc1_ref[...],
                            preferred_element_type=jnp.float32), 0.0)
    F = jax.nn.sigmoid(jnp.dot(h, wfc2_ref[...],
                               preferred_element_type=jnp.float32))  # [F1|F2|F3]

    # ---- BA module (three Linear+BN1d branches folded & concatenated on host) ------
    fusion = jnp.dot(F, wba_ref[...],
                     preferred_element_type=jnp.float32) + bba_ref[...]
    att = jax.nn.sigmoid(jnp.dot(jnp.maximum(fusion, 0.0), wgen_ref[...],
                                 preferred_element_type=jnp.float32))  # (bblk, c4)

    # ---- apply channel attention, add residual, ReLU --------------------------------
    o_ref[...] = jnp.maximum(o3_3d * att[:, None, :] + x3, 0.0).astype(o_ref.dtype)


# ------------------------------ parameter setup ---------------------------------
def make_dct_filter(channel, dct_h, dct_w):
    # FcaNet 'top16' frequency selection
    mx = [0, 0, 6, 0, 0, 1, 1, 4, 5, 1, 3, 0, 0, 0, 3, 2]
    my = [0, 1, 0, 5, 2, 0, 2, 0, 0, 6, 0, 4, 6, 3, 5, 2]
    mx = [u * (dct_h // 7) for u in mx]
    my = [v * (dct_w // 7) for v in my]
    c_part = channel // len(mx)

    def basis(pos, freq, POS):
        r = np.cos(np.pi * freq * (pos + 0.5) / POS) / np.sqrt(POS)
        return r if freq == 0 else r * np.sqrt(2.0)

    filt = np.zeros((channel, dct_h, dct_w), np.float64)
    for i, (u, v) in enumerate(zip(mx, my)):
        fx = np.array([basis(t, u, dct_h) for t in range(dct_h)])
        fy = np.array([basis(t, v, dct_w) for t in range(dct_w)])
        filt[i * c_part:(i + 1) * c_part] = np.outer(fx, fy)[None]
    return filt                                           # (C, dct_h, dct_w)


def pooled_padded_filter(channel, dct_h, dct_w, H, W):
    # adaptive_avg_pool2d UP-sampling by an integer factor == pixel replication, so
    # replicate-then-DCT-weighted-sum == weighted-sum with the block-summed filter.
    assert dct_h % H == 0 and dct_w % W == 0
    # TODO(synk): general (non-integer-ratio) adaptive_avg_pool2d not implemented.
    rh, rw = dct_h // H, dct_w // W
    filt = make_dct_filter(channel, dct_h, dct_w)
    pooled = filt.reshape(channel, H, rh, W, rw).sum(axis=(2, 4))      # (C, H, W)
    pad = np.zeros((channel, H + 2, W + 2), np.float64)                # zero pad ring
    pad[:, 1:H + 1, 1:W + 1] = pooled
    flat = pad.transpose(1, 2, 0).reshape((H + 2) * (W + 2), channel)  # (S, C)
    return jnp.asarray(flat, dtype=jnp.float32)


def grouped_3x3_tap_weights(w, groups):
    # torch weight (Cout, Cin/groups, 3, 3) -> per-tap block-diagonal weights (9, Cin, Cout)
    w = np.asarray(w)
    Cout, cig, KH, KW = w.shape
    cog = Cout // groups
    Cin = cig * groups
    dense = np.zeros((KH * KW, Cin, Cout), np.float64)
    for co in range(Cout):
        g = co // cog
        for k in range(cig):
            dense[:, g * cig + k, co] = w[co, k].reshape(-1)   # tap order = kh*3+kw
    return dense                                               # (9, Cin, Cout)


def block_diag(*blocks):
    rows = sum(b.shape[0] for b in blocks)
    cols = sum(b.shape[1] for b in blocks)
    out = np.zeros((rows, cols), np.float64)
    r = c = 0
    for b in blocks:
        out[r:r + b.shape[0], c:c + b.shape[1]] = b
        r += b.shape[0]
        c += b.shape[1]
    return out


def init_params(key, inplanes=256, planes=64, groups=32, base_width=4, reduction=16,
                H=14, W=14):
    width = int(planes * (base_width / 64.0)) * groups        # 128
    c4 = planes * 4                                           # 256
    cr = c4 // reduction                                      # 16
    dct = {64: 56, 128: 28, 256: 14, 512: 7}[planes]
    ks = iter(jax.random.split(key, 40))

    def lin(k, fin, fout):
        return np.asarray(jax.random.normal(k, (fin, fout), jnp.float32)) / np.sqrt(fin)

    def bn(k, c):   # folded eval-mode BatchNorm -> (scale, bias)
        k1, k2, k3, k4 = jax.random.split(k, 4)
        gamma = np.asarray(jax.random.uniform(k1, (c,), jnp.float32, 0.5, 1.5))
        beta = 0.1 * np.asarray(jax.random.normal(k2, (c,), jnp.float32))
        mean = 0.1 * np.asarray(jax.random.normal(k3, (c,), jnp.float32))
        var = np.asarray(jax.random.uniform(k4, (c,), jnp.float32, 0.5, 1.5))
        scale = gamma / np.sqrt(var + EPS)
        bias = beta - mean * scale
        return scale, bias

    p = {}
    # conv1 (1x1, no bias) + bn1 -> BN scale folded into weight columns, bf16
    w1 = lin(next(ks), inplanes, width)
    s1, b1 = bn(next(ks), width)
    p['w1'] = jnp.asarray(w1 * s1[None, :], jnp.bfloat16)
    p['b1'] = jnp.asarray(b1[None, :], jnp.float32)
    # conv2 (3x3 grouped, no bias) + bn2 -> per-tap block-diagonal weights, BN folded
    w2 = np.asarray(jax.random.normal(next(ks), (width, width // groups, 3, 3),
                                      jnp.float32)) / np.sqrt(9.0 * width / groups)
    s2, b2 = bn(next(ks), width)
    p['w2'] = jnp.asarray(grouped_3x3_tap_weights(w2, groups) * s2[None, None, :],
                          jnp.bfloat16)                        # (9, width, width)
    p['b2'] = jnp.asarray(b2[None, :], jnp.float32)
    # conv3 (1x1, no bias) + bn3
    w3 = lin(next(ks), width, c4)
    s3, b3 = bn(next(ks), c4)
    p['w3'] = jnp.asarray(w3 * s3[None, :], jnp.bfloat16)
    p['b3'] = jnp.asarray(b3[None, :], jnp.float32)
    # MultiSpectralAttention: pre-pooled + zero-padded DCT filters, FC weights packed
    # as two block-diagonal matrices acting on the concatenated [d1|d2|d3] descriptor.
    p['filt_w'] = pooled_padded_filter(width, dct, dct, H, W)
    p['filt_c4'] = pooled_padded_filter(c4, dct, dct, H, W)
    fe1_w1 = lin(next(ks), width, width // reduction)
    fe1_w2 = lin(next(ks), width // reduction, width)
    fe2_w1 = lin(next(ks), width, width // reduction)
    fe2_w2 = lin(next(ks), width // reduction, width)
    fe3_w1 = lin(next(ks), c4, c4 // reduction)
    fe3_w2 = lin(next(ks), c4 // reduction, c4)
    p['w_fc1'] = jnp.asarray(block_diag(fe1_w1, fe2_w1, fe3_w1), jnp.float32)
    p['w_fc2'] = jnp.asarray(block_diag(fe1_w2, fe2_w2, fe3_w2), jnp.float32)
    # BA module: three Linear(no bias)+BatchNorm1d branches, folded per-branch and
    # concatenated along input features so one ([F1|F2|F3] @ w_ba + b_ba) matmul
    # computes cur_fusion + sum(pre_fusions).
    wp1 = lin(next(ks), width, cr); sp1, bp1 = bn(next(ks), cr)
    wp2 = lin(next(ks), width, cr); sp2, bp2 = bn(next(ks), cr)
    wc = lin(next(ks), c4, cr);     sc, bc = bn(next(ks), cr)
    p['w_ba'] = jnp.asarray(np.concatenate([wp1 * sp1[None, :],
                                            wp2 * sp2[None, :],
                                            wc * sc[None, :]], axis=0), jnp.float32)
    p['b_ba'] = jnp.asarray((bp1 + bp2 + bc)[None, :], jnp.float32)
    p['w_gen'] = jnp.asarray(lin(next(ks), cr, c4), jnp.float32)
    # interior mask on the (H+2)x(W+2) padded grid (zeros on the 1-pixel pad ring)
    m = np.zeros((H + 2, W + 2, 1), np.float32)
    m[1:H + 1, 1:W + 1, :] = 1.0
    p['mask'] = jnp.asarray(m.reshape((H + 2) * (W + 2), 1))
    return p


# ------------------------------ forward pass ------------------------------------
def bottleneck_forward(x_nchw, p, block_b=2):
    B, Cin, H, W = x_nchw.shape
    width = p['w1'].shape[1]
    c4 = p['w3'].shape[1]
    assert Cin == c4, "downsample is None -> inplanes must equal 4*planes"
    assert B % block_b == 0
    Hp, Wp = H + 2, W + 2
    S = Hp * Wp
    assert p['filt_w'].shape[0] == S and p['mask'].shape[0] == S

    # NCHW -> padded-flat NHWC (B, (H+2)*(W+2), C); border rows are zero.
    xh = jnp.transpose(x_nchw, (0, 2, 3, 1))
    xp = jnp.pad(xh, ((0, 0), (1, 1), (1, 1), (0, 0)))
    x_flat = xp.reshape(B, S, Cin).astype(jnp.float32)

    operands = (x_flat, p['mask'],
                p['w1'], p['b1'], p['w2'], p['b2'], p['w3'], p['b3'],
                p['filt_w'], p['filt_c4'],
                p['w_fc1'], p['w_fc2'],
                p['w_ba'], p['b_ba'], p['w_gen'])

    def const_spec(a):
        zeros = (0,) * a.ndim
        return pl.BlockSpec(tuple(a.shape), lambda b, z=zeros: z)

    in_specs = [pl.BlockSpec((block_b, S, Cin), lambda b: (b, 0, 0))]
    in_specs += [const_spec(a) for a in operands[1:]]

    kern = functools.partial(_bottleneck_kernel, padded_w=Wp)
    out = pl.pallas_call(
        kern,
        out_shape=jax.ShapeDtypeStruct((B, S, c4), jnp.float32),
        grid=(B // block_b,),
        in_specs=in_specs,
        out_specs=pl.BlockSpec((block_b, S, c4), lambda b: (b, 0, 0)),
        scratch_shapes=[pltpu.VMEM((block_b * S, width), jnp.float32)],
        compiler_params=pltpu.CompilerParams(
            dimension_semantics=("parallel",),        # independent batch blocks
            vmem_limit_bytes=32 * 1024 * 1024),
    )(*operands)

    # drop the pad ring, back to NCHW
    y = out.reshape(B, Hp, Wp, c4)[:, 1:1 + H, 1:1 + W, :]
    return jnp.transpose(y, (0, 3, 1, 2))


if __name__ == "__main__":
    key = jax.random.PRNGKey(0)
    kx, kp = jax.random.split(key)
    # planes must be a key of c2wh={64:56,...}; smallest config: planes=64,
    # width=128, inplanes=4*planes=256 (required since downsample=None).
    planes, inplanes = 64, 256
    B, H, W = 4, 14, 14
    x = jax.random.normal(kx, (B, inplanes, H, W), jnp.float32)
    params = init_params(kp, inplanes=inplanes, planes=planes, H=H, W=W)
    fwd = jax.jit(functools.partial(bottleneck_forward, block_b=2))
    out = jax.block_until_ready(fwd(x, params))
    assert out.shape == (B, 4 * planes, H, W)
    assert bool(jnp.all(jnp.isfinite(out)))
    print("KERNEL_OK")
</pallas_src>

<mosaic_0001>
module attributes {stable_mosaic.version = 11 : i64} {
  func.func @_bottleneck_kernel(%arg0: i32, %arg1: memref<2x256x256xf32, #tpu.memory_space<vmem>>, %arg2: memref<256x1xf32, #tpu.memory_space<vmem>>, %arg3: memref<256x128xbf16, #tpu.memory_space<vmem>>, %arg4: memref<1x128xf32, #tpu.memory_space<vmem>>, %arg5: memref<9x128x128xbf16, #tpu.memory_space<vmem>>, %arg6: memref<1x128xf32, #tpu.memory_space<vmem>>, %arg7: memref<128x256xbf16, #tpu.memory_space<vmem>>, %arg8: memref<1x256xf32, #tpu.memory_space<vmem>>, %arg9: memref<256x128xf32, #tpu.memory_space<vmem>>, %arg10: memref<256x256xf32, #tpu.memory_space<vmem>>, %arg11: memref<512x32xf32, #tpu.memory_space<vmem>>, %arg12: memref<32x512xf32, #tpu.memory_space<vmem>>, %arg13: memref<512x16xf32, #tpu.memory_space<vmem>>, %arg14: memref<1x16xf32, #tpu.memory_space<vmem>>, %arg15: memref<16x256xf32, #tpu.memory_space<vmem>>, %arg16: memref<2x256x256xf32, #tpu.memory_space<vmem>>, %arg17: memref<512x128xf32, #tpu.memory_space<vmem>>) attributes {dimension_semantics = [#tpu.dimension_semantics<parallel>], iteration_bounds = array<i64: 2>, scalar_prefetch = 0 : i64, scratch_operands = 1 : i64, tpu.core_type = #tpu.core_type<tc>, window_params = [{transform_indices = @transform_0, window_bounds = array<i64: 2, 256, 256>}, {pipeline_mode = #tpu.pipeline_mode<synchronous>, transform_indices = @transform_1, window_bounds = array<i64: 256, 1>}, {pipeline_mode = #tpu.pipeline_mode<synchronous>, transform_indices = @transform_2, window_bounds = array<i64: 256, 128>}, {pipeline_mode = #tpu.pipeline_mode<synchronous>, transform_indices = @transform_3, window_bounds = array<i64: 1, 128>}, {pipeline_mode = #tpu.pipeline_mode<synchronous>, transform_indices = @transform_4, window_bounds = array<i64: 9, 128, 128>}, {pipeline_mode = #tpu.pipeline_mode<synchronous>, transform_indices = @transform_5, window_bounds = array<i64: 1, 128>}, {pipeline_mode = #tpu.pipeline_mode<synchronous>, transform_indices = @transform_6, window_bounds = array<i64: 128, 256>}, {pipeline_mode = #tpu.pipeline_mode<synchronous>, transform_indices = @transform_7, window_bounds = array<i64: 1, 256>}, {pipeline_mode = #tpu.pipeline_mode<synchronous>, transform_indices = @transform_8, window_bounds = array<i64: 256, 128>}, {pipeline_mode = #tpu.pipeline_mode<synchronous>, transform_indices = @transform_9, window_bounds = array<i64: 256, 256>}, {pipeline_mode = #tpu.pipeline_mode<synchronous>, transform_indices = @transform_10, window_bounds = array<i64: 512, 32>}, {pipeline_mode = #tpu.pipeline_mode<synchronous>, transform_indices = @transform_11, window_bounds = array<i64: 32, 512>}, {pipeline_mode = #tpu.pipeline_mode<synchronous>, transform_indices = @transform_12, window_bounds = array<i64: 512, 16>}, {pipeline_mode = #tpu.pipeline_mode<synchronous>, transform_indices = @transform_13, window_bounds = array<i64: 1, 16>}, {pipeline_mode = #tpu.pipeline_mode<synchronous>, transform_indices = @transform_14, window_bounds = array<i64: 16, 256>}, {transform_indices = @transform_15, window_bounds = array<i64: 2, 256, 256>}]} {
    %c0 = arith.constant 0 : index
    %c0_0 = arith.constant 0 : index
    %c0_1 = arith.constant 0 : index
    %0 = vector.load %arg1[%c0, %c0_0, %c0_1] : memref<2x256x256xf32, #tpu.memory_space<vmem>>, vector<2x256x256xf32>
    %1 = vector.shape_cast %0 : vector<2x256x256xf32> to vector<512x256xf32>
    %2 = arith.truncf %1 : vector<512x256xf32> to vector<512x256xbf16>
    %c0_2 = arith.constant 0 : index
    %c0_3 = arith.constant 0 : index
    %3 = vector.load %arg3[%c0_2, %c0_3] : memref<256x128xbf16, #tpu.memory_space<vmem>>, vector<256x128xbf16>
    %cst = arith.constant dense<0.000000e+00> : vector<512x128xf32>
    %4 = tpu.matmul %2, %3, %cst {dimension_numbers = #tpu.dot_dimension_numbers<[1], [0], [0], [1], [0, 0, 1, 1], [], []>} : vector<512x256xbf16>, vector<256x128xbf16>, vector<512x128xf32> -> vector<512x128xf32>
    %c0_4 = arith.constant 0 : index
    %c0_5 = arith.constant 0 : index
    %5 = vector.load %arg4[%c0_4, %c0_5] : memref<1x128xf32, #tpu.memory_space<vmem>>, vector<1x128xf32>
    %6 = vector.broadcast %5 : vector<1x128xf32> to vector<512x128xf32>
    %7 = arith.addf %4, %6 : vector<512x128xf32>
    %cst_6 = arith.constant 0.000000e+00 : f32
    %8 = vector.broadcast %cst_6 : f32 to vector<512x128xf32>
    %9 = arith.maximumf %7, %8 : vector<512x128xf32>
    %10 = vector.shape_cast %9 : vector<512x128xf32> to vector<2x256x128xf32>
    %c0_7 = arith.constant 0 : index
    %c0_8 = arith.constant 0 : index
    %11 = vector.load %arg2[%c0_7, %c0_8] : memref<256x1xf32, #tpu.memory_space<vmem>>, vector<256x1xf32>
    %12 = vector.shape_cast %11 : vector<256x1xf32> to vector<1x256x1xf32>
    %13 = vector.broadcast %12 : vector<1x256x1xf32> to vector<2x256x128xf32>
    %14 = arith.mulf %10, %13 : vector<2x256x128xf32>
    %c0_9 = arith.constant 0 : index
    %c0_10 = arith.constant 0 : index
    %15 = vector.load %arg9[%c0_9, %c0_10] : memref<256x128xf32, #tpu.memory_space<vmem>>, vector<256x128xf32>
    %16 = vector.shape_cast %15 : vector<256x128xf32> to vector<1x256x128xf32>
    %17 = vector.broadcast %16 : vector<1x256x128xf32> to vector<2x256x128xf32>
    %18 = arith.mulf %14, %17 : vector<2x256x128xf32>
    %cst_11 = arith.constant dense<0.000000e+00> : vector<2x128xf32>
    %19 = vector.multi_reduction <add>, %18, %cst_11 [1] : vector<2x256x128xf32> to vector<2x128xf32>
    %20 = vector.shape_cast %14 : vector<2x256x128xf32> to vector<512x128xf32>
    %c17_i32 = arith.constant 17 : i32
    %21 = tpu.dynamic_rotate %20 by %c17_i32 dim 0 : vector<512x128xf32>, i32 -> vector<512x128xf32>
    %22 = arith.truncf %21 : vector<512x128xf32> to vector<512x128xbf16>
    %c0_12 = arith.constant 0 : index
    %c0_13 = arith.constant 0 : index
    %c0_14 = arith.constant 0 : index
    %23 = vector.load %arg5[%c0_12, %c0_13, %c0_14] : memref<9x128x128xbf16, #tpu.memory_space<vmem>>, vector<1x128x128xbf16>
    %24 = vector.shape_cast %23 : vector<1x128x128xbf16> to vector<128x128xbf16>
    %cst_15 = arith.constant dense<0.000000e+00> : vector<512x128xf32>
    %25 = tpu.matmul %22, %24, %cst_15 {dimension_numbers = #tpu.dot_dimension_numbers<[1], [0], [0], [1], [0, 0, 1, 1], [], []>} : vector<512x128xbf16>, vector<128x128xbf16>, vector<512x128xf32> -> vector<512x128xf32>
    %c0_16 = arith.constant 0 : index
    %c0_17 = arith.constant 0 : index
    %26 = vector.load %arg17[%c0_16, %c0_17] : memref<512x128xf32, #tpu.memory_space<vmem>>, vector<512x128xf32>
    tpu.vector_store %arg17[%c0_16, %c0_17], %25 {strides = array<i32>} : memref<512x128xf32, #tpu.memory_space<vmem>>, vector<512x128xf32>,
    %c16_i32 = arith.constant 16 : i32
    %27 = tpu.dynamic_rotate %20 by %c16_i32 dim 0 : vector<512x128xf32>, i32 -> vector<512x128xf32>
    %28 = arith.truncf %27 : vector<512x128xf32> to vector<512x128xbf16>
    %c1 = arith.constant 1 : index
    %c0_18 = arith.constant 0 : index
    %c0_19 = arith.constant 0 : index
    %29 = vector.load %arg5[%c1, %c0_18, %c0_19] : memref<9x128x128xbf16, #tpu.memory_space<vmem>>, vector<1x128x128xbf16>
    %30 = vector.shape_cast %29 : vector<1x128x128xbf16> to vector<128x128xbf16>
    %cst_20 = arith.constant dense<0.000000e+00> : vector<512x128xf32>
    %31 = tpu.matmul %28, %30, %cst_20 {dimension_numbers = #tpu.dot_dimension_numbers<[1], [0], [0], [1], [0, 0, 1, 1], [], []>} : vector<512x128xbf16>, vector<128x128xbf16>, vector<512x128xf32> -> vector<512x128xf32>
    %c0_21 = arith.constant 0 : index
    %c0_22 = arith.constant 0 : index
    %32 = vector.load %arg17[%c0_21, %c0_22] : memref<512x128xf32, #tpu.memory_space<vmem>>, vector<512x128xf32>
    %33 = arith.addf %32, %31 : vector<512x128xf32>
    %c0_23 = arith.constant 0 : index
    %c0_24 = arith.constant 0 : index
    %34 = vector.load %arg17[%c0_23, %c0_24] : memref<512x128xf32, #tpu.memory_space<vmem>>, vector<512x128xf32>
    tpu.vector_store %arg17[%c0_23, %c0_24], %33 {strides = array<i32>} : memref<512x128xf32, #tpu.memory_space<vmem>>, vector<512x128xf32>,
    %c15_i32 = arith.constant 15 : i32
    %35 = tpu.dynamic_rotate %20 by %c15_i32 dim 0 : vector<512x128xf32>, i32 -> vector<512x128xf32>
    %36 = arith.truncf %35 : vector<512x128xf32> to vector<512x128xbf16>
    %c2 = arith.constant 2 : index
    %c0_25 = arith.constant 0 : index
    %c0_26 = arith.constant 0 : index
    %37 = vector.load %arg5[%c2, %c0_25, %c0_26] : memref<9x128x128xbf16, #tpu.memory_space<vmem>>, vector<1x128x128xbf16>
    %38 = vector.shape_cast %37 : vector<1x128x128xbf16> to vector<128x128xbf16>
    %cst_27 = arith.constant dense<0.000000e+00> : vector<512x128xf32>
    %39 = tpu.matmul %36, %38, %cst_27 {dimension_numbers = #tpu.dot_dimension_numbers<[1], [0], [0], [1], [0, 0, 1, 1], [], []>} : vector<512x128xbf16>, vector<128x128xbf16>, vector<512x128xf32> -> vector<512x128xf32>
    %c0_28 = arith.constant 0 : index
    %c0_29 = arith.constant 0 : index
    %40 = vector.load %arg17[%c0_28, %c0_29] : memref<512x128xf32, #tpu.memory_space<vmem>>, vector<512x128xf32>
    %41 = arith.addf %40, %39 : vector<512x128xf32>
    %c0_30 = arith.constant 0 : index
    %c0_31 = arith.constant 0 : index
    %42 = vector.load %arg17[%c0_30, %c0_31] : memref<512x128xf32, #tpu.memory_space<vmem>>, vector<512x128xf32>
    tpu.vector_store %arg17[%c0_30, %c0_31], %41 {strides = array<i32>} : memref<512x128xf32, #tpu.memory_space<vmem>>, vector<512x128xf32>,
    %c1_i32 = arith.constant 1 : i32
    %43 = tpu.dynamic_rotate %20 by %c1_i32 dim 0 : vector<512x128xf32>, i32 -> vector<512x128xf32>
    %44 = arith.truncf %43 : vector<512x128xf32> to vector<512x128xbf16>
    %c3 = arith.constant 3 : index
    %c0_32 = arith.constant 0 : index
    %c0_33 = arith.constant 0 : index
    %45 = vector.load %arg5[%c3, %c0_32, %c0_33] : memref<9x128x128xbf16, #tpu.memory_space<vmem>>, vector<1x128x128xbf16>
    %46 = vector.shape_cast %45 : vector<1x128x128xbf16> to vector<128x128xbf16>
    %cst_34 = arith.constant dense<0.000000e+00> : vector<512x128xf32>
    %47 = tpu.matmul %44, %46, %cst_34 {dimension_numbers = #tpu.dot_dimension_numbers<[1], [0], [0], [1], [0, 0, 1, 1], [], []>} : vector<512x128xbf16>, vector<128x128xbf16>, vector<512x128xf32> -> vector<512x128xf32>
    %c0_35 = arith.constant 0 : index
    %c0_36 = arith.constant 0 : index
    %48 = vector.load %arg17[%c0_35, %c0_36] : memref<512x128xf32, #tpu.memory_space<vmem>>, vector<512x128xf32>
    %49 = arith.addf %48, %47 : vector<512x128xf32>
    %c0_37 = arith.constant 0 : index
    %c0_38 = arith.constant 0 : index
    %50 = vector.load %arg17[%c0_37, %c0_38] : memref<512x128xf32, #tpu.memory_space<vmem>>, vector<512x128xf32>
    tpu.vector_store %arg17[%c0_37, %c0_38], %49 {strides = array<i32>} : memref<512x128xf32, #tpu.memory_space<vmem>>, vector<512x128xf32>,
    %51 = arith.truncf %20 : vector<512x128xf32> to vector<512x128xbf16>
    %c4 = arith.constant 4 : index
    %c0_39 = arith.constant 0 : index
    %c0_40 = arith.constant 0 : index
    %52 = vector.load %arg5[%c4, %c0_39, %c0_40] : memref<9x128x128xbf16, #tpu.memory_space<vmem>>, vector<1x128x128xbf16>
    %53 = vector.shape_cast %52 : vector<1x128x128xbf16> to vector<128x128xbf16>
    %cst_41 = arith.constant dense<0.000000e+00> : vector<512x128xf32>
    %54 = tpu.matmul %51, %53, %cst_41 {dimension_numbers = #tpu.dot_dimension_numbers<[1], [0], [0], [1], [0, 0, 1, 1], [], []>} : vector<512x128xbf16>, vector<128x128xbf16>, vector<512x128xf32> -> vector<512x128xf32>
    %c0_42 = arith.constant 0 : index
    %c0_43 = arith.constant 0 : index
    %55 = vector.load %arg17[%c0_42, %c0_43] : memref<512x128xf32, #tpu.memory_space<vmem>>, vector<512x128xf32>
    %56 = arith.addf %55, %54 : vector<512x128xf32>
    %c0_44 = arith.constant 0 : index
    %c0_45 = arith.constant 0 : index
    %57 = vector.load %arg17[%c0_44, %c0_45] : memref<512x128xf32, #tpu.memory_space<vmem>>, vector<512x128xf32>
    tpu.vector_store %arg17[%c0_44, %c0_45], %56 {strides = array<i32>} : memref<512x128xf32, #tpu.memory_space<vmem>>, vector<512x128xf32>,
    %c511_i32 = arith.constant 511 : i32
    %58 = tpu.dynamic_rotate %20 by %c511_i32 dim 0 : vector<512x128xf32>, i32 -> vector<512x128xf32>
    %59 = arith.truncf %58 : vector<512x128xf32> to vector<512x128xbf16>
    %c5 = arith.constant 5 : index
    %c0_46 = arith.constant 0 : index
    %c0_47 = arith.constant 0 : index
    %60 = vector.load %arg5[%c5, %c0_46, %c0_47] : memref<9x128x128xbf16, #tpu.memory_space<vmem>>, vector<1x128x128xbf16>
    %61 = vector.shape_cast %60 : vector<1x128x128xbf16> to vector<128x128xbf16>
    %cst_48 = arith.constant dense<0.000000e+00> : vector<512x128xf32>
    %62 = tpu.matmul %59, %61, %cst_48 {dimension_numbers = #tpu.dot_dimension_numbers<[1], [0], [0], [1], [0, 0, 1, 1], [], []>} : vector<512x128xbf16>, vector<128x128xbf16>, vector<512x128xf32> -> vector<512x128xf32>
    %c0_49 = arith.constant 0 : index
    %c0_50 = arith.constant 0 : index
    %63 = vector.load %arg17[%c0_49, %c0_50] : memref<512x128xf32, #tpu.memory_space<vmem>>, vector<512x128xf32>
    %64 = arith.addf %63, %62 : vector<512x128xf32>
    %c0_51 = arith.constant 0 : index
    %c0_52 = arith.constant 0 : index
    %65 = vector.load %arg17[%c0_51, %c0_52] : memref<512x128xf32, #tpu.memory_space<vmem>>, vector<512x128xf32>
    tpu.vector_store %arg17[%c0_51, %c0_52], %64 {strides = array<i32>} : memref<512x128xf32, #tpu.memory_space<vmem>>, vector<512x128xf32>,
    %c497_i32 = arith.constant 497 : i32
    %66 = tpu.dynamic_rotate %20 by %c497_i32 dim 0 : vector<512x128xf32>, i32 -> vector<512x128xf32>
    %67 = arith.truncf %66 : vector<512x128xf32> to vector<512x128xbf16>
    %c6 = arith.constant 6 : index
    %c0_53 = arith.constant 0 : index
    %c0_54 = arith.constant 0 : index
    %68 = vector.load %arg5[%c6, %c0_53, %c0_54] : memref<9x128x128xbf16, #tpu.memory_space<vmem>>, vector<1x128x128xbf16>
    %69 = vector.shape_cast %68 : vector<1x128x128xbf16> to vector<128x128xbf16>
    %cst_55 = arith.constant dense<0.000000e+00> : vector<512x128xf32>
    %70 = tpu.matmul %67, %69, %cst_55 {dimension_numbers = #tpu.dot_dimension_numbers<[1], [0], [0], [1], [0, 0, 1, 1], [], []>} : vector<512x128xbf16>, vector<128x128xbf16>, vector<512x128xf32> -> vector<512x128xf32>
    %c0_56 = arith.constant 0 : index
    %c0_57 = arith.constant 0 : index
    %71 = vector.load %arg17[%c0_56, %c0_57] : memref<512x128xf32, #tpu.memory_space<vmem>>, vector<512x128xf32>
    %72 = arith.addf %71, %70 : vector<512x128xf32>
    %c0_58 = arith.constant 0 : index
    %c0_59 = arith.constant 0 : index
    %73 = vector.load %arg17[%c0_58, %c0_59] : memref<512x128xf32, #tpu.memory_space<vmem>>, vector<512x128xf32>
    tpu.vector_store %arg17[%c0_58, %c0_59], %72 {strides = array<i32>} : memref<512x128xf32, #tpu.memory_space<vmem>>, vector<512x128xf32>,
    %c496_i32 = arith.constant 496 : i32
    %74 = tpu.dynamic_rotate %20 by %c496_i32 dim 0 : vector<512x128xf32>, i32 -> vector<512x128xf32>
    %75 = arith.truncf %74 : vector<512x128xf32> to vector<512x128xbf16>
    %c7 = arith.constant 7 : index
    %c0_60 = arith.constant 0 : index
    %c0_61 = arith.constant 0 : index
    %76 = vector.load %arg5[%c7, %c0_60, %c0_61] : memref<9x128x128xbf16, #tpu.memory_space<vmem>>, vector<1x128x128xbf16>
    %77 = vector.shape_cast %76 : vector<1x128x128xbf16> to vector<128x128xbf16>
    %cst_62 = arith.constant dense<0.000000e+00> : vector<512x128xf32>
    %78 = tpu.matmul %75, %77, %cst_62 {dimension_numbers = #tpu.dot_dimension_numbers<[1], [0], [0], [1], [0, 0, 1, 1], [], []>} : vector<512x128xbf16>, vector<128x128xbf16>, vector<512x128xf32> -> vector<512x128xf32>
    %c0_63 = arith.constant 0 : index
    %c0_64 = arith.constant 0 : index
    %79 = vector.load %arg17[%c0_63, %c0_64] : memref<512x128xf32, #tpu.memory_space<vmem>>, vector<512x128xf32>
    %80 = arith.addf %79, %78 : vector<512x128xf32>
    %c0_65 = arith.constant 0 : index
    %c0_66 = arith.constant 0 : index
    %81 = vector.load %arg17[%c0_65, %c0_66] : memref<512x128xf32, #tpu.memory_space<vmem>>, vector<512x128xf32>
    tpu.vector_store %arg17[%c0_65, %c0_66], %80 {strides = array<i32>} : memref<512x128xf32, #tpu.memory_space<vmem>>, vector<512x128xf32>,
    %c495_i32 = arith.constant 495 : i32
    %82 = tpu.dynamic_rotate %20 by %c495_i32 dim 0 : vector<512x128xf32>, i32 -> vector<512x128xf32>
    %83 = arith.truncf %82 : vector<512x128xf32> to vector<512x128xbf16>
    %c8 = arith.constant 8 : index
    %c0_67 = arith.constant 0 : index
    %c0_68 = arith.constant 0 : index
    %84 = vector.load %arg5[%c8, %c0_67, %c0_68] : memref<9x128x128xbf16, #tpu.memory_space<vmem>>, vector<1x128x128xbf16>
    %85 = vector.shape_cast %84 : vector<1x128x128xbf16> to vector<128x128xbf16>
    %cst_69 = arith.constant dense<0.000000e+00> : vector<512x128xf32>
    %86 = tpu.matmul %83, %85, %cst_69 {dimension_numbers = #tpu.dot_dimension_numbers<[1], [0], [0], [1], [0, 0, 1, 1], [], []>} : vector<512x128xbf16>, vector<128x128xbf16>, vector<512x128xf32> -> vector<512x128xf32>
    %c0_70 = arith.constant 0 : index
    %c0_71 = arith.constant 0 : index
    %87 = vector.load %arg17[%c0_70, %c0_71] : memref<512x128xf32, #tpu.memory_space<vmem>>, vector<512x128xf32>
    %88 = arith.addf %87, %86 : vector<512x128xf32>
    %c0_72 = arith.constant 0 : index
    %c0_73 = arith.constant 0 : index
    %89 = vector.load %arg17[%c0_72, %c0_73] : memref<512x128xf32, #tpu.memory_space<vmem>>, vector<512x128xf32>
    tpu.vector_store %arg17[%c0_72, %c0_73], %88 {strides = array<i32>} : memref<512x128xf32, #tpu.memory_space<vmem>>, vector<512x128xf32>,
    %c0_74 = arith.constant 0 : index
    %c0_75 = arith.constant 0 : index
    %90 = vector.load %arg17[%c0_74, %c0_75] : memref<512x128xf32, #tpu.memory_space<vmem>>, vector<512x128xf32>
    %c0_76 = arith.constant 0 : index
    %c0_77 = arith.constant 0 : index
    %91 = vector.load %arg6[%c0_76, %c0_77] : memref<1x128xf32, #tpu.memory_space<vmem>>, vector<1x128xf32>
    %92 = vector.broadcast %91 : vector<1x128xf32> to vector<512x128xf32>
    %93 = arith.addf %90, %92 : vector<512x128xf32>
    %cst_78 = arith.constant 0.000000e+00 : f32
    %94 = vector.broadcast %cst_78 : f32 to vector<512x128xf32>
    %95 = arith.maximumf %93, %94 : vector<512x128xf32>
    %96 = vector.shape_cast %95 : vector<512x128xf32> to vector<2x256x128xf32>
    %c0_79 = arith.constant 0 : index
    %c0_80 = arith.constant 0 : index
    %97 = vector.load %arg9[%c0_79, %c0_80] : memref<256x128xf32, #tpu.memory_space<vmem>>, vector<256x128xf32>
    %98 = vector.shape_cast %97 : vector<256x128xf32> to vector<1x256x128xf32>
    %99 = vector.broadcast %98 : vector<1x256x128xf32> to vector<2x256x128xf32>
    %100 = arith.mulf %96, %99 : vector<2x256x128xf32>
    %cst_81 = arith.constant dense<0.000000e+00> : vector<2x128xf32>
    %101 = vector.multi_reduction <add>, %100, %cst_81 [1] : vector<2x256x128xf32> to vector<2x128xf32>
    %102 = arith.truncf %95 : vector<512x128xf32> to vector<512x128xbf16>
    %c0_82 = arith.constant 0 : index
    %c0_83 = arith.constant 0 : index
    %103 = vector.load %arg7[%c0_82, %c0_83] : memref<128x256xbf16, #tpu.memory_space<vmem>>, vector<128x256xbf16>
    %cst_84 = arith.constant dense<0.000000e+00> : vector<512x256xf32>
    %104 = tpu.matmul %102, %103, %cst_84 {dimension_numbers = #tpu.dot_dimension_numbers<[1], [0], [0], [1], [0, 0, 1, 1], [], []>} : vector<512x128xbf16>, vector<128x256xbf16>, vector<512x256xf32> -> vector<512x256xf32>
    %c0_85 = arith.constant 0 : index
    %c0_86 = arith.constant 0 : index
    %105 = vector.load %arg8[%c0_85, %c0_86] : memref<1x256xf32, #tpu.memory_space<vmem>>, vector<1x256xf32>
    %106 = vector.broadcast %105 : vector<1x256xf32> to vector<512x256xf32>
    %107 = arith.addf %104, %106 : vector<512x256xf32>
    %108 = vector.shape_cast %107 : vector<512x256xf32> to vector<2x256x256xf32>
    %c0_87 = arith.constant 0 : index
    %c0_88 = arith.constant 0 : index
    %109 = vector.load %arg10[%c0_87, %c0_88] : memref<256x256xf32, #tpu.memory_space<vmem>>, vector<256x256xf32>
    %110 = vector.shape_cast %109 : vector<256x256xf32> to vector<1x256x256xf32>
    %111 = vector.broadcast %110 : vector<1x256x256xf32> to vector<2x256x256xf32>
    %112 = arith.mulf %108, %111 : vector<2x256x256xf32>
    %cst_89 = arith.constant dense<0.000000e+00> : vector<2x256xf32>
    %113 = vector.multi_reduction <add>, %112, %cst_89 [1] : vector<2x256x256xf32> to vector<2x256xf32>
    %114 = tpu.concatenate %19, %101, %113 in 1 : vector<2x128xf32>, vector<2x128xf32>, vector<2x256xf32> -> vector<2x512xf32>
    %c0_90 = arith.constant 0 : index
    %c0_91 = arith.constant 0 : index
    %115 = vector.load %arg11[%c0_90, %c0_91] : memref<512x32xf32, #tpu.memory_space<vmem>>, vector<512x32xf32>
    %cst_92 = arith.constant dense<0.000000e+00> : vector<2x32xf32>
    %116 = tpu.matmul %114, %115, %cst_92 {dimension_numbers = #tpu.dot_dimension_numbers<[1], [0], [0], [1], [0, 0, 1, 1], [], []>} : vector<2x512xf32>, vector<512x32xf32>, vector<2x32xf32> -> vector<2x32xf32>
    %cst_93 = arith.constant 0.000000e+00 : f32
    %117 = vector.broadcast %cst_93 : f32 to vector<2x32xf32>
    %118 = arith.maximumf %116, %117 : vector<2x32xf32>
    %c0_94 = arith.constant 0 : index
    %c0_95 = arith.constant 0 : index
    %119 = vector.load %arg12[%c0_94, %c0_95] : memref<32x512xf32, #tpu.memory_space<vmem>>, vector<32x512xf32>
    %cst_96 = arith.constant dense<0.000000e+00> : vector<2x512xf32>
    %120 = tpu.matmul %118, %119, %cst_96 {dimension_numbers = #tpu.dot_dimension_numbers<[1], [0], [0], [1], [0, 0, 1, 1], [], []>} : vector<2x32xf32>, vector<32x512xf32>, vector<2x512xf32> -> vector<2x512xf32>
    %121 = arith.negf %120 : vector<2x512xf32>
    %122 = math.exp %121 : vector<2x512xf32>
    %cst_97 = arith.constant 1.000000e+00 : f32
    %123 = vector.broadcast %cst_97 : f32 to vector<2x512xf32>
    %124 = arith.addf %123, %122 : vector<2x512xf32>
    %125 = arith.divf %123, %124 : vector<2x512xf32>
    %c0_98 = arith.constant 0 : index
    %c0_99 = arith.constant 0 : index
    %126 = vector.load %arg13[%c0_98, %c0_99] : memref<512x16xf32, #tpu.memory_space<vmem>>, vector<512x16xf32>
    %cst_100 = arith.constant dense<0.000000e+00> : vector<2x16xf32>
    %127 = tpu.matmul %125, %126, %cst_100 {dimension_numbers = #tpu.dot_dimension_numbers<[1], [0], [0], [1], [0, 0, 1, 1], [], []>} : vector<2x512xf32>, vector<512x16xf32>, vector<2x16xf32> -> vector<2x16xf32>
    %c0_101 = arith.constant 0 : index
    %c0_102 = arith.constant 0 : index
    %128 = vector.load %arg14[%c0_101, %c0_102] : memref<1x16xf32, #tpu.memory_space<vmem>>, vector<1x16xf32>
    %129 = vector.broadcast %128 : vector<1x16xf32> to vector<2x16xf32>
    %130 = arith.addf %127, %129 : vector<2x16xf32>
    %cst_103 = arith.constant 0.000000e+00 : f32
    %131 = vector.broadcast %cst_103 : f32 to vector<2x16xf32>
    %132 = arith.maximumf %130, %131 : vector<2x16xf32>
    %c0_104 = arith.constant 0 : index
    %c0_105 = arith.constant 0 : index
    %133 = vector.load %arg15[%c0_104, %c0_105] : memref<16x256xf32, #tpu.memory_space<vmem>>, vector<16x256xf32>
    %cst_106 = arith.constant dense<0.000000e+00> : vector<2x256xf32>
    %134 = tpu.matmul %132, %133, %cst_106 {dimension_numbers = #tpu.dot_dimension_numbers<[1], [0], [0], [1], [0, 0, 1, 1], [], []>} : vector<2x16xf32>, vector<16x256xf32>, vector<2x256xf32> -> vector<2x256xf32>
    %135 = arith.negf %134 : vector<2x256xf32>
    %136 = math.exp %135 : vector<2x256xf32>
    %cst_107 = arith.constant 1.000000e+00 : f32
    %137 = vector.broadcast %cst_107 : f32 to vector<2x256xf32>
    %138 = arith.addf %137, %136 : vector<2x256xf32>
    %139 = arith.divf %137, %138 : vector<2x256xf32>
    %140 = vector.shape_cast %139 : vector<2x256xf32> to vector<2x1x256xf32>
    %141 = vector.broadcast %140 : vector<2x1x256xf32> to vector<2x256x256xf32>
    %142 = arith.mulf %108, %141 : vector<2x256x256xf32>
    %143 = arith.addf %142, %0 : vector<2x256x256xf32>
    %cst_108 = arith.constant 0.000000e+00 : f32
    %144 = vector.broadcast %cst_108 : f32 to vector<2x256x256xf32>
    %145 = arith.maximumf %143, %144 : vector<2x256x256xf32>
    %c0_109 = arith.constant 0 : index
    %c0_110 = arith.constant 0 : index
    %c0_111 = arith.constant 0 : index
    %146 = vector.load %arg16[%c0_109, %c0_110, %c0_111] : memref<2x256x256xf32, #tpu.memory_space<vmem>>, vector<2x256x256xf32>
    tpu.vector_store %arg16[%c0_109, %c0_110, %c0_111], %145 {strides = array<i32>} : memref<2x256x256xf32, #tpu.memory_space<vmem>>, vector<2x256x256xf32>,
    return
  }
  func.func @transform_0(%arg0: i32) -> (i32, i32, i32) {
    %c0_i32 = arith.constant 0 : i32
    %c0_i32_0 = arith.constant 0 : i32
    %c0_i32_1 = arith.constant 0 : i32
    return %arg0, %c0_i32, %c0_i32_0 : i32, i32, i32
  }
  func.func @transform_1(%arg0: i32) -> (i32, i32) {
    %c0_i32 = arith.constant 0 : i32
    %c0_i32_0 = arith.constant 0 : i32
    %c0_i32_1 = arith.constant 0 : i32
    return %c0_i32, %c0_i32_0 : i32, i32
  }
  func.func @transform_2(%arg0: i32) -> (i32, i32) {
    %c0_i32 = arith.constant 0 : i32
    %c0_i32_0 = arith.constant 0 : i32
    %c0_i32_1 = arith.constant 0 : i32
    return %c0_i32, %c0_i32_0 : i32, i32
  }
  func.func @transform_3(%arg0: i32) -> (i32, i32) {
    %c0_i32 = arith.constant 0 : i32
    %c0_i32_0 = arith.constant 0 : i32
    %c0_i32_1 = arith.constant 0 : i32
    return %c0_i32, %c0_i32_0 : i32, i32
  }
  func.func @transform_4(%arg0: i32) -> (i32, i32, i32) {
    %c0_i32 = arith.constant 0 : i32
    %c0_i32_0 = arith.constant 0 : i32
    %c0_i32_1 = arith.constant 0 : i32
    %c0_i32_2 = arith.constant 0 : i32
    return %c0_i32, %c0_i32_0, %c0_i32_1 : i32, i32, i32
  }
  func.func @transform_5(%arg0: i32) -> (i32, i32) {
    %c0_i32 = arith.constant 0 : i32
    %c0_i32_0 = arith.constant 0 : i32
    %c0_i32_1 = arith.constant 0 : i32
    return %c0_i32, %c0_i32_0 : i32, i32
  }
  func.func @transform_6(%arg0: i32) -> (i32, i32) {
    %c0_i32 = arith.constant 0 : i32
    %c0_i32_0 = arith.constant 0 : i32
    %c0_i32_1 = arith.constant 0 : i32
    return %c0_i32, %c0_i32_0 : i32, i32
  }
  func.func @transform_7(%arg0: i32) -> (i32, i32) {
    %c0_i32 = arith.constant 0 : i32
    %c0_i32_0 = arith.constant 0 : i32
    %c0_i32_1 = arith.constant 0 : i32
    return %c0_i32, %c0_i32_0 : i32, i32
  }
  func.func @transform_8(%arg0: i32) -> (i32, i32) {
    %c0_i32 = arith.constant 0 : i32
    %c0_i32_0 = arith.constant 0 : i32
    %c0_i32_1 = arith.constant 0 : i32
    return %c0_i32, %c0_i32_0 : i32, i32
  }
  func.func @transform_9(%arg0: i32) -> (i32, i32) {
    %c0_i32 = arith.constant 0 : i32
    %c0_i32_0 = arith.constant 0 : i32
    %c0_i32_1 = arith.constant 0 : i32
    return %c0_i32, %c0_i32_0 : i32, i32
  }
  func.func @transform_10(%arg0: i32) -> (i32, i32) {
    %c0_i32 = arith.constant 0 : i32
    %c0_i32_0 = arith.constant 0 : i32
    %c0_i32_1 = arith.constant 0 : i32
    return %c0_i32, %c0_i32_0 : i32, i32
  }
  func.func @transform_11(%arg0: i32) -> (i32, i32) {
    %c0_i32 = arith.constant 0 : i32
    %c0_i32_0 = arith.constant 0 : i32
    %c0_i32_1 = arith.constant 0 : i32
    return %c0_i32, %c0_i32_0 : i32, i32
  }
  func.func @transform_12(%arg0: i32) -> (i32, i32) {
    %c0_i32 = arith.constant 0 : i32
    %c0_i32_0 = arith.constant 0 : i32
    %c0_i32_1 = arith.constant 0 : i32
    return %c0_i32, %c0_i32_0 : i32, i32
  }
  func.func @transform_13(%arg0: i32) -> (i32, i32) {
    %c0_i32 = arith.constant 0 : i32
    %c0_i32_0 = arith.constant 0 : i32
    %c0_i32_1 = arith.constant 0 : i32
    return %c0_i32, %c0_i32_0 : i32, i32
  }
  func.func @transform_14(%arg0: i32) -> (i32, i32) {
    %c0_i32 = arith.constant 0 : i32
    %c0_i32_0 = arith.constant 0 : i32
    %c0_i32_1 = arith.constant 0 : i32
    return %c0_i32, %c0_i32_0 : i32, i32
  }
  func.func @transform_15(%arg0: i32) -> (i32, i32, i32) {
    %c0_i32 = arith.constant 0 : i32
    %c0_i32_0 = arith.constant 0 : i32
    %c0_i32_1 = arith.constant 0 : i32
    return %arg0, %c0_i32, %c0_i32_0 : i32, i32, i32
  }
}

</mosaic_0001>

<llo_original>
// kernel: bottleneck_forward.1
$region0: #{bottleneck_forward.1}
  #allocation0 [shape = 'u32[]', space=smem, size = 0x4, offset = 0x4, fixed_abs, tag = 'smem constant byte address 0x4 - core index']
  #allocation1 [shape = 'u32[72,128]{1,0:T(1,128)}', space=vmem, size = 0x9000, scoped, tag = 'internal scratch']
  #allocation2 [shape = 'f32[512,128]{1,0:T(8,128)}', space=vmem, size = 0x40000, scoped, tag = 'scratch operand']
  %s0 = inlined_call_operand.vmem [shape: f32[4,256,256], index: 0, kind: input, shape index: {}]
  %s1 = inlined_call_operand.vmem [shape: f32[256,1], index: 1, kind: input, shape index: {}]
  %s2 = inlined_call_operand.vmem [shape: bf16[256,128], index: 2, kind: input, shape index: {}]
  %s3 = inlined_call_operand.vmem [shape: f32[1,128], index: 3, kind: input, shape index: {}]
  %s4 = inlined_call_operand.vmem [shape: bf16[9,128,128], index: 4, kind: input, shape index: {}]
  %s5 = inlined_call_operand.vmem [shape: f32[1,128], index: 5, kind: input, shape index: {}]
  %s6 = inlined_call_operand.vmem [shape: bf16[128,256], index: 6, kind: input, shape index: {}]
  %s7 = inlined_call_operand.vmem [shape: f32[1,256], index: 7, kind: input, shape index: {}]
  %s8 = inlined_call_operand.vmem [shape: f32[256,128], index: 8, kind: input, shape index: {}]
  %s9 = inlined_call_operand.vmem [shape: f32[256,256], index: 9, kind: input, shape index: {}]
  %s10 = inlined_call_operand.vmem [shape: f32[512,32], index: 10, kind: input, shape index: {}]
  %s11 = inlined_call_operand.vmem [shape: f32[32,512], index: 11, kind: input, shape index: {}]
  %s12 = inlined_call_operand.vmem [shape: f32[512,16], index: 12, kind: input, shape index: {}]
  %s13 = inlined_call_operand.vmem [shape: f32[1,16], index: 13, kind: input, shape index: {}]
  %s14 = inlined_call_operand.vmem [shape: f32[16,256], index: 14, kind: input, shape index: {}]
  %s15 = inlined_call_operand.vmem [shape: f32[4,256,256], index: 15, kind: output, shape index: {}]
  %s16 = sld [smem:[#allocation0]]
  $region93: #{bottleneck_forward.1} parent=0
    _
  %s18 = ssub.s32 1, %s16
  %s19 = scalar_select 0, %s18, %s16
  loop: start=0, step=1, limit=4
  $region2: #{bottleneck_forward.1} parent=0 // loop_pre_header
    _
  $region3: #{bottleneck_forward.1} parent=0 // loop_header
    %s21 = sphi 0, %s25
    %p22 = scmp.ge.s32.totalorder %s21, 4
    %s31 = sphi 0, %s33
    %s34 = sphi 0, %s31
    %s35 = sphi 0, %s34
    %s51 = sphi 0, %s35
    %s55 = sphi 0, %s55
    %s57 = sphi 0, %s55
    %s58 = sphi 0, %s57
    %s72 = sphi 0, %s58
    %s76 = sphi 0, %s76
    %s78 = sphi 0, %s76
    %s79 = sphi 0, %s78
    %s93 = sphi 0, %s79
    %s97 = sphi 0, %s97
    %s99 = sphi 0, %s97
    %s100 = sphi 0, %s99
    %s114 = sphi 0, %s100
    %s118 = sphi 0, %s118
    %s120 = sphi 0, %s118
    %s121 = sphi 0, %s120
    %s135 = sphi 0, %s121
    %s139 = sphi 0, %s139
    %s141 = sphi 0, %s139
    %s142 = sphi 0, %s141
    %s156 = sphi 0, %s142
    %s160 = sphi 0, %s160
    %s162 = sphi 0, %s160
    %s163 = sphi 0, %s162
    %s177 = sphi 0, %s163
    %s181 = sphi 0, %s181
    %s183 = sphi 0, %s181
    %s184 = sphi 0, %s183
    %s198 = sphi 0, %s184
    %s202 = sphi 0, %s202
    %s204 = sphi 0, %s202
    %s205 = sphi 0, %s204
    %s219 = sphi 0, %s205
    %s223 = sphi 0, %s223
    %s225 = sphi 0, %s223
    %s226 = sphi 0, %s225
    %s240 = sphi 0, %s226
    %s244 = sphi 0, %s244
    %s246 = sphi 0, %s244
    %s247 = sphi 0, %s246
    %s261 = sphi 0, %s247
    %s265 = sphi 0, %s265
    %s267 = sphi 0, %s265
    %s268 = sphi 0, %s267
    %s282 = sphi 0, %s268
    %s286 = sphi 0, %s286
    %s288 = sphi 0, %s286
    %s289 = sphi 0, %s288
    %s303 = sphi 0, %s289
    %s307 = sphi 0, %s307
    %s309 = sphi 0, %s307
    %s310 = sphi 0, %s309
    %s324 = sphi 0, %s310
    %s328 = sphi 0, %s328
    %s330 = sphi 0, %s328
    %s331 = sphi 0, %s330
    %s345 = sphi 0, %s331
    %s351 = sphi 0, %s353
    %s354 = sphi 0, %s351
    %s355 = sphi 0, %s354
    %s371 = sphi 0, %s355
  $region4: #{bottleneck_forward.1} parent=0 // loop_header_branch
    %24 = sbr.rel (%p22) target = $region8
  $region5: #{bottleneck_forward.1} parent=0 // loop_body
    %s26 = ssub.s32 %s21, 1
    %s27 = ssub.s32 %s21, 2
    %s28 = sadd.s32 %s21, 1
    %s29 = ssub.s32 %s21, %s28
    %p30 = scmp.eq.s32.totalorder %s29, 0
    %s32 = sadd.s32 %s31, 1
    %s33 = scalar_select %p30, %s31, %s32
    %p36 = pneg %p30
    %p37 = scmp.eq.s32.totalorder %s21, 1
    %p38 = por %p36, %p37
    %p39 = scmp.ne.s32.totalorder %s31, %s34
    %p40 = scmp.eq.s32.totalorder %s21, 0
    %p41 = por %p39, %p40
    %p42 = scmp.ne.s32.totalorder %s31, %s34
    %p43 = scmp.eq.s32.totalorder %s26, 1
    %p44 = por %p42, %p43
    %p45 = scmp.ne.s32.totalorder %s34, %s35
    %p46 = scmp.eq.s32.totalorder %s26, 0
    %p47 = por %p45, %p46
    %p48 = scmp.ne.s32.totalorder %s34, %s35
    %p49 = scmp.eq.s32.totalorder %s27, 1
    %p50 = por %p48, %p49
    %p52 = scmp.ne.s32.totalorder %s35, %s51
    %p53 = scmp.eq.s32.totalorder %s27, 0
    %p54 = por %p52, %p53
    %s56 = sadd.s32 %s55, 1
    %p59 = scmp.eq.s32.totalorder %s21, 1
    %p60 = scmp.ne.s32.totalorder %s55, %s57
    %p61 = scmp.eq.s32.totalorder %s21, 0
    %p62 = por %p60, %p61
    %p63 = scmp.ne.s32.totalorder %s55, %s57
    %p64 = scmp.eq.s32.totalorder %s26, 1
    %p65 = por %p63, %p64
    %p66 = scmp.ne.s32.totalorder %s57, %s58
    %p67 = scmp.eq.s32.totalorder %s26, 0
    %p68 = por %p66, %p67
    %p69 = scmp.ne.s32.totalorder %s57, %s58
    %p70 = scmp.eq.s32.totalorder %s27, 1
    %p71 = por %p69, %p70
    %p73 = scmp.ne.s32.totalorder %s58, %s72
    %p74 = scmp.eq.s32.totalorder %s27, 0
    %p75 = por %p73, %p74
    %s77 = sadd.s32 %s76, 1
    %p80 = scmp.eq.s32.totalorder %s21, 1
    %p81 = scmp.ne.s32.totalorder %s76, %s78
    %p82 = scmp.eq.s32.totalorder %s21, 0
    %p83 = por %p81, %p82
    %p84 = scmp.ne.s32.totalorder %s76, %s78
    %p85 = scmp.eq.s32.totalorder %s26, 1
    %p86 = por %p84, %p85
    %p87 = scmp.ne.s32.totalorder %s78, %s79
    %p88 = scmp.eq.s32.totalorder %s26, 0
    %p89 = por %p87, %p88
    %p90 = scmp.ne.s32.totalorder %s78, %s79
    %p91 = scmp.eq.s32.totalorder %s27, 1
    %p92 = por %p90, %p91
    %p94 = scmp.ne.s32.totalorder %s79, %s93
    %p95 = scmp.eq.s32.totalorder %s27, 0
    %p96 = por %p94, %p95
    %s98 = sadd.s32 %s97, 1
    %p101 = scmp.eq.s32.totalorder %s21, 1
    %p102 = scmp.ne.s32.totalorder %s97, %s99
    %p103 = scmp.eq.s32.totalorder %s21, 0
    %p104 = por %p102, %p103
    %p105 = scmp.ne.s32.totalorder %s97, %s99
    %p106 = scmp.eq.s32.totalorder %s26, 1
    %p107 = por %p105, %p106
    %p108 = scmp.ne.s32.totalorder %s99, %s100
    %p109 = scmp.eq.s32.totalorder %s26, 0
    %p110 = por %p108, %p109
    %p111 = scmp.ne.s32.totalorder %s99, %s100
    %p112 = scmp.eq.s32.totalorder %s27, 1
    %p113 = por %p111, %p112
    %p115 = scmp.ne.s32.totalorder %s100, %s114
    %p116 = scmp.eq.s32.totalorder %s27, 0
    %p117 = por %p115, %p116
    %s119 = sadd.s32 %s118, 1
    %p122 = scmp.eq.s32.totalorder %s21, 1
    %p123 = scmp.ne.s32.totalorder %s118, %s120
    %p124 = scmp.eq.s32.totalorder %s21, 0
    %p125 = por %p123, %p124
    %p126 = scmp.ne.s32.totalorder %s118, %s120
    %p127 = scmp.eq.s32.totalorder %s26, 1
    %p128 = por %p126, %p127
    %p129 = scmp.ne.s32.totalorder %s120, %s121
    %p130 = scmp.eq.s32.totalorder %s26, 0
    %p131 = por %p129, %p130
    %p132 = scmp.ne.s32.totalorder %s120, %s121
    %p133 = scmp.eq.s32.totalorder %s27, 1
    %p134 = por %p132, %p133
    %p136 = scmp.ne.s32.totalorder %s121, %s135
    %p137 = scmp.eq.s32.totalorder %s27, 0
    %p138 = por %p136, %p137
    %s140 = sadd.s32 %s139, 1
    %p143 = scmp.eq.s32.totalorder %s21, 1
    %p144 = scmp.ne.s32.totalorder %s139, %s141
    %p145 = scmp.eq.s32.totalorder %s21, 0
    %p146 = por %p144, %p145
    %p147 = scmp.ne.s32.totalorder %s139, %s141
    %p148 = scmp.eq.s32.totalorder %s26, 1
    %p149 = por %p147, %p148
    %p150 = scmp.ne.s32.totalorder %s141, %s142
    %p151 = scmp.eq.s32.totalorder %s26, 0
    %p152 = por %p150, %p151
    %p153 = scmp.ne.s32.totalorder %s141, %s142
    %p154 = scmp.eq.s32.totalorder %s27, 1
    %p155 = por %p153, %p154
    %p157 = scmp.ne.s32.totalorder %s142, %s156
    %p158 = scmp.eq.s32.totalorder %s27, 0
    %p159 = por %p157, %p158
    %s161 = sadd.s32 %s160, 1
    %p164 = scmp.eq.s32.totalorder %s21, 1
    %p165 = scmp.ne.s32.totalorder %s160, %s162
    %p166 = scmp.eq.s32.totalorder %s21, 0
    %p167 = por %p165, %p166
    %p168 = scmp.ne.s32.totalorder %s160, %s162
    %p169 = scmp.eq.s32.totalorder %s26, 1
    %p170 = por %p168, %p169
    %p171 = scmp.ne.s32.totalorder %s162, %s163
    %p172 = scmp.eq.s32.totalorder %s26, 0
    %p173 = por %p171, %p172
    %p174 = scmp.ne.s32.totalorder %s162, %s163
    %p175 = scmp.eq.s32.totalorder %s27, 1
    %p176 = por %p174, %p175
    %p178 = scmp.ne.s32.totalorder %s163, %s177
    %p179 = scmp.eq.s32.totalorder %s27, 0
    %p180 = por %p178, %p179
    %s182 = sadd.s32 %s181, 1
    %p185 = scmp.eq.s32.totalorder %s21, 1
    %p186 = scmp.ne.s32.totalorder %s181, %s183
    %p187 = scmp.eq.s32.totalorder %s21, 0
    %p188 = por %p186, %p187
    %p189 = scmp.ne.s32.totalorder %s181, %s183
    %p190 = scmp.eq.s32.totalorder %s26, 1
    %p191 = por %p189, %p190
    %p192 = scmp.ne.s32.totalorder %s183, %s184
    %p193 = scmp.eq.s32.totalorder %s26, 0
    %p194 = por %p192, %p193
    %p195 = scmp.ne.s32.totalorder %s183, %s184
    %p196 = scmp.eq.s32.totalorder %s27, 1
    %p197 = por %p195, %p196
    %p199 = scmp.ne.s32.totalorder %s184, %s198
    %p200 = scmp.eq.s32.totalorder %s27, 0
    %p201 = por %p199, %p200
    %s203 = sadd.s32 %s202, 1
    %p206 = scmp.eq.s32.totalorder %s21, 1
    %p207 = scmp.ne.s32.totalorder %s202, %s204
    %p208 = scmp.eq.s32.totalorder %s21, 0
    %p209 = por %p207, %p208
    %p210 = scmp.ne.s32.totalorder %s202, %s204
    %p211 = scmp.eq.s32.totalorder %s26, 1
    %p212 = por %p210, %p211
    %p213 = scmp.ne.s32.totalorder %s204, %s205
    %p214 = scmp.eq.s32.totalorder %s26, 0
    %p215 = por %p213, %p214
    %p216 = scmp.ne.s32.totalorder %s204, %s205
    %p217 = scmp.eq.s32.totalorder %s27, 1
    %p218 = por %p216, %p217
    %p220 = scmp.ne.s32.totalorder %s205, %s219
    %p221 = scmp.eq.s32.totalorder %s27, 0
    %p222 = por %p220, %p221
    %s224 = sadd.s32 %s223, 1
    %p227 = scmp.eq.s32.totalorder %s21, 1
    %p228 = scmp.ne.s32.totalorder %s223, %s225
    %p229 = scmp.eq.s32.totalorder %s21, 0
    %p230 = por %p228, %p229
    %p231 = scmp.ne.s32.totalorder %s223, %s225
    %p232 = scmp.eq.s32.totalorder %s26, 1
    %p233 = por %p231, %p232
    %p234 = scmp.ne.s32.totalorder %s225, %s226
    %p235 = scmp.eq.s32.totalorder %s26, 0
    %p236 = por %p234, %p235
    %p237 = scmp.ne.s32.totalorder %s225, %s226
    %p238 = scmp.eq.s32.totalorder %s27, 1
    %p239 = por %p237, %p238
    %p241 = scmp.ne.s32.totalorder %s226, %s240
    %p242 = scmp.eq.s32.totalorder %s27, 0
    %p243 = por %p241, %p242
    %s245 = sadd.s32 %s244, 1
    %p248 = scmp.eq.s32.totalorder %s21, 1
    %p249 = scmp.ne.s32.totalorder %s244, %s246
    %p250 = scmp.eq.s32.totalorder %s21, 0
    %p251 = por %p249, %p250
    %p252 = scmp.ne.s32.totalorder %s244, %s246
    %p253 = scmp.eq.s32.totalorder %s26, 1
    %p254 = por %p252, %p253
    %p255 = scmp.ne.s32.totalorder %s246, %s247
    %p256 = scmp.eq.s32.totalorder %s26, 0
    %p257 = por %p255, %p256
    %p258 = scmp.ne.s32.totalorder %s246, %s247
    %p259 = scmp.eq.s32.totalorder %s27, 1
    %p260 = por %p258, %p259
    %p262 = scmp.ne.s32.totalorder %s247, %s261
    %p263 = scmp.eq.s32.totalorder %s27, 0
    %p264 = por %p262, %p263
    %s266 = sadd.s32 %s265, 1
    %p269 = scmp.eq.s32.totalorder %s21, 1
    %p270 = scmp.ne.s32.totalorder %s265, %s267
    %p271 = scmp.eq.s32.totalorder %s21, 0
    %p272 = por %p270, %p271
    %p273 = scmp.ne.s32.totalorder %s265, %s267
    %p274 = scmp.eq.s32.totalorder %s26, 1
    %p275 = por %p273, %p274
    %p276 = scmp.ne.s32.totalorder %s267, %s268
    %p277 = scmp.eq.s32.totalorder %s26, 0
    %p278 = por %p276, %p277
    %p279 = scmp.ne.s32.totalorder %s267, %s268
    %p280 = scmp.eq.s32.totalorder %s27, 1
    %p281 = por %p279, %p280
    %p283 = scmp.ne.s32.totalorder %s268, %s282
    %p284 = scmp.eq.s32.totalorder %s27, 0
    %p285 = por %p283, %p284
    %s287 = sadd.s32 %s286, 1
    %p290 = scmp.eq.s32.totalorder %s21, 1
    %p291 = scmp.ne.s32.totalorder %s286, %s288
    %p292 = scmp.eq.s32.totalorder %s21, 0
    %p293 = por %p291, %p292
    %p294 = scmp.ne.s32.totalorder %s286, %s288
    %p295 = scmp.eq.s32.totalorder %s26, 1
    %p296 = por %p294, %p295
    %p297 = scmp.ne.s32.totalorder %s288, %s289
    %p298 = scmp.eq.s32.totalorder %s26, 0
    %p299 = por %p297, %p298
    %p300 = scmp.ne.s32.totalorder %s288, %s289
    %p301 = scmp.eq.s32.totalorder %s27, 1
    %p302 = por %p300, %p301
    %p304 = scmp.ne.s32.totalorder %s289, %s303
    %p305 = scmp.eq.s32.totalorder %s27, 0
    %p306 = por %p304, %p305
    %s308 = sadd.s32 %s307, 1
    %p311 = scmp.eq.s32.totalorder %s21, 1
    %p312 = scmp.ne.s32.totalorder %s307, %s309
    %p313 = scmp.eq.s32.totalorder %s21, 0
    %p314 = por %p312, %p313
    %p315 = scmp.ne.s32.totalorder %s307, %s309
    %p316 = scmp.eq.s32.totalorder %s26, 1
    %p317 = por %p315, %p316
    %p318 = scmp.ne.s32.totalorder %s309, %s310
    %p319 = scmp.eq.s32.totalorder %s26, 0
    %p320 = por %p318, %p319
    %p321 = scmp.ne.s32.totalorder %s309, %s310
    %p322 = scmp.eq.s32.totalorder %s27, 1
    %p323 = por %p321, %p322
    %p325 = scmp.ne.s32.totalorder %s310, %s324
    %p326 = scmp.eq.s32.totalorder %s27, 0
    %p327 = por %p325, %p326
    %s329 = sadd.s32 %s328, 1
    %p332 = scmp.eq.s32.totalorder %s21, 1
    %p333 = scmp.ne.s32.totalorder %s328, %s330
    %p334 = scmp.eq.s32.totalorder %s21, 0
    %p335 = por %p333, %p334
    %p336 = scmp.ne.s32.totalorder %s328, %s330
    %p337 = scmp.eq.s32.totalorder %s26, 1
    %p338 = por %p336, %p337
    %p339 = scmp.ne.s32.totalorder %s330, %s331
    %p340 = scmp.eq.s32.totalorder %s26, 0
    %p341 = por %p339, %p340
    %p342 = scmp.ne.s32.totalorder %s330, %s331
    %p343 = scmp.eq.s32.totalorder %s27, 1
    %p344 = por %p342, %p343
    %p346 = scmp.ne.s32.totalorder %s331, %s345
    %p347 = scmp.eq.s32.totalorder %s27, 0
    %p348 = por %p346, %p347
    %s349 = ssub.s32 %s21, %s28
    %p350 = scmp.eq.s32.totalorder %s349, 0
    %s352 = sadd.s32 %s351, 1
    %s353 = scalar_select %p350, %s351, %s352
    %p356 = pneg %p350
    %p357 = scmp.eq.s32.totalorder %s21, 1
    %p358 = por %p356, %p357
    %p359 = scmp.ne.s32.totalorder %s351, %s354
    %p360 = scmp.eq.s32.totalorder %s21, 0
    %p361 = por %p359, %p360
    %p362 = scmp.ne.s32.totalorder %s351, %s354
    %p363 = scmp.eq.s32.totalorder %s26, 1
    %p364 = por %p362, %p363
    %p365 = scmp.ne.s32.totalorder %s354, %s355
    %p366 = scmp.eq.s32.totalorder %s26, 0
    %p367 = por %p365, %p366
    %p368 = scmp.ne.s32.totalorder %s354, %s355
    %p369 = scmp.eq.s32.totalorder %s27, 1
    %p370 = por %p368, %p369
    %p372 = scmp.ne.s32.totalorder %s355, %s371
    %p373 = scmp.eq.s32.totalorder %s27, 0
    %p374 = por %p372, %p373
    %p375 = scmp.le.s32.totalorder 1, %s21
    %p376 = scmp.lt.s32.totalorder %s21, 3
    %p377 = pnand %p375, %p376
    %p378 = pneg %p377
    // Predicated region
    $region9: #{bottleneck_forward.1} parent=5 // pred_check
      _
    $region10: #{bottleneck_forward.1} parent=5 // pred_check_branch
      %380 = sbr.rel (%p377) target = $region12
    $region11: #{bottleneck_forward.1} parent=5 // pred_region
      %s381 = ssub.s32 %s21, 1
      // Predicated region
      $region13: #{bottleneck_forward.1} parent=11 // pred_check
        %p382 = pneg %p68
      $region14: #{bottleneck_forward.1} parent=11 // pred_check_branch
        %384 = sbr.rel (%p382) target = $region16
      $region15: #{bottleneck_forward.1} parent=11 // pred_region
        _
      $region16: #{bottleneck_forward.1} parent=11 // pred_fallthru
        _
      // Predicated region
      $region17: #{bottleneck_forward.1} parent=11 // pred_check
        %p385 = pneg %p89
      $region18: #{bottleneck_forward.1} parent=11 // pred_check_branch
        %387 = sbr.rel (%p385) target = $region20
      $region19: #{bottleneck_forward.1} parent=11 // pred_region
        _
      $region20: #{bottleneck_forward.1} parent=11 // pred_fallthru
        _
      // Predicated region
      $region21: #{bottleneck_forward.1} parent=11 // pred_check
        %p388 = pneg %p110
      $region22: #{bottleneck_forward.1} parent=11 // pred_check_branch
        %390 = sbr.rel (%p388) target = $region24
      $region23: #{bottleneck_forward.1} parent=11 // pred_region
        _
      $region24: #{bottleneck_forward.1} parent=11 // pred_fallthru
        _
      // Predicated region
      $region25: #{bottleneck_forward.1} parent=11 // pred_check
        %p391 = pneg %p131
      $region26: #{bottleneck_forward.1} parent=11 // pred_check_branch
        %393 = sbr.rel (%p391) target = $region28
      $region27: #{bottleneck_forward.1} parent=11 // pred_region
        _
      $region28: #{bottleneck_forward.1} parent=11 // pred_fallthru
        _
      // Predicated region
      $region29: #{bottleneck_forward.1} parent=11 // pred_check
        %p394 = pneg %p152
      $region30: #{bottleneck_forward.1} parent=11 // pred_check_branch
        %396 = sbr.rel (%p394) target = $region32
      $region31: #{bottleneck_forward.1} parent=11 // pred_region
        _
      $region32: #{bottleneck_forward.1} parent=11 // pred_fallthru
        _
      // Predicated region
      $region33: #{bottleneck_forward.1} parent=11 // pred_check
        %p397 = pneg %p173
      $region34: #{bottleneck_forward.1} parent=11 // pred_check_branch
        %399 = sbr.rel (%p397) target = $region36
      $region35: #{bottleneck_forward.1} parent=11 // pred_region
        _
      $region36: #{bottleneck_forward.1} parent=11 // pred_fallthru
        _
      // Predicated region
      $region37: #{bottleneck_forward.1} parent=11 // pred_check
        %p400 = pneg %p194
      $region38: #{bottleneck_forward.1} parent=11 // pred_check_branch
        %402 = sbr.rel (%p400) target = $region40
      $region39: #{bottleneck_forward.1} parent=11 // pred_region
        _
      $region40: #{bottleneck_forward.1} parent=11 // pred_fallthru
        _
      // Predicated region
      $region41: #{bottleneck_forward.1} parent=11 // pred_check
        %p403 = pneg %p215
      $region42: #{bottleneck_forward.1} parent=11 // pred_check_branch
        %405 = sbr.rel (%p403) target = $region44
      $region43: #{bottleneck_forward.1} parent=11 // pred_region
        _
      $region44: #{bottleneck_forward.1} parent=11 // pred_fallthru
        _
      // Predicated region
      $region45: #{bottleneck_forward.1} parent=11 // pred_check
        %p406 = pneg %p236
      $region46: #{bottleneck_forward.1} parent=11 // pred_check_branch
        %408 = sbr.rel (%p406) target = $region48
      $region47: #{bottleneck_forward.1} parent=11 // pred_region
        _
      $region48: #{bottleneck_forward.1} parent=11 // pred_fallthru
        _
      // Predicated region
      $region49: #{bottleneck_forward.1} parent=11 // pred_check
        %p409 = pneg %p257
      $region50: #{bottleneck_forward.1} parent=11 // pred_check_branch
        %411 = sbr.rel (%p409) target = $region52
      $region51: #{bottleneck_forward.1} parent=11 // pred_region
        _
      $region52: #{bottleneck_forward.1} parent=11 // pred_fallthru
        _
      // Predicated region
      $region53: #{bottleneck_forward.1} parent=11 // pred_check
        %p412 = pneg %p278
      $region54: #{bottleneck_forward.1} parent=11 // pred_check_branch
        %414 = sbr.rel (%p412) target = $region56
      $region55: #{bottleneck_forward.1} parent=11 // pred_region
        _
      $region56: #{bottleneck_forward.1} parent=11 // pred_fallthru
        _
      // Predicated region
      $region57: #{bottleneck_forward.1} parent=11 // pred_check
        %p415 = pneg %p299
      $region58: #{bottleneck_forward.1} parent=11 // pred_check_branch
        %417 = sbr.rel (%p415) target = $region60
      $region59: #{bottleneck_forward.1} parent=11 // pred_region
        _
      $region60: #{bottleneck_forward.1} parent=11 // pred_fallthru
        _
      // Predicated region
      $region61: #{bottleneck_forward.1} parent=11 // pred_check
        %p418 = pneg %p320
      $region62: #{bottleneck_forward.1} parent=11 // pred_check_branch
        %420 = sbr.rel (%p418) target = $region64
      $region63: #{bottleneck_forward.1} parent=11 // pred_region
        _
      $region64: #{bottleneck_forward.1} parent=11 // pred_fallthru
        _
      // Predicated region
      $region65: #{bottleneck_forward.1} parent=11 // pred_check
        %p421 = pneg %p341
      $region66: #{bottleneck_forward.1} parent=11 // pred_check_branch
        %423 = sbr.rel (%p421) target = $region68
      $region67: #{bottleneck_forward.1} parent=11 // pred_region
        _
      $region68: #{bottleneck_forward.1} parent=11 // pred_fallthru
        _
    $region12: #{bottleneck_forward.1} parent=5 // pred_fallthru
      _
    %p424 = scmp.lt.s32.totalorder %s21, 2
    // Predicated region
    $region69: #{bottleneck_forward.1} parent=5 // pred_check
      %p425 = pneg %p424
    $region70: #{bottleneck_forward.1} parent=5 // pred_check_branch
      %427 = sbr.rel (%p425) target = $region72
    $region71: #{bottleneck_forward.1} parent=5 // pred_region
      // Predicated region
      $region73: #{bottleneck_forward.1} parent=71 // pred_check
        %p428 = pneg %p41
      $region74: #{bottleneck_forward.1} parent=71 // pred_check_branch
        %430 = sbr.rel (%p428) target = $region76
      $region75: #{bottleneck_forward.1} parent=71 // pred_region
        %s431 = smul.u32 2, %s21
        %p432 = scmp.lt.s32.totalorder %s431, 3
        %s433 = scalar_select %p432, %s431, 3
        %s434 = smul.addr %s433, 64
        %s435 = smul.addr %s434, 8
        %s436 = scalar_lea.vmem %s0, %s435
        %s437 = smul.u32 2, %s21
      $region76: #{bottleneck_forward.1} parent=71 // pred_fallthru
        _
    $region72: #{bottleneck_forward.1} parent=5 // pred_fallthru
      _
    %p438 = scmp.le.s32.totalorder 1, %s21
    %p439 = scmp.lt.s32.totalorder %s21, 3
    %p440 = pnand %p438, %p439
    %p441 = pneg %p440
    // Predicated region
    $region77: #{bottleneck_forward.1} parent=5 // pred_check
      _
    $region78: #{bottleneck_forward.1} parent=5 // pred_check_branch
      %443 = sbr.rel (%p440) target = $region80
    $region79: #{bottleneck_forward.1} parent=5 // pred_region
      %s444 = ssub.s32 %s21, 1
      %s445 = smul.u32 2, %s26
      %p446 = scmp.lt.s32.totalorder %s445, 3
      %s447 = scalar_select %p446, %s445, 3
      %s448 = smul.addr %s447, 64
      %s449 = smul.addr %s448, 8
      %s450 = scalar_lea.vmem %s0, %s449
      %p451 = pneg %p47
      %p452 = pneg %p44
      %p453 = pneg %p68
      %p454 = pneg %p65
      %p455 = pneg %p89
      %p456 = pneg %p86
      %p457 = pneg %p110
      %p458 = pneg %p107
      %p459 = pneg %p131
      %p460 = pneg %p128
      %p461 = pneg %p152
      %p462 = pneg %p149
      %p463 = pneg %p173
      %p464 = pneg %p170
      %p465 = pneg %p194
      %p466 = pneg %p191
      %p467 = pneg %p215
      %p468 = pneg %p212
      %p469 = pneg %p236
      %p470 = pneg %p233
      %p471 = pneg %p257
      %p472 = pneg %p254
      %p473 = pneg %p278
      %p474 = pneg %p275
      %p475 = pneg %p299
      %p476 = pneg %p296
      %p477 = pneg %p320
      %p478 = pneg %p317
      %p479 = pneg %p341
      %p480 = pneg %p338
      %p481 = pneg %p367
      %p482 = pneg %p364
      %s483 = smul.u32 2, %s26
      %p484 = scmp.lt.s32.totalorder %s483, 3
      %s485 = scalar_select %p484, %s483, 3
      %s486 = smul.addr %s485, 64
      %s487 = smul.addr %s486, 8
      %s488 = scalar_lea.vmem %s15, %s487
      %s489 = smul.u32 2, %s26
      %p490 = scmp.lt.s32.totalorder %s489, 3
      %s491 = scalar_select %p490, %s489, 3
      %s492 = smul.addr %s491, 64
      %s493 = smul.addr %s492, 8
      %s494 = scalar_lea.vmem %s0, %s493
      %s495 = smul.u32 2, %s26
      %s496 = smul.u32 2, %s26
      %p497 = scmp.lt.s32.totalorder %s496, 3
      %s498 = scalar_select %p497, %s496, 3
      %s499 = smul.addr %s498, 64
      %s500 = smul.addr %s499, 8
      %s501 = scalar_lea.vmem %s15, %s500
      %s502 = smul.u32 2, %s26
      %v503 = vld [vmem:[%s494] sm:$0xff]
      %v504 = vld [vmem:[%s494 + $0x8] sm:$0xff]
      %v505 = vld [vmem:[%s494 + $0x10] sm:$0xff]
      %v506 = vld [vmem:[%s494 + $0x18] sm:$0xff]
      %v507 = vld [vmem:[%s494 + $0x20] sm:$0xff]
      %v508 = vld [vmem:[%s494 + $0x28] sm:$0xff]
      %v509 = vld [vmem:[%s494 + $0x30] sm:$0xff]
      %v510 = vld [vmem:[%s494 + $0x38] sm:$0xff]
      %v511 = vld [vmem:[%s494 + $0x40] sm:$0xff]
      %v512 = vld [vmem:[%s494 + $0x48] sm:$0xff]
      %v513 = vld [vmem:[%s494 + $0x50] sm:$0xff]
      %v514 = vld [vmem:[%s494 + $0x58] sm:$0xff]
      %v515 = vld [vmem:[%s494 + $0x60] sm:$0xff]
      %v516 = vld [vmem:[%s494 + $0x68] sm:$0xff]
      %v517 = vld [vmem:[%s494 + $0x70] sm:$0xff]
      %v518 = vld [vmem:[%s494 + $0x78] sm:$0xff]
      %v519 = vld [vmem:[%s494 + $0x80] sm:$0xff]
      %v520 = vld [vmem:[%s494 + $0x88] sm:$0xff]
      %v521 = vld [vmem:[%s494 + $0x90] sm:$0xff]
      %v522 = vld [vmem:[%s494 + $0x98] sm:$0xff]
      %v523 = vld [vmem:[%s494 + $0xa0] sm:$0xff]
      %v524 = vld [vmem:[%s494 + $0xa8] sm:$0xff]
      %v525 = vld [vmem:[%s494 + $0xb0] sm:$0xff]
      %v526 = vld [vmem:[%s494 + $0xb8] sm:$0xff]
      %v527 = vld [vmem:[%s494 + $0xc0] sm:$0xff]
      %v528 = vld [vmem:[%s494 + $0xc8] sm:$0xff]
      %v529 = vld [vmem:[%s494 + $0xd0] sm:$0xff]
      %v530 = vld [vmem:[%s494 + $0xd8] sm:$0xff]
      %v531 = vld [vmem:[%s494 + $0xe0] sm:$0xff]
      %v532 = vld [vmem:[%s494 + $0xe8] sm:$0xff]
      %v533 = vld [vmem:[%s494 + $0xf0] sm:$0xff]
      %v534 = vld [vmem:[%s494 + $0xf8] sm:$0xff]
      %v535 = vld [vmem:[%s494 + $0x100] sm:$0xff]
      %v536 = vld [vmem:[%s494 + $0x108] sm:$0xff]
      %v537 = vld [vmem:[%s494 + $0x110] sm:$0xff]
      %v538 = vld [vmem:[%s494 + $0x118] sm:$0xff]
      %v539 = vld [vmem:[%s494 + $0x120] sm:$0xff]
      %v540 = vld [vmem:[%s494 + $0x128] sm:$0xff]
      %v541 = vld [vmem:[%s494 + $0x130] sm:$0xff]
      %v542 = vld [vmem:[%s494 + $0x138] sm:$0xff]
      %v543 = vld [vmem:[%s494 + $0x140] sm:$0xff]
      %v544 = vld [vmem:[%s494 + $0x148] sm:$0xff]
      %v545 = vld [vmem:[%s494 + $0x150] sm:$0xff]
      %v546 = vld [vmem:[%s494 + $0x158] sm:$0xff]
      %v547 = vld [vmem:[%s494 + $0x160] sm:$0xff]
      %v548 = vld [vmem:[%s494 + $0x168] sm:$0xff]
      %v549 = vld [vmem:[%s494 + $0x170] sm:$0xff]
      %v550 = vld [vmem:[%s494 + $0x178] sm:$0xff]
      %v551 = vld [vmem:[%s494 + $0x180] sm:$0xff]
      %v552 = vld [vmem:[%s494 + $0x188] sm:$0xff]
      %v553 = vld [vmem:[%s494 + $0x190] sm:$0xff]
      %v554 = vld [vmem:[%s494 + $0x198] sm:$0xff]
      %v555 = vld [vmem:[%s494 + $0x1a0] sm:$0xff]
      %v556 = vld [vmem:[%s494 + $0x1a8] sm:$0xff]
      %v557 = vld [vmem:[%s494 + $0x1b0] sm:$0xff]
      %v558 = vld [vmem:[%s494 + $0x1b8] sm:$0xff]
      %v559 = vld [vmem:[%s494 + $0x1c0] sm:$0xff]
      %v560 = vld [vmem:[%s494 + $0x1c8] sm:$0xff]
      %v561 = vld [vmem:[%s494 + $0x1d0] sm:$0xff]
      %v562 = vld [vmem:[%s494 + $0x1d8] sm:$0xff]
      %v563 = vld [vmem:[%s494 + $0x1e0] sm:$0xff]
      %v564 = vld [vmem:[%s494 + $0x1e8] sm:$0xff]
      %v565 = vld [vmem:[%s494 + $0x1f0] sm:$0xff]
      %v566 = vld [vmem:[%s494 + $0x1f8] sm:$0xff]
      %v567 = vld [vmem:[%s494 + $0x200] sm:$0xff]
      %v568 = vld [vmem:[%s494 + $0x208] sm:$0xff]
      %v569 = vld [vmem:[%s494 + $0x210] sm:$0xff]
      %v570 = vld [vmem:[%s494 + $0x218] sm:$0xff]
      %v571 = vld [vmem:[%s494 + $0x220] sm:$0xff]
      %v572 = vld [vmem:[%s494 + $0x228] sm:$0xff]
      %v573 = vld [vmem:[%s494 + $0x230] sm:$0xff]
      %v574 = vld [vmem:[%s494 + $0x238] sm:$0xff]
      %v575 = vld [vmem:[%s494 + $0x240] sm:$0xff]
      %v576 = vld [vmem:[%s494 + $0x248] sm:$0xff]
      %v577 = vld [vmem:[%s494 + $0x250] sm:$0xff]
      %v578 = vld [vmem:[%s494 + $0x258] sm:$0xff]
      %v579 = vld [vmem:[%s494 + $0x260] sm:$0xff]
      %v580 = vld [vmem:[%s494 + $0x268] sm:$0xff]
      %v581 = vld [vmem:[%s494 + $0x270] sm:$0xff]
      %v582 = vld [vmem:[%s494 + $0x278] sm:$0xff]
      %v583 = vld [vmem:[%s494 + $0x280] sm:$0xff]
      %v584 = vld [vmem:[%s494 + $0x288] sm:$0xff]
      %v585 = vld [vmem:[%s494 + $0x290] sm:$0xff]
      %v586 = vld [vmem:[%s494 + $0x298] sm:$0xff]
      %v587 = vld [vmem:[%s494 + $0x2a0] sm:$0xff]
      %v588 = vld [vmem:[%s494 + $0x2a8] sm:$0xff]
      %v589 = vld [vmem:[%s494 + $0x2b0] sm:$0xff]
      %v590 = vld [vmem:[%s494 + $0x2b8] sm:$0xff]
      %v591 = vld [vmem:[%s494 + $0x2c0] sm:$0xff]
      %v592 = vld [vmem:[%s494 + $0x2c8] sm:$0xff]
      %v593 = vld [vmem:[%s494 + $0x2d0] sm:$0xff]
      %v594 = vld [vmem:[%s494 + $0x2d8] sm:$0xff]
      %v595 = vld [vmem:[%s494 + $0x2e0] sm:$0xff]
      %v596 = vld [vmem:[%s494 + $0x2e8] sm:$0xff]
      %v597 = vld [vmem:[%s494 + $0x2f0] sm:$0xff]
      %v598 = vld [vmem:[%s494 + $0x2f8] sm:$0xff]
      %v599 = vld [vmem:[%s494 + $0x300] sm:$0xff]
      %v600 = vld [vmem:[%s494 + $0x308] sm:$0xff]
      %v601 = vld [vmem:[%s494 + $0x310] sm:$0xff]
      %v602 = vld [vmem:[%s494 + $0x318] sm:$0xff]
      %v603 = vld [vmem:[%s494 + $0x320] sm:$0xff]
      %v604 = vld [vmem:[%s494 + $0x328] sm:$0xff]
      %v605 = vld [vmem:[%s494 + $0x330] sm:$0xff]
      %v606 = vld [vmem:[%s494 + $0x338] sm:$0xff]
      %v607 = vld [vmem:[%s494 + $0x340] sm:$0xff]
      %v608 = vld [vmem:[%s494 + $0x348] sm:$0xff]
      %v609 = vld [vmem:[%s494 + $0x350] sm:$0xff]
      %v610 = vld [vmem:[%s494 + $0x358] sm:$0xff]
      %v611 = vld [vmem:[%s494 + $0x360] sm:$0xff]
      %v612 = vld [vmem:[%s494 + $0x368] sm:$0xff]
      %v613 = vld [vmem:[%s494 + $0x370] sm:$0xff]
      %v614 = vld [vmem:[%s494 + $0x378] sm:$0xff]
      %v615 = vld [vmem:[%s494 + $0x380] sm:$0xff]
      %v616 = vld [vmem:[%s494 + $0x388] sm:$0xff]
      %v617 = vld [vmem:[%s494 + $0x390] sm:$0xff]
      %v618 = vld [vmem:[%s494 + $0x398] sm:$0xff]
      %v619 = vld [vmem:[%s494 + $0x3a0] sm:$0xff]
      %v620 = vld [vmem:[%s494 + $0x3a8] sm:$0xff]
      %v621 = vld [vmem:[%s494 + $0x3b0] sm:$0xff]
      %v622 = vld [vmem:[%s494 + $0x3b8] sm:$0xff]
      %v623 = vld [vmem:[%s494 + $0x3c0] sm:$0xff]
      %v624 = vld [vmem:[%s494 + $0x3c8] sm:$0xff]
      %v625 = vld [vmem:[%s494 + $0x3d0] sm:$0xff]
      %v626 = vld [vmem:[%s494 + $0x3d8] sm:$0xff]
      %v627 = vld [vmem:[%s494 + $0x3e0] sm:$0xff]
      %v628 = vld [vmem:[%s494 + $0x3e8] sm:$0xff]
      %v629 = vld [vmem:[%s494 + $0x3f0] sm:$0xff]
      %v630 = vld [vmem:[%s494 + $0x3f8] sm:$0xff]
      %v631 = vpack.c.bf16 %v505, %v503
      %v632 = vpack.c.bf16 %v506, %v504
      %v633 = vpack.c.bf16 %v509, %v507
      %v634 = vpack.c.bf16 %v510, %v508
      %v635 = vpack.c.bf16 %v513, %v511
      %v636 = vpack.c.bf16 %v514, %v512
      %v637 = vpack.c.bf16 %v517, %v515
      %v638 = vpack.c.bf16 %v518, %v516
      %v639 = vpack.c.bf16 %v521, %v519
      %v640 = vpack.c.bf16 %v522, %v520
      %v641 = vpack.c.bf16 %v525, %v523
      %v642 = vpack.c.bf16 %v526, %v524
      %v643 = vpack.c.bf16 %v529, %v527
      %v644 = vpack.c.bf16 %v530, %v528
      %v645 = vpack.c.bf16 %v533, %v531
      %v646 = vpack.c.bf16 %v534, %v532
      %v647 = vpack.c.bf16 %v537, %v535
      %v648 = vpack.c.bf16 %v538, %v536
      %v649 = vpack.c.bf16 %v541, %v539
      %v650 = vpack.c.bf16 %v542, %v540
      %v651 = vpack.c.bf16 %v545, %v543
      %v652 = vpack.c.bf16 %v546, %v544
      %v653 = vpack.c.bf16 %v549, %v547
      %v654 = vpack.c.bf16 %v550, %v548
      %v655 = vpack.c.bf16 %v553, %v551
      %v656 = vpack.c.bf16 %v554, %v552
      %v657 = vpack.c.bf16 %v557, %v555
      %v658 = vpack.c.bf16 %v558, %v556
      %v659 = vpack.c.bf16 %v561, %v559
      %v660 = vpack.c.bf16 %v562, %v560
      %v661 = vpack.c.bf16 %v565, %v563
      %v662 = vpack.c.bf16 %v566, %v564
      %v663 = vpack.c.bf16 %v569, %v567
      %v664 = vpack.c.bf16 %v570, %v568
      %v665 = vpack.c.bf16 %v573, %v571
      %v666 = vpack.c.bf16 %v574, %v572
      %v667 = vpack.c.bf16 %v577, %v575
      %v668 = vpack.c.bf16 %v578, %v576
      %v669 = vpack.c.bf16 %v581, %v579
      %v670 = vpack.c.bf16 %v582, %v580
      %v671 = vpack.c.bf16 %v585, %v583
      %v672 = vpack.c.bf16 %v586, %v584
      %v673 = vpack.c.bf16 %v589, %v587
      %v674 = vpack.c.bf16 %v590, %v588
      %v675 = vpack.c.bf16 %v593, %v591
      %v676 = vpack.c.bf16 %v594, %v592
      %v677 = vpack.c.bf16 %v597, %v595
      %v678 = vpack.c.bf16 %v598, %v596
      %v679 = vpack.c.bf16 %v601, %v599
      %v680 = vpack.c.bf16 %v602, %v600
      %v681 = vpack.c.bf16 %v605, %v603
      %v682 = vpack.c.bf16 %v606, %v604
      %v683 = vpack.c.bf16 %v609, %v607
      %v684 = vpack.c.bf16 %v610, %v608
      %v685 = vpack.c.bf16 %v613, %v611
      %v686 = vpack.c.bf16 %v614, %v612
      %v687 = vpack.c.bf16 %v617, %v615
      %v688 = vpack.c.bf16 %v618, %v616
      %v689 = vpack.c.bf16 %v621, %v619
      %v690 = vpack.c.bf16 %v622, %v620
      %v691 = vpack.c.bf16 %v625, %v623
      %v692 = vpack.c.bf16 %v626, %v624
      %v693 = vpack.c.bf16 %v629, %v627
      %v694 = vpack.c.bf16 %v630, %v628
      %v695 = vld [vmem:[%s2] sm:$0xf]
      %v696 = vld [vmem:[%s2 + $0x4] sm:$0xf]
      %v697 = vld [vmem:[%s2 + $0x8] sm:$0xf]
      %v698 = vld [vmem:[%s2 + $0xc] sm:$0xf]
      %v699 = vld [vmem:[%s2 + $0x10] sm:$0xf]
      %v700 = vld [vmem:[%s2 + $0x14] sm:$0xf]
      %v701 = vld [vmem:[%s2 + $0x18] sm:$0xf]
      %v702 = vld [vmem:[%s2 + $0x1c] sm:$0xf]
      %v703 = vld [vmem:[%s2 + $0x20] sm:$0xf]
      %v704 = vld [vmem:[%s2 + $0x24] sm:$0xf]
      %v705 = vld [vmem:[%s2 + $0x28] sm:$0xf]
      %v706 = vld [vmem:[%s2 + $0x2c] sm:$0xf]
      %v707 = vld [vmem:[%s2 + $0x30] sm:$0xf]
      %v708 = vld [vmem:[%s2 + $0x34] sm:$0xf]
      %v709 = vld [vmem:[%s2 + $0x38] sm:$0xf]
      %v710 = vld [vmem:[%s2 + $0x3c] sm:$0xf]
      %v711 = vld [vmem:[%s2 + $0x40] sm:$0xf]
      %v712 = vld [vmem:[%s2 + $0x44] sm:$0xf]
      %v713 = vld [vmem:[%s2 + $0x48] sm:$0xf]
      %v714 = vld [vmem:[%s2 + $0x4c] sm:$0xf]
      %v715 = vld [vmem:[%s2 + $0x50] sm:$0xf]
      %v716 = vld [vmem:[%s2 + $0x54] sm:$0xf]
      %v717 = vld [vmem:[%s2 + $0x58] sm:$0xf]
      %v718 = vld [vmem:[%s2 + $0x5c] sm:$0xf]
      %v719 = vld [vmem:[%s2 + $0x60] sm:$0xf]
      %v720 = vld [vmem:[%s2 + $0x64] sm:$0xf]
      %v721 = vld [vmem:[%s2 + $0x68] sm:$0xf]
      %v722 = vld [vmem:[%s2 + $0x6c] sm:$0xf]
      %v723 = vld [vmem:[%s2 + $0x70] sm:$0xf]
      %v724 = vld [vmem:[%s2 + $0x74] sm:$0xf]
      %v725 = vld [vmem:[%s2 + $0x78] sm:$0xf]
      %v726 = vld [vmem:[%s2 + $0x7c] sm:$0xf]
      %v727 = vld [vmem:[%s3] sm:$0x1]
      %v729 = vperm.slane %v727, 0
      %v763 = vunpack.c.l.b16 %v695
      %v764 = vunpack.c.l.b16 %v696
      %v765 = vunpack.c.l.b16 %v697
      %v766 = vunpack.c.l.b16 %v698
      %v767 = vunpack.c.l.b16 %v699
      %v768 = vunpack.c.l.b16 %v700
      %v769 = vunpack.c.l.b16 %v701
      %v770 = vunpack.c.l.b16 %v702
      %v771 = vunpack.c.l.b16 %v703
      %v772 = vunpack.c.l.b16 %v704
      %v773 = vunpack.c.l.b16 %v705
      %v774 = vunpack.c.l.b16 %v706
      %v775 = vunpack.c.l.b16 %v707
      %v776 = vunpack.c.l.b16 %v708
      %v777 = vunpack.c.l.b16 %v709
      %v778 = vunpack.c.l.b16 %v710
      %v779 = vunpack.c.l.b16 %v711
      %v780 = vunpack.c.l.b16 %v712
      %v781 = vunpack.c.l.b16 %v713
      %v782 = vunpack.c.l.b16 %v714
      %v783 = vunpack.c.l.b16 %v715
      %v784 = vunpack.c.l.b16 %v716
      %v785 = vunpack.c.l.b16 %v717
      %v786 = vunpack.c.l.b16 %v718
      %v787 = vunpack.c.l.b16 %v719
      %v788 = vunpack.c.l.b16 %v720
      %v789 = vunpack.c.l.b16 %v721
      %v790 = vunpack.c.l.b16 %v722
      %v791 = vunpack.c.l.b16 %v723
      %v792 = vunpack.c.l.b16 %v724
      %v793 = vunpack.c.l.b16 %v725
      %v794 = vunpack.c.l.b16 %v726
      %v795 = vpack.c.b16 %v764, %v763
      %v796 = vpack.c.b16 %v766, %v765
      %v797 = vpack.c.b16 %v768, %v767
      %v798 = vpack.c.b16 %v770, %v769
      %v799 = vpack.c.b16 %v772, %v771
      %v800 = vpack.c.b16 %v774, %v773
      %v801 = vpack.c.b16 %v776, %v775
      %v802 = vpack.c.b16 %v778, %v777
      %v803 = vpack.c.b16 %v780, %v779
      %v804 = vpack.c.b16 %v782, %v781
      %v805 = vpack.c.b16 %v784, %v783
      %v806 = vpack.c.b16 %v786, %v785
      %v807 = vpack.c.b16 %v788, %v787
      %v808 = vpack.c.b16 %v790, %v789
      %v809 = vpack.c.b16 %v792, %v791
      %v810 = vpack.c.b16 %v794, %v793
      %827 = vmatpush.bf16.msra.mxu0 %v802
      %828 = vmatpush.bf16.msra.mxu0 %v801
      %829 = vmatpush.bf16.msra.mxu0 %v800
      %830 = vmatpush.bf16.msra.mxu0 %v799
      %831 = vmatpush.bf16.msra.mxu0 %v798
      %832 = vmatpush.bf16.msra.mxu0 %v797
      %833 = vmatpush.bf16.msra.mxu0 %v796
      %834 = vmatpush.bf16.msra.mxu0 %v795
      %835 = vmatmul.bf16.gmra.mxu0 %v631
      %v836 = vpop.f32.mrf.mxu0
      %v837 = vadd.f32 %v729, %v836
      %v838 = vpop.f32.mrf.mxu0
      %v839 = vadd.f32 %v729, %v838
      %840 = vmatmul.bf16.gmra.mxu0 %v633
      %v841 = vpop.f32.mrf.mxu0
      %v842 = vadd.f32 %v729, %v841
      %v843 = vpop.f32.mrf.mxu0
      %v844 = vadd.f32 %v729, %v843
      %845 = vmatmul.bf16.gmra.mxu0 %v635
      %v846 = vpop.f32.mrf.mxu0
      %v847 = vadd.f32 %v729, %v846
      %v848 = vpop.f32.mrf.mxu0
      %v849 = vadd.f32 %v729, %v848
      %850 = vmatmul.bf16.gmra.mxu0 %v637
      %v851 = vpop.f32.mrf.mxu0
      %v852 = vadd.f32 %v729, %v851
      %v853 = vpop.f32.mrf.mxu0
      %v854 = vadd.f32 %v729, %v853
      %855 = vmatmul.bf16.gmra.mxu0 %v639
      %v856 = vpop.f32.mrf.mxu0
      %v857 = vadd.f32 %v729, %v856
      %v858 = vpop.f32.mrf.mxu0
      %v859 = vadd.f32 %v729, %v858
      %860 = vmatmul.bf16.gmra.mxu0 %v641
      %v861 = vpop.f32.mrf.mxu0
      %v862 = vadd.f32 %v729, %v861
      %v863 = vpop.f32.mrf.mxu0
      %v864 = vadd.f32 %v729, %v863
      %865 = vmatmul.bf16.gmra.mxu0 %v643
      %v866 = vpop.f32.mrf.mxu0
      %v867 = vadd.f32 %v729, %v866
      %v868 = vpop.f32.mrf.mxu0
      %v869 = vadd.f32 %v729, %v868
      %870 = vmatmul.bf16.gmra.mxu0 %v645
      %v871 = vpop.f32.mrf.mxu0
      %v872 = vadd.f32 %v729, %v871
      %v873 = vpop.f32.mrf.mxu0
      %v874 = vadd.f32 %v729, %v873
      %875 = vmatmul.bf16.gmra.mxu0 %v647
      %v876 = vpop.f32.mrf.mxu0
      %v877 = vadd.f32 %v729, %v876
      %v878 = vpop.f32.mrf.mxu0
      %v879 = vadd.f32 %v729, %v878
      %880 = vmatmul.bf16.gmra.mxu0 %v649
      %v881 = vpop.f32.mrf.mxu0
      %v882 = vadd.f32 %v729, %v881
      %v883 = vpop.f32.mrf.mxu0
      %v884 = vadd.f32 %v729, %v883
      %885 = vmatmul.bf16.gmra.mxu0 %v651
      %v886 = vpop.f32.mrf.mxu0
      %v887 = vadd.f32 %v729, %v886
      %v888 = vpop.f32.mrf.mxu0
      %v889 = vadd.f32 %v729, %v888
      %890 = vmatmul.bf16.gmra.mxu0 %v653
      %v891 = vpop.f32.mrf.mxu0
      %v892 = vadd.f32 %v729, %v891
      %v893 = vpop.f32.mrf.mxu0
      %v894 = vadd.f32 %v729, %v893
      %895 = vmatmul.bf16.gmra.mxu0 %v655
      %v896 = vpop.f32.mrf.mxu0
      %v897 = vadd.f32 %v729, %v896
      %v898 = vpop.f32.mrf.mxu0
      %v899 = vadd.f32 %v729, %v898
      %900 = vmatmul.bf16.gmra.mxu0 %v657
      %v901 = vpop.f32.mrf.mxu0
      %v902 = vadd.f32 %v729, %v901
      %v903 = vpop.f32.mrf.mxu0
      %v904 = vadd.f32 %v729, %v903
      %905 = vmatmul.bf16.gmra.mxu0 %v659
      %v906 = vpop.f32.mrf.mxu0
      %v907 = vadd.f32 %v729, %v906
      %v908 = vpop.f32.mrf.mxu0
      %v909 = vadd.f32 %v729, %v908
      %910 = vmatmul.bf16.gmra.mxu0 %v661
      %v911 = vpop.f32.mrf.mxu0
      %v912 = vadd.f32 %v729, %v911
      %v913 = vpop.f32.mrf.mxu0
      %v914 = vadd.f32 %v729, %v913
      %915 = vmatmul.bf16.gmra.mxu0 %v663
      %v916 = vpop.f32.mrf.mxu0
      %v917 = vadd.f32 %v729, %v916
      %v918 = vpop.f32.mrf.mxu0
      %v919 = vadd.f32 %v729, %v918
      %920 = vmatmul.bf16.gmra.mxu0 %v665
      %v921 = vpop.f32.mrf.mxu0
      %v922 = vadd.f32 %v729, %v921
      %v923 = vpop.f32.mrf.mxu0
      %v924 = vadd.f32 %v729, %v923
      %925 = vmatmul.bf16.gmra.mxu0 %v667
      %v926 = vpop.f32.mrf.mxu0
      %v927 = vadd.f32 %v729, %v926
      %v928 = vpop.f32.mrf.mxu0
      %v929 = vadd.f32 %v729, %v928
      %930 = vmatmul.bf16.gmra.mxu0 %v669
      %v931 = vpop.f32.mrf.mxu0
      %v932 = vadd.f32 %v729, %v931
      %v933 = vpop.f32.mrf.mxu0
      %v934 = vadd.f32 %v729, %v933
      %935 = vmatmul.bf16.gmra.mxu0 %v671
      %v936 = vpop.f32.mrf.mxu0
      %v937 = vadd.f32 %v729, %v936
      %v938 = vpop.f32.mrf.mxu0
      %v939 = vadd.f32 %v729, %v938
      %940 = vmatmul.bf16.gmra.mxu0 %v673
      %v941 = vpop.f32.mrf.mxu0
      %v942 = vadd.f32 %v729, %v941
      %v943 = vpop.f32.mrf.mxu0
      %v944 = vadd.f32 %v729, %v943
      %945 = vmatmul.bf16.gmra.mxu0 %v675
      %v946 = vpop.f32.mrf.mxu0
      %v947 = vadd.f32 %v729, %v946
      %v948 = vpop.f32.mrf.mxu0
      %v949 = vadd.f32 %v729, %v948
      %950 = vmatmul.bf16.gmra.mxu0 %v677
      %v951 = vpop.f32.mrf.mxu0
      %v952 = vadd.f32 %v729, %v951
      %v953 = vpop.f32.mrf.mxu0
      %v954 = vadd.f32 %v729, %v953
      %955 = vmatmul.bf16.gmra.mxu0 %v679
      %v956 = vpop.f32.mrf.mxu0
      %v957 = vadd.f32 %v729, %v956
      %v958 = vpop.f32.mrf.mxu0
      %v959 = vadd.f32 %v729, %v958
      %960 = vmatmul.bf16.gmra.mxu0 %v681
      %v961 = vpop.f32.mrf.mxu0
      %v962 = vadd.f32 %v729, %v961
      %v963 = vpop.f32.mrf.mxu0
      %v964 = vadd.f32 %v729, %v963
      %965 = vmatmul.bf16.gmra.mxu0 %v683
      %v966 = vpop.f32.mrf.mxu0
      %v967 = vadd.f32 %v729, %v966
      %v968 = vpop.f32.mrf.mxu0
      %v969 = vadd.f32 %v729, %v968
      %970 = vmatmul.bf16.gmra.mxu0 %v685
      %v971 = vpop.f32.mrf.mxu0
      %v972 = vadd.f32 %v729, %v971
      %v973 = vpop.f32.mrf.mxu0
      %v974 = vadd.f32 %v729, %v973
      %975 = vmatmul.bf16.gmra.mxu0 %v687
      %v976 = vpop.f32.mrf.mxu0
      %v977 = vadd.f32 %v729, %v976
      %v978 = vpop.f32.mrf.mxu0
      %v979 = vadd.f32 %v729, %v978
      %980 = vmatmul.bf16.gmra.mxu0 %v689
      %v981 = vpop.f32.mrf.mxu0
      %v982 = vadd.f32 %v729, %v981
      %v983 = vpop.f32.mrf.mxu0
      %v984 = vadd.f32 %v729, %v983
      %985 = vmatmul.bf16.gmra.mxu0 %v691
      %v986 = vpop.f32.mrf.mxu0
      %v987 = vadd.f32 %v729, %v986
      %v988 = vpop.f32.mrf.mxu0
      %v989 = vadd.f32 %v729, %v988
      %990 = vmatmul.bf16.gmra.mxu0 %v693
      %v991 = vpop.f32.mrf.mxu0
      %v992 = vadd.f32 %v729, %v991
      %v993 = vpop.f32.mrf.mxu0
      %v994 = vadd.f32 %v729, %v993
      %995 = vdwg.mxu0
      %996 = vmatpush.bf16.msra.mxu0 %v810
      %997 = vmatpush.bf16.msra.mxu0 %v809
      %998 = vmatpush.bf16.msra.mxu0 %v808
      %999 = vmatpush.bf16.msra.mxu0 %v807
      %1000 = vmatpush.bf16.msra.mxu0 %v806
      %1001 = vmatpush.bf16.msra.mxu0 %v805
      %1002 = vmatpush.bf16.msra.mxu0 %v804
      %1003 = vmatpush.bf16.msra.mxu0 %v803
      %1004 = vmatmul.bf16.gmra.mxu0 %v632
      %v1005 = vpop.f32.mrf.mxu0
      %v1006 = vadd.f32 %v837, %v1005
      %v1007 = vpop.f32.mrf.mxu0
      %v1008 = vadd.f32 %v839, %v1007
      %1009 = vmatmul.bf16.gmra.mxu0 %v634
      %v1010 = vpop.f32.mrf.mxu0
      %v1011 = vadd.f32 %v842, %v1010
      %v1012 = vpop.f32.mrf.mxu0
      %v1013 = vadd.f32 %v844, %v1012
      %1014 = vmatmul.bf16.gmra.mxu0 %v636
      %v1015 = vpop.f32.mrf.mxu0
      %v1016 = vadd.f32 %v847, %v1015
      %v1017 = vpop.f32.mrf.mxu0
      %v1018 = vadd.f32 %v849, %v1017
      %1019 = vmatmul.bf16.gmra.mxu0 %v638
      %v1020 = vpop.f32.mrf.mxu0
      %v1021 = vadd.f32 %v852, %v1020
      %v1022 = vpop.f32.mrf.mxu0
      %v1023 = vadd.f32 %v854, %v1022
      %1024 = vmatmul.bf16.gmra.mxu0 %v640
      %v1025 = vpop.f32.mrf.mxu0
      %v1026 = vadd.f32 %v857, %v1025
      %v1027 = vpop.f32.mrf.mxu0
      %v1028 = vadd.f32 %v859, %v1027
      %1029 = vmatmul.bf16.gmra.mxu0 %v642
      %v1030 = vpop.f32.mrf.mxu0
      %v1031 = vadd.f32 %v862, %v1030
      %v1032 = vpop.f32.mrf.mxu0
      %v1033 = vadd.f32 %v864, %v1032
      %1034 = vmatmul.bf16.gmra.mxu0 %v644
      %v1035 = vpop.f32.mrf.mxu0
      %v1036 = vadd.f32 %v867, %v1035
      %v1037 = vpop.f32.mrf.mxu0
      %v1038 = vadd.f32 %v869, %v1037
      %1039 = vmatmul.bf16.gmra.mxu0 %v646
      %v1040 = vpop.f32.mrf.mxu0
      %v1041 = vadd.f32 %v872, %v1040
      %v1042 = vpop.f32.mrf.mxu0
      %v1043 = vadd.f32 %v874, %v1042
      %1044 = vmatmul.bf16.gmra.mxu0 %v648
      %v1045 = vpop.f32.mrf.mxu0
      %v1046 = vadd.f32 %v877, %v1045
      %v1047 = vpop.f32.mrf.mxu0
      %v1048 = vadd.f32 %v879, %v1047
      %1049 = vmatmul.bf16.gmra.mxu0 %v650
      %v1050 = vpop.f32.mrf.mxu0
      %v1051 = vadd.f32 %v882, %v1050
      %v1052 = vpop.f32.mrf.mxu0
      %v1053 = vadd.f32 %v884, %v1052
      %1054 = vmatmul.bf16.gmra.mxu0 %v652
      %v1055 = vpop.f32.mrf.mxu0
      %v1056 = vadd.f32 %v887, %v1055
      %v1057 = vpop.f32.mrf.mxu0
      %v1058 = vadd.f32 %v889, %v1057
      %1059 = vmatmul.bf16.gmra.mxu0 %v654
      %v1060 = vpop.f32.mrf.mxu0
      %v1061 = vadd.f32 %v892, %v1060
      %v1062 = vpop.f32.mrf.mxu0
      %v1063 = vadd.f32 %v894, %v1062
      %1064 = vmatmul.bf16.gmra.mxu0 %v656
      %v1065 = vpop.f32.mrf.mxu0
      %v1066 = vadd.f32 %v897, %v1065
      %v1067 = vpop.f32.mrf.mxu0
      %v1068 = vadd.f32 %v899, %v1067
      %1069 = vmatmul.bf16.gmra.mxu0 %v658
      %v1070 = vpop.f32.mrf.mxu0
      %v1071 = vadd.f32 %v902, %v1070
      %v1072 = vpop.f32.mrf.mxu0
      %v1073 = vadd.f32 %v904, %v1072
      %1074 = vmatmul.bf16.gmra.mxu0 %v660
      %v1075 = vpop.f32.mrf.mxu0
      %v1076 = vadd.f32 %v907, %v1075
      %v1077 = vpop.f32.mrf.mxu0
      %v1078 = vadd.f32 %v909, %v1077
      %1079 = vmatmul.bf16.gmra.mxu0 %v662
      %v1080 = vpop.f32.mrf.mxu0
      %v1081 = vadd.f32 %v912, %v1080
      %v1082 = vpop.f32.mrf.mxu0
      %v1083 = vadd.f32 %v914, %v1082
      %1084 = vmatmul.bf16.gmra.mxu0 %v664
      %v1085 = vpop.f32.mrf.mxu0
      %v1086 = vadd.f32 %v917, %v1085
      %v1087 = vpop.f32.mrf.mxu0
      %v1088 = vadd.f32 %v919, %v1087
      %1089 = vmatmul.bf16.gmra.mxu0 %v666
      %v1090 = vpop.f32.mrf.mxu0
      %v1091 = vadd.f32 %v922, %v1090
      %v1092 = vpop.f32.mrf.mxu0
      %v1093 = vadd.f32 %v924, %v1092
      %1094 = vmatmul.bf16.gmra.mxu0 %v668
      %v1095 = vpop.f32.mrf.mxu0
      %v1096 = vadd.f32 %v927, %v1095
      %v1097 = vpop.f32.mrf.mxu0
      %v1098 = vadd.f32 %v929, %v1097
      %1099 = vmatmul.bf16.gmra.mxu0 %v670
      %v1100 = vpop.f32.mrf.mxu0
      %v1101 = vadd.f32 %v932, %v1100
      %v1102 = vpop.f32.mrf.mxu0
      %v1103 = vadd.f32 %v934, %v1102
      %1104 = vmatmul.bf16.gmra.mxu0 %v672
      %v1105 = vpop.f32.mrf.mxu0
      %v1106 = vadd.f32 %v937, %v1105
      %v1107 = vpop.f32.mrf.mxu0
      %v1108 = vadd.f32 %v939, %v1107
      %1109 = vmatmul.bf16.gmra.mxu0 %v674
      %v1110 = vpop.f32.mrf.mxu0
      %v1111 = vadd.f32 %v942, %v1110
      %v1112 = vpop.f32.mrf.mxu0
      %v1113 = vadd.f32 %v944, %v1112
      %1114 = vmatmul.bf16.gmra.mxu0 %v676
      %v1115 = vpop.f32.mrf.mxu0
      %v1116 = vadd.f32 %v947, %v1115
      %v1117 = vpop.f32.mrf.mxu0
      %v1118 = vadd.f32 %v949, %v1117
      %1119 = vmatmul.bf16.gmra.mxu0 %v678
      %v1120 = vpop.f32.mrf.mxu0
      %v1121 = vadd.f32 %v952, %v1120
      %v1122 = vpop.f32.mrf.mxu0
      %v1123 = vadd.f32 %v954, %v1122
      %1124 = vmatmul.bf16.gmra.mxu0 %v680
      %v1125 = vpop.f32.mrf.mxu0
      %v1126 = vadd.f32 %v957, %v1125
      %v1127 = vpop.f32.mrf.mxu0
      %v1128 = vadd.f32 %v959, %v1127
      %1129 = vmatmul.bf16.gmra.mxu0 %v682
      %v1130 = vpop.f32.mrf.mxu0
      %v1131 = vadd.f32 %v962, %v1130
      %v1132 = vpop.f32.mrf.mxu0
      %v1133 = vadd.f32 %v964, %v1132
      %1134 = vmatmul.bf16.gmra.mxu0 %v684
      %v1135 = vpop.f32.mrf.mxu0
      %v1136 = vadd.f32 %v967, %v1135
      %v1137 = vpop.f32.mrf.mxu0
      %v1138 = vadd.f32 %v969, %v1137
      %1139 = vmatmul.bf16.gmra.mxu0 %v686
      %v1140 = vpop.f32.mrf.mxu0
      %v1141 = vadd.f32 %v972, %v1140
      %v1142 = vpop.f32.mrf.mxu0
      %v1143 = vadd.f32 %v974, %v1142
      %1144 = vmatmul.bf16.gmra.mxu0 %v688
      %v1145 = vpop.f32.mrf.mxu0
      %v1146 = vadd.f32 %v977, %v1145
      %v1147 = vpop.f32.mrf.mxu0
      %v1148 = vadd.f32 %v979, %v1147
      %1149 = vmatmul.bf16.gmra.mxu0 %v690
      %v1150 = vpop.f32.mrf.mxu0
      %v1151 = vadd.f32 %v982, %v1150
      %v1152 = vpop.f32.mrf.mxu0
      %v1153 = vadd.f32 %v984, %v1152
      %1154 = vmatmul.bf16.gmra.mxu0 %v692
      %v1155 = vpop.f32.mrf.mxu0
      %v1156 = vadd.f32 %v987, %v1155
      %v1157 = vpop.f32.mrf.mxu0
      %v1158 = vadd.f32 %v989, %v1157
      %1159 = vmatmul.bf16.gmra.mxu0 %v694
      %v1160 = vpop.f32.mrf.mxu0
      %v1161 = vadd.f32 %v992, %v1160
      %v1162 = vpop.f32.mrf.mxu0
      %v1163 = vadd.f32 %v994, %v1162
      %1164 = vdwg.mxu0
      %v1165 = vmax.f32 %v1006, 0.0
      %v1166 = vmax.f32 %v1008, 0.0
      %v1167 = vmax.f32 %v1011, 0.0
      %v1168 = vmax.f32 %v1013, 0.0
      %v1169 = vmax.f32 %v1016, 0.0
      %v1170 = vmax.f32 %v1018, 0.0
      %v1171 = vmax.f32 %v1021, 0.0
      %v1172 = vmax.f32 %v1023, 0.0
      %v1173 = vmax.f32 %v1026, 0.0
      %v1174 = vmax.f32 %v1028, 0.0
      %v1175 = vmax.f32 %v1031, 0.0
      %v1176 = vmax.f32 %v1033, 0.0
      %v1177 = vmax.f32 %v1036, 0.0
      %v1178 = vmax.f32 %v1038, 0.0
      %v1179 = vmax.f32 %v1041, 0.0
      %v1180 = vmax.f32 %v1043, 0.0
      %v1181 = vmax.f32 %v1046, 0.0
      %v1182 = vmax.f32 %v1048, 0.0
      %v1183 = vmax.f32 %v1051, 0.0
      %v1184 = vmax.f32 %v1053, 0.0
      %v1185 = vmax.f32 %v1056, 0.0
      %v1186 = vmax.f32 %v1058, 0.0
      %v1187 = vmax.f32 %v1061, 0.0
      %v1188 = vmax.f32 %v1063, 0.0
      %v1189 = vmax.f32 %v1066, 0.0
      %v1190 = vmax.f32 %v1068, 0.0
      %v1191 = vmax.f32 %v1071, 0.0
      %v1192 = vmax.f32 %v1073, 0.0
      %v1193 = vmax.f32 %v1076, 0.0
      %v1194 = vmax.f32 %v1078, 0.0
      %v1195 = vmax.f32 %v1081, 0.0
      %v1196 = vmax.f32 %v1083, 0.0
      %v1197 = vmax.f32 %v1086, 0.0
      %v1198 = vmax.f32 %v1088, 0.0
      %v1199 = vmax.f32 %v1091, 0.0
      %v1200 = vmax.f32 %v1093, 0.0
      %v1201 = vmax.f32 %v1096, 0.0
      %v1202 = vmax.f32 %v1098, 0.0
      %v1203 = vmax.f32 %v1101, 0.0
      %v1204 = vmax.f32 %v1103, 0.0
      %v1205 = vmax.f32 %v1106, 0.0
      %v1206 = vmax.f32 %v1108, 0.0
      %v1207 = vmax.f32 %v1111, 0.0
      %v1208 = vmax.f32 %v1113, 0.0
      %v1209 = vmax.f32 %v1116, 0.0
      %v1210 = vmax.f32 %v1118, 0.0
      %v1211 = vmax.f32 %v1121, 0.0
      %v1212 = vmax.f32 %v1123, 0.0
      %v1213 = vmax.f32 %v1126, 0.0
      %v1214 = vmax.f32 %v1128, 0.0
      %v1215 = vmax.f32 %v1131, 0.0
      %v1216 = vmax.f32 %v1133, 0.0
      %v1217 = vmax.f32 %v1136, 0.0
      %v1218 = vmax.f32 %v1138, 0.0
      %v1219 = vmax.f32 %v1141, 0.0
      %v1220 = vmax.f32 %v1143, 0.0
      %v1221 = vmax.f32 %v1146, 0.0
      %v1222 = vmax.f32 %v1148, 0.0
      %v1223 = vmax.f32 %v1151, 0.0
      %v1224 = vmax.f32 %v1153, 0.0
      %v1225 = vmax.f32 %v1156, 0.0
      %v1226 = vmax.f32 %v1158, 0.0
      %v1227 = vmax.f32 %v1161, 0.0
      %v1228 = vmax.f32 %v1163, 0.0
      %v1229 = vld [vmem:[%s1] sm:$0xff]
      %v1230 = vld [vmem:[%s1 + $0x8] sm:$0xff]
      %v1231 = vld [vmem:[%s1 + $0x10] sm:$0xff]
      %v1232 = vld [vmem:[%s1 + $0x18] sm:$0xff]
      %v1233 = vld [vmem:[%s1 + $0x20] sm:$0xff]
      %v1234 = vld [vmem:[%s1 + $0x28] sm:$0xff]
      %v1235 = vld [vmem:[%s1 + $0x30] sm:$0xff]
      %v1236 = vld [vmem:[%s1 + $0x38] sm:$0xff]
      %v1237 = vld [vmem:[%s1 + $0x40] sm:$0xff]
      %v1238 = vld [vmem:[%s1 + $0x48] sm:$0xff]
      %v1239 = vld [vmem:[%s1 + $0x50] sm:$0xff]
      %v1240 = vld [vmem:[%s1 + $0x58] sm:$0xff]
      %v1241 = vld [vmem:[%s1 + $0x60] sm:$0xff]
      %v1242 = vld [vmem:[%s1 + $0x68] sm:$0xff]
      %v1243 = vld [vmem:[%s1 + $0x70] sm:$0xff]
      %v1244 = vld [vmem:[%s1 + $0x78] sm:$0xff]
      %v1245 = vld [vmem:[%s1 + $0x80] sm:$0xff]
      %v1246 = vld [vmem:[%s1 + $0x88] sm:$0xff]
      %v1247 = vld [vmem:[%s1 + $0x90] sm:$0xff]
      %v1248 = vld [vmem:[%s1 + $0x98] sm:$0xff]
      %v1249 = vld [vmem:[%s1 + $0xa0] sm:$0xff]
      %v1250 = vld [vmem:[%s1 + $0xa8] sm:$0xff]
      %v1251 = vld [vmem:[%s1 + $0xb0] sm:$0xff]
      %v1252 = vld [vmem:[%s1 + $0xb8] sm:$0xff]
      %v1253 = vld [vmem:[%s1 + $0xc0] sm:$0xff]
      %v1254 = vld [vmem:[%s1 + $0xc8] sm:$0xff]
      %v1255 = vld [vmem:[%s1 + $0xd0] sm:$0xff]
      %v1256 = vld [vmem:[%s1 + $0xd8] sm:$0xff]
      %v1257 = vld [vmem:[%s1 + $0xe0] sm:$0xff]
      %v1258 = vld [vmem:[%s1 + $0xe8] sm:$0xff]
      %v1259 = vld [vmem:[%s1 + $0xf0] sm:$0xff]
      %v1260 = vld [vmem:[%s1 + $0xf8] sm:$0xff]
      %1262 = vset.pattern.permute.xlu0 0
      %1263 = vperm.xlu0 %1262, %v1229
      %v1264 = vpop.permute.xlu0 %1263
      %1267 = vset.pattern.permute.xlu0 0
      %1268 = vperm.xlu0 %1267, %v1230
      %v1269 = vpop.permute.xlu0 %1268
      %1272 = vset.pattern.permute.xlu0 0
      %1273 = vperm.xlu0 %1272, %v1231
      %v1274 = vpop.permute.xlu0 %1273
      %1277 = vset.pattern.permute.xlu0 0
      %1278 = vperm.xlu0 %1277, %v1232
      %v1279 = vpop.permute.xlu0 %1278
      %1282 = vset.pattern.permute.xlu0 0
      %1283 = vperm.xlu0 %1282, %v1233
      %v1284 = vpop.permute.xlu0 %1283
      %1287 = vset.pattern.permute.xlu0 0
      %1288 = vperm.xlu0 %1287, %v1234
      %v1289 = vpop.permute.xlu0 %1288
      %1292 = vset.pattern.permute.xlu0 0
      %1293 = vperm.xlu0 %1292, %v1235
      %v1294 = vpop.permute.xlu0 %1293
      %1297 = vset.pattern.permute.xlu0 0
      %1298 = vperm.xlu0 %1297, %v1236
      %v1299 = vpop.permute.xlu0 %1298
      %1302 = vset.pattern.permute.xlu0 0
      %1303 = vperm.xlu0 %1302, %v1237
      %v1304 = vpop.permute.xlu0 %1303
      %1307 = vset.pattern.permute.xlu0 0
      %1308 = vperm.xlu0 %1307, %v1238
      %v1309 = vpop.permute.xlu0 %1308
      %1312 = vset.pattern.permute.xlu0 0
      %1313 = vperm.xlu0 %1312, %v1239
      %v1314 = vpop.permute.xlu0 %1313
      %1317 = vset.pattern.permute.xlu0 0
      %1318 = vperm.xlu0 %1317, %v1240
      %v1319 = vpop.permute.xlu0 %1318
      %1322 = vset.pattern.permute.xlu0 0
      %1323 = vperm.xlu0 %1322, %v1241
      %v1324 = vpop.permute.xlu0 %1323
      %1327 = vset.pattern.permute.xlu0 0
      %1328 = vperm.xlu0 %1327, %v1242
      %v1329 = vpop.permute.xlu0 %1328
      %1332 = vset.pattern.permute.xlu0 0
      %1333 = vperm.xlu0 %1332, %v1243
      %v1334 = vpop.permute.xlu0 %1333
      %1337 = vset.pattern.permute.xlu0 0
      %1338 = vperm.xlu0 %1337, %v1244
      %v1339 = vpop.permute.xlu0 %1338
      %1342 = vset.pattern.permute.xlu0 0
      %1343 = vperm.xlu0 %1342, %v1245
      %v1344 = vpop.permute.xlu0 %1343
      %1347 = vset.pattern.permute.xlu0 0
      %1348 = vperm.xlu0 %1347, %v1246
      %v1349 = vpop.permute.xlu0 %1348
      %1352 = vset.pattern.permute.xlu0 0
      %1353 = vperm.xlu0 %1352, %v1247
      %v1354 = vpop.permute.xlu0 %1353
      %1357 = vset.pattern.permute.xlu0 0
      %1358 = vperm.xlu0 %1357, %v1248
      %v1359 = vpop.permute.xlu0 %1358
      %1362 = vset.pattern.permute.xlu0 0
      %1363 = vperm.xlu0 %1362, %v1249
      %v1364 = vpop.permute.xlu0 %1363
      %1367 = vset.pattern.permute.xlu0 0
      %1368 = vperm.xlu0 %1367, %v1250
      %v1369 = vpop.permute.xlu0 %1368
      %1372 = vset.pattern.permute.xlu0 0
      %1373 = vperm.xlu0 %1372, %v1251
      %v1374 = vpop.permute.xlu0 %1373
      %1377 = vset.pattern.permute.xlu0 0
      %1378 = vperm.xlu0 %1377, %v1252
      %v1379 = vpop.permute.xlu0 %1378
      %1382 = vset.pattern.permute.xlu0 0
      %1383 = vperm.xlu0 %1382, %v1253
      %v1384 = vpop.permute.xlu0 %1383
      %1387 = vset.pattern.permute.xlu0 0
      %1388 = vperm.xlu0 %1387, %v1254
      %v1389 = vpop.permute.xlu0 %1388
      %1392 = vset.pattern.permute.xlu0 0
      %1393 = vperm.xlu0 %1392, %v1255
      %v1394 = vpop.permute.xlu0 %1393
      %1397 = vset.pattern.permute.xlu0 0
      %1398 = vperm.xlu0 %1397, %v1256
      %v1399 = vpop.permute.xlu0 %1398
      %1402 = vset.pattern.permute.xlu0 0
      %1403 = vperm.xlu0 %1402, %v1257
      %v1404 = vpop.permute.xlu0 %1403
      %1407 = vset.pattern.permute.xlu0 0
      %1408 = vperm.xlu0 %1407, %v1258
      %v1409 = vpop.permute.xlu0 %1408
      %1412 = vset.pattern.permute.xlu0 0
      %1413 = vperm.xlu0 %1412, %v1259
      %v1414 = vpop.permute.xlu0 %1413
      %1417 = vset.pattern.permute.xlu0 0
      %1418 = vperm.xlu0 %1417, %v1260
      %v1419 = vpop.permute.xlu0 %1418
      %v1421 = vmul.f32 %v1165, %v1264
      %v1422 = vmul.f32 %v1166, %v1269
      %v1423 = vmul.f32 %v1167, %v1274
      %v1424 = vmul.f32 %v1168, %v1279
      %v1425 = vmul.f32 %v1169, %v1284
      %v1426 = vmul.f32 %v1170, %v1289
      %v1427 = vmul.f32 %v1171, %v1294
      %v1428 = vmul.f32 %v1172, %v1299
      %v1429 = vmul.f32 %v1173, %v1304
      %v1430 = vmul.f32 %v1174, %v1309
      %v1431 = vmul.f32 %v1175, %v1314
      %v1432 = vmul.f32 %v1176, %v1319
      %v1433 = vmul.f32 %v1177, %v1324
      %v1434 = vmul.f32 %v1178, %v1329
      %v1435 = vmul.f32 %v1179, %v1334
      %v1436 = vmul.f32 %v1180, %v1339
      %v1437 = vmul.f32 %v1181, %v1344
      %v1438 = vmul.f32 %v1182, %v1349
      %v1439 = vmul.f32 %v1183, %v1354
      %v1440 = vmul.f32 %v1184, %v1359
      %v1441 = vmul.f32 %v1185, %v1364
      %v1442 = vmul.f32 %v1186, %v1369
      %v1443 = vmul.f32 %v1187, %v1374
      %v1444 = vmul.f32 %v1188, %v1379
      %v1445 = vmul.f32 %v1189, %v1384
      %v1446 = vmul.f32 %v1190, %v1389
      %v1447 = vmul.f32 %v1191, %v1394
      %v1448 = vmul.f32 %v1192, %v1399
      %v1449 = vmul.f32 %v1193, %v1404
      %v1450 = vmul.f32 %v1194, %v1409
      %v1451 = vmul.f32 %v1195, %v1414
      %v1452 = vmul.f32 %v1196, %v1419
      %v1453 = vmul.f32 %v1197, %v1264
      %v1454 = vmul.f32 %v1198, %v1269
      %v1455 = vmul.f32 %v1199, %v1274
      %v1456 = vmul.f32 %v1200, %v1279
      %v1457 = vmul.f32 %v1201, %v1284
      %v1458 = vmul.f32 %v1202, %v1289
      %v1459 = vmul.f32 %v1203, %v1294
      %v1460 = vmul.f32 %v1204, %v1299
      %v1461 = vmul.f32 %v1205, %v1304
      %v1462 = vmul.f32 %v1206, %v1309
      %v1463 = vmul.f32 %v1207, %v1314
      %v1464 = vmul.f32 %v1208, %v1319
      %v1465 = vmul.f32 %v1209, %v1324
      %v1466 = vmul.f32 %v1210, %v1329
      %v1467 = vmul.f32 %v1211, %v1334
      %v1468 = vmul.f32 %v1212, %v1339
      %v1469 = vmul.f32 %v1213, %v1344
      %v1470 = vmul.f32 %v1214, %v1349
      %v1471 = vmul.f32 %v1215, %v1354
      %v1472 = vmul.f32 %v1216, %v1359
      %v1473 = vmul.f32 %v1217, %v1364
      %v1474 = vmul.f32 %v1218, %v1369
      %v1475 = vmul.f32 %v1219, %v1374
      %v1476 = vmul.f32 %v1220, %v1379
      %v1477 = vmul.f32 %v1221, %v1384
      %v1478 = vmul.f32 %v1222, %v1389
      %v1479 = vmul.f32 %v1223, %v1394
      %v1480 = vmul.f32 %v1224, %v1399
      %v1481 = vmul.f32 %v1225, %v1404
      %v1482 = vmul.f32 %v1226, %v1409
      %v1483 = vmul.f32 %v1227, %v1414
      %v1484 = vmul.f32 %v1228, %v1419
      %v1485 = vld [vmem:[%s8] sm:$0xff]
      %v1486 = vld [vmem:[%s8 + $0x8] sm:$0xff]
      %v1487 = vld [vmem:[%s8 + $0x10] sm:$0xff]
      %v1488 = vld [vmem:[%s8 + $0x18] sm:$0xff]
      %v1489 = vld [vmem:[%s8 + $0x20] sm:$0xff]
      %v1490 = vld [vmem:[%s8 + $0x28] sm:$0xff]
      %v1491 = vld [vmem:[%s8 + $0x30] sm:$0xff]
      %v1492 = vld [vmem:[%s8 + $0x38] sm:$0xff]
      %v1493 = vld [vmem:[%s8 + $0x40] sm:$0xff]
      %v1494 = vld [vmem:[%s8 + $0x48] sm:$0xff]
      %v1495 = vld [vmem:[%s8 + $0x50] sm:$0xff]
      %v1496 = vld [vmem:[%s8 + $0x58] sm:$0xff]
      %v1497 = vld [vmem:[%s8 + $0x60] sm:$0xff]
      %v1498 = vld [vmem:[%s8 + $0x68] sm:$0xff]
      %v1499 = vld [vmem:[%s8 + $0x70] sm:$0xff]
      %v1500 = vld [vmem:[%s8 + $0x78] sm:$0xff]
      %v1501 = vld [vmem:[%s8 + $0x80] sm:$0xff]
      %v1502 = vld [vmem:[%s8 + $0x88] sm:$0xff]
      %v1503 = vld [vmem:[%s8 + $0x90] sm:$0xff]
      %v1504 = vld [vmem:[%s8 + $0x98] sm:$0xff]
      %v1505 = vld [vmem:[%s8 + $0xa0] sm:$0xff]
      %v1506 = vld [vmem:[%s8 + $0xa8] sm:$0xff]
      %v1507 = vld [vmem:[%s8 + $0xb0] sm:$0xff]
      %v1508 = vld [vmem:[%s8 + $0xb8] sm:$0xff]
      %v1509 = vld [vmem:[%s8 + $0xc0] sm:$0xff]
      %v1510 = vld [vmem:[%s8 + $0xc8] sm:$0xff]
      %v1511 = vld [vmem:[%s8 + $0xd0] sm:$0xff]
      %v1512 = vld [vmem:[%s8 + $0xd8] sm:$0xff]
      %v1513 = vld [vmem:[%s8 + $0xe0] sm:$0xff]
      %v1514 = vld [vmem:[%s8 + $0xe8] sm:$0xff]
      %v1515 = vld [vmem:[%s8 + $0xf0] sm:$0xff]
      %v1516 = vld [vmem:[%s8 + $0xf8] sm:$0xff]
      %v1517 = vmul.f32 %v1421, %v1485
      %v1518 = vmul.f32 %v1422, %v1486
      %v1519 = vmul.f32 %v1423, %v1487
      %v1520 = vmul.f32 %v1424, %v1488
      %v1521 = vmul.f32 %v1425, %v1489
      %v1522 = vmul.f32 %v1426, %v1490
      %v1523 = vmul.f32 %v1427, %v1491
      %v1524 = vmul.f32 %v1428, %v1492
      %v1525 = vmul.f32 %v1429, %v1493
      %v1526 = vmul.f32 %v1430, %v1494
      %v1527 = vmul.f32 %v1431, %v1495
      %v1528 = vmul.f32 %v1432, %v1496
      %v1529 = vmul.f32 %v1433, %v1497
      %v1530 = vmul.f32 %v1434, %v1498
      %v1531 = vmul.f32 %v1435, %v1499
      %v1532 = vmul.f32 %v1436, %v1500
      %v1533 = vmul.f32 %v1437, %v1501
      %v1534 = vmul.f32 %v1438, %v1502
      %v1535 = vmul.f32 %v1439, %v1503
      %v1536 = vmul.f32 %v1440, %v1504
      %v1537 = vmul.f32 %v1441, %v1505
      %v1538 = vmul.f32 %v1442, %v1506
      %v1539 = vmul.f32 %v1443, %v1507
      %v1540 = vmul.f32 %v1444, %v1508
      %v1541 = vmul.f32 %v1445, %v1509
      %v1542 = vmul.f32 %v1446, %v1510
      %v1543 = vmul.f32 %v1447, %v1511
      %v1544 = vmul.f32 %v1448, %v1512
      %v1545 = vmul.f32 %v1449, %v1513
      %v1546 = vmul.f32 %v1450, %v1514
      %v1547 = vmul.f32 %v1451, %v1515
      %v1548 = vmul.f32 %v1452, %v1516
      %v1549 = vmul.f32 %v1453, %v1485
      %v1550 = vmul.f32 %v1454, %v1486
      %v1551 = vmul.f32 %v1455, %v1487
      %v1552 = vmul.f32 %v1456, %v1488
      %v1553 = vmul.f32 %v1457, %v1489
      %v1554 = vmul.f32 %v1458, %v1490
      %v1555 = vmul.f32 %v1459, %v1491
      %v1556 = vmul.f32 %v1460, %v1492
      %v1557 = vmul.f32 %v1461, %v1493
      %v1558 = vmul.f32 %v1462, %v1494
      %v1559 = vmul.f32 %v1463, %v1495
      %v1560 = vmul.f32 %v1464, %v1496
      %v1561 = vmul.f32 %v1465, %v1497
      %v1562 = vmul.f32 %v1466, %v1498
      %v1563 = vmul.f32 %v1467, %v1499
      %v1564 = vmul.f32 %v1468, %v1500
      %v1565 = vmul.f32 %v1469, %v1501
      %v1566 = vmul.f32 %v1470, %v1502
      %v1567 = vmul.f32 %v1471, %v1503
      %v1568 = vmul.f32 %v1472, %v1504
      %v1569 = vmul.f32 %v1473, %v1505
      %v1570 = vmul.f32 %v1474, %v1506
      %v1571 = vmul.f32 %v1475, %v1507
      %v1572 = vmul.f32 %v1476, %v1508
      %v1573 = vmul.f32 %v1477, %v1509
      %v1574 = vmul.f32 %v1478, %v1510
      %v1575 = vmul.f32 %v1479, %v1511
      %v1576 = vmul.f32 %v1480, %v1512
      %v1577 = vmul.f32 %v1481, %v1513
      %v1578 = vmul.f32 %v1482, %v1514
      %v1579 = vmul.f32 %v1483, %v1515
      %v1580 = vmul.f32 %v1484, %v1516
      %v1581 = vadd.f32 %v1517, %v1518
      %v1582 = vadd.f32 %v1581, %v1519
      %v1583 = vadd.f32 %v1582, %v1520
      %v1584 = vadd.f32 %v1583, %v1521
      %v1585 = vadd.f32 %v1584, %v1522
      %v1586 = vadd.f32 %v1585, %v1523
      %v1587 = vadd.f32 %v1586, %v1524
      %v1588 = vadd.f32 %v1587, %v1525
      %v1589 = vadd.f32 %v1588, %v1526
      %v1590 = vadd.f32 %v1589, %v1527
      %v1591 = vadd.f32 %v1590, %v1528
      %v1592 = vadd.f32 %v1591, %v1529
      %v1593 = vadd.f32 %v1592, %v1530
      %v1594 = vadd.f32 %v1593, %v1531
      %v1595 = vadd.f32 %v1594, %v1532
      %v1596 = vadd.f32 %v1595, %v1533
      %v1597 = vadd.f32 %v1596, %v1534
      %v1598 = vadd.f32 %v1597, %v1535
      %v1599 = vadd.f32 %v1598, %v1536
      %v1600 = vadd.f32 %v1599, %v1537
      %v1601 = vadd.f32 %v1600, %v1538
      %v1602 = vadd.f32 %v1601, %v1539
      %v1603 = vadd.f32 %v1602, %v1540
      %v1604 = vadd.f32 %v1603, %v1541
      %v1605 = vadd.f32 %v1604, %v1542
      %v1606 = vadd.f32 %v1605, %v1543
      %v1607 = vadd.f32 %v1606, %v1544
      %v1608 = vadd.f32 %v1607, %v1545
      %v1609 = vadd.f32 %v1608, %v1546
      %v1610 = vadd.f32 %v1609, %v1547
      %v1611 = vadd.f32 %v1610, %v1548
      %v1612 = vrot.slane %v1611, 4
      %v1613 = vadd.f32 %v1611, %v1612
      %v1614 = vrot.slane %v1613, 2
      %v1615 = vadd.f32 %v1613, %v1614
      %v1616 = vrot.slane %v1615, 1
      %v1617 = vadd.f32 %v1615, %v1616
      %v1618 = vadd.f32 %v1549, %v1550
      %v1619 = vadd.f32 %v1618, %v1551
      %v1620 = vadd.f32 %v1619, %v1552
      %v1621 = vadd.f32 %v1620, %v1553
      %v1622 = vadd.f32 %v1621, %v1554
      %v1623 = vadd.f32 %v1622, %v1555
      %v1624 = vadd.f32 %v1623, %v1556
      %v1625 = vadd.f32 %v1624, %v1557
      %v1626 = vadd.f32 %v1625, %v1558
      %v1627 = vadd.f32 %v1626, %v1559
      %v1628 = vadd.f32 %v1627, %v1560
      %v1629 = vadd.f32 %v1628, %v1561
      %v1630 = vadd.f32 %v1629, %v1562
      %v1631 = vadd.f32 %v1630, %v1563
      %v1632 = vadd.f32 %v1631, %v1564
      %v1633 = vadd.f32 %v1632, %v1565
      %v1634 = vadd.f32 %v1633, %v1566
      %v1635 = vadd.f32 %v1634, %v1567
      %v1636 = vadd.f32 %v1635, %v1568
      %v1637 = vadd.f32 %v1636, %v1569
      %v1638 = vadd.f32 %v1637, %v1570
      %v1639 = vadd.f32 %v1638, %v1571
      %v1640 = vadd.f32 %v1639, %v1572
      %v1641 = vadd.f32 %v1640, %v1573
      %v1642 = vadd.f32 %v1641, %v1574
      %v1643 = vadd.f32 %v1642, %v1575
      %v1644 = vadd.f32 %v1643, %v1576
      %v1645 = vadd.f32 %v1644, %v1577
      %v1646 = vadd.f32 %v1645, %v1578
      %v1647 = vadd.f32 %v1646, %v1579
      %v1648 = vadd.f32 %v1647, %v1580
      %v1649 = vrot.slane %v1648, 4
      %v1650 = vadd.f32 %v1648, %v1649
      %v1651 = vrot.slane %v1650, 2
      %v1652 = vadd.f32 %v1650, %v1651
      %v1653 = vrot.slane %v1652, 1
      %v1654 = vadd.f32 %v1652, %v1653
      %v1655 = vrot.slane %v1421, 7
      %v1656 = vrot.slane %v1422, 7
      %v1657 = vrot.slane %v1423, 7
      %v1658 = vrot.slane %v1424, 7
      %v1659 = vrot.slane %v1425, 7
      %v1660 = vrot.slane %v1426, 7
      %v1661 = vrot.slane %v1427, 7
      %v1662 = vrot.slane %v1428, 7
      %v1663 = vrot.slane %v1429, 7
      %v1664 = vrot.slane %v1430, 7
      %v1665 = vrot.slane %v1431, 7
      %v1666 = vrot.slane %v1432, 7
      %v1667 = vrot.slane %v1433, 7
      %v1668 = vrot.slane %v1434, 7
      %v1669 = vrot.slane %v1435, 7
      %v1670 = vrot.slane %v1436, 7
      %v1671 = vrot.slane %v1437, 7
      %v1672 = vrot.slane %v1438, 7
      %v1673 = vrot.slane %v1439, 7
      %v1674 = vrot.slane %v1440, 7
      %v1675 = vrot.slane %v1441, 7
      %v1676 = vrot.slane %v1442, 7
      %v1677 = vrot.slane %v1443, 7
      %v1678 = vrot.slane %v1444, 7
      %v1679 = vrot.slane %v1445, 7
      %v1680 = vrot.slane %v1446, 7
      %v1681 = vrot.slane %v1447, 7
      %v1682 = vrot.slane %v1448, 7
      %v1683 = vrot.slane %v1449, 7
      %v1684 = vrot.slane %v1450, 7
      %v1685 = vrot.slane %v1451, 7
      %v1686 = vrot.slane %v1452, 7
      %v1687 = vrot.slane %v1453, 7
      %v1688 = vrot.slane %v1454, 7
      %v1689 = vrot.slane %v1455, 7
      %v1690 = vrot.slane %v1456, 7
      %v1691 = vrot.slane %v1457, 7
      %v1692 = vrot.slane %v1458, 7
      %v1693 = vrot.slane %v1459, 7
      %v1694 = vrot.slane %v1460, 7
      %v1695 = vrot.slane %v1461, 7
      %v1696 = vrot.slane %v1462, 7
      %v1697 = vrot.slane %v1463, 7
      %v1698 = vrot.slane %v1464, 7
      %v1699 = vrot.slane %v1465, 7
      %v1700 = vrot.slane %v1466, 7
      %v1701 = vrot.slane %v1467, 7
      %v1702 = vrot.slane %v1468, 7
      %v1703 = vrot.slane %v1469, 7
      %v1704 = vrot.slane %v1470, 7
      %v1705 = vrot.slane %v1471, 7
      %v1706 = vrot.slane %v1472, 7
      %v1707 = vrot.slane %v1473, 7
      %v1708 = vrot.slane %v1474, 7
      %v1709 = vrot.slane %v1475, 7
      %v1710 = vrot.slane %v1476, 7
      %v1711 = vrot.slane %v1477, 7
      %v1712 = vrot.slane %v1478, 7
      %v1713 = vrot.slane %v1479, 7
      %v1714 = vrot.slane %v1480, 7
      %v1715 = vrot.slane %v1481, 7
      %v1716 = vrot.slane %v1482, 7
      %v1717 = vrot.slane %v1483, 7
      %v1718 = vrot.slane %v1484, 7
      %v1719 = vlaneseq
      %v1720 = vshrl.u32 %v1719, 7
      %vm1721 = vcmp.lt.s32.totalorder %v1720, 1
      %v1722 = vsel %vm1721, %v1717, %v1718
      %v1723 = vsel %vm1721, %v1716, %v1717
      %v1724 = vsel %vm1721, %v1715, %v1716
      %v1725 = vsel %vm1721, %v1714, %v1715
      %v1726 = vsel %vm1721, %v1713, %v1714
      %v1727 = vsel %vm1721, %v1712, %v1713
      %v1728 = vsel %vm1721, %v1711, %v1712
      %v1729 = vsel %vm1721, %v1710, %v1711
      %v1730 = vsel %vm1721, %v1709, %v1710
      %v1731 = vsel %vm1721, %v1708, %v1709
      %v1732 = vsel %vm1721, %v1707, %v1708
      %v1733 = vsel %vm1721, %v1706, %v1707
      %v1734 = vsel %vm1721, %v1705, %v1706
      %v1735 = vsel %vm1721, %v1704, %v1705
      %v1736 = vsel %vm1721, %v1703, %v1704
      %v1737 = vsel %vm1721, %v1702, %v1703
      %v1738 = vsel %vm1721, %v1701, %v1702
      %v1739 = vsel %vm1721, %v1700, %v1701
      %v1740 = vsel %vm1721, %v1699, %v1700
      %v1741 = vsel %vm1721, %v1698, %v1699
      %v1742 = vsel %vm1721, %v1697, %v1698
      %v1743 = vsel %vm1721, %v1696, %v1697
      %v1744 = vsel %vm1721, %v1695, %v1696
      %v1745 = vsel %vm1721, %v1694, %v1695
      %v1746 = vsel %vm1721, %v1693, %v1694
      %v1747 = vsel %vm1721, %v1692, %v1693
      %v1748 = vsel %vm1721, %v1691, %v1692
      %v1749 = vsel %vm1721, %v1690, %v1691
      %v1750 = vsel %vm1721, %v1689, %v1690
      %v1751 = vsel %vm1721, %v1688, %v1689
      %v1752 = vsel %vm1721, %v1687, %v1688
      %v1753 = vsel %vm1721, %v1686, %v1687
      %v1754 = vsel %vm1721, %v1685, %v1686
      %v1755 = vsel %vm1721, %v1684, %v1685
      %v1756 = vsel %vm1721, %v1683, %v1684
      %v1757 = vsel %vm1721, %v1682, %v1683
      %v1758 = vsel %vm1721, %v1681, %v1682
      %v1759 = vsel %vm1721, %v1680, %v1681
      %v1760 = vsel %vm1721, %v1679, %v1680
      %v1761 = vsel %vm1721, %v1678, %v1679
      %v1762 = vsel %vm1721, %v1677, %v1678
      %v1763 = vsel %vm1721, %v1676, %v1677
      %v1764 = vsel %vm1721, %v1675, %v1676
      %v1765 = vsel %vm1721, %v1674, %v1675
      %v1766 = vsel %vm1721, %v1673, %v1674
      %v1767 = vsel %vm1721, %v1672, %v1673
      %v1768 = vsel %vm1721, %v1671, %v1672
      %v1769 = vsel %vm1721, %v1670, %v1671
      %v1770 = vsel %vm1721, %v1669, %v1670
      %v1771 = vsel %vm1721, %v1668, %v1669
      %v1772 = vsel %vm1721, %v1667, %v1668
      %v1773 = vsel %vm1721, %v1666, %v1667
      %v1774 = vsel %vm1721, %v1665, %v1666
      %v1775 = vsel %vm1721, %v1664, %v1665
      %v1776 = vsel %vm1721, %v1663, %v1664
      %v1777 = vsel %vm1721, %v1662, %v1663
      %v1778 = vsel %vm1721, %v1661, %v1662
      %v1779 = vsel %vm1721, %v1660, %v1661
      %v1780 = vsel %vm1721, %v1659, %v1660
      %v1781 = vsel %vm1721, %v1658, %v1659
      %v1782 = vsel %vm1721, %v1657, %v1658
      %v1783 = vsel %vm1721, %v1656, %v1657
      %v1784 = vsel %vm1721, %v1655, %v1656
      %v1785 = vsel %vm1721, %v1718, %v1655
      %v1786 = vpack.c.bf16 %v1722, %v1723
      %v1787 = vpack.c.bf16 %v1784, %v1785
      %v1788 = vpack.c.bf16 %v1782, %v1783
      %v1789 = vpack.c.bf16 %v1780, %v1781
      %v1790 = vpack.c.bf16 %v1778, %v1779
      %v1791 = vpack.c.bf16 %v1776, %v1777
      %v1792 = vpack.c.bf16 %v1774, %v1775
      %v1793 = vpack.c.bf16 %v1772, %v1773
      %v1794 = vpack.c.bf16 %v1770, %v1771
      %v1795 = vpack.c.bf16 %v1768, %v1769
      %v1796 = vpack.c.bf16 %v1766, %v1767
      %v1797 = vpack.c.bf16 %v1764, %v1765
      %v1798 = vpack.c.bf16 %v1762, %v1763
      %v1799 = vpack.c.bf16 %v1760, %v1761
      %v1800 = vpack.c.bf16 %v1758, %v1759
      %v1801 = vpack.c.bf16 %v1756, %v1757
      %v1802 = vpack.c.bf16 %v1754, %v1755
      %v1803 = vpack.c.bf16 %v1752, %v1753
      %v1804 = vpack.c.bf16 %v1750, %v1751
      %v1805 = vpack.c.bf16 %v1748, %v1749
      %v1806 = vpack.c.bf16 %v1746, %v1747
      %v1807 = vpack.c.bf16 %v1744, %v1745
      %v1808 = vpack.c.bf16 %v1742, %v1743
      %v1809 = vpack.c.bf16 %v1740, %v1741
      %v1810 = vpack.c.bf16 %v1738, %v1739
      %v1811 = vpack.c.bf16 %v1736, %v1737
      %v1812 = vpack.c.bf16 %v1734, %v1735
      %v1813 = vpack.c.bf16 %v1732, %v1733
      %v1814 = vpack.c.bf16 %v1730, %v1731
      %v1815 = vpack.c.bf16 %v1728, %v1729
      %v1816 = vpack.c.bf16 %v1726, %v1727
      %v1817 = vpack.c.bf16 %v1724, %v1725
      %v1818 = vld [vmem:[%s4] sm:$0xf]
      %v1819 = vld [vmem:[%s4 + $0x4] sm:$0xf]
      %v1820 = vld [vmem:[%s4 + $0x8] sm:$0xf]
      %v1821 = vld [vmem:[%s4 + $0xc] sm:$0xf]
      %v1822 = vld [vmem:[%s4 + $0x10] sm:$0xf]
      %v1823 = vld [vmem:[%s4 + $0x14] sm:$0xf]
      %v1824 = vld [vmem:[%s4 + $0x18] sm:$0xf]
      %v1825 = vld [vmem:[%s4 + $0x1c] sm:$0xf]
      %v1826 = vld [vmem:[%s4 + $0x20] sm:$0xf]
      %v1827 = vld [vmem:[%s4 + $0x24] sm:$0xf]
      %v1828 = vld [vmem:[%s4 + $0x28] sm:$0xf]
      %v1829 = vld [vmem:[%s4 + $0x2c] sm:$0xf]
      %v1830 = vld [vmem:[%s4 + $0x30] sm:$0xf]
      %v1831 = vld [vmem:[%s4 + $0x34] sm:$0xf]
      %v1832 = vld [vmem:[%s4 + $0x38] sm:$0xf]
      %v1833 = vld [vmem:[%s4 + $0x3c] sm:$0xf]
      %v1850 = vunpack.c.l.b16 %v1818
      %v1851 = vunpack.c.l.b16 %v1819
      %v1852 = vunpack.c.l.b16 %v1820
      %v1853 = vunpack.c.l.b16 %v1821
      %v1854 = vunpack.c.l.b16 %v1822
      %v1855 = vunpack.c.l.b16 %v1823
      %v1856 = vunpack.c.l.b16 %v1824
      %v1857 = vunpack.c.l.b16 %v1825
      %v1858 = vunpack.c.l.b16 %v1826
      %v1859 = vunpack.c.l.b16 %v1827
      %v1860 = vunpack.c.l.b16 %v1828
      %v1861 = vunpack.c.l.b16 %v1829
      %v1862 = vunpack.c.l.b16 %v1830
      %v1863 = vunpack.c.l.b16 %v1831
      %v1864 = vunpack.c.l.b16 %v1832
      %v1865 = vunpack.c.l.b16 %v1833
      %v1866 = vpack.c.b16 %v1851, %v1850
      %v1867 = vpack.c.b16 %v1853, %v1852
      %v1868 = vpack.c.b16 %v1855, %v1854
      %v1869 = vpack.c.b16 %v1857, %v1856
      %v1870 = vpack.c.b16 %v1859, %v1858
      %v1871 = vpack.c.b16 %v1861, %v1860
      %v1872 = vpack.c.b16 %v1863, %v1862
      %v1873 = vpack.c.b16 %v1865, %v1864
      %1882 = vmatpush.bf16.msra.mxu0 %v1873
      %1883 = vmatpush.bf16.msra.mxu0 %v1872
      %1884 = vmatpush.bf16.msra.mxu0 %v1871
      %1885 = vmatpush.bf16.msra.mxu0 %v1870
      %1886 = vmatpush.bf16.msra.mxu0 %v1869
      %1887 = vmatpush.bf16.msra.mxu0 %v1868
      %1888 = vmatpush.bf16.msra.mxu0 %v1867
      %1889 = vmatpush.bf16.msra.mxu0 %v1866
      %1890 = vmatmul.bf16.gmra.mxu0 %v1786
      %v1891 = vpop.f32.mrf.mxu0
      %v1892 = vadd.f32 0.0, %v1891
      %v1893 = vpop.f32.mrf.mxu0
      %v1894 = vadd.f32 0.0, %v1893
      %1895 = vmatmul.bf16.gmra.mxu0 %v1787
      %v1896 = vpop.f32.mrf.mxu0
      %v1897 = vadd.f32 0.0, %v1896
      %v1898 = vpop.f32.mrf.mxu0
      %v1899 = vadd.f32 0.0, %v1898
      %1900 = vmatmul.bf16.gmra.mxu0 %v1788
      %v1901 = vpop.f32.mrf.mxu0
      %v1902 = vadd.f32 0.0, %v1901
      %v1903 = vpop.f32.mrf.mxu0
      %v1904 = vadd.f32 0.0, %v1903
      %1905 = vmatmul.bf16.gmra.mxu0 %v1789
      %v1906 = vpop.f32.mrf.mxu0
      %v1907 = vadd.f32 0.0, %v1906
      %v1908 = vpop.f32.mrf.mxu0
      %v1909 = vadd.f32 0.0, %v1908
      %1910 = vmatmul.bf16.gmra.mxu0 %v1790
      %v1911 = vpop.f32.mrf.mxu0
      %v1912 = vadd.f32 0.0, %v1911
      %v1913 = vpop.f32.mrf.mxu0
      %v1914 = vadd.f32 0.0, %v1913
      %1915 = vmatmul.bf16.gmra.mxu0 %v1791
      %v1916 = vpop.f32.mrf.mxu0
      %v1917 = vadd.f32 0.0, %v1916
      %v1918 = vpop.f32.mrf.mxu0
      %v1919 = vadd.f32 0.0, %v1918
      %1920 = vmatmul.bf16.gmra.mxu0 %v1792
      %v1921 = vpop.f32.mrf.mxu0
      %v1922 = vadd.f32 0.0, %v1921
      %v1923 = vpop.f32.mrf.mxu0
      %v1924 = vadd.f32 0.0, %v1923
      %1925 = vmatmul.bf16.gmra.mxu0 %v1793
      %v1926 = vpop.f32.mrf.mxu0
      %v1927 = vadd.f32 0.0, %v1926
      %v1928 = vpop.f32.mrf.mxu0
      %v1929 = vadd.f32 0.0, %v1928
      %1930 = vmatmul.bf16.gmra.mxu0 %v1794
      %v1931 = vpop.f32.mrf.mxu0
      %v1932 = vadd.f32 0.0, %v1931
      %v1933 = vpop.f32.mrf.mxu0
      %v1934 = vadd.f32 0.0, %v1933
      %1935 = vmatmul.bf16.gmra.mxu0 %v1795
      %v1936 = vpop.f32.mrf.mxu0
      %v1937 = vadd.f32 0.0, %v1936
      %v1938 = vpop.f32.mrf.mxu0
      %v1939 = vadd.f32 0.0, %v1938
      %1940 = vmatmul.bf16.gmra.mxu0 %v1796
      %v1941 = vpop.f32.mrf.mxu0
      %v1942 = vadd.f32 0.0, %v1941
      %v1943 = vpop.f32.mrf.mxu0
      %v1944 = vadd.f32 0.0, %v1943
      %1945 = vmatmul.bf16.gmra.mxu0 %v1797
      %v1946 = vpop.f32.mrf.mxu0
      %v1947 = vadd.f32 0.0, %v1946
      %v1948 = vpop.f32.mrf.mxu0
      %v1949 = vadd.f32 0.0, %v1948
      %1950 = vmatmul.bf16.gmra.mxu0 %v1798
      %v1951 = vpop.f32.mrf.mxu0
      %v1952 = vadd.f32 0.0, %v1951
      %v1953 = vpop.f32.mrf.mxu0
      %v1954 = vadd.f32 0.0, %v1953
      %1955 = vmatmul.bf16.gmra.mxu0 %v1799
      %v1956 = vpop.f32.mrf.mxu0
      %v1957 = vadd.f32 0.0, %v1956
      %v1958 = vpop.f32.mrf.mxu0
      %v1959 = vadd.f32 0.0, %v1958
      %1960 = vmatmul.bf16.gmra.mxu0 %v1800
      %v1961 = vpop.f32.mrf.mxu0
      %v1962 = vadd.f32 0.0, %v1961
      %v1963 = vpop.f32.mrf.mxu0
      %v1964 = vadd.f32 0.0, %v1963
      %1965 = vmatmul.bf16.gmra.mxu0 %v1801
      %v1966 = vpop.f32.mrf.mxu0
      %v1967 = vadd.f32 0.0, %v1966
      %v1968 = vpop.f32.mrf.mxu0
      %v1969 = vadd.f32 0.0, %v1968
      %1970 = vmatmul.bf16.gmra.mxu0 %v1802
      %v1971 = vpop.f32.mrf.mxu0
      %v1972 = vadd.f32 0.0, %v1971
      %v1973 = vpop.f32.mrf.mxu0
      %v1974 = vadd.f32 0.0, %v1973
      %1975 = vmatmul.bf16.gmra.mxu0 %v1803
      %v1976 = vpop.f32.mrf.mxu0
      %v1977 = vadd.f32 0.0, %v1976
      %v1978 = vpop.f32.mrf.mxu0
      %v1979 = vadd.f32 0.0, %v1978
      %1980 = vmatmul.bf16.gmra.mxu0 %v1804
      %v1981 = vpop.f32.mrf.mxu0
      %v1982 = vadd.f32 0.0, %v1981
      %v1983 = vpop.f32.mrf.mxu0
      %v1984 = vadd.f32 0.0, %v1983
      %1985 = vmatmul.bf16.gmra.mxu0 %v1805
      %v1986 = vpop.f32.mrf.mxu0
      %v1987 = vadd.f32 0.0, %v1986
      %v1988 = vpop.f32.mrf.mxu0
      %v1989 = vadd.f32 0.0, %v1988
      %1990 = vmatmul.bf16.gmra.mxu0 %v1806
      %v1991 = vpop.f32.mrf.mxu0
      %v1992 = vadd.f32 0.0, %v1991
      %v1993 = vpop.f32.mrf.mxu0
      %v1994 = vadd.f32 0.0, %v1993
      %1995 = vmatmul.bf16.gmra.mxu0 %v1807
      %v1996 = vpop.f32.mrf.mxu0
      %v1997 = vadd.f32 0.0, %v1996
      %v1998 = vpop.f32.mrf.mxu0
      %v1999 = vadd.f32 0.0, %v1998
      %2000 = vmatmul.bf16.gmra.mxu0 %v1808
      %v2001 = vpop.f32.mrf.mxu0
      %v2002 = vadd.f32 0.0, %v2001
      %v2003 = vpop.f32.mrf.mxu0
      %v2004 = vadd.f32 0.0, %v2003
      %2005 = vmatmul.bf16.gmra.mxu0 %v1809
      %v2006 = vpop.f32.mrf.mxu0
      %v2007 = vadd.f32 0.0, %v2006
      %v2008 = vpop.f32.mrf.mxu0
      %v2009 = vadd.f32 0.0, %v2008
      %2010 = vmatmul.bf16.gmra.mxu0 %v1810
      %v2011 = vpop.f32.mrf.mxu0
      %v2012 = vadd.f32 0.0, %v2011
      %v2013 = vpop.f32.mrf.mxu0
      %v2014 = vadd.f32 0.0, %v2013
      %2015 = vmatmul.bf16.gmra.mxu0 %v1811
      %v2016 = vpop.f32.mrf.mxu0
      %v2017 = vadd.f32 0.0, %v2016
      %v2018 = vpop.f32.mrf.mxu0
      %v2019 = vadd.f32 0.0, %v2018
      %2020 = vmatmul.bf16.gmra.mxu0 %v1812
      %v2021 = vpop.f32.mrf.mxu0
      %v2022 = vadd.f32 0.0, %v2021
      %v2023 = vpop.f32.mrf.mxu0
      %v2024 = vadd.f32 0.0, %v2023
      %2025 = vmatmul.bf16.gmra.mxu0 %v1813
      %v2026 = vpop.f32.mrf.mxu0
      %v2027 = vadd.f32 0.0, %v2026
      %v2028 = vpop.f32.mrf.mxu0
      %v2029 = vadd.f32 0.0, %v2028
      %2030 = vmatmul.bf16.gmra.mxu0 %v1814
      %v2031 = vpop.f32.mrf.mxu0
      %v2032 = vadd.f32 0.0, %v2031
      %v2033 = vpop.f32.mrf.mxu0
      %v2034 = vadd.f32 0.0, %v2033
      %2035 = vmatmul.bf16.gmra.mxu0 %v1815
      %v2036 = vpop.f32.mrf.mxu0
      %v2037 = vadd.f32 0.0, %v2036
      %v2038 = vpop.f32.mrf.mxu0
      %v2039 = vadd.f32 0.0, %v2038
      %2040 = vmatmul.bf16.gmra.mxu0 %v1816
      %v2041 = vpop.f32.mrf.mxu0
      %v2042 = vadd.f32 0.0, %v2041
      %v2043 = vpop.f32.mrf.mxu0
      %v2044 = vadd.f32 0.0, %v2043
      %2045 = vmatmul.bf16.gmra.mxu0 %v1817
      %v2046 = vpop.f32.mrf.mxu0
      %v2047 = vadd.f32 0.0, %v2046
      %v2048 = vpop.f32.mrf.mxu0
      %v2049 = vadd.f32 0.0, %v2048
      %2050 = vdwg.mxu0
      %2051 = vst [vmem:[#allocation2] sm:$0xff] %v1892
      %2052 = vst [vmem:[#allocation2 + $0x8] sm:$0xff] %v1894
      %2053 = vst [vmem:[#allocation2 + $0x10] sm:$0xff] %v1897
      %2054 = vst [vmem:[#allocation2 + $0x18] sm:$0xff] %v1899
      %2055 = vst [vmem:[#allocation2 + $0x20] sm:$0xff] %v1902
      %2056 = vst [vmem:[#allocation2 + $0x28] sm:$0xff] %v1904
      %2057 = vst [vmem:[#allocation2 + $0x30] sm:$0xff] %v1907
      %2058 = vst [vmem:[#allocation2 + $0x38] sm:$0xff] %v1909
      %2059 = vst [vmem:[#allocation2 + $0x40] sm:$0xff] %v1912
      %2060 = vst [vmem:[#allocation2 + $0x48] sm:$0xff] %v1914
      %2061 = vst [vmem:[#allocation2 + $0x50] sm:$0xff] %v1917
      %2062 = vst [vmem:[#allocation2 + $0x58] sm:$0xff] %v1919
      %2063 = vst [vmem:[#allocation2 + $0x60] sm:$0xff] %v1922
      %2064 = vst [vmem:[#allocation2 + $0x68] sm:$0xff] %v1924
      %2065 = vst [vmem:[#allocation2 + $0x70] sm:$0xff] %v1927
      %2066 = vst [vmem:[#allocation2 + $0x78] sm:$0xff] %v1929
      %2067 = vst [vmem:[#allocation2 + $0x80] sm:$0xff] %v1932
      %2068 = vst [vmem:[#allocation2 + $0x88] sm:$0xff] %v1934
      %2069 = vst [vmem:[#allocation2 + $0x90] sm:$0xff] %v1937
      %2070 = vst [vmem:[#allocation2 + $0x98] sm:$0xff] %v1939
      %2071 = vst [vmem:[#allocation2 + $0xa0] sm:$0xff] %v1942
      %2072 = vst [vmem:[#allocation2 + $0xa8] sm:$0xff] %v1944
      %2073 = vst [vmem:[#allocation2 + $0xb0] sm:$0xff] %v1947
      %2074 = vst [vmem:[#allocation2 + $0xb8] sm:$0xff] %v1949
      %2075 = vst [vmem:[#allocation2 + $0xc0] sm:$0xff] %v1952
      %2076 = vst [vmem:[#allocation2 + $0xc8] sm:$0xff] %v1954
      %2077 = vst [vmem:[#allocation2 + $0xd0] sm:$0xff] %v1957
      %2078 = vst [vmem:[#allocation2 + $0xd8] sm:$0xff] %v1959
      %2079 = vst [vmem:[#allocation2 + $0xe0] sm:$0xff] %v1962
      %2080 = vst [vmem:[#allocation2 + $0xe8] sm:$0xff] %v1964
      %2081 = vst [vmem:[#allocation2 + $0xf0] sm:$0xff] %v1967
      %2082 = vst [vmem:[#allocation2 + $0xf8] sm:$0xff] %v1969
      %2083 = vst [vmem:[#allocation2 + $0x100] sm:$0xff] %v1972
      %2084 = vst [vmem:[#allocation2 + $0x108] sm:$0xff] %v1974
      %2085 = vst [vmem:[#allocation2 + $0x110] sm:$0xff] %v1977
      %2086 = vst [vmem:[#allocation2 + $0x118] sm:$0xff] %v1979
      %2087 = vst [vmem:[#allocation2 + $0x120] sm:$0xff] %v1982
      %2088 = vst [vmem:[#allocation2 + $0x128] sm:$0xff] %v1984
      %2089 = vst [vmem:[#allocation2 + $0x130] sm:$0xff] %v1987
      %2090 = vst [vmem:[#allocation2 + $0x138] sm:$0xff] %v1989
      %2091 = vst [vmem:[#allocation2 + $0x140] sm:$0xff] %v1992
      %2092 = vst [vmem:[#allocation2 + $0x148] sm:$0xff] %v1994
      %2093 = vst [vmem:[#allocation2 + $0x150] sm:$0xff] %v1997
      %2094 = vst [vmem:[#allocation2 + $0x158] sm:$0xff] %v1999
      %2095 = vst [vmem:[#allocation2 + $0x160] sm:$0xff] %v2002
      %2096 = vst [vmem:[#allocation2 + $0x168] sm:$0xff] %v2004
      %2097 = vst [vmem:[#allocation2 + $0x170] sm:$0xff] %v2007
      %2098 = vst [vmem:[#allocation2 + $0x178] sm:$0xff] %v2009
      %2099 = vst [vmem:[#allocation2 + $0x180] sm:$0xff] %v2012
      %2100 = vst [vmem:[#allocation2 + $0x188] sm:$0xff] %v2014
      %2101 = vst [vmem:[#allocation2 + $0x190] sm:$0xff] %v2017
      %2102 = vst [vmem:[#allocation2 + $0x198] sm:$0xff] %v2019
      %2103 = vst [vmem:[#allocation2 + $0x1a0] sm:$0xff] %v2022
      %2104 = vst [vmem:[#allocation2 + $0x1a8] sm:$0xff] %v2024
      %2105 = vst [vmem:[#allocation2 + $0x1b0] sm:$0xff] %v2027
      %2106 = vst [vmem:[#allocation2 + $0x1b8] sm:$0xff] %v2029
      %2107 = vst [vmem:[#allocation2 + $0x1c0] sm:$0xff] %v2032
      %2108 = vst [vmem:[#allocation2 + $0x1c8] sm:$0xff] %v2034
      %2109 = vst [vmem:[#allocation2 + $0x1d0] sm:$0xff] %v2037
      %2110 = vst [vmem:[#allocation2 + $0x1d8] sm:$0xff] %v2039
      %2111 = vst [vmem:[#allocation2 + $0x1e0] sm:$0xff] %v2042
      %2112 = vst [vmem:[#allocation2 + $0x1e8] sm:$0xff] %v2044
      %2113 = vst [vmem:[#allocation2 + $0x1f0] sm:$0xff] %v2047
      %2114 = vst [vmem:[#allocation2 + $0x1f8] sm:$0xff] %v2049
      %v2115 = vpack.c.bf16 %v1484, %v1483
      %v2116 = vpack.c.bf16 %v1422, %v1421
      %v2117 = vpack.c.bf16 %v1424, %v1423
      %v2118 = vpack.c.bf16 %v1426, %v1425
      %v2119 = vpack.c.bf16 %v1428, %v1427
      %v2120 = vpack.c.bf16 %v1430, %v1429
      %v2121 = vpack.c.bf16 %v1432, %v1431
      %v2122 = vpack.c.bf16 %v1434, %v1433
      %v2123 = vpack.c.bf16 %v1436, %v1435
      %v2124 = vpack.c.bf16 %v1438, %v1437
      %v2125 = vpack.c.bf16 %v1440, %v1439
      %v2126 = vpack.c.bf16 %v1442, %v1441
      %v2127 = vpack.c.bf16 %v1444, %v1443
      %v2128 = vpack.c.bf16 %v1446, %v1445
      %v2129 = vpack.c.bf16 %v1448, %v1447
      %v2130 = vpack.c.bf16 %v1450, %v1449
      %v2131 = vpack.c.bf16 %v1452, %v1451
      %v2132 = vpack.c.bf16 %v1454, %v1453
      %v2133 = vpack.c.bf16 %v1456, %v1455
      %v2134 = vpack.c.bf16 %v1458, %v1457
      %v2135 = vpack.c.bf16 %v1460, %v1459
      %v2136 = vpack.c.bf16 %v1462, %v1461
      %v2137 = vpack.c.bf16 %v1464, %v1463
      %v2138 = vpack.c.bf16 %v1466, %v1465
      %v2139 = vpack.c.bf16 %v1468, %v1467
      %v2140 = vpack.c.bf16 %v1470, %v1469
      %v2141 = vpack.c.bf16 %v1472, %v1471
      %v2142 = vpack.c.bf16 %v1474, %v1473
      %v2143 = vpack.c.bf16 %v1476, %v1475
      %v2144 = vpack.c.bf16 %v1478, %v1477
      %v2145 = vpack.c.bf16 %v1480, %v1479
      %v2146 = vpack.c.bf16 %v1482, %v1481
      %s2147 = scalar_lea.vmem %s4, 64
      %v2148 = vld [vmem:[%s2147] sm:$0xf]
      %v2149 = vld [vmem:[%s2147 + $0x4] sm:$0xf]
      %v2150 = vld [vmem:[%s2147 + $0x8] sm:$0xf]
      %v2151 = vld [vmem:[%s2147 + $0xc] sm:$0xf]
      %v2152 = vld [vmem:[%s2147 + $0x10] sm:$0xf]
      %v2153 = vld [vmem:[%s2147 + $0x14] sm:$0xf]
      %v2154 = vld [vmem:[%s2147 + $0x18] sm:$0xf]
      %v2155 = vld [vmem:[%s2147 + $0x1c] sm:$0xf]
      %v2156 = vld [vmem:[%s2147 + $0x20] sm:$0xf]
      %v2157 = vld [vmem:[%s2147 + $0x24] sm:$0xf]
      %v2158 = vld [vmem:[%s2147 + $0x28] sm:$0xf]
      %v2159 = vld [vmem:[%s2147 + $0x2c] sm:$0xf]
      %v2160 = vld [vmem:[%s2147 + $0x30] sm:$0xf]
      %v2161 = vld [vmem:[%s2147 + $0x34] sm:$0xf]
      %v2162 = vld [vmem:[%s2147 + $0x38] sm:$0xf]
      %v2163 = vld [vmem:[%s2147 + $0x3c] sm:$0xf]
      %v2180 = vunpack.c.l.b16 %v2148
      %v2181 = vunpack.c.l.b16 %v2149
      %v2182 = vunpack.c.l.b16 %v2150
      %v2183 = vunpack.c.l.b16 %v2151
      %v2184 = vunpack.c.l.b16 %v2152
      %v2185 = vunpack.c.l.b16 %v2153
      %v2186 = vunpack.c.l.b16 %v2154
      %v2187 = vunpack.c.l.b16 %v2155
      %v2188 = vunpack.c.l.b16 %v2156
      %v2189 = vunpack.c.l.b16 %v2157
      %v2190 = vunpack.c.l.b16 %v2158
      %v2191 = vunpack.c.l.b16 %v2159
      %v2192 = vunpack.c.l.b16 %v2160
      %v2193 = vunpack.c.l.b16 %v2161
      %v2194 = vunpack.c.l.b16 %v2162
      %v2195 = vunpack.c.l.b16 %v2163
      %v2196 = vpack.c.b16 %v2181, %v2180
      %v2197 = vpack.c.b16 %v2183, %v2182
      %v2198 = vpack.c.b16 %v2185, %v2184
      %v2199 = vpack.c.b16 %v2187, %v2186
      %v2200 = vpack.c.b16 %v2189, %v2188
      %v2201 = vpack.c.b16 %v2191, %v2190
      %v2202 = vpack.c.b16 %v2193, %v2192
      %v2203 = vpack.c.b16 %v2195, %v2194
      %2212 = vmatpush.bf16.msra.mxu0 %v2203
      %2213 = vmatpush.bf16.msra.mxu0 %v2202
      %2214 = vmatpush.bf16.msra.mxu0 %v2201
      %2215 = vmatpush.bf16.msra.mxu0 %v2200
      %2216 = vmatpush.bf16.msra.mxu0 %v2199
      %2217 = vmatpush.bf16.msra.mxu0 %v2198
      %2218 = vmatpush.bf16.msra.mxu0 %v2197
      %2219 = vmatpush.bf16.msra.mxu0 %v2196
      %2220 = vmatmul.bf16.gmra.mxu0 %v2115
      %v2221 = vpop.f32.mrf.mxu0
      %v2222 = vadd.f32 0.0, %v2221
      %v2223 = vpop.f32.mrf.mxu0
      %v2224 = vadd.f32 0.0, %v2223
      %2225 = vmatmul.bf16.gmra.mxu0 %v2116
      %v2226 = vpop.f32.mrf.mxu0
      %v2227 = vadd.f32 0.0, %v2226
      %v2228 = vpop.f32.mrf.mxu0
      %v2229 = vadd.f32 0.0, %v2228
      %2230 = vmatmul.bf16.gmra.mxu0 %v2117
      %v2231 = vpop.f32.mrf.mxu0
      %v2232 = vadd.f32 0.0, %v2231
      %v2233 = vpop.f32.mrf.mxu0
      %v2234 = vadd.f32 0.0, %v2233
      %2235 = vmatmul.bf16.gmra.mxu0 %v2118
      %v2236 = vpop.f32.mrf.mxu0
      %v2237 = vadd.f32 0.0, %v2236
      %v2238 = vpop.f32.mrf.mxu0
      %v2239 = vadd.f32 0.0, %v2238
      %2240 = vmatmul.bf16.gmra.mxu0 %v2119
      %v2241 = vpop.f32.mrf.mxu0
      %v2242 = vadd.f32 0.0, %v2241
      %v2243 = vpop.f32.mrf.mxu0
      %v2244 = vadd.f32 0.0, %v2243
      %2245 = vmatmul.bf16.gmra.mxu0 %v2120
      %v2246 = vpop.f32.mrf.mxu0
      %v2247 = vadd.f32 0.0, %v2246
      %v2248 = vpop.f32.mrf.mxu0
      %v2249 = vadd.f32 0.0, %v2248
      %2250 = vmatmul.bf16.gmra.mxu0 %v2121
      %v2251 = vpop.f32.mrf.mxu0
      %v2252 = vadd.f32 0.0, %v2251
      %v2253 = vpop.f32.mrf.mxu0
      %v2254 = vadd.f32 0.0, %v2253
      %2255 = vmatmul.bf16.gmra.mxu0 %v2122
      %v2256 = vpop.f32.mrf.mxu0
      %v2257 = vadd.f32 0.0, %v2256
      %v2258 = vpop.f32.mrf.mxu0
      %v2259 = vadd.f32 0.0, %v2258
      %2260 = vmatmul.bf16.gmra.mxu0 %v2123
      %v2261 = vpop.f32.mrf.mxu0
      %v2262 = vadd.f32 0.0, %v2261
      %v2263 = vpop.f32.mrf.mxu0
      %v2264 = vadd.f32 0.0, %v2263
      %2265 = vmatmul.bf16.gmra.mxu0 %v2124
      %v2266 = vpop.f32.mrf.mxu0
      %v2267 = vadd.f32 0.0, %v2266
      %v2268 = vpop.f32.mrf.mxu0
      %v2269 = vadd.f32 0.0, %v2268
      %2270 = vmatmul.bf16.gmra.mxu0 %v2125
      %v2271 = vpop.f32.mrf.mxu0
      %v2272 = vadd.f32 0.0, %v2271
      %v2273 = vpop.f32.mrf.mxu0
      %v2274 = vadd.f32 0.0, %v2273
      %2275 = vmatmul.bf16.gmra.mxu0 %v2126
      %v2276 = vpop.f32.mrf.mxu0
      %v2277 = vadd.f32 0.0, %v2276
      %v2278 = vpop.f32.mrf.mxu0
      %v2279 = vadd.f32 0.0, %v2278
      %2280 = vmatmul.bf16.gmra.mxu0 %v2127
      %v2281 = vpop.f32.mrf.mxu0
      %v2282 = vadd.f32 0.0, %v2281
      %v2283 = vpop.f32.mrf.mxu0
      %v2284 = vadd.f32 0.0, %v2283
      %2285 = vmatmul.bf16.gmra.mxu0 %v2128
      %v2286 = vpop.f32.mrf.mxu0
      %v2287 = vadd.f32 0.0, %v2286
      %v2288 = vpop.f32.mrf.mxu0
      %v2289 = vadd.f32 0.0, %v2288
      %2290 = vmatmul.bf16.gmra.mxu0 %v2129
      %v2291 = vpop.f32.mrf.mxu0
      %v2292 = vadd.f32 0.0, %v2291
      %v2293 = vpop.f32.mrf.mxu0
      %v2294 = vadd.f32 0.0, %v2293
      %2295 = vmatmul.bf16.gmra.mxu0 %v2130
      %v2296 = vpop.f32.mrf.mxu0
      %v2297 = vadd.f32 0.0, %v2296
      %v2298 = vpop.f32.mrf.mxu0
      %v2299 = vadd.f32 0.0, %v2298
      %2300 = vmatmul.bf16.gmra.mxu0 %v2131
      %v2301 = vpop.f32.mrf.mxu0
      %v2302 = vadd.f32 0.0, %v2301
      %v2303 = vpop.f32.mrf.mxu0
      %v2304 = vadd.f32 0.0, %v2303
      %2305 = vmatmul.bf16.gmra.mxu0 %v2132
      %v2306 = vpop.f32.mrf.mxu0
      %v2307 = vadd.f32 0.0, %v2306
      %v2308 = vpop.f32.mrf.mxu0
      %v2309 = vadd.f32 0.0, %v2308
      %2310 = vmatmul.bf16.gmra.mxu0 %v2133
      %v2311 = vpop.f32.mrf.mxu0
      %v2312 = vadd.f32 0.0, %v2311
      %v2313 = vpop.f32.mrf.mxu0
      %v2314 = vadd.f32 0.0, %v2313
      %2315 = vmatmul.bf16.gmra.mxu0 %v2134
      %v2316 = vpop.f32.mrf.mxu0
      %v2317 = vadd.f32 0.0, %v2316
      %v2318 = vpop.f32.mrf.mxu0
      %v2319 = vadd.f32 0.0, %v2318
      %2320 = vmatmul.bf16.gmra.mxu0 %v2135
      %v2321 = vpop.f32.mrf.mxu0
      %v2322 = vadd.f32 0.0, %v2321
      %v2323 = vpop.f32.mrf.mxu0
      %v2324 = vadd.f32 0.0, %v2323
      %2325 = vmatmul.bf16.gmra.mxu0 %v2136
      %v2326 = vpop.f32.mrf.mxu0
      %v2327 = vadd.f32 0.0, %v2326
      %v2328 = vpop.f32.mrf.mxu0
      %v2329 = vadd.f32 0.0, %v2328
      %2330 = vmatmul.bf16.gmra.mxu0 %v2137
      %v2331 = vpop.f32.mrf.mxu0
      %v2332 = vadd.f32 0.0, %v2331
      %v2333 = vpop.f32.mrf.mxu0
      %v2334 = vadd.f32 0.0, %v2333
      %2335 = vmatmul.bf16.gmra.mxu0 %v2138
      %v2336 = vpop.f32.mrf.mxu0
      %v2337 = vadd.f32 0.0, %v2336
      %v2338 = vpop.f32.mrf.mxu0
      %v2339 = vadd.f32 0.0, %v2338
      %2340 = vmatmul.bf16.gmra.mxu0 %v2139
      %v2341 = vpop.f32.mrf.mxu0
      %v2342 = vadd.f32 0.0, %v2341
      %v2343 = vpop.f32.mrf.mxu0
      %v2344 = vadd.f32 0.0, %v2343
      %2345 = vmatmul.bf16.gmra.mxu0 %v2140
      %v2346 = vpop.f32.mrf.mxu0
      %v2347 = vadd.f32 0.0, %v2346
      %v2348 = vpop.f32.mrf.mxu0
      %v2349 = vadd.f32 0.0, %v2348
      %2350 = vmatmul.bf16.gmra.mxu0 %v2141
      %v2351 = vpop.f32.mrf.mxu0
      %v2352 = vadd.f32 0.0, %v2351
      %v2353 = vpop.f32.mrf.mxu0
      %v2354 = vadd.f32 0.0, %v2353
      %2355 = vmatmul.bf16.gmra.mxu0 %v2142
      %v2356 = vpop.f32.mrf.mxu0
      %v2357 = vadd.f32 0.0, %v2356
      %v2358 = vpop.f32.mrf.mxu0
      %v2359 = vadd.f32 0.0, %v2358
      %2360 = vmatmul.bf16.gmra.mxu0 %v2143
      %v2361 = vpop.f32.mrf.mxu0
      %v2362 = vadd.f32 0.0, %v2361
      %v2363 = vpop.f32.mrf.mxu0
      %v2364 = vadd.f32 0.0, %v2363
      %2365 = vmatmul.bf16.gmra.mxu0 %v2144
      %v2366 = vpop.f32.mrf.mxu0
      %v2367 = vadd.f32 0.0, %v2366
      %v2368 = vpop.f32.mrf.mxu0
      %v2369 = vadd.f32 0.0, %v2368
      %2370 = vmatmul.bf16.gmra.mxu0 %v2145
      %v2371 = vpop.f32.mrf.mxu0
      %v2372 = vadd.f32 0.0, %v2371
      %v2373 = vpop.f32.mrf.mxu0
      %v2374 = vadd.f32 0.0, %v2373
      %2375 = vmatmul.bf16.gmra.mxu0 %v2146
      %v2376 = vpop.f32.mrf.mxu0
      %v2377 = vadd.f32 0.0, %v2376
      %v2378 = vpop.f32.mrf.mxu0
      %v2379 = vadd.f32 0.0, %v2378
      %2380 = vdwg.mxu0
      %v2381 = vld [vmem:[#allocation2] sm:$0xff]
      %v2382 = vld [vmem:[#allocation2 + $0x8] sm:$0xff]
      %v2383 = vld [vmem:[#allocation2 + $0x10] sm:$0xff]
      %v2384 = vld [vmem:[#allocation2 + $0x18] sm:$0xff]
      %v2385 = vld [vmem:[#allocation2 + $0x20] sm:$0xff]
      %v2386 = vld [vmem:[#allocation2 + $0x28] sm:$0xff]
      %v2387 = vld [vmem:[#allocation2 + $0x30] sm:$0xff]
      %v2388 = vld [vmem:[#allocation2 + $0x38] sm:$0xff]
      %v2389 = vld [vmem:[#allocation2 + $0x40] sm:$0xff]
      %v2390 = vld [vmem:[#allocation2 + $0x48] sm:$0xff]
      %v2391 = vld [vmem:[#allocation2 + $0x50] sm:$0xff]
      %v2392 = vld [vmem:[#allocation2 + $0x58] sm:$0xff]
      %v2393 = vld [vmem:[#allocation2 + $0x60] sm:$0xff]
      %v2394 = vld [vmem:[#allocation2 + $0x68] sm:$0xff]
      %v2395 = vld [vmem:[#allocation2 + $0x70] sm:$0xff]
      %v2396 = vld [vmem:[#allocation2 + $0x78] sm:$0xff]
      %v2397 = vld [vmem:[#allocation2 + $0x80] sm:$0xff]
      %v2398 = vld [vmem:[#allocation2 + $0x88] sm:$0xff]
      %v2399 = vld [vmem:[#allocation2 + $0x90] sm:$0xff]
      %v2400 = vld [vmem:[#allocation2 + $0x98] sm:$0xff]
      %v2401 = vld [vmem:[#allocation2 + $0xa0] sm:$0xff]
      %v2402 = vld [vmem:[#allocation2 + $0xa8] sm:$0xff]
      %v2403 = vld [vmem:[#allocation2 + $0xb0] sm:$0xff]
      %v2404 = vld [vmem:[#allocation2 + $0xb8] sm:$0xff]
      %v2405 = vld [vmem:[#allocation2 + $0xc0] sm:$0xff]
      %v2406 = vld [vmem:[#allocation2 + $0xc8] sm:$0xff]
      %v2407 = vld [vmem:[#allocation2 + $0xd0] sm:$0xff]
      %v2408 = vld [vmem:[#allocation2 + $0xd8] sm:$0xff]
      %v2409 = vld [vmem:[#allocation2 + $0xe0] sm:$0xff]
      %v2410 = vld [vmem:[#allocation2 + $0xe8] sm:$0xff]
      %v2411 = vld [vmem:[#allocation2 + $0xf0] sm:$0xff]
      %v2412 = vld [vmem:[#allocation2 + $0xf8] sm:$0xff]
      %v2413 = vld [vmem:[#allocation2 + $0x100] sm:$0xff]
      %v2414 = vld [vmem:[#allocation2 + $0x108] sm:$0xff]
      %v2415 = vld [vmem:[#allocation2 + $0x110] sm:$0xff]
      %v2416 = vld [vmem:[#allocation2 + $0x118] sm:$0xff]
      %v2417 = vld [vmem:[#allocation2 + $0x120] sm:$0xff]
      %v2418 = vld [vmem:[#allocation2 + $0x128] sm:$0xff]
      %v2419 = vld [vmem:[#allocation2 + $0x130] sm:$0xff]
      %v2420 = vld [vmem:[#allocation2 + $0x138] sm:$0xff]
      %v2421 = vld [vmem:[#allocation2 + $0x140] sm:$0xff]
      %v2422 = vld [vmem:[#allocation2 + $0x148] sm:$0xff]
      %v2423 = vld [vmem:[#allocation2 + $0x150] sm:$0xff]
      %v2424 = vld [vmem:[#allocation2 + $0x158] sm:$0xff]
      %v2425 = vld [vmem:[#allocation2 + $0x160] sm:$0xff]
      %v2426 = vld [vmem:[#allocation2 + $0x168] sm:$0xff]
      %v2427 = vld [vmem:[#allocation2 + $0x170] sm:$0xff]
      %v2428 = vld [vmem:[#allocation2 + $0x178] sm:$0xff]
      %v2429 = vld [vmem:[#allocation2 + $0x180] sm:$0xff]
      %v2430 = vld [vmem:[#allocation2 + $0x188] sm:$0xff]
      %v2431 = vld [vmem:[#allocation2 + $0x190] sm:$0xff]
      %v2432 = vld [vmem:[#allocation2 + $0x198] sm:$0xff]
      %v2433 = vld [vmem:[#allocation2 + $0x1a0] sm:$0xff]
      %v2434 = vld [vmem:[#allocation2 + $0x1a8] sm:$0xff]
      %v2435 = vld [vmem:[#allocation2 + $0x1b0] sm:$0xff]
      %v2436 = vld [vmem:[#allocation2 + $0x1b8] sm:$0xff]
      %v2437 = vld [vmem:[#allocation2 + $0x1c0] sm:$0xff]
      %v2438 = vld [vmem:[#allocation2 + $0x1c8] sm:$0xff]
      %v2439 = vld [vmem:[#allocation2 + $0x1d0] sm:$0xff]
      %v2440 = vld [vmem:[#allocation2 + $0x1d8] sm:$0xff]
      %v2441 = vld [vmem:[#allocation2 + $0x1e0] sm:$0xff]
      %v2442 = vld [vmem:[#allocation2 + $0x1e8] sm:$0xff]
      %v2443 = vld [vmem:[#allocation2 + $0x1f0] sm:$0xff]
      %v2444 = vld [vmem:[#allocation2 + $0x1f8] sm:$0xff]
      %v2445 = vadd.f32 %v2381, %v2222
      %v2446 = vadd.f32 %v2382, %v2224
      %v2447 = vadd.f32 %v2383, %v2227
      %v2448 = vadd.f32 %v2384, %v2229
      %v2449 = vadd.f32 %v2385, %v2232
      %v2450 = vadd.f32 %v2386, %v2234
      %v2451 = vadd.f32 %v2387, %v2237
      %v2452 = vadd.f32 %v2388, %v2239
      %v2453 = vadd.f32 %v2389, %v2242
      %v2454 = vadd.f32 %v2390, %v2244
      %v2455 = vadd.f32 %v2391, %v2247
      %v2456 = vadd.f32 %v2392, %v2249
      %v2457 = vadd.f32 %v2393, %v2252
      %v2458 = vadd.f32 %v2394, %v2254
      %v2459 = vadd.f32 %v2395, %v2257
      %v2460 = vadd.f32 %v2396, %v2259
      %v2461 = vadd.f32 %v2397, %v2262
      %v2462 = vadd.f32 %v2398, %v2264
      %v2463 = vadd.f32 %v2399, %v2267
      %v2464 = vadd.f32 %v2400, %v2269
      %v2465 = vadd.f32 %v2401, %v2272
      %v2466 = vadd.f32 %v2402, %v2274
      %v2467 = vadd.f32 %v2403, %v2277
      %v2468 = vadd.f32 %v2404, %v2279
      %v2469 = vadd.f32 %v2405, %v2282
      %v2470 = vadd.f32 %v2406, %v2284
      %v2471 = vadd.f32 %v2407, %v2287
      %v2472 = vadd.f32 %v2408, %v2289
      %v2473 = vadd.f32 %v2409, %v2292
      %v2474 = vadd.f32 %v2410, %v2294
      %v2475 = vadd.f32 %v2411, %v2297
      %v2476 = vadd.f32 %v2412, %v2299
      %v2477 = vadd.f32 %v2413, %v2302
      %v2478 = vadd.f32 %v2414, %v2304
      %v2479 = vadd.f32 %v2415, %v2307
      %v2480 = vadd.f32 %v2416, %v2309
      %v2481 = vadd.f32 %v2417, %v2312
      %v2482 = vadd.f32 %v2418, %v2314
      %v2483 = vadd.f32 %v2419, %v2317
      %v2484 = vadd.f32 %v2420, %v2319
      %v2485 = vadd.f32 %v2421, %v2322
      %v2486 = vadd.f32 %v2422, %v2324
      %v2487 = vadd.f32 %v2423, %v2327
      %v2488 = vadd.f32 %v2424, %v2329
      %v2489 = vadd.f32 %v2425, %v2332
      %v2490 = vadd.f32 %v2426, %v2334
      %v2491 = vadd.f32 %v2427, %v2337
      %v2492 = vadd.f32 %v2428, %v2339
      %v2493 = vadd.f32 %v2429, %v2342
      %v2494 = vadd.f32 %v2430, %v2344
      %v2495 = vadd.f32 %v2431, %v2347
      %v2496 = vadd.f32 %v2432, %v2349
      %v2497 = vadd.f32 %v2433, %v2352
      %v2498 = vadd.f32 %v2434, %v2354
      %v2499 = vadd.f32 %v2435, %v2357
      %v2500 = vadd.f32 %v2436, %v2359
      %v2501 = vadd.f32 %v2437, %v2362
      %v2502 = vadd.f32 %v2438, %v2364
      %v2503 = vadd.f32 %v2439, %v2367
      %v2504 = vadd.f32 %v2440, %v2369
      %v2505 = vadd.f32 %v2441, %v2372
      %v2506 = vadd.f32 %v2442, %v2374
      %v2507 = vadd.f32 %v2443, %v2377
      %v2508 = vadd.f32 %v2444, %v2379
      %2509 = vst [vmem:[#allocation2] sm:$0xff] %v2445
      %2510 = vst [vmem:[#allocation2 + $0x8] sm:$0xff] %v2446
      %2511 = vst [vmem:[#allocation2 + $0x10] sm:$0xff] %v2447
      %2512 = vst [vmem:[#allocation2 + $0x18] sm:$0xff] %v2448
      %2513 = vst [vmem:[#allocation2 + $0x20] sm:$0xff] %v2449
      %2514 = vst [vmem:[#allocation2 + $0x28] sm:$0xff] %v2450
      %2515 = vst [vmem:[#allocation2 + $0x30] sm:$0xff] %v2451
      %2516 = vst [vmem:[#allocation2 + $0x38] sm:$0xff] %v2452
      %2517 = vst [vmem:[#allocation2 + $0x40] sm:$0xff] %v2453
      %2518 = vst [vmem:[#allocation2 + $0x48] sm:$0xff] %v2454
      %2519 = vst [vmem:[#allocation2 + $0x50] sm:$0xff] %v2455
      %2520 = vst [vmem:[#allocation2 + $0x58] sm:$0xff] %v2456
      %2521 = vst [vmem:[#allocation2 + $0x60] sm:$0xff] %v2457
      %2522 = vst [vmem:[#allocation2 + $0x68] sm:$0xff] %v2458
      %2523 = vst [vmem:[#allocation2 + $0x70] sm:$0xff] %v2459
      %2524 = vst [vmem:[#allocation2 + $0x78] sm:$0xff] %v2460
      %2525 = vst [vmem:[#allocation2 + $0x80] sm:$0xff] %v2461
      %2526 = vst [vmem:[#allocation2 + $0x88] sm:$0xff] %v2462
      %2527 = vst [vmem:[#allocation2 + $0x90] sm:$0xff] %v2463
      %2528 = vst [vmem:[#allocation2 + $0x98] sm:$0xff] %v2464
      %2529 = vst [vmem:[#allocation2 + $0xa0] sm:$0xff] %v2465
      %2530 = vst [vmem:[#allocation2 + $0xa8] sm:$0xff] %v2466
      %2531 = vst [vmem:[#allocation2 + $0xb0] sm:$0xff] %v2467
      %2532 = vst [vmem:[#allocation2 + $0xb8] sm:$0xff] %v2468
      %2533 = vst [vmem:[#allocation2 + $0xc0] sm:$0xff] %v2469
      %2534 = vst [vmem:[#allocation2 + $0xc8] sm:$0xff] %v2470
      %2535 = vst [vmem:[#allocation2 + $0xd0] sm:$0xff] %v2471
      %2536 = vst [vmem:[#allocation2 + $0xd8] sm:$0xff] %v2472
      %2537 = vst [vmem:[#allocation2 + $0xe0] sm:$0xff] %v2473
      %2538 = vst [vmem:[#allocation2 + $0xe8] sm:$0xff] %v2474
      %2539 = vst [vmem:[#allocation2 + $0xf0] sm:$0xff] %v2475
      %2540 = vst [vmem:[#allocation2 + $0xf8] sm:$0xff] %v2476
      %2541 = vst [vmem:[#allocation2 + $0x100] sm:$0xff] %v2477
      %2542 = vst [vmem:[#allocation2 + $0x108] sm:$0xff] %v2478
      %2543 = vst [vmem:[#allocation2 + $0x110] sm:$0xff] %v2479
      %2544 = vst [vmem:[#allocation2 + $0x118] sm:$0xff] %v2480
      %2545 = vst [vmem:[#allocation2 + $0x120] sm:$0xff] %v2481
      %2546 = vst [vmem:[#allocation2 + $0x128] sm:$0xff] %v2482
      %2547 = vst [vmem:[#allocation2 + $0x130] sm:$0xff] %v2483
      %2548 = vst [vmem:[#allocation2 + $0x138] sm:$0xff] %v2484
      %2549 = vst [vmem:[#allocation2 + $0x140] sm:$0xff] %v2485
      %2550 = vst [vmem:[#allocation2 + $0x148] sm:$0xff] %v2486
      %2551 = vst [vmem:[#allocation2 + $0x150] sm:$0xff] %v2487
      %2552 = vst [vmem:[#allocation2 + $0x158] sm:$0xff] %v2488
      %2553 = vst [vmem:[#allocation2 + $0x160] sm:$0xff] %v2489
      %2554 = vst [vmem:[#allocation2 + $0x168] sm:$0xff] %v2490
      %2555 = vst [vmem:[#allocation2 + $0x170] sm:$0xff] %v2491
      %2556 = vst [vmem:[#allocation2 + $0x178] sm:$0xff] %v2492
      %2557 = vst [vmem:[#allocation2 + $0x180] sm:$0xff] %v2493
      %2558 = vst [vmem:[#allocation2 + $0x188] sm:$0xff] %v2494
      %2559 = vst [vmem:[#allocation2 + $0x190] sm:$0xff] %v2495
      %2560 = vst [vmem:[#allocation2 + $0x198] sm:$0xff] %v2496
      %2561 = vst [vmem:[#allocation2 + $0x1a0] sm:$0xff] %v2497
      %2562 = vst [vmem:[#allocation2 + $0x1a8] sm:$0xff] %v2498
      %2563 = vst [vmem:[#allocation2 + $0x1b0] sm:$0xff] %v2499
      %2564 = vst [vmem:[#allocation2 + $0x1b8] sm:$0xff] %v2500
      %2565 = vst [vmem:[#allocation2 + $0x1c0] sm:$0xff] %v2501
      %2566 = vst [vmem:[#allocation2 + $0x1c8] sm:$0xff] %v2502
      %2567 = vst [vmem:[#allocation2 + $0x1d0] sm:$0xff] %v2503
      %2568 = vst [vmem:[#allocation2 + $0x1d8] sm:$0xff] %v2504
      %2569 = vst [vmem:[#allocation2 + $0x1e0] sm:$0xff] %v2505
      %2570 = vst [vmem:[#allocation2 + $0x1e8] sm:$0xff] %v2506
      %2571 = vst [vmem:[#allocation2 + $0x1f0] sm:$0xff] %v2507
      %2572 = vst [vmem:[#allocation2 + $0x1f8] sm:$0xff] %v2508
      %v2573 = vrot.slane %v1421, 1
      %v2574 = vrot.slane %v1422, 1
      %v2575 = vrot.slane %v1423, 1
      %v2576 = vrot.slane %v1424, 1
      %v2577 = vrot.slane %v1425, 1
      %v2578 = vrot.slane %v1426, 1
      %v2579 = vrot.slane %v1427, 1
      %v2580 = vrot.slane %v1428, 1
      %v2581 = vrot.slane %v1429, 1
      %v2582 = vrot.slane %v1430, 1
      %v2583 = vrot.slane %v1431, 1
      %v2584 = vrot.slane %v1432, 1
      %v2585 = vrot.slane %v1433, 1
      %v2586 = vrot.slane %v1434, 1
      %v2587 = vrot.slane %v1435, 1
      %v2588 = vrot.slane %v1436, 1
      %v2589 = vrot.slane %v1437, 1
      %v2590 = vrot.slane %v1438, 1
      %v2591 = vrot.slane %v1439, 1
      %v2592 = vrot.slane %v1440, 1
      %v2593 = vrot.slane %v1441, 1
      %v2594 = vrot.slane %v1442, 1
      %v2595 = vrot.slane %v1443, 1
      %v2596 = vrot.slane %v1444, 1
      %v2597 = vrot.slane %v1445, 1
      %v2598 = vrot.slane %v1446, 1
      %v2599 = vrot.slane %v1447, 1
      %v2600 = vrot.slane %v1448, 1
      %v2601 = vrot.slane %v1449, 1
      %v2602 = vrot.slane %v1450, 1
      %v2603 = vrot.slane %v1451, 1
      %v2604 = vrot.slane %v1452, 1
      %v2605 = vrot.slane %v1453, 1
      %v2606 = vrot.slane %v1454, 1
      %v2607 = vrot.slane %v1455, 1
      %v2608 = vrot.slane %v1456, 1
      %v2609 = vrot.slane %v1457, 1
      %v2610 = vrot.slane %v1458, 1
      %v2611 = vrot.slane %v1459, 1
      %v2612 = vrot.slane %v1460, 1
      %v2613 = vrot.slane %v1461, 1
      %v2614 = vrot.slane %v1462, 1
      %v2615 = vrot.slane %v1463, 1
      %v2616 = vrot.slane %v1464, 1
      %v2617 = vrot.slane %v1465, 1
      %v2618 = vrot.slane %v1466, 1
      %v2619 = vrot.slane %v1467, 1
      %v2620 = vrot.slane %v1468, 1
      %v2621 = vrot.slane %v1469, 1
      %v2622 = vrot.slane %v1470, 1
      %v2623 = vrot.slane %v1471, 1
      %v2624 = vrot.slane %v1472, 1
      %v2625 = vrot.slane %v1473, 1
      %v2626 = vrot.slane %v1474, 1
      %v2627 = vrot.slane %v1475, 1
      %v2628 = vrot.slane %v1476, 1
      %v2629 = vrot.slane %v1477, 1
      %v2630 = vrot.slane %v1478, 1
      %v2631 = vrot.slane %v1479, 1
      %v2632 = vrot.slane %v1480, 1
      %v2633 = vrot.slane %v1481, 1
      %v2634 = vrot.slane %v1482, 1
      %v2635 = vrot.slane %v1483, 1
      %v2636 = vrot.slane %v1484, 1
      %vm2637 = vcmp.lt.s32.totalorder %v1720, 7
      %v2638 = vsel %vm2637, %v2635, %v2636
      %v2639 = vsel %vm2637, %v2634, %v2635
      %v2640 = vsel %vm2637, %v2633, %v2634
      %v2641 = vsel %vm2637, %v2632, %v2633
      %v2642 = vsel %vm2637, %v2631, %v2632
      %v2643 = vsel %vm2637, %v2630, %v2631
      %v2644 = vsel %vm2637, %v2629, %v2630
      %v2645 = vsel %vm2637, %v2628, %v2629
      %v2646 = vsel %vm2637, %v2627, %v2628
      %v2647 = vsel %vm2637, %v2626, %v2627
      %v2648 = vsel %vm2637, %v2625, %v2626
      %v2649 = vsel %vm2637, %v2624, %v2625
      %v2650 = vsel %vm2637, %v2623, %v2624
      %v2651 = vsel %vm2637, %v2622, %v2623
      %v2652 = vsel %vm2637, %v2621, %v2622
      %v2653 = vsel %vm2637, %v2620, %v2621
      %v2654 = vsel %vm2637, %v2619, %v2620
      %v2655 = vsel %vm2637, %v2618, %v2619
      %v2656 = vsel %vm2637, %v2617, %v2618
      %v2657 = vsel %vm2637, %v2616, %v2617
      %v2658 = vsel %vm2637, %v2615, %v2616
      %v2659 = vsel %vm2637, %v2614, %v2615
      %v2660 = vsel %vm2637, %v2613, %v2614
      %v2661 = vsel %vm2637, %v2612, %v2613
      %v2662 = vsel %vm2637, %v2611, %v2612
      %v2663 = vsel %vm2637, %v2610, %v2611
      %v2664 = vsel %vm2637, %v2609, %v2610
      %v2665 = vsel %vm2637, %v2608, %v2609
      %v2666 = vsel %vm2637, %v2607, %v2608
      %v2667 = vsel %vm2637, %v2606, %v2607
      %v2668 = vsel %vm2637, %v2605, %v2606
      %v2669 = vsel %vm2637, %v2604, %v2605
      %v2670 = vsel %vm2637, %v2603, %v2604
      %v2671 = vsel %vm2637, %v2602, %v2603
      %v2672 = vsel %vm2637, %v2601, %v2602
      %v2673 = vsel %vm2637, %v2600, %v2601
      %v2674 = vsel %vm2637, %v2599, %v2600
      %v2675 = vsel %vm2637, %v2598, %v2599
      %v2676 = vsel %vm2637, %v2597, %v2598
      %v2677 = vsel %vm2637, %v2596, %v2597
      %v2678 = vsel %vm2637, %v2595, %v2596
      %v2679 = vsel %vm2637, %v2594, %v2595
      %v2680 = vsel %vm2637, %v2593, %v2594
      %v2681 = vsel %vm2637, %v2592, %v2593
      %v2682 = vsel %vm2637, %v2591, %v2592
      %v2683 = vsel %vm2637, %v2590, %v2591
      %v2684 = vsel %vm2637, %v2589, %v2590
      %v2685 = vsel %vm2637, %v2588, %v2589
      %v2686 = vsel %vm2637, %v2587, %v2588
      %v2687 = vsel %vm2637, %v2586, %v2587
      %v2688 = vsel %vm2637, %v2585, %v2586
      %v2689 = vsel %vm2637, %v2584, %v2585
      %v2690 = vsel %vm2637, %v2583, %v2584
      %v2691 = vsel %vm2637, %v2582, %v2583
      %v2692 = vsel %vm2637, %v2581, %v2582
      %v2693 = vsel %vm2637, %v2580, %v2581
      %v2694 = vsel %vm2637, %v2579, %v2580
      %v2695 = vsel %vm2637, %v2578, %v2579
      %v2696 = vsel %vm2637, %v2577, %v2578
      %v2697 = vsel %vm2637, %v2576, %v2577
      %v2698 = vsel %vm2637, %v2575, %v2576
      %v2699 = vsel %vm2637, %v2574, %v2575
      %v2700 = vsel %vm2637, %v2573, %v2574
      %v2701 = vsel %vm2637, %v2636, %v2573
      %v2702 = vpack.c.bf16 %v2701, %v2638
      %v2703 = vpack.c.bf16 %v2699, %v2700
      %v2704 = vpack.c.bf16 %v2697, %v2698
      %v2705 = vpack.c.bf16 %v2695, %v2696
      %v2706 = vpack.c.bf16 %v2693, %v2694
      %v2707 = vpack.c.bf16 %v2691, %v2692
      %v2708 = vpack.c.bf16 %v2689, %v2690
      %v2709 = vpack.c.bf16 %v2687, %v2688
      %v2710 = vpack.c.bf16 %v2685, %v2686
      %v2711 = vpack.c.bf16 %v2683, %v2684
      %v2712 = vpack.c.bf16 %v2681, %v2682
      %v2713 = vpack.c.bf16 %v2679, %v2680
      %v2714 = vpack.c.bf16 %v2677, %v2678
      %v2715 = vpack.c.bf16 %v2675, %v2676
      %v2716 = vpack.c.bf16 %v2673, %v2674
      %v2717 = vpack.c.bf16 %v2671, %v2672
      %v2718 = vpack.c.bf16 %v2669, %v2670
      %v2719 = vpack.c.bf16 %v2667, %v2668
      %v2720 = vpack.c.bf16 %v2665, %v2666
      %v2721 = vpack.c.bf16 %v2663, %v2664
      %v2722 = vpack.c.bf16 %v2661, %v2662
      %v2723 = vpack.c.bf16 %v2659, %v2660
      %v2724 = vpack.c.bf16 %v2657, %v2658
      %v2725 = vpack.c.bf16 %v2655, %v2656
      %v2726 = vpack.c.bf16 %v2653, %v2654
      %v2727 = vpack.c.bf16 %v2651, %v2652
      %v2728 = vpack.c.bf16 %v2649, %v2650
      %v2729 = vpack.c.bf16 %v2647, %v2648
      %v2730 = vpack.c.bf16 %v2645, %v2646
      %v2731 = vpack.c.bf16 %v2643, %v2644
      %v2732 = vpack.c.bf16 %v2641, %v2642
      %v2733 = vpack.c.bf16 %v2639, %v2640
      %s2734 = scalar_lea.vmem %s4, 128
      %v2735 = vld [vmem:[%s2734] sm:$0xf]
      %v2736 = vld [vmem:[%s2734 + $0x4] sm:$0xf]
      %v2737 = vld [vmem:[%s2734 + $0x8] sm:$0xf]
      %v2738 = vld [vmem:[%s2734 + $0xc] sm:$0xf]
      %v2739 = vld [vmem:[%s2734 + $0x10] sm:$0xf]
      %v2740 = vld [vmem:[%s2734 + $0x14] sm:$0xf]
      %v2741 = vld [vmem:[%s2734 + $0x18] sm:$0xf]
      %v2742 = vld [vmem:[%s2734 + $0x1c] sm:$0xf]
      %v2743 = vld [vmem:[%s2734 + $0x20] sm:$0xf]
      %v2744 = vld [vmem:[%s2734 + $0x24] sm:$0xf]
      %v2745 = vld [vmem:[%s2734 + $0x28] sm:$0xf]
      %v2746 = vld [vmem:[%s2734 + $0x2c] sm:$0xf]
      %v2747 = vld [vmem:[%s2734 + $0x30] sm:$0xf]
      %v2748 = vld [vmem:[%s2734 + $0x34] sm:$0xf]
      %v2749 = vld [vmem:[%s2734 + $0x38] sm:$0xf]
      %v2750 = vld [vmem:[%s2734 + $0x3c] sm:$0xf]
      %v2767 = vunpack.c.l.b16 %v2735
      %v2768 = vunpack.c.l.b16 %v2736
      %v2769 = vunpack.c.l.b16 %v2737
      %v2770 = vunpack.c.l.b16 %v2738
      %v2771 = vunpack.c.l.b16 %v2739
      %v2772 = vunpack.c.l.b16 %v2740
      %v2773 = vunpack.c.l.b16 %v2741
      %v2774 = vunpack.c.l.b16 %v2742
      %v2775 = vunpack.c.l.b16 %v2743
      %v2776 = vunpack.c.l.b16 %v2744
      %v2777 = vunpack.c.l.b16 %v2745
      %v2778 = vunpack.c.l.b16 %v2746
      %v2779 = vunpack.c.l.b16 %v2747
      %v2780 = vunpack.c.l.b16 %v2748
      %v2781 = vunpack.c.l.b16 %v2749
      %v2782 = vunpack.c.l.b16 %v2750
      %v2783 = vpack.c.b16 %v2768, %v2767
      %v2784 = vpack.c.b16 %v2770, %v2769
      %v2785 = vpack.c.b16 %v2772, %v2771
      %v2786 = vpack.c.b16 %v2774, %v2773
      %v2787 = vpack.c.b16 %v2776, %v2775
      %v2788 = vpack.c.b16 %v2778, %v2777
      %v2789 = vpack.c.b16 %v2780, %v2779
      %v2790 = vpack.c.b16 %v2782, %v2781
      %2799 = vmatpush.bf16.msra.mxu0 %v2790
      %2800 = vmatpush.bf16.msra.mxu0 %v2789
      %2801 = vmatpush.bf16.msra.mxu0 %v2788
      %2802 = vmatpush.bf16.msra.mxu0 %v2787
      %2803 = vmatpush.bf16.msra.mxu0 %v2786
      %2804 = vmatpush.bf16.msra.mxu0 %v2785
      %2805 = vmatpush.bf16.msra.mxu0 %v2784
      %2806 = vmatpush.bf16.msra.mxu0 %v2783
      %2807 = vmatmul.bf16.gmra.mxu0 %v2702
      %v2808 = vpop.f32.mrf.mxu0
      %v2809 = vadd.f32 0.0, %v2808
      %v2810 = vpop.f32.mrf.mxu0
      %v2811 = vadd.f32 0.0, %v2810
      %2812 = vmatmul.bf16.gmra.mxu0 %v2703
      %v2813 = vpop.f32.mrf.mxu0
      %v2814 = vadd.f32 0.0, %v2813
      %v2815 = vpop.f32.mrf.mxu0
      %v2816 = vadd.f32 0.0, %v2815
      %2817 = vmatmul.bf16.gmra.mxu0 %v2704
      %v2818 = vpop.f32.mrf.mxu0
      %v2819 = vadd.f32 0.0, %v2818
      %v2820 = vpop.f32.mrf.mxu0
      %v2821 = vadd.f32 0.0, %v2820
      %2822 = vmatmul.bf16.gmra.mxu0 %v2705
      %v2823 = vpop.f32.mrf.mxu0
      %v2824 = vadd.f32 0.0, %v2823
      %v2825 = vpop.f32.mrf.mxu0
      %v2826 = vadd.f32 0.0, %v2825
      %2827 = vmatmul.bf16.gmra.mxu0 %v2706
      %v2828 = vpop.f32.mrf.mxu0
      %v2829 = vadd.f32 0.0, %v2828
      %v2830 = vpop.f32.mrf.mxu0
      %v2831 = vadd.f32 0.0, %v2830
      %2832 = vmatmul.bf16.gmra.mxu0 %v2707
      %v2833 = vpop.f32.mrf.mxu0
      %v2834 = vadd.f32 0.0, %v2833
      %v2835 = vpop.f32.mrf.mxu0
      %v2836 = vadd.f32 0.0, %v2835
      %2837 = vmatmul.bf16.gmra.mxu0 %v2708
      %v2838 = vpop.f32.mrf.mxu0
      %v2839 = vadd.f32 0.0, %v2838
      %v2840 = vpop.f32.mrf.mxu0
      %v2841 = vadd.f32 0.0, %v2840
      %2842 = vmatmul.bf16.gmra.mxu0 %v2709
      %v2843 = vpop.f32.mrf.mxu0
      %v2844 = vadd.f32 0.0, %v2843
      %v2845 = vpop.f32.mrf.mxu0
      %v2846 = vadd.f32 0.0, %v2845
      %2847 = vmatmul.bf16.gmra.mxu0 %v2710
      %v2848 = vpop.f32.mrf.mxu0
      %v2849 = vadd.f32 0.0, %v2848
      %v2850 = vpop.f32.mrf.mxu0
      %v2851 = vadd.f32 0.0, %v2850
      %2852 = vmatmul.bf16.gmra.mxu0 %v2711
      %v2853 = vpop.f32.mrf.mxu0
      %v2854 = vadd.f32 0.0, %v2853
      %v2855 = vpop.f32.mrf.mxu0
      %v2856 = vadd.f32 0.0, %v2855
      %2857 = vmatmul.bf16.gmra.mxu0 %v2712
      %v2858 = vpop.f32.mrf.mxu0
      %v2859 = vadd.f32 0.0, %v2858
      %v2860 = vpop.f32.mrf.mxu0
      %v2861 = vadd.f32 0.0, %v2860
      %2862 = vmatmul.bf16.gmra.mxu0 %v2713
      %v2863 = vpop.f32.mrf.mxu0
      %v2864 = vadd.f32 0.0, %v2863
      %v2865 = vpop.f32.mrf.mxu0
      %v2866 = vadd.f32 0.0, %v2865
      %2867 = vmatmul.bf16.gmra.mxu0 %v2714
      %v2868 = vpop.f32.mrf.mxu0
      %v2869 = vadd.f32 0.0, %v2868
      %v2870 = vpop.f32.mrf.mxu0
      %v2871 = vadd.f32 0.0, %v2870
      %2872 = vmatmul.bf16.gmra.mxu0 %v2715
      %v2873 = vpop.f32.mrf.mxu0
      %v2874 = vadd.f32 0.0, %v2873
      %v2875 = vpop.f32.mrf.mxu0
      %v2876 = vadd.f32 0.0, %v2875
      %2877 = vmatmul.bf16.gmra.mxu0 %v2716
      %v2878 = vpop.f32.mrf.mxu0
      %v2879 = vadd.f32 0.0, %v2878
      %v2880 = vpop.f32.mrf.mxu0
      %v2881 = vadd.f32 0.0, %v2880
      %2882 = vmatmul.bf16.gmra.mxu0 %v2717
      %v2883 = vpop.f32.mrf.mxu0
      %v2884 = vadd.f32 0.0, %v2883
      %v2885 = vpop.f32.mrf.mxu0
      %v2886 = vadd.f32 0.0, %v2885
      %2887 = vmatmul.bf16.gmra.mxu0 %v2718
      %v2888 = vpop.f32.mrf.mxu0
      %v2889 = vadd.f32 0.0, %v2888
      %v2890 = vpop.f32.mrf.mxu0
      %v2891 = vadd.f32 0.0, %v2890
      %2892 = vmatmul.bf16.gmra.mxu0 %v2719
      %v2893 = vpop.f32.mrf.mxu0
      %v2894 = vadd.f32 0.0, %v2893
      %v2895 = vpop.f32.mrf.mxu0
      %v2896 = vadd.f32 0.0, %v2895
      %2897 = vmatmul.bf16.gmra.mxu0 %v2720
      %v2898 = vpop.f32.mrf.mxu0
      %v2899 = vadd.f32 0.0, %v2898
      %v2900 = vpop.f32.mrf.mxu0
      %v2901 = vadd.f32 0.0, %v2900
      %2902 = vmatmul.bf16.gmra.mxu0 %v2721
      %v2903 = vpop.f32.mrf.mxu0
      %v2904 = vadd.f32 0.0, %v2903
      %v2905 = vpop.f32.mrf.mxu0
      %v2906 = vadd.f32 0.0, %v2905
      %2907 = vmatmul.bf16.gmra.mxu0 %v2722
      %v2908 = vpop.f32.mrf.mxu0
      %v2909 = vadd.f32 0.0, %v2908
      %v2910 = vpop.f32.mrf.mxu0
      %v2911 = vadd.f32 0.0, %v2910
      %2912 = vmatmul.bf16.gmra.mxu0 %v2723
      %v2913 = vpop.f32.mrf.mxu0
      %v2914 = vadd.f32 0.0, %v2913
      %v2915 = vpop.f32.mrf.mxu0
      %v2916 = vadd.f32 0.0, %v2915
      %2917 = vmatmul.bf16.gmra.mxu0 %v2724
      %v2918 = vpop.f32.mrf.mxu0
      %v2919 = vadd.f32 0.0, %v2918
      %v2920 = vpop.f32.mrf.mxu0
      %v2921 = vadd.f32 0.0, %v2920
      %2922 = vmatmul.bf16.gmra.mxu0 %v2725
      %v2923 = vpop.f32.mrf.mxu0
      %v2924 = vadd.f32 0.0, %v2923
      %v2925 = vpop.f32.mrf.mxu0
      %v2926 = vadd.f32 0.0, %v2925
      %2927 = vmatmul.bf16.gmra.mxu0 %v2726
      %v2928 = vpop.f32.mrf.mxu0
      %v2929 = vadd.f32 0.0, %v2928
      %v2930 = vpop.f32.mrf.mxu0
      %v2931 = vadd.f32 0.0, %v2930
      %2932 = vmatmul.bf16.gmra.mxu0 %v2727
      %v2933 = vpop.f32.mrf.mxu0
      %v2934 = vadd.f32 0.0, %v2933
      %v2935 = vpop.f32.mrf.mxu0
      %v2936 = vadd.f32 0.0, %v2935
      %2937 = vmatmul.bf16.gmra.mxu0 %v2728
      %v2938 = vpop.f32.mrf.mxu0
      %v2939 = vadd.f32 0.0, %v2938
      %v2940 = vpop.f32.mrf.mxu0
      %v2941 = vadd.f32 0.0, %v2940
      %2942 = vmatmul.bf16.gmra.mxu0 %v2729
      %v2943 = vpop.f32.mrf.mxu0
      %v2944 = vadd.f32 0.0, %v2943
      %v2945 = vpop.f32.mrf.mxu0
      %v2946 = vadd.f32 0.0, %v2945
      %2947 = vmatmul.bf16.gmra.mxu0 %v2730
      %v2948 = vpop.f32.mrf.mxu0
      %v2949 = vadd.f32 0.0, %v2948
      %v2950 = vpop.f32.mrf.mxu0
      %v2951 = vadd.f32 0.0, %v2950
      %2952 = vmatmul.bf16.gmra.mxu0 %v2731
      %v2953 = vpop.f32.mrf.mxu0
      %v2954 = vadd.f32 0.0, %v2953
      %v2955 = vpop.f32.mrf.mxu0
      %v2956 = vadd.f32 0.0, %v2955
      %2957 = vmatmul.bf16.gmra.mxu0 %v2732
      %v2958 = vpop.f32.mrf.mxu0
      %v2959 = vadd.f32 0.0, %v2958
      %v2960 = vpop.f32.mrf.mxu0
      %v2961 = vadd.f32 0.0, %v2960
      %2962 = vmatmul.bf16.gmra.mxu0 %v2733
      %v2963 = vpop.f32.mrf.mxu0
      %v2964 = vadd.f32 0.0, %v2963
      %v2965 = vpop.f32.mrf.mxu0
      %v2966 = vadd.f32 0.0, %v2965
      %2967 = vdwg.mxu0
      %v2968 = vld [vmem:[#allocation2] sm:$0xff]
      %v2969 = vld [vmem:[#allocation2 + $0x8] sm:$0xff]
      %v2970 = vld [vmem:[#allocation2 + $0x10] sm:$0xff]
      %v2971 = vld [vmem:[#allocation2 + $0x18] sm:$0xff]
      %v2972 = vld [vmem:[#allocation2 + $0x20] sm:$0xff]
      %v2973 = vld [vmem:[#allocation2 + $0x28] sm:$0xff]
      %v2974 = vld [vmem:[#allocation2 + $0x30] sm:$0xff]
      %v2975 = vld [vmem:[#allocation2 + $0x38] sm:$0xff]
      %v2976 = vld [vmem:[#allocation2 + $0x40] sm:$0xff]
      %v2977 = vld [vmem:[#allocation2 + $0x48] sm:$0xff]
      %v2978 = vld [vmem:[#allocation2 + $0x50] sm:$0xff]
      %v2979 = vld [vmem:[#allocation2 + $0x58] sm:$0xff]
      %v2980 = vld [vmem:[#allocation2 + $0x60] sm:$0xff]
      %v2981 = vld [vmem:[#allocation2 + $0x68] sm:$0xff]
      %v2982 = vld [vmem:[#allocation2 + $0x70] sm:$0xff]
      %v2983 = vld [vmem:[#allocation2 + $0x78] sm:$0xff]
      %v2984 = vld [vmem:[#allocation2 + $0x80] sm:$0xff]
      %v2985 = vld [vmem:[#allocation2 + $0x88] sm:$0xff]
      %v2986 = vld [vmem:[#allocation2 + $0x90] sm:$0xff]
      %v2987 = vld [vmem:[#allocation2 + $0x98] sm:$0xff]
      %v2988 = vld [vmem:[#allocation2 + $0xa0] sm:$0xff]
      %v2989 = vld [vmem:[#allocation2 + $0xa8] sm:$0xff]
      %v2990 = vld [vmem:[#allocation2 + $0xb0] sm:$0xff]
      %v2991 = vld [vmem:[#allocation2 + $0xb8] sm:$0xff]
      %v2992 = vld [vmem:[#allocation2 + $0xc0] sm:$0xff]
      %v2993 = vld [vmem:[#allocation2 + $0xc8] sm:$0xff]
      %v2994 = vld [vmem:[#allocation2 + $0xd0] sm:$0xff]
      %v2995 = vld [vmem:[#allocation2 + $0xd8] sm:$0xff]
      %v2996 = vld [vmem:[#allocation2 + $0xe0] sm:$0xff]
      %v2997 = vld [vmem:[#allocation2 + $0xe8] sm:$0xff]
      %v2998 = vld [vmem:[#allocation2 + $0xf0] sm:$0xff]
      %v2999 = vld [vmem:[#allocation2 + $0xf8] sm:$0xff]
      %v3000 = vld [vmem:[#allocation2 + $0x100] sm:$0xff]
      %v3001 = vld [vmem:[#allocation2 + $0x108] sm:$0xff]
      %v3002 = vld [vmem:[#allocation2 + $0x110] sm:$0xff]
      %v3003 = vld [vmem:[#allocation2 + $0x118] sm:$0xff]
      %v3004 = vld [vmem:[#allocation2 + $0x120] sm:$0xff]
      %v3005 = vld [vmem:[#allocation2 + $0x128] sm:$0xff]
      %v3006 = vld [vmem:[#allocation2 + $0x130] sm:$0xff]
      %v3007 = vld [vmem:[#allocation2 + $0x138] sm:$0xff]
      %v3008 = vld [vmem:[#allocation2 + $0x140] sm:$0xff]
      %v3009 = vld [vmem:[#allocation2 + $0x148] sm:$0xff]
      %v3010 = vld [vmem:[#allocation2 + $0x150] sm:$0xff]
      %v3011 = vld [vmem:[#allocation2 + $0x158] sm:$0xff]
      %v3012 = vld [vmem:[#allocation2 + $0x160] sm:$0xff]
      %v3013 = vld [vmem:[#allocation2 + $0x168] sm:$0xff]
      %v3014 = vld [vmem:[#allocation2 + $0x170] sm:$0xff]
      %v3015 = vld [vmem:[#allocation2 + $0x178] sm:$0xff]
      %v3016 = vld [vmem:[#allocation2 + $0x180] sm:$0xff]
      %v3017 = vld [vmem:[#allocation2 + $0x188] sm:$0xff]
      %v3018 = vld [vmem:[#allocation2 + $0x190] sm:$0xff]
      %v3019 = vld [vmem:[#allocation2 + $0x198] sm:$0xff]
      %v3020 = vld [vmem:[#allocation2 + $0x1a0] sm:$0xff]
      %v3021 = vld [vmem:[#allocation2 + $0x1a8] sm:$0xff]
      %v3022 = vld [vmem:[#allocation2 + $0x1b0] sm:$0xff]
      %v3023 = vld [vmem:[#allocation2 + $0x1b8] sm:$0xff]
      %v3024 = vld [vmem:[#allocation2 + $0x1c0] sm:$0xff]
      %v3025 = vld [vmem:[#allocation2 + $0x1c8] sm:$0xff]
      %v3026 = vld [vmem:[#allocation2 + $0x1d0] sm:$0xff]
      %v3027 = vld [vmem:[#allocation2 + $0x1d8] sm:$0xff]
      %v3028 = vld [vmem:[#allocation2 + $0x1e0] sm:$0xff]
      %v3029 = vld [vmem:[#allocation2 + $0x1e8] sm:$0xff]
      %v3030 = vld [vmem:[#allocation2 + $0x1f0] sm:$0xff]
      %v3031 = vld [vmem:[#allocation2 + $0x1f8] sm:$0xff]
      %v3032 = vadd.f32 %v2968, %v2809
      %v3033 = vadd.f32 %v2969, %v2811
      %v3034 = vadd.f32 %v2970, %v2814
      %v3035 = vadd.f32 %v2971, %v2816
      %v3036 = vadd.f32 %v2972, %v2819
      %v3037 = vadd.f32 %v2973, %v2821
      %v3038 = vadd.f32 %v2974, %v2824
      %v3039 = vadd.f32 %v2975, %v2826
      %v3040 = vadd.f32 %v2976, %v2829
      %v3041 = vadd.f32 %v2977, %v2831
      %v3042 = vadd.f32 %v2978, %v2834
      %v3043 = vadd.f32 %v2979, %v2836
      %v3044 = vadd.f32 %v2980, %v2839
      %v3045 = vadd.f32 %v2981, %v2841
      %v3046 = vadd.f32 %v2982, %v2844
      %v3047 = vadd.f32 %v2983, %v2846
      %v3048 = vadd.f32 %v2984, %v2849
      %v3049 = vadd.f32 %v2985, %v2851
      %v3050 = vadd.f32 %v2986, %v2854
      %v3051 = vadd.f32 %v2987, %v2856
      %v3052 = vadd.f32 %v2988, %v2859
      %v3053 = vadd.f32 %v2989, %v2861
      %v3054 = vadd.f32 %v2990, %v2864
      %v3055 = vadd.f32 %v2991, %v2866
      %v3056 = vadd.f32 %v2992, %v2869
      %v3057 = vadd.f32 %v2993, %v2871
      %v3058 = vadd.f32 %v2994, %v2874
      %v3059 = vadd.f32 %v2995, %v2876
      %v3060 = vadd.f32 %v2996, %v2879
      %v3061 = vadd.f32 %v2997, %v2881
      %v3062 = vadd.f32 %v2998, %v2884
      %v3063 = vadd.f32 %v2999, %v2886
      %v3064 = vadd.f32 %v3000, %v2889
      %v3065 = vadd.f32 %v3001, %v2891
      %v3066 = vadd.f32 %v3002, %v2894
      %v3067 = vadd.f32 %v3003, %v2896
      %v3068 = vadd.f32 %v3004, %v2899
      %v3069 = vadd.f32 %v3005, %v2901
      %v3070 = vadd.f32 %v3006, %v2904
      %v3071 = vadd.f32 %v3007, %v2906
      %v3072 = vadd.f32 %v3008, %v2909
      %v3073 = vadd.f32 %v3009, %v2911
      %v3074 = vadd.f32 %v3010, %v2914
      %v3075 = vadd.f32 %v3011, %v2916
      %v3076 = vadd.f32 %v3012, %v2919
      %v3077 = vadd.f32 %v3013, %v2921
      %v3078 = vadd.f32 %v3014, %v2924
      %v3079 = vadd.f32 %v3015, %v2926
      %v3080 = vadd.f32 %v3016, %v2929
      %v3081 = vadd.f32 %v3017, %v2931
      %v3082 = vadd.f32 %v3018, %v2934
      %v3083 = vadd.f32 %v3019, %v2936
      %v3084 = vadd.f32 %v3020, %v2939
      %v3085 = vadd.f32 %v3021, %v2941
      %v3086 = vadd.f32 %v3022, %v2944
      %v3087 = vadd.f32 %v3023, %v2946
      %v3088 = vadd.f32 %v3024, %v2949
      %v3089 = vadd.f32 %v3025, %v2951
      %v3090 = vadd.f32 %v3026, %v2954
      %v3091 = vadd.f32 %v3027, %v2956
      %v3092 = vadd.f32 %v3028, %v2959
      %v3093 = vadd.f32 %v3029, %v2961
      %v3094 = vadd.f32 %v3030, %v2964
      %v3095 = vadd.f32 %v3031, %v2966
      %3096 = vst [vmem:[#allocation2] sm:$0xff] %v3032
      %3097 = vst [vmem:[#allocation2 + $0x8] sm:$0xff] %v3033
      %3098 = vst [vmem:[#allocation2 + $0x10] sm:$0xff] %v3034
      %3099 = vst [vmem:[#allocation2 + $0x18] sm:$0xff] %v3035
      %3100 = vst [vmem:[#allocation2 + $0x20] sm:$0xff] %v3036
      %3101 = vst [vmem:[#allocation2 + $0x28] sm:$0xff] %v3037
      %3102 = vst [vmem:[#allocation2 + $0x30] sm:$0xff] %v3038
      %3103 = vst [vmem:[#allocation2 + $0x38] sm:$0xff] %v3039
      %3104 = vst [vmem:[#allocation2 + $0x40] sm:$0xff] %v3040
      %3105 = vst [vmem:[#allocation2 + $0x48] sm:$0xff] %v3041
      %3106 = vst [vmem:[#allocation2 + $0x50] sm:$0xff] %v3042
      %3107 = vst [vmem:[#allocation2 + $0x58] sm:$0xff] %v3043
      %3108 = vst [vmem:[#allocation2 + $0x60] sm:$0xff] %v3044
      %3109 = vst [vmem:[#allocation2 + $0x68] sm:$0xff] %v3045
      %3110 = vst [vmem:[#allocation2 + $0x70] sm:$0xff] %v3046
      %3111 = vst [vmem:[#allocation2 + $0x78] sm:$0xff] %v3047
      %3112 = vst [vmem:[#allocation2 + $0x80] sm:$0xff] %v3048
      %3113 = vst [vmem:[#allocation2 + $0x88] sm:$0xff] %v3049
      %3114 = vst [vmem:[#allocation2 + $0x90] sm:$0xff] %v3050
      %3115 = vst [vmem:[#allocation2 + $0x98] sm:$0xff] %v3051
      %3116 = vst [vmem:[#allocation2 + $0xa0] sm:$0xff] %v3052
      %3117 = vst [vmem:[#allocation2 + $0xa8] sm:$0xff] %v3053
      %3118 = vst [vmem:[#allocation2 + $0xb0] sm:$0xff] %v3054
      %3119 = vst [vmem:[#allocation2 + $0xb8] sm:$0xff] %v3055
      %3120 = vst [vmem:[#allocation2 + $0xc0] sm:$0xff] %v3056
      %3121 = vst [vmem:[#allocation2 + $0xc8] sm:$0xff] %v3057
      %3122 = vst [vmem:[#allocation2 + $0xd0] sm:$0xff] %v3058
      %3123 = vst [vmem:[#allocation2 + $0xd8] sm:$0xff] %v3059
      %3124 = vst [vmem:[#allocation2 + $0xe0] sm:$0xff] %v3060
      %3125 = vst [vmem:[#allocation2 + $0xe8] sm:$0xff] %v3061
      %3126 = vst [vmem:[#allocation2 + $0xf0] sm:$0xff] %v3062
      %3127 = vst [vmem:[#allocation2 + $0xf8] sm:$0xff] %v3063
      %3128 = vst [vmem:[#allocation2 + $0x100] sm:$0xff] %v3064
      %3129 = vst [vmem:[#allocation2 + $0x108] sm:$0xff] %v3065
      %3130 = vst [vmem:[#allocation2 + $0x110] sm:$0xff] %v3066
      %3131 = vst [vmem:[#allocation2 + $0x118] sm:$0xff] %v3067
      %3132 = vst [vmem:[#allocation2 + $0x120] sm:$0xff] %v3068
      %3133 = vst [vmem:[#allocation2 + $0x128] sm:$0xff] %v3069
      %3134 = vst [vmem:[#allocation2 + $0x130] sm:$0xff] %v3070
      %3135 = vst [vmem:[#allocation2 + $0x138] sm:$0xff] %v3071
      %3136 = vst [vmem:[#allocation2 + $0x140] sm:$0xff] %v3072
      %3137 = vst [vmem:[#allocation2 + $0x148] sm:$0xff] %v3073
      %3138 = vst [vmem:[#allocation2 + $0x150] sm:$0xff] %v3074
      %3139 = vst [vmem:[#allocation2 + $0x158] sm:$0xff] %v3075
      %3140 = vst [vmem:[#allocation2 + $0x160] sm:$0xff] %v3076
      %3141 = vst [vmem:[#allocation2 + $0x168] sm:$0xff] %v3077
      %3142 = vst [vmem:[#allocation2 + $0x170] sm:$0xff] %v3078
      %3143 = vst [vmem:[#allocation2 + $0x178] sm:$0xff] %v3079
      %3144 = vst [vmem:[#allocation2 + $0x180] sm:$0xff] %v3080
      %3145 = vst [vmem:[#allocation2 + $0x188] sm:$0xff] %v3081
      %3146 = vst [vmem:[#allocation2 + $0x190] sm:$0xff] %v3082
      %3147 = vst [vmem:[#allocation2 + $0x198] sm:$0xff] %v3083
      %3148 = vst [vmem:[#allocation2 + $0x1a0] sm:$0xff] %v3084
      %3149 = vst [vmem:[#allocation2 + $0x1a8] sm:$0xff] %v3085
      %3150 = vst [vmem:[#allocation2 + $0x1b0] sm:$0xff] %v3086
      %3151 = vst [vmem:[#allocation2 + $0x1b8] sm:$0xff] %v3087
      %3152 = vst [vmem:[#allocation2 + $0x1c0] sm:$0xff] %v3088
      %3153 = vst [vmem:[#allocation2 + $0x1c8] sm:$0xff] %v3089
      %3154 = vst [vmem:[#allocation2 + $0x1d0] sm:$0xff] %v3090
      %3155 = vst [vmem:[#allocation2 + $0x1d8] sm:$0xff] %v3091
      %3156 = vst [vmem:[#allocation2 + $0x1e0] sm:$0xff] %v3092
      %3157 = vst [vmem:[#allocation2 + $0x1e8] sm:$0xff] %v3093
      %3158 = vst [vmem:[#allocation2 + $0x1f0] sm:$0xff] %v3094
      %3159 = vst [vmem:[#allocation2 + $0x1f8] sm:$0xff] %v3095
      %s3160 = scalar_lea.vmem %s4, 192
      %v3161 = vld [vmem:[%s3160] sm:$0xf]
      %v3162 = vld [vmem:[%s3160 + $0x4] sm:$0xf]
      %v3163 = vld [vmem:[%s3160 + $0x8] sm:$0xf]
      %v3164 = vld [vmem:[%s3160 + $0xc] sm:$0xf]
      %v3165 = vld [vmem:[%s3160 + $0x10] sm:$0xf]
      %v3166 = vld [vmem:[%s3160 + $0x14] sm:$0xf]
      %v3167 = vld [vmem:[%s3160 + $0x18] sm:$0xf]
      %v3168 = vld [vmem:[%s3160 + $0x1c] sm:$0xf]
      %v3169 = vld [vmem:[%s3160 + $0x20] sm:$0xf]
      %v3170 = vld [vmem:[%s3160 + $0x24] sm:$0xf]
      %v3171 = vld [vmem:[%s3160 + $0x28] sm:$0xf]
      %v3172 = vld [vmem:[%s3160 + $0x2c] sm:$0xf]
      %v3173 = vld [vmem:[%s3160 + $0x30] sm:$0xf]
      %v3174 = vld [vmem:[%s3160 + $0x34] sm:$0xf]
      %v3175 = vld [vmem:[%s3160 + $0x38] sm:$0xf]
      %v3176 = vld [vmem:[%s3160 + $0x3c] sm:$0xf]
      %v3193 = vunpack.c.l.b16 %v3161
      %v3194 = vunpack.c.l.b16 %v3162
      %v3195 = vunpack.c.l.b16 %v3163
      %v3196 = vunpack.c.l.b16 %v3164
      %v3197 = vunpack.c.l.b16 %v3165
      %v3198 = vunpack.c.l.b16 %v3166
      %v3199 = vunpack.c.l.b16 %v3167
      %v3200 = vunpack.c.l.b16 %v3168
      %v3201 = vunpack.c.l.b16 %v3169
      %v3202 = vunpack.c.l.b16 %v3170
      %v3203 = vunpack.c.l.b16 %v3171
      %v3204 = vunpack.c.l.b16 %v3172
      %v3205 = vunpack.c.l.b16 %v3173
      %v3206 = vunpack.c.l.b16 %v3174
      %v3207 = vunpack.c.l.b16 %v3175
      %v3208 = vunpack.c.l.b16 %v3176
      %v3209 = vpack.c.b16 %v3194, %v3193
      %v3210 = vpack.c.b16 %v3196, %v3195
      %v3211 = vpack.c.b16 %v3198, %v3197
      %v3212 = vpack.c.b16 %v3200, %v3199
      %v3213 = vpack.c.b16 %v3202, %v3201
      %v3214 = vpack.c.b16 %v3204, %v3203
      %v3215 = vpack.c.b16 %v3206, %v3205
      %v3216 = vpack.c.b16 %v3208, %v3207
      %3225 = vmatpush.bf16.msra.mxu0 %v3216
      %3226 = vmatpush.bf16.msra.mxu0 %v3215
      %3227 = vmatpush.bf16.msra.mxu0 %v3214
      %3228 = vmatpush.bf16.msra.mxu0 %v3213
      %3229 = vmatpush.bf16.msra.mxu0 %v3212
      %3230 = vmatpush.bf16.msra.mxu0 %v3211
      %3231 = vmatpush.bf16.msra.mxu0 %v3210
      %3232 = vmatpush.bf16.msra.mxu0 %v3209
      %3233 = vmatmul.bf16.gmra.mxu0 %v1787
      %v3234 = vpop.f32.mrf.mxu0
      %v3235 = vadd.f32 0.0, %v3234
      %v3236 = vpop.f32.mrf.mxu0
      %v3237 = vadd.f32 0.0, %v3236
      %3238 = vmatmul.bf16.gmra.mxu0 %v1788
      %v3239 = vpop.f32.mrf.mxu0
      %v3240 = vadd.f32 0.0, %v3239
      %v3241 = vpop.f32.mrf.mxu0
      %v3242 = vadd.f32 0.0, %v3241
      %3243 = vmatmul.bf16.gmra.mxu0 %v1789
      %v3244 = vpop.f32.mrf.mxu0
      %v3245 = vadd.f32 0.0, %v3244
      %v3246 = vpop.f32.mrf.mxu0
      %v3247 = vadd.f32 0.0, %v3246
      %3248 = vmatmul.bf16.gmra.mxu0 %v1790
      %v3249 = vpop.f32.mrf.mxu0
      %v3250 = vadd.f32 0.0, %v3249
      %v3251 = vpop.f32.mrf.mxu0
      %v3252 = vadd.f32 0.0, %v3251
      %3253 = vmatmul.bf16.gmra.mxu0 %v1791
      %v3254 = vpop.f32.mrf.mxu0
      %v3255 = vadd.f32 0.0, %v3254
      %v3256 = vpop.f32.mrf.mxu0
      %v3257 = vadd.f32 0.0, %v3256
      %3258 = vmatmul.bf16.gmra.mxu0 %v1792
      %v3259 = vpop.f32.mrf.mxu0
      %v3260 = vadd.f32 0.0, %v3259
      %v3261 = vpop.f32.mrf.mxu0
      %v3262 = vadd.f32 0.0, %v3261
      %3263 = vmatmul.bf16.gmra.mxu0 %v1793
      %v3264 = vpop.f32.mrf.mxu0
      %v3265 = vadd.f32 0.0, %v3264
      %v3266 = vpop.f32.mrf.mxu0
      %v3267 = vadd.f32 0.0, %v3266
      %3268 = vmatmul.bf16.gmra.mxu0 %v1794
      %v3269 = vpop.f32.mrf.mxu0
      %v3270 = vadd.f32 0.0, %v3269
      %v3271 = vpop.f32.mrf.mxu0
      %v3272 = vadd.f32 0.0, %v3271
      %3273 = vmatmul.bf16.gmra.mxu0 %v1795
      %v3274 = vpop.f32.mrf.mxu0
      %v3275 = vadd.f32 0.0, %v3274
      %v3276 = vpop.f32.mrf.mxu0
      %v3277 = vadd.f32 0.0, %v3276
      %3278 = vmatmul.bf16.gmra.mxu0 %v1796
      %v3279 = vpop.f32.mrf.mxu0
      %v3280 = vadd.f32 0.0, %v3279
      %v3281 = vpop.f32.mrf.mxu0
      %v3282 = vadd.f32 0.0, %v3281
      %3283 = vmatmul.bf16.gmra.mxu0 %v1797
      %v3284 = vpop.f32.mrf.mxu0
      %v3285 = vadd.f32 0.0, %v3284
      %v3286 = vpop.f32.mrf.mxu0
      %v3287 = vadd.f32 0.0, %v3286
      %3288 = vmatmul.bf16.gmra.mxu0 %v1798
      %v3289 = vpop.f32.mrf.mxu0
      %v3290 = vadd.f32 0.0, %v3289
      %v3291 = vpop.f32.mrf.mxu0
      %v3292 = vadd.f32 0.0, %v3291
      %3293 = vmatmul.bf16.gmra.mxu0 %v1799
      %v3294 = vpop.f32.mrf.mxu0
      %v3295 = vadd.f32 0.0, %v3294
      %v3296 = vpop.f32.mrf.mxu0
      %v3297 = vadd.f32 0.0, %v3296
      %3298 = vmatmul.bf16.gmra.mxu0 %v1800
      %v3299 = vpop.f32.mrf.mxu0
      %v3300 = vadd.f32 0.0, %v3299
      %v3301 = vpop.f32.mrf.mxu0
      %v3302 = vadd.f32 0.0, %v3301
      %3303 = vmatmul.bf16.gmra.mxu0 %v1801
      %v3304 = vpop.f32.mrf.mxu0
      %v3305 = vadd.f32 0.0, %v3304
      %v3306 = vpop.f32.mrf.mxu0
      %v3307 = vadd.f32 0.0, %v3306
      %3308 = vmatmul.bf16.gmra.mxu0 %v1802
      %v3309 = vpop.f32.mrf.mxu0
      %v3310 = vadd.f32 0.0, %v3309
      %v3311 = vpop.f32.mrf.mxu0
      %v3312 = vadd.f32 0.0, %v3311
      %3313 = vmatmul.bf16.gmra.mxu0 %v1803
      %v3314 = vpop.f32.mrf.mxu0
      %v3315 = vadd.f32 0.0, %v3314
      %v3316 = vpop.f32.mrf.mxu0
      %v3317 = vadd.f32 0.0, %v3316
      %3318 = vmatmul.bf16.gmra.mxu0 %v1804
      %v3319 = vpop.f32.mrf.mxu0
      %v3320 = vadd.f32 0.0, %v3319
      %v3321 = vpop.f32.mrf.mxu0
      %v3322 = vadd.f32 0.0, %v3321
      %3323 = vmatmul.bf16.gmra.mxu0 %v1805
      %v3324 = vpop.f32.mrf.mxu0
      %v3325 = vadd.f32 0.0, %v3324
      %v3326 = vpop.f32.mrf.mxu0
      %v3327 = vadd.f32 0.0, %v3326
      %3328 = vmatmul.bf16.gmra.mxu0 %v1806
      %v3329 = vpop.f32.mrf.mxu0
      %v3330 = vadd.f32 0.0, %v3329
      %v3331 = vpop.f32.mrf.mxu0
      %v3332 = vadd.f32 0.0, %v3331
      %3333 = vmatmul.bf16.gmra.mxu0 %v1807
      %v3334 = vpop.f32.mrf.mxu0
      %v3335 = vadd.f32 0.0, %v3334
      %v3336 = vpop.f32.mrf.mxu0
      %v3337 = vadd.f32 0.0, %v3336
      %3338 = vmatmul.bf16.gmra.mxu0 %v1808
      %v3339 = vpop.f32.mrf.mxu0
      %v3340 = vadd.f32 0.0, %v3339
      %v3341 = vpop.f32.mrf.mxu0
      %v3342 = vadd.f32 0.0, %v3341
      %3343 = vmatmul.bf16.gmra.mxu0 %v1809
      %v3344 = vpop.f32.mrf.mxu0
      %v3345 = vadd.f32 0.0, %v3344
      %v3346 = vpop.f32.mrf.mxu0
      %v3347 = vadd.f32 0.0, %v3346
      %3348 = vmatmul.bf16.gmra.mxu0 %v1810
      %v3349 = vpop.f32.mrf.mxu0
      %v3350 = vadd.f32 0.0, %v3349
      %v3351 = vpop.f32.mrf.mxu0
      %v3352 = vadd.f32 0.0, %v3351
      %3353 = vmatmul.bf16.gmra.mxu0 %v1811
      %v3354 = vpop.f32.mrf.mxu0
      %v3355 = vadd.f32 0.0, %v3354
      %v3356 = vpop.f32.mrf.mxu0
      %v3357 = vadd.f32 0.0, %v3356
      %3358 = vmatmul.bf16.gmra.mxu0 %v1812
      %v3359 = vpop.f32.mrf.mxu0
      %v3360 = vadd.f32 0.0, %v3359
      %v3361 = vpop.f32.mrf.mxu0
      %v3362 = vadd.f32 0.0, %v3361
      %3363 = vmatmul.bf16.gmra.mxu0 %v1813
      %v3364 = vpop.f32.mrf.mxu0
      %v3365 = vadd.f32 0.0, %v3364
      %v3366 = vpop.f32.mrf.mxu0
      %v3367 = vadd.f32 0.0, %v3366
      %3368 = vmatmul.bf16.gmra.mxu0 %v1814
      %v3369 = vpop.f32.mrf.mxu0
      %v3370 = vadd.f32 0.0, %v3369
      %v3371 = vpop.f32.mrf.mxu0
      %v3372 = vadd.f32 0.0, %v3371
      %3373 = vmatmul.bf16.gmra.mxu0 %v1815
      %v3374 = vpop.f32.mrf.mxu0
      %v3375 = vadd.f32 0.0, %v3374
      %v3376 = vpop.f32.mrf.mxu0
      %v3377 = vadd.f32 0.0, %v3376
      %3378 = vmatmul.bf16.gmra.mxu0 %v1816
      %v3379 = vpop.f32.mrf.mxu0
      %v3380 = vadd.f32 0.0, %v3379
      %v3381 = vpop.f32.mrf.mxu0
      %v3382 = vadd.f32 0.0, %v3381
      %3383 = vmatmul.bf16.gmra.mxu0 %v1817
      %v3384 = vpop.f32.mrf.mxu0
      %v3385 = vadd.f32 0.0, %v3384
      %v3386 = vpop.f32.mrf.mxu0
      %v3387 = vadd.f32 0.0, %v3386
      %3388 = vmatmul.bf16.gmra.mxu0 %v1786
      %v3389 = vpop.f32.mrf.mxu0
      %v3390 = vadd.f32 0.0, %v3389
      %v3391 = vpop.f32.mrf.mxu0
      %v3392 = vadd.f32 0.0, %v3391
      %3393 = vdwg.mxu0
      %v3394 = vld [vmem:[#allocation2] sm:$0xff]
      %v3395 = vld [vmem:[#allocation2 + $0x8] sm:$0xff]
      %v3396 = vld [vmem:[#allocation2 + $0x10] sm:$0xff]
      %v3397 = vld [vmem:[#allocation2 + $0x18] sm:$0xff]
      %v3398 = vld [vmem:[#allocation2 + $0x20] sm:$0xff]
      %v3399 = vld [vmem:[#allocation2 + $0x28] sm:$0xff]
      %v3400 = vld [vmem:[#allocation2 + $0x30] sm:$0xff]
      %v3401 = vld [vmem:[#allocation2 + $0x38] sm:$0xff]
      %v3402 = vld [vmem:[#allocation2 + $0x40] sm:$0xff]
      %v3403 = vld [vmem:[#allocation2 + $0x48] sm:$0xff]
      %v3404 = vld [vmem:[#allocation2 + $0x50] sm:$0xff]
      %v3405 = vld [vmem:[#allocation2 + $0x58] sm:$0xff]
      %v3406 = vld [vmem:[#allocation2 + $0x60] sm:$0xff]
      %v3407 = vld [vmem:[#allocation2 + $0x68] sm:$0xff]
      %v3408 = vld [vmem:[#allocation2 + $0x70] sm:$0xff]
      %v3409 = vld [vmem:[#allocation2 + $0x78] sm:$0xff]
      %v3410 = vld [vmem:[#allocation2 + $0x80] sm:$0xff]
      %v3411 = vld [vmem:[#allocation2 + $0x88] sm:$0xff]
      %v3412 = vld [vmem:[#allocation2 + $0x90] sm:$0xff]
      %v3413 = vld [vmem:[#allocation2 + $0x98] sm:$0xff]
      %v3414 = vld [vmem:[#allocation2 + $0xa0] sm:$0xff]
      %v3415 = vld [vmem:[#allocation2 + $0xa8] sm:$0xff]
      %v3416 = vld [vmem:[#allocation2 + $0xb0] sm:$0xff]
      %v3417 = vld [vmem:[#allocation2 + $0xb8] sm:$0xff]
      %v3418 = vld [vmem:[#allocation2 + $0xc0] sm:$0xff]
      %v3419 = vld [vmem:[#allocation2 + $0xc8] sm:$0xff]
      %v3420 = vld [vmem:[#allocation2 + $0xd0] sm:$0xff]
      %v3421 = vld [vmem:[#allocation2 + $0xd8] sm:$0xff]
      %v3422 = vld [vmem:[#allocation2 + $0xe0] sm:$0xff]
      %v3423 = vld [vmem:[#allocation2 + $0xe8] sm:$0xff]
      %v3424 = vld [vmem:[#allocation2 + $0xf0] sm:$0xff]
      %v3425 = vld [vmem:[#allocation2 + $0xf8] sm:$0xff]
      %v3426 = vld [vmem:[#allocation2 + $0x100] sm:$0xff]
      %v3427 = vld [vmem:[#allocation2 + $0x108] sm:$0xff]
      %v3428 = vld [vmem:[#allocation2 + $0x110] sm:$0xff]
      %v3429 = vld [vmem:[#allocation2 + $0x118] sm:$0xff]
      %v3430 = vld [vmem:[#allocation2 + $0x120] sm:$0xff]
      %v3431 = vld [vmem:[#allocation2 + $0x128] sm:$0xff]
      %v3432 = vld [vmem:[#allocation2 + $0x130] sm:$0xff]
      %v3433 = vld [vmem:[#allocation2 + $0x138] sm:$0xff]
      %v3434 = vld [vmem:[#allocation2 + $0x140] sm:$0xff]
      %v3435 = vld [vmem:[#allocation2 + $0x148] sm:$0xff]
      %v3436 = vld [vmem:[#allocation2 + $0x150] sm:$0xff]
      %v3437 = vld [vmem:[#allocation2 + $0x158] sm:$0xff]
      %v3438 = vld [vmem:[#allocation2 + $0x160] sm:$0xff]
      %v3439 = vld [vmem:[#allocation2 + $0x168] sm:$0xff]
      %v3440 = vld [vmem:[#allocation2 + $0x170] sm:$0xff]
      %v3441 = vld [vmem:[#allocation2 + $0x178] sm:$0xff]
      %v3442 = vld [vmem:[#allocation2 + $0x180] sm:$0xff]
      %v3443 = vld [vmem:[#allocation2 + $0x188] sm:$0xff]
      %v3444 = vld [vmem:[#allocation2 + $0x190] sm:$0xff]
      %v3445 = vld [vmem:[#allocation2 + $0x198] sm:$0xff]
      %v3446 = vld [vmem:[#allocation2 + $0x1a0] sm:$0xff]
      %v3447 = vld [vmem:[#allocation2 + $0x1a8] sm:$0xff]
      %v3448 = vld [vmem:[#allocation2 + $0x1b0] sm:$0xff]
      %v3449 = vld [vmem:[#allocation2 + $0x1b8] sm:$0xff]
      %v3450 = vld [vmem:[#allocation2 + $0x1c0] sm:$0xff]
      %v3451 = vld [vmem:[#allocation2 + $0x1c8] sm:$0xff]
      %v3452 = vld [vmem:[#allocation2 + $0x1d0] sm:$0xff]
      %v3453 = vld [vmem:[#allocation2 + $0x1d8] sm:$0xff]
      %v3454 = vld [vmem:[#allocation2 + $0x1e0] sm:$0xff]
      %v3455 = vld [vmem:[#allocation2 + $0x1e8] sm:$0xff]
      %v3456 = vld [vmem:[#allocation2 + $0x1f0] sm:$0xff]
      %v3457 = vld [vmem:[#allocation2 + $0x1f8] sm:$0xff]
      %v3458 = vadd.f32 %v3394, %v3235
      %v3459 = vadd.f32 %v3395, %v3237
      %v3460 = vadd.f32 %v3396, %v3240
      %v3461 = vadd.f32 %v3397, %v3242
      %v3462 = vadd.f32 %v3398, %v3245
      %v3463 = vadd.f32 %v3399, %v3247
      %v3464 = vadd.f32 %v3400, %v3250
      %v3465 = vadd.f32 %v3401, %v3252
      %v3466 = vadd.f32 %v3402, %v3255
      %v3467 = vadd.f32 %v3403, %v3257
      %v3468 = vadd.f32 %v3404, %v3260
      %v3469 = vadd.f32 %v3405, %v3262
      %v3470 = vadd.f32 %v3406, %v3265
      %v3471 = vadd.f32 %v3407, %v3267
      %v3472 = vadd.f32 %v3408, %v3270
      %v3473 = vadd.f32 %v3409, %v3272
      %v3474 = vadd.f32 %v3410, %v3275
      %v3475 = vadd.f32 %v3411, %v3277
      %v3476 = vadd.f32 %v3412, %v3280
      %v3477 = vadd.f32 %v3413, %v3282
      %v3478 = vadd.f32 %v3414, %v3285
      %v3479 = vadd.f32 %v3415, %v3287
      %v3480 = vadd.f32 %v3416, %v3290
      %v3481 = vadd.f32 %v3417, %v3292
      %v3482 = vadd.f32 %v3418, %v3295
      %v3483 = vadd.f32 %v3419, %v3297
      %v3484 = vadd.f32 %v3420, %v3300
      %v3485 = vadd.f32 %v3421, %v3302
      %v3486 = vadd.f32 %v3422, %v3305
      %v3487 = vadd.f32 %v3423, %v3307
      %v3488 = vadd.f32 %v3424, %v3310
      %v3489 = vadd.f32 %v3425, %v3312
      %v3490 = vadd.f32 %v3426, %v3315
      %v3491 = vadd.f32 %v3427, %v3317
      %v3492 = vadd.f32 %v3428, %v3320
      %v3493 = vadd.f32 %v3429, %v3322
      %v3494 = vadd.f32 %v3430, %v3325
      %v3495 = vadd.f32 %v3431, %v3327
      %v3496 = vadd.f32 %v3432, %v3330
      %v3497 = vadd.f32 %v3433, %v3332
      %v3498 = vadd.f32 %v3434, %v3335
      %v3499 = vadd.f32 %v3435, %v3337
      %v3500 = vadd.f32 %v3436, %v3340
      %v3501 = vadd.f32 %v3437, %v3342
      %v3502 = vadd.f32 %v3438, %v3345
      %v3503 = vadd.f32 %v3439, %v3347
      %v3504 = vadd.f32 %v3440, %v3350
      %v3505 = vadd.f32 %v3441, %v3352
      %v3506 = vadd.f32 %v3442, %v3355
      %v3507 = vadd.f32 %v3443, %v3357
      %v3508 = vadd.f32 %v3444, %v3360
      %v3509 = vadd.f32 %v3445, %v3362
      %v3510 = vadd.f32 %v3446, %v3365
      %v3511 = vadd.f32 %v3447, %v3367
      %v3512 = vadd.f32 %v3448, %v3370
      %v3513 = vadd.f32 %v3449, %v3372
      %v3514 = vadd.f32 %v3450, %v3375
      %v3515 = vadd.f32 %v3451, %v3377
      %v3516 = vadd.f32 %v3452, %v3380
      %v3517 = vadd.f32 %v3453, %v3382
      %v3518 = vadd.f32 %v3454, %v3385
      %v3519 = vadd.f32 %v3455, %v3387
      %v3520 = vadd.f32 %v3456, %v3390
      %v3521 = vadd.f32 %v3457, %v3392
      %3522 = vst [vmem:[#allocation2] sm:$0xff] %v3458
      %3523 = vst [vmem:[#allocation2 + $0x8] sm:$0xff] %v3459
      %3524 = vst [vmem:[#allocation2 + $0x10] sm:$0xff] %v3460
      %3525 = vst [vmem:[#allocation2 + $0x18] sm:$0xff] %v3461
      %3526 = vst [vmem:[#allocation2 + $0x20] sm:$0xff] %v3462
      %3527 = vst [vmem:[#allocation2 + $0x28] sm:$0xff] %v3463
      %3528 = vst [vmem:[#allocation2 + $0x30] sm:$0xff] %v3464
      %3529 = vst [vmem:[#allocation2 + $0x38] sm:$0xff] %v3465
      %3530 = vst [vmem:[#allocation2 + $0x40] sm:$0xff] %v3466
      %3531 = vst [vmem:[#allocation2 + $0x48] sm:$0xff] %v3467
      %3532 = vst [vmem:[#allocation2 + $0x50] sm:$0xff] %v3468
      %3533 = vst [vmem:[#allocation2 + $0x58] sm:$0xff] %v3469
      %3534 = vst [vmem:[#allocation2 + $0x60] sm:$0xff] %v3470
      %3535 = vst [vmem:[#allocation2 + $0x68] sm:$0xff] %v3471
      %3536 = vst [vmem:[#allocation2 + $0x70] sm:$0xff] %v3472
      %3537 = vst [vmem:[#allocation2 + $0x78] sm:$0xff] %v3473
      %3538 = vst [vmem:[#allocation2 + $0x80] sm:$0xff] %v3474
      %3539 = vst [vmem:[#allocation2 + $0x88] sm:$0xff] %v3475
      %3540 = vst [vmem:[#allocation2 + $0x90] sm:$0xff] %v3476
      %3541 = vst [vmem:[#allocation2 + $0x98] sm:$0xff] %v3477
      %3542 = vst [vmem:[#allocation2 + $0xa0] sm:$0xff] %v3478
      %3543 = vst [vmem:[#allocation2 + $0xa8] sm:$0xff] %v3479
      %3544 = vst [vmem:[#allocation2 + $0xb0] sm:$0xff] %v3480
      %3545 = vst [vmem:[#allocation2 + $0xb8] sm:$0xff] %v3481
      %3546 = vst [vmem:[#allocation2 + $0xc0] sm:$0xff] %v3482
      %3547 = vst [vmem:[#allocation2 + $0xc8] sm:$0xff] %v3483
      %3548 = vst [vmem:[#allocation2 + $0xd0] sm:$0xff] %v3484
      %3549 = vst [vmem:[#allocation2 + $0xd8] sm:$0xff] %v3485
      %3550 = vst [vmem:[#allocation2 + $0xe0] sm:$0xff] %v3486
      %3551 = vst [vmem:[#allocation2 + $0xe8] sm:$0xff] %v3487
      %3552 = vst [vmem:[#allocation2 + $0xf0] sm:$0xff] %v3488
      %3553 = vst [vmem:[#allocation2 + $0xf8] sm:$0xff] %v3489
      %3554 = vst [vmem:[#allocation2 + $0x100] sm:$0xff] %v3490
      %3555 = vst [vmem:[#allocation2 + $0x108] sm:$0xff] %v3491
      %3556 = vst [vmem:[#allocation2 + $0x110] sm:$0xff] %v3492
      %3557 = vst [vmem:[#allocation2 + $0x118] sm:$0xff] %v3493
      %3558 = vst [vmem:[#allocation2 + $0x120] sm:$0xff] %v3494
      %3559 = vst [vmem:[#allocation2 + $0x128] sm:$0xff] %v3495
      %3560 = vst [vmem:[#allocation2 + $0x130] sm:$0xff] %v3496
      %3561 = vst [vmem:[#allocation2 + $0x138] sm:$0xff] %v3497
      %3562 = vst [vmem:[#allocation2 + $0x140] sm:$0xff] %v3498
      %3563 = vst [vmem:[#allocation2 + $0x148] sm:$0xff] %v3499
      %3564 = vst [vmem:[#allocation2 + $0x150] sm:$0xff] %v3500
      %3565 = vst [vmem:[#allocation2 + $0x158] sm:$0xff] %v3501
      %3566 = vst [vmem:[#allocation2 + $0x160] sm:$0xff] %v3502
      %3567 = vst [vmem:[#allocation2 + $0x168] sm:$0xff] %v3503
      %3568 = vst [vmem:[#allocation2 + $0x170] sm:$0xff] %v3504
      %3569 = vst [vmem:[#allocation2 + $0x178] sm:$0xff] %v3505
      %3570 = vst [vmem:[#allocation2 + $0x180] sm:$0xff] %v3506
      %3571 = vst [vmem:[#allocation2 + $0x188] sm:$0xff] %v3507
      %3572 = vst [vmem:[#allocation2 + $0x190] sm:$0xff] %v3508
      %3573 = vst [vmem:[#allocation2 + $0x198] sm:$0xff] %v3509
      %3574 = vst [vmem:[#allocation2 + $0x1a0] sm:$0xff] %v3510
      %3575 = vst [vmem:[#allocation2 + $0x1a8] sm:$0xff] %v3511
      %3576 = vst [vmem:[#allocation2 + $0x1b0] sm:$0xff] %v3512
      %3577 = vst [vmem:[#allocation2 + $0x1b8] sm:$0xff] %v3513
      %3578 = vst [vmem:[#allocation2 + $0x1c0] sm:$0xff] %v3514
      %3579 = vst [vmem:[#allocation2 + $0x1c8] sm:$0xff] %v3515
      %3580 = vst [vmem:[#allocation2 + $0x1d0] sm:$0xff] %v3516
      %3581 = vst [vmem:[#allocation2 + $0x1d8] sm:$0xff] %v3517
      %3582 = vst [vmem:[#allocation2 + $0x1e0] sm:$0xff] %v3518
      %3583 = vst [vmem:[#allocation2 + $0x1e8] sm:$0xff] %v3519
      %3584 = vst [vmem:[#allocation2 + $0x1f0] sm:$0xff] %v3520
      %3585 = vst [vmem:[#allocation2 + $0x1f8] sm:$0xff] %v3521
      %s3586 = scalar_lea.vmem %s4, 256
      %v3587 = vld [vmem:[%s3586] sm:$0xf]
      %v3588 = vld [vmem:[%s3586 + $0x4] sm:$0xf]
      %v3589 = vld [vmem:[%s3586 + $0x8] sm:$0xf]
      %v3590 = vld [vmem:[%s3586 + $0xc] sm:$0xf]
      %v3591 = vld [vmem:[%s3586 + $0x10] sm:$0xf]
      %v3592 = vld [vmem:[%s3586 + $0x14] sm:$0xf]
      %v3593 = vld [vmem:[%s3586 + $0x18] sm:$0xf]
      %v3594 = vld [vmem:[%s3586 + $0x1c] sm:$0xf]
      %v3595 = vld [vmem:[%s3586 + $0x20] sm:$0xf]
      %v3596 = vld [vmem:[%s3586 + $0x24] sm:$0xf]
      %v3597 = vld [vmem:[%s3586 + $0x28] sm:$0xf]
      %v3598 = vld [vmem:[%s3586 + $0x2c] sm:$0xf]
      %v3599 = vld [vmem:[%s3586 + $0x30] sm:$0xf]
      %v3600 = vld [vmem:[%s3586 + $0x34] sm:$0xf]
      %v3601 = vld [vmem:[%s3586 + $0x38] sm:$0xf]
      %v3602 = vld [vmem:[%s3586 + $0x3c] sm:$0xf]
      %v3619 = vunpack.c.l.b16 %v3587
      %v3620 = vunpack.c.l.b16 %v3588
      %v3621 = vunpack.c.l.b16 %v3589
      %v3622 = vunpack.c.l.b16 %v3590
      %v3623 = vunpack.c.l.b16 %v3591
      %v3624 = vunpack.c.l.b16 %v3592
      %v3625 = vunpack.c.l.b16 %v3593
      %v3626 = vunpack.c.l.b16 %v3594
      %v3627 = vunpack.c.l.b16 %v3595
      %v3628 = vunpack.c.l.b16 %v3596
      %v3629 = vunpack.c.l.b16 %v3597
      %v3630 = vunpack.c.l.b16 %v3598
      %v3631 = vunpack.c.l.b16 %v3599
      %v3632 = vunpack.c.l.b16 %v3600
      %v3633 = vunpack.c.l.b16 %v3601
      %v3634 = vunpack.c.l.b16 %v3602
      %v3635 = vpack.c.b16 %v3620, %v3619
      %v3636 = vpack.c.b16 %v3622, %v3621
      %v3637 = vpack.c.b16 %v3624, %v3623
      %v3638 = vpack.c.b16 %v3626, %v3625
      %v3639 = vpack.c.b16 %v3628, %v3627
      %v3640 = vpack.c.b16 %v3630, %v3629
      %v3641 = vpack.c.b16 %v3632, %v3631
      %v3642 = vpack.c.b16 %v3634, %v3633
      %3651 = vmatpush.bf16.msra.mxu0 %v3642
      %3652 = vmatpush.bf16.msra.mxu0 %v3641
      %3653 = vmatpush.bf16.msra.mxu0 %v3640
      %3654 = vmatpush.bf16.msra.mxu0 %v3639
      %3655 = vmatpush.bf16.msra.mxu0 %v3638
      %3656 = vmatpush.bf16.msra.mxu0 %v3637
      %3657 = vmatpush.bf16.msra.mxu0 %v3636
      %3658 = vmatpush.bf16.msra.mxu0 %v3635
      %3659 = vmatmul.bf16.gmra.mxu0 %v2116
      %v3660 = vpop.f32.mrf.mxu0
      %v3661 = vadd.f32 0.0, %v3660
      %v3662 = vpop.f32.mrf.mxu0
      %v3663 = vadd.f32 0.0, %v3662
      %3664 = vmatmul.bf16.gmra.mxu0 %v2117
      %v3665 = vpop.f32.mrf.mxu0
      %v3666 = vadd.f32 0.0, %v3665
      %v3667 = vpop.f32.mrf.mxu0
      %v3668 = vadd.f32 0.0, %v3667
      %3669 = vmatmul.bf16.gmra.mxu0 %v2118
      %v3670 = vpop.f32.mrf.mxu0
      %v3671 = vadd.f32 0.0, %v3670
      %v3672 = vpop.f32.mrf.mxu0
      %v3673 = vadd.f32 0.0, %v3672
      %3674 = vmatmul.bf16.gmra.mxu0 %v2119
      %v3675 = vpop.f32.mrf.mxu0
      %v3676 = vadd.f32 0.0, %v3675
      %v3677 = vpop.f32.mrf.mxu0
      %v3678 = vadd.f32 0.0, %v3677
      %3679 = vmatmul.bf16.gmra.mxu0 %v2120
      %v3680 = vpop.f32.mrf.mxu0
      %v3681 = vadd.f32 0.0, %v3680
      %v3682 = vpop.f32.mrf.mxu0
      %v3683 = vadd.f32 0.0, %v3682
      %3684 = vmatmul.bf16.gmra.mxu0 %v2121
      %v3685 = vpop.f32.mrf.mxu0
      %v3686 = vadd.f32 0.0, %v3685
      %v3687 = vpop.f32.mrf.mxu0
      %v3688 = vadd.f32 0.0, %v3687
      %3689 = vmatmul.bf16.gmra.mxu0 %v2122
      %v3690 = vpop.f32.mrf.mxu0
      %v3691 = vadd.f32 0.0, %v3690
      %v3692 = vpop.f32.mrf.mxu0
      %v3693 = vadd.f32 0.0, %v3692
      %3694 = vmatmul.bf16.gmra.mxu0 %v2123
      %v3695 = vpop.f32.mrf.mxu0
      %v3696 = vadd.f32 0.0, %v3695
      %v3697 = vpop.f32.mrf.mxu0
      %v3698 = vadd.f32 0.0, %v3697
      %3699 = vmatmul.bf16.gmra.mxu0 %v2124
      %v3700 = vpop.f32.mrf.mxu0
      %v3701 = vadd.f32 0.0, %v3700
      %v3702 = vpop.f32.mrf.mxu0
      %v3703 = vadd.f32 0.0, %v3702
      %3704 = vmatmul.bf16.gmra.mxu0 %v2125
      %v3705 = vpop.f32.mrf.mxu0
      %v3706 = vadd.f32 0.0, %v3705
      %v3707 = vpop.f32.mrf.mxu0
      %v3708 = vadd.f32 0.0, %v3707
      %3709 = vmatmul.bf16.gmra.mxu0 %v2126
      %v3710 = vpop.f32.mrf.mxu0
      %v3711 = vadd.f32 0.0, %v3710
      %v3712 = vpop.f32.mrf.mxu0
      %v3713 = vadd.f32 0.0, %v3712
      %3714 = vmatmul.bf16.gmra.mxu0 %v2127
      %v3715 = vpop.f32.mrf.mxu0
      %v3716 = vadd.f32 0.0, %v3715
      %v3717 = vpop.f32.mrf.mxu0
      %v3718 = vadd.f32 0.0, %v3717
      %3719 = vmatmul.bf16.gmra.mxu0 %v2128
      %v3720 = vpop.f32.mrf.mxu0
      %v3721 = vadd.f32 0.0, %v3720
      %v3722 = vpop.f32.mrf.mxu0
      %v3723 = vadd.f32 0.0, %v3722
      %3724 = vmatmul.bf16.gmra.mxu0 %v2129
      %v3725 = vpop.f32.mrf.mxu0
      %v3726 = vadd.f32 0.0, %v3725
      %v3727 = vpop.f32.mrf.mxu0
      %v3728 = vadd.f32 0.0, %v3727
      %3729 = vmatmul.bf16.gmra.mxu0 %v2130
      %v3730 = vpop.f32.mrf.mxu0
      %v3731 = vadd.f32 0.0, %v3730
      %v3732 = vpop.f32.mrf.mxu0
      %v3733 = vadd.f32 0.0, %v3732
      %3734 = vmatmul.bf16.gmra.mxu0 %v2131
      %v3735 = vpop.f32.mrf.mxu0
      %v3736 = vadd.f32 0.0, %v3735
      %v3737 = vpop.f32.mrf.mxu0
      %v3738 = vadd.f32 0.0, %v3737
      %3739 = vmatmul.bf16.gmra.mxu0 %v2132
      %v3740 = vpop.f32.mrf.mxu0
      %v3741 = vadd.f32 0.0, %v3740
      %v3742 = vpop.f32.mrf.mxu0
      %v3743 = vadd.f32 0.0, %v3742
      %3744 = vmatmul.bf16.gmra.mxu0 %v2133
      %v3745 = vpop.f32.mrf.mxu0
      %v3746 = vadd.f32 0.0, %v3745
      %v3747 = vpop.f32.mrf.mxu0
      %v3748 = vadd.f32 0.0, %v3747
      %3749 = vmatmul.bf16.gmra.mxu0 %v2134
      %v3750 = vpop.f32.mrf.mxu0
      %v3751 = vadd.f32 0.0, %v3750
      %v3752 = vpop.f32.mrf.mxu0
      %v3753 = vadd.f32 0.0, %v3752
      %3754 = vmatmul.bf16.gmra.mxu0 %v2135
      %v3755 = vpop.f32.mrf.mxu0
      %v3756 = vadd.f32 0.0, %v3755
      %v3757 = vpop.f32.mrf.mxu0
      %v3758 = vadd.f32 0.0, %v3757
      %3759 = vmatmul.bf16.gmra.mxu0 %v2136
      %v3760 = vpop.f32.mrf.mxu0
      %v3761 = vadd.f32 0.0, %v3760
      %v3762 = vpop.f32.mrf.mxu0
      %v3763 = vadd.f32 0.0, %v3762
      %3764 = vmatmul.bf16.gmra.mxu0 %v2137
      %v3765 = vpop.f32.mrf.mxu0
      %v3766 = vadd.f32 0.0, %v3765
      %v3767 = vpop.f32.mrf.mxu0
      %v3768 = vadd.f32 0.0, %v3767
      %3769 = vmatmul.bf16.gmra.mxu0 %v2138
      %v3770 = vpop.f32.mrf.mxu0
      %v3771 = vadd.f32 0.0, %v3770
      %v3772 = vpop.f32.mrf.mxu0
      %v3773 = vadd.f32 0.0, %v3772
      %3774 = vmatmul.bf16.gmra.mxu0 %v2139
      %v3775 = vpop.f32.mrf.mxu0
      %v3776 = vadd.f32 0.0, %v3775
      %v3777 = vpop.f32.mrf.mxu0
      %v3778 = vadd.f32 0.0, %v3777
      %3779 = vmatmul.bf16.gmra.mxu0 %v2140
      %v3780 = vpop.f32.mrf.mxu0
      %v3781 = vadd.f32 0.0, %v3780
      %v3782 = vpop.f32.mrf.mxu0
      %v3783 = vadd.f32 0.0, %v3782
      %3784 = vmatmul.bf16.gmra.mxu0 %v2141
      %v3785 = vpop.f32.mrf.mxu0
      %v3786 = vadd.f32 0.0, %v3785
      %v3787 = vpop.f32.mrf.mxu0
      %v3788 = vadd.f32 0.0, %v3787
      %3789 = vmatmul.bf16.gmra.mxu0 %v2142
      %v3790 = vpop.f32.mrf.mxu0
      %v3791 = vadd.f32 0.0, %v3790
      %v3792 = vpop.f32.mrf.mxu0
      %v3793 = vadd.f32 0.0, %v3792
      %3794 = vmatmul.bf16.gmra.mxu0 %v2143
      %v3795 = vpop.f32.mrf.mxu0
      %v3796 = vadd.f32 0.0, %v3795
      %v3797 = vpop.f32.mrf.mxu0
      %v3798 = vadd.f32 0.0, %v3797
      %3799 = vmatmul.bf16.gmra.mxu0 %v2144
      %v3800 = vpop.f32.mrf.mxu0
      %v3801 = vadd.f32 0.0, %v3800
      %v3802 = vpop.f32.mrf.mxu0
      %v3803 = vadd.f32 0.0, %v3802
      %3804 = vmatmul.bf16.gmra.mxu0 %v2145
      %v3805 = vpop.f32.mrf.mxu0
      %v3806 = vadd.f32 0.0, %v3805
      %v3807 = vpop.f32.mrf.mxu0
      %v3808 = vadd.f32 0.0, %v3807
      %3809 = vmatmul.bf16.gmra.mxu0 %v2146
      %v3810 = vpop.f32.mrf.mxu0
      %v3811 = vadd.f32 0.0, %v3810
      %v3812 = vpop.f32.mrf.mxu0
      %v3813 = vadd.f32 0.0, %v3812
      %3814 = vmatmul.bf16.gmra.mxu0 %v2115
      %v3815 = vpop.f32.mrf.mxu0
      %v3816 = vadd.f32 0.0, %v3815
      %v3817 = vpop.f32.mrf.mxu0
      %v3818 = vadd.f32 0.0, %v3817
      %3819 = vdwg.mxu0
      %v3820 = vld [vmem:[#allocation2] sm:$0xff]
      %v3821 = vld [vmem:[#allocation2 + $0x8] sm:$0xff]
      %v3822 = vld [vmem:[#allocation2 + $0x10] sm:$0xff]
      %v3823 = vld [vmem:[#allocation2 + $0x18] sm:$0xff]
      %v3824 = vld [vmem:[#allocation2 + $0x20] sm:$0xff]
      %v3825 = vld [vmem:[#allocation2 + $0x28] sm:$0xff]
      %v3826 = vld [vmem:[#allocation2 + $0x30] sm:$0xff]
      %v3827 = vld [vmem:[#allocation2 + $0x38] sm:$0xff]
      %v3828 = vld [vmem:[#allocation2 + $0x40] sm:$0xff]
      %v3829 = vld [vmem:[#allocation2 + $0x48] sm:$0xff]
      %v3830 = vld [vmem:[#allocation2 + $0x50] sm:$0xff]
      %v3831 = vld [vmem:[#allocation2 + $0x58] sm:$0xff]
      %v3832 = vld [vmem:[#allocation2 + $0x60] sm:$0xff]
      %v3833 = vld [vmem:[#allocation2 + $0x68] sm:$0xff]
      %v3834 = vld [vmem:[#allocation2 + $0x70] sm:$0xff]
      %v3835 = vld [vmem:[#allocation2 + $0x78] sm:$0xff]
      %v3836 = vld [vmem:[#allocation2 + $0x80] sm:$0xff]
      %v3837 = vld [vmem:[#allocation2 + $0x88] sm:$0xff]
      %v3838 = vld [vmem:[#allocation2 + $0x90] sm:$0xff]
      %v3839 = vld [vmem:[#allocation2 + $0x98] sm:$0xff]
      %v3840 = vld [vmem:[#allocation2 + $0xa0] sm:$0xff]
      %v3841 = vld [vmem:[#allocation2 + $0xa8] sm:$0xff]
      %v3842 = vld [vmem:[#allocation2 + $0xb0] sm:$0xff]
      %v3843 = vld [vmem:[#allocation2 + $0xb8] sm:$0xff]
      %v3844 = vld [vmem:[#allocation2 + $0xc0] sm:$0xff]
      %v3845 = vld [vmem:[#allocation2 + $0xc8] sm:$0xff]
      %v3846 = vld [vmem:[#allocation2 + $0xd0] sm:$0xff]
      %v3847 = vld [vmem:[#allocation2 + $0xd8] sm:$0xff]
      %v3848 = vld [vmem:[#allocation2 + $0xe0] sm:$0xff]
      %v3849 = vld [vmem:[#allocation2 + $0xe8] sm:$0xff]
      %v3850 = vld [vmem:[#allocation2 + $0xf0] sm:$0xff]
      %v3851 = vld [vmem:[#allocation2 + $0xf8] sm:$0xff]
      %v3852 = vld [vmem:[#allocation2 + $0x100] sm:$0xff]
      %v3853 = vld [vmem:[#allocation2 + $0x108] sm:$0xff]
      %v3854 = vld [vmem:[#allocation2 + $0x110] sm:$0xff]
      %v3855 = vld [vmem:[#allocation2 + $0x118] sm:$0xff]
      %v3856 = vld [vmem:[#allocation2 + $0x120] sm:$0xff]
      %v3857 = vld [vmem:[#allocation2 + $0x128] sm:$0xff]
      %v3858 = vld [vmem:[#allocation2 + $0x130] sm:$0xff]
      %v3859 = vld [vmem:[#allocation2 + $0x138] sm:$0xff]
      %v3860 = vld [vmem:[#allocation2 + $0x140] sm:$0xff]
      %v3861 = vld [vmem:[#allocation2 + $0x148] sm:$0xff]
      %v3862 = vld [vmem:[#allocation2 + $0x150] sm:$0xff]
      %v3863 = vld [vmem:[#allocation2 + $0x158] sm:$0xff]
      %v3864 = vld [vmem:[#allocation2 + $0x160] sm:$0xff]
      %v3865 = vld [vmem:[#allocation2 + $0x168] sm:$0xff]
      %v3866 = vld [vmem:[#allocation2 + $0x170] sm:$0xff]
      %v3867 = vld [vmem:[#allocation2 + $0x178] sm:$0xff]
      %v3868 = vld [vmem:[#allocation2 + $0x180] sm:$0xff]
      %v3869 = vld [vmem:[#allocation2 + $0x188] sm:$0xff]
      %v3870 = vld [vmem:[#allocation2 + $0x190] sm:$0xff]
      %v3871 = vld [vmem:[#allocation2 + $0x198] sm:$0xff]
      %v3872 = vld [vmem:[#allocation2 + $0x1a0] sm:$0xff]
      %v3873 = vld [vmem:[#allocation2 + $0x1a8] sm:$0xff]
      %v3874 = vld [vmem:[#allocation2 + $0x1b0] sm:$0xff]
      %v3875 = vld [vmem:[#allocation2 + $0x1b8] sm:$0xff]
      %v3876 = vld [vmem:[#allocation2 + $0x1c0] sm:$0xff]
      %v3877 = vld [vmem:[#allocation2 + $0x1c8] sm:$0xff]
      %v3878 = vld [vmem:[#allocation2 + $0x1d0] sm:$0xff]
      %v3879 = vld [vmem:[#allocation2 + $0x1d8] sm:$0xff]
      %v3880 = vld [vmem:[#allocation2 + $0x1e0] sm:$0xff]
      %v3881 = vld [vmem:[#allocation2 + $0x1e8] sm:$0xff]
      %v3882 = vld [vmem:[#allocation2 + $0x1f0] sm:$0xff]
      %v3883 = vld [vmem:[#allocation2 + $0x1f8] sm:$0xff]
      %v3884 = vadd.f32 %v3820, %v3661
      %v3885 = vadd.f32 %v3821, %v3663
      %v3886 = vadd.f32 %v3822, %v3666
      %v3887 = vadd.f32 %v3823, %v3668
      %v3888 = vadd.f32 %v3824, %v3671
      %v3889 = vadd.f32 %v3825, %v3673
      %v3890 = vadd.f32 %v3826, %v3676
      %v3891 = vadd.f32 %v3827, %v3678
      %v3892 = vadd.f32 %v3828, %v3681
      %v3893 = vadd.f32 %v3829, %v3683
      %v3894 = vadd.f32 %v3830, %v3686
      %v3895 = vadd.f32 %v3831, %v3688
      %v3896 = vadd.f32 %v3832, %v3691
      %v3897 = vadd.f32 %v3833, %v3693
      %v3898 = vadd.f32 %v3834, %v3696
      %v3899 = vadd.f32 %v3835, %v3698
      %v3900 = vadd.f32 %v3836, %v3701
      %v3901 = vadd.f32 %v3837, %v3703
      %v3902 = vadd.f32 %v3838, %v3706
      %v3903 = vadd.f32 %v3839, %v3708
      %v3904 = vadd.f32 %v3840, %v3711
      %v3905 = vadd.f32 %v3841, %v3713
      %v3906 = vadd.f32 %v3842, %v3716
      %v3907 = vadd.f32 %v3843, %v3718
      %v3908 = vadd.f32 %v3844, %v3721
      %v3909 = vadd.f32 %v3845, %v3723
      %v3910 = vadd.f32 %v3846, %v3726
      %v3911 = vadd.f32 %v3847, %v3728
      %v3912 = vadd.f32 %v3848, %v3731
      %v3913 = vadd.f32 %v3849, %v3733
      %v3914 = vadd.f32 %v3850, %v3736
      %v3915 = vadd.f32 %v3851, %v3738
      %v3916 = vadd.f32 %v3852, %v3741
      %v3917 = vadd.f32 %v3853, %v3743
      %v3918 = vadd.f32 %v3854, %v3746
      %v3919 = vadd.f32 %v3855, %v3748
      %v3920 = vadd.f32 %v3856, %v3751
      %v3921 = vadd.f32 %v3857, %v3753
      %v3922 = vadd.f32 %v3858, %v3756
      %v3923 = vadd.f32 %v3859, %v3758
      %v3924 = vadd.f32 %v3860, %v3761
      %v3925 = vadd.f32 %v3861, %v3763
      %v3926 = vadd.f32 %v3862, %v3766
      %v3927 = vadd.f32 %v3863, %v3768
      %v3928 = vadd.f32 %v3864, %v3771
      %v3929 = vadd.f32 %v3865, %v3773
      %v3930 = vadd.f32 %v3866, %v3776
      %v3931 = vadd.f32 %v3867, %v3778
      %v3932 = vadd.f32 %v3868, %v3781
      %v3933 = vadd.f32 %v3869, %v3783
      %v3934 = vadd.f32 %v3870, %v3786
      %v3935 = vadd.f32 %v3871, %v3788
      %v3936 = vadd.f32 %v3872, %v3791
      %v3937 = vadd.f32 %v3873, %v3793
      %v3938 = vadd.f32 %v3874, %v3796
      %v3939 = vadd.f32 %v3875, %v3798
      %v3940 = vadd.f32 %v3876, %v3801
      %v3941 = vadd.f32 %v3877, %v3803
      %v3942 = vadd.f32 %v3878, %v3806
      %v3943 = vadd.f32 %v3879, %v3808
      %v3944 = vadd.f32 %v3880, %v3811
      %v3945 = vadd.f32 %v3881, %v3813
      %v3946 = vadd.f32 %v3882, %v3816
      %v3947 = vadd.f32 %v3883, %v3818
      %3948 = vst [vmem:[#allocation2] sm:$0xff] %v3884
      %3949 = vst [vmem:[#allocation2 + $0x8] sm:$0xff] %v3885
      %3950 = vst [vmem:[#allocation2 + $0x10] sm:$0xff] %v3886
      %3951 = vst [vmem:[#allocation2 + $0x18] sm:$0xff] %v3887
      %3952 = vst [vmem:[#allocation2 + $0x20] sm:$0xff] %v3888
      %3953 = vst [vmem:[#allocation2 + $0x28] sm:$0xff] %v3889
      %3954 = vst [vmem:[#allocation2 + $0x30] sm:$0xff] %v3890
      %3955 = vst [vmem:[#allocation2 + $0x38] sm:$0xff] %v3891
      %3956 = vst [vmem:[#allocation2 + $0x40] sm:$0xff] %v3892
      %3957 = vst [vmem:[#allocation2 + $0x48] sm:$0xff] %v3893
      %3958 = vst [vmem:[#allocation2 + $0x50] sm:$0xff] %v3894
      %3959 = vst [vmem:[#allocation2 + $0x58] sm:$0xff] %v3895
      %3960 = vst [vmem:[#allocation2 + $0x60] sm:$0xff] %v3896
      %3961 = vst [vmem:[#allocation2 + $0x68] sm:$0xff] %v3897
      %3962 = vst [vmem:[#allocation2 + $0x70] sm:$0xff] %v3898
      %3963 = vst [vmem:[#allocation2 + $0x78] sm:$0xff] %v3899
      %3964 = vst [vmem:[#allocation2 + $0x80] sm:$0xff] %v3900
      %3965 = vst [vmem:[#allocation2 + $0x88] sm:$0xff] %v3901
      %3966 = vst [vmem:[#allocation2 + $0x90] sm:$0xff] %v3902
      %3967 = vst [vmem:[#allocation2 + $0x98] sm:$0xff] %v3903
      %3968 = vst [vmem:[#allocation2 + $0xa0] sm:$0xff] %v3904
      %3969 = vst [vmem:[#allocation2 + $0xa8] sm:$0xff] %v3905
      %3970 = vst [vmem:[#allocation2 + $0xb0] sm:$0xff] %v3906
      %3971 = vst [vmem:[#allocation2 + $0xb8] sm:$0xff] %v3907
      %3972 = vst [vmem:[#allocation2 + $0xc0] sm:$0xff] %v3908
      %3973 = vst [vmem:[#allocation2 + $0xc8] sm:$0xff] %v3909
      %3974 = vst [vmem:[#allocation2 + $0xd0] sm:$0xff] %v3910
      %3975 = vst [vmem:[#allocation2 + $0xd8] sm:$0xff] %v3911
      %3976 = vst [vmem:[#allocation2 + $0xe0] sm:$0xff] %v3912
      %3977 = vst [vmem:[#allocation2 + $0xe8] sm:$0xff] %v3913
      %3978 = vst [vmem:[#allocation2 + $0xf0] sm:$0xff] %v3914
      %3979 = vst [vmem:[#allocation2 + $0xf8] sm:$0xff] %v3915
      %3980 = vst [vmem:[#allocation2 + $0x100] sm:$0xff] %v3916
      %3981 = vst [vmem:[#allocation2 + $0x108] sm:$0xff] %v3917
      %3982 = vst [vmem:[#allocation2 + $0x110] sm:$0xff] %v3918
      %3983 = vst [vmem:[#allocation2 + $0x118] sm:$0xff] %v3919
      %3984 = vst [vmem:[#allocation2 + $0x120] sm:$0xff] %v3920
      %3985 = vst [vmem:[#allocation2 + $0x128] sm:$0xff] %v3921
      %3986 = vst [vmem:[#allocation2 + $0x130] sm:$0xff] %v3922
      %3987 = vst [vmem:[#allocation2 + $0x138] sm:$0xff] %v3923
      %3988 = vst [vmem:[#allocation2 + $0x140] sm:$0xff] %v3924
      %3989 = vst [vmem:[#allocation2 + $0x148] sm:$0xff] %v3925
      %3990 = vst [vmem:[#allocation2 + $0x150] sm:$0xff] %v3926
      %3991 = vst [vmem:[#allocation2 + $0x158] sm:$0xff] %v3927
      %3992 = vst [vmem:[#allocation2 + $0x160] sm:$0xff] %v3928
      %3993 = vst [vmem:[#allocation2 + $0x168] sm:$0xff] %v3929
      %3994 = vst [vmem:[#allocation2 + $0x170] sm:$0xff] %v3930
      %3995 = vst [vmem:[#allocation2 + $0x178] sm:$0xff] %v3931
      %3996 = vst [vmem:[#allocation2 + $0x180] sm:$0xff] %v3932
      %3997 = vst [vmem:[#allocation2 + $0x188] sm:$0xff] %v3933
      %3998 = vst [vmem:[#allocation2 + $0x190] sm:$0xff] %v3934
      %3999 = vst [vmem:[#allocation2 + $0x198] sm:$0xff] %v3935
      %4000 = vst [vmem:[#allocation2 + $0x1a0] sm:$0xff] %v3936
      %4001 = vst [vmem:[#allocation2 + $0x1a8] sm:$0xff] %v3937
      %4002 = vst [vmem:[#allocation2 + $0x1b0] sm:$0xff] %v3938
      %4003 = vst [vmem:[#allocation2 + $0x1b8] sm:$0xff] %v3939
      %4004 = vst [vmem:[#allocation2 + $0x1c0] sm:$0xff] %v3940
      %4005 = vst [vmem:[#allocation2 + $0x1c8] sm:$0xff] %v3941
      %4006 = vst [vmem:[#allocation2 + $0x1d0] sm:$0xff] %v3942
      %4007 = vst [vmem:[#allocation2 + $0x1d8] sm:$0xff] %v3943
      %4008 = vst [vmem:[#allocation2 + $0x1e0] sm:$0xff] %v3944
      %4009 = vst [vmem:[#allocation2 + $0x1e8] sm:$0xff] %v3945
      %4010 = vst [vmem:[#allocation2 + $0x1f0] sm:$0xff] %v3946
      %4011 = vst [vmem:[#allocation2 + $0x1f8] sm:$0xff] %v3947
      %s4012 = scalar_lea.vmem %s4, 320
      %v4013 = vld [vmem:[%s4012] sm:$0xf]
      %v4014 = vld [vmem:[%s4012 + $0x4] sm:$0xf]
      %v4015 = vld [vmem:[%s4012 + $0x8] sm:$0xf]
      %v4016 = vld [vmem:[%s4012 + $0xc] sm:$0xf]
      %v4017 = vld [vmem:[%s4012 + $0x10] sm:$0xf]
      %v4018 = vld [vmem:[%s4012 + $0x14] sm:$0xf]
      %v4019 = vld [vmem:[%s4012 + $0x18] sm:$0xf]
      %v4020 = vld [vmem:[%s4012 + $0x1c] sm:$0xf]
      %v4021 = vld [vmem:[%s4012 + $0x20] sm:$0xf]
      %v4022 = vld [vmem:[%s4012 + $0x24] sm:$0xf]
      %v4023 = vld [vmem:[%s4012 + $0x28] sm:$0xf]
      %v4024 = vld [vmem:[%s4012 + $0x2c] sm:$0xf]
      %v4025 = vld [vmem:[%s4012 + $0x30] sm:$0xf]
      %v4026 = vld [vmem:[%s4012 + $0x34] sm:$0xf]
      %v4027 = vld [vmem:[%s4012 + $0x38] sm:$0xf]
      %v4028 = vld [vmem:[%s4012 + $0x3c] sm:$0xf]
      %v4045 = vunpack.c.l.b16 %v4013
      %v4046 = vunpack.c.l.b16 %v4014
      %v4047 = vunpack.c.l.b16 %v4015
      %v4048 = vunpack.c.l.b16 %v4016
      %v4049 = vunpack.c.l.b16 %v4017
      %v4050 = vunpack.c.l.b16 %v4018
      %v4051 = vunpack.c.l.b16 %v4019
      %v4052 = vunpack.c.l.b16 %v4020
      %v4053 = vunpack.c.l.b16 %v4021
      %v4054 = vunpack.c.l.b16 %v4022
      %v4055 = vunpack.c.l.b16 %v4023
      %v4056 = vunpack.c.l.b16 %v4024
      %v4057 = vunpack.c.l.b16 %v4025
      %v4058 = vunpack.c.l.b16 %v4026
      %v4059 = vunpack.c.l.b16 %v4027
      %v4060 = vunpack.c.l.b16 %v4028
      %v4061 = vpack.c.b16 %v4046, %v4045
      %v4062 = vpack.c.b16 %v4048, %v4047
      %v4063 = vpack.c.b16 %v4050, %v4049
      %v4064 = vpack.c.b16 %v4052, %v4051
      %v4065 = vpack.c.b16 %v4054, %v4053
      %v4066 = vpack.c.b16 %v4056, %v4055
      %v4067 = vpack.c.b16 %v4058, %v4057
      %v4068 = vpack.c.b16 %v4060, %v4059
      %4077 = vmatpush.bf16.msra.mxu0 %v4068
      %4078 = vmatpush.bf16.msra.mxu0 %v4067
      %4079 = vmatpush.bf16.msra.mxu0 %v4066
      %4080 = vmatpush.bf16.msra.mxu0 %v4065
      %4081 = vmatpush.bf16.msra.mxu0 %v4064
      %4082 = vmatpush.bf16.msra.mxu0 %v4063
      %4083 = vmatpush.bf16.msra.mxu0 %v4062
      %4084 = vmatpush.bf16.msra.mxu0 %v4061
      %4085 = vmatmul.bf16.gmra.mxu0 %v2703
      %v4086 = vpop.f32.mrf.mxu0
      %v4087 = vadd.f32 0.0, %v4086
      %v4088 = vpop.f32.mrf.mxu0
      %v4089 = vadd.f32 0.0, %v4088
      %4090 = vmatmul.bf16.gmra.mxu0 %v2704
      %v4091 = vpop.f32.mrf.mxu0
      %v4092 = vadd.f32 0.0, %v4091
      %v4093 = vpop.f32.mrf.mxu0
      %v4094 = vadd.f32 0.0, %v4093
      %4095 = vmatmul.bf16.gmra.mxu0 %v2705
      %v4096 = vpop.f32.mrf.mxu0
      %v4097 = vadd.f32 0.0, %v4096
      %v4098 = vpop.f32.mrf.mxu0
      %v4099 = vadd.f32 0.0, %v4098
      %4100 = vmatmul.bf16.gmra.mxu0 %v2706
      %v4101 = vpop.f32.mrf.mxu0
      %v4102 = vadd.f32 0.0, %v4101
      %v4103 = vpop.f32.mrf.mxu0
      %v4104 = vadd.f32 0.0, %v4103
      %4105 = vmatmul.bf16.gmra.mxu0 %v2707
      %v4106 = vpop.f32.mrf.mxu0
      %v4107 = vadd.f32 0.0, %v4106
      %v4108 = vpop.f32.mrf.mxu0
      %v4109 = vadd.f32 0.0, %v4108
      %4110 = vmatmul.bf16.gmra.mxu0 %v2708
      %v4111 = vpop.f32.mrf.mxu0
      %v4112 = vadd.f32 0.0, %v4111
      %v4113 = vpop.f32.mrf.mxu0
      %v4114 = vadd.f32 0.0, %v4113
      %4115 = vmatmul.bf16.gmra.mxu0 %v2709
      %v4116 = vpop.f32.mrf.mxu0
      %v4117 = vadd.f32 0.0, %v4116
      %v4118 = vpop.f32.mrf.mxu0
      %v4119 = vadd.f32 0.0, %v4118
      %4120 = vmatmul.bf16.gmra.mxu0 %v2710
      %v4121 = vpop.f32.mrf.mxu0
      %v4122 = vadd.f32 0.0, %v4121
      %v4123 = vpop.f32.mrf.mxu0
      %v4124 = vadd.f32 0.0, %v4123
      %4125 = vmatmul.bf16.gmra.mxu0 %v2711
      %v4126 = vpop.f32.mrf.mxu0
      %v4127 = vadd.f32 0.0, %v4126
      %v4128 = vpop.f32.mrf.mxu0
      %v4129 = vadd.f32 0.0, %v4128
      %4130 = vmatmul.bf16.gmra.mxu0 %v2712
      %v4131 = vpop.f32.mrf.mxu0
      %v4132 = vadd.f32 0.0, %v4131
      %v4133 = vpop.f32.mrf.mxu0
      %v4134 = vadd.f32 0.0, %v4133
      %4135 = vmatmul.bf16.gmra.mxu0 %v2713
      %v4136 = vpop.f32.mrf.mxu0
      %v4137 = vadd.f32 0.0, %v4136
      %v4138 = vpop.f32.mrf.mxu0
      %v4139 = vadd.f32 0.0, %v4138
      %4140 = vmatmul.bf16.gmra.mxu0 %v2714
      %v4141 = vpop.f32.mrf.mxu0
      %v4142 = vadd.f32 0.0, %v4141
      %v4143 = vpop.f32.mrf.mxu0
      %v4144 = vadd.f32 0.0, %v4143
      %4145 = vmatmul.bf16.gmra.mxu0 %v2715
      %v4146 = vpop.f32.mrf.mxu0
      %v4147 = vadd.f32 0.0, %v4146
      %v4148 = vpop.f32.mrf.mxu0
      %v4149 = vadd.f32 0.0, %v4148
      %4150 = vmatmul.bf16.gmra.mxu0 %v2716
      %v4151 = vpop.f32.mrf.mxu0
      %v4152 = vadd.f32 0.0, %v4151
      %v4153 = vpop.f32.mrf.mxu0
      %v4154 = vadd.f32 0.0, %v4153
      %4155 = vmatmul.bf16.gmra.mxu0 %v2717
      %v4156 = vpop.f32.mrf.mxu0
      %v4157 = vadd.f32 0.0, %v4156
      %v4158 = vpop.f32.mrf.mxu0
      %v4159 = vadd.f32 0.0, %v4158
      %4160 = vmatmul.bf16.gmra.mxu0 %v2718
      %v4161 = vpop.f32.mrf.mxu0
      %v4162 = vadd.f32 0.0, %v4161
      %v4163 = vpop.f32.mrf.mxu0
      %v4164 = vadd.f32 0.0, %v4163
      %4165 = vmatmul.bf16.gmra.mxu0 %v2719
      %v4166 = vpop.f32.mrf.mxu0
      %v4167 = vadd.f32 0.0, %v4166
      %v4168 = vpop.f32.mrf.mxu0
      %v4169 = vadd.f32 0.0, %v4168
      %4170 = vmatmul.bf16.gmra.mxu0 %v2720
      %v4171 = vpop.f32.mrf.mxu0
      %v4172 = vadd.f32 0.0, %v4171
      %v4173 = vpop.f32.mrf.mxu0
      %v4174 = vadd.f32 0.0, %v4173
      %4175 = vmatmul.bf16.gmra.mxu0 %v2721
      %v4176 = vpop.f32.mrf.mxu0
      %v4177 = vadd.f32 0.0, %v4176
      %v4178 = vpop.f32.mrf.mxu0
      %v4179 = vadd.f32 0.0, %v4178
      %4180 = vmatmul.bf16.gmra.mxu0 %v2722
      %v4181 = vpop.f32.mrf.mxu0
      %v4182 = vadd.f32 0.0, %v4181
      %v4183 = vpop.f32.mrf.mxu0
      %v4184 = vadd.f32 0.0, %v4183
      %4185 = vmatmul.bf16.gmra.mxu0 %v2723
      %v4186 = vpop.f32.mrf.mxu0
      %v4187 = vadd.f32 0.0, %v4186
      %v4188 = vpop.f32.mrf.mxu0
      %v4189 = vadd.f32 0.0, %v4188
      %4190 = vmatmul.bf16.gmra.mxu0 %v2724
      %v4191 = vpop.f32.mrf.mxu0
      %v4192 = vadd.f32 0.0, %v4191
      %v4193 = vpop.f32.mrf.mxu0
      %v4194 = vadd.f32 0.0, %v4193
      %4195 = vmatmul.bf16.gmra.mxu0 %v2725
      %v4196 = vpop.f32.mrf.mxu0
      %v4197 = vadd.f32 0.0, %v4196
      %v4198 = vpop.f32.mrf.mxu0
      %v4199 = vadd.f32 0.0, %v4198
      %4200 = vmatmul.bf16.gmra.mxu0 %v2726
      %v4201 = vpop.f32.mrf.mxu0
      %v4202 = vadd.f32 0.0, %v4201
      %v4203 = vpop.f32.mrf.mxu0
      %v4204 = vadd.f32 0.0, %v4203
      %4205 = vmatmul.bf16.gmra.mxu0 %v2727
      %v4206 = vpop.f32.mrf.mxu0
      %v4207 = vadd.f32 0.0, %v4206
      %v4208 = vpop.f32.mrf.mxu0
      %v4209 = vadd.f32 0.0, %v4208
      %4210 = vmatmul.bf16.gmra.mxu0 %v2728
      %v4211 = vpop.f32.mrf.mxu0
      %v4212 = vadd.f32 0.0, %v4211
      %v4213 = vpop.f32.mrf.mxu0
      %v4214 = vadd.f32 0.0, %v4213
      %4215 = vmatmul.bf16.gmra.mxu0 %v2729
      %v4216 = vpop.f32.mrf.mxu0
      %v4217 = vadd.f32 0.0, %v4216
      %v4218 = vpop.f32.mrf.mxu0
      %v4219 = vadd.f32 0.0, %v4218
      %4220 = vmatmul.bf16.gmra.mxu0 %v2730
      %v4221 = vpop.f32.mrf.mxu0
      %v4222 = vadd.f32 0.0, %v4221
      %v4223 = vpop.f32.mrf.mxu0
      %v4224 = vadd.f32 0.0, %v4223
      %4225 = vmatmul.bf16.gmra.mxu0 %v2731
      %v4226 = vpop.f32.mrf.mxu0
      %v4227 = vadd.f32 0.0, %v4226
      %v4228 = vpop.f32.mrf.mxu0
      %v4229 = vadd.f32 0.0, %v4228
      %4230 = vmatmul.bf16.gmra.mxu0 %v2732
      %v4231 = vpop.f32.mrf.mxu0
      %v4232 = vadd.f32 0.0, %v4231
      %v4233 = vpop.f32.mrf.mxu0
      %v4234 = vadd.f32 0.0, %v4233
      %4235 = vmatmul.bf16.gmra.mxu0 %v2733
      %v4236 = vpop.f32.mrf.mxu0
      %v4237 = vadd.f32 0.0, %v4236
      %v4238 = vpop.f32.mrf.mxu0
      %v4239 = vadd.f32 0.0, %v4238
      %4240 = vmatmul.bf16.gmra.mxu0 %v2702
      %v4241 = vpop.f32.mrf.mxu0
      %v4242 = vadd.f32 0.0, %v4241
      %v4243 = vpop.f32.mrf.mxu0
      %v4244 = vadd.f32 0.0, %v4243
      %4245 = vdwg.mxu0
      %v4246 = vld [vmem:[#allocation2] sm:$0xff]
      %v4247 = vld [vmem:[#allocation2 + $0x8] sm:$0xff]
      %v4248 = vld [vmem:[#allocation2 + $0x10] sm:$0xff]
      %v4249 = vld [vmem:[#allocation2 + $0x18] sm:$0xff]
      %v4250 = vld [vmem:[#allocation2 + $0x20] sm:$0xff]
      %v4251 = vld [vmem:[#allocation2 + $0x28] sm:$0xff]
      %v4252 = vld [vmem:[#allocation2 + $0x30] sm:$0xff]
      %v4253 = vld [vmem:[#allocation2 + $0x38] sm:$0xff]
      %v4254 = vld [vmem:[#allocation2 + $0x40] sm:$0xff]
      %v4255 = vld [vmem:[#allocation2 + $0x48] sm:$0xff]
      %v4256 = vld [vmem:[#allocation2 + $0x50] sm:$0xff]
      %v4257 = vld [vmem:[#allocation2 + $0x58] sm:$0xff]
      %v4258 = vld [vmem:[#allocation2 + $0x60] sm:$0xff]
      %v4259 = vld [vmem:[#allocation2 + $0x68] sm:$0xff]
      %v4260 = vld [vmem:[#allocation2 + $0x70] sm:$0xff]
      %v4261 = vld [vmem:[#allocation2 + $0x78] sm:$0xff]
      %v4262 = vld [vmem:[#allocation2 + $0x80] sm:$0xff]
      %v4263 = vld [vmem:[#allocation2 + $0x88] sm:$0xff]
      %v4264 = vld [vmem:[#allocation2 + $0x90] sm:$0xff]
      %v4265 = vld [vmem:[#allocation2 + $0x98] sm:$0xff]
      %v4266 = vld [vmem:[#allocation2 + $0xa0] sm:$0xff]
      %v4267 = vld [vmem:[#allocation2 + $0xa8] sm:$0xff]
      %v4268 = vld [vmem:[#allocation2 + $0xb0] sm:$0xff]
      %v4269 = vld [vmem:[#allocation2 + $0xb8] sm:$0xff]
      %v4270 = vld [vmem:[#allocation2 + $0xc0] sm:$0xff]
      %v4271 = vld [vmem:[#allocation2 + $0xc8] sm:$0xff]
      %v4272 = vld [vmem:[#allocation2 + $0xd0] sm:$0xff]
      %v4273 = vld [vmem:[#allocation2 + $0xd8] sm:$0xff]
      %v4274 = vld [vmem:[#allocation2 + $0xe0] sm:$0xff]
      %v4275 = vld [vmem:[#allocation2 + $0xe8] sm:$0xff]
      %v4276 = vld [vmem:[#allocation2 + $0xf0] sm:$0xff]
      %v4277 = vld [vmem:[#allocation2 + $0xf8] sm:$0xff]
      %v4278 = vld [vmem:[#allocation2 + $0x100] sm:$0xff]
      %v4279 = vld [vmem:[#allocation2 + $0x108] sm:$0xff]
      %v4280 = vld [vmem:[#allocation2 + $0x110] sm:$0xff]
      %v4281 = vld [vmem:[#allocation2 + $0x118] sm:$0xff]
      %v4282 = vld [vmem:[#allocation2 + $0x120] sm:$0xff]
      %v4283 = vld [vmem:[#allocation2 + $0x128] sm:$0xff]
      %v4284 = vld [vmem:[#allocation2 + $0x130] sm:$0xff]
      %v4285 = vld [vmem:[#allocation2 + $0x138] sm:$0xff]
      %v4286 = vld [vmem:[#allocation2 + $0x140] sm:$0xff]
      %v4287 = vld [vmem:[#allocation2 + $0x148] sm:$0xff]
      %v4288 = vld [vmem:[#allocation2 + $0x150] sm:$0xff]
      %v4289 = vld [vmem:[#allocation2 + $0x158] sm:$0xff]
      %v4290 = vld [vmem:[#allocation2 + $0x160] sm:$0xff]
      %v4291 = vld [vmem:[#allocation2 + $0x168] sm:$0xff]
      %v4292 = vld [vmem:[#allocation2 + $0x170] sm:$0xff]
      %v4293 = vld [vmem:[#allocation2 + $0x178] sm:$0xff]
      %v4294 = vld [vmem:[#allocation2 + $0x180] sm:$0xff]
      %v4295 = vld [vmem:[#allocation2 + $0x188] sm:$0xff]
      %v4296 = vld [vmem:[#allocation2 + $0x190] sm:$0xff]
      %v4297 = vld [vmem:[#allocation2 + $0x198] sm:$0xff]
      %v4298 = vld [vmem:[#allocation2 + $0x1a0] sm:$0xff]
      %v4299 = vld [vmem:[#allocation2 + $0x1a8] sm:$0xff]
      %v4300 = vld [vmem:[#allocation2 + $0x1b0] sm:$0xff]
      %v4301 = vld [vmem:[#allocation2 + $0x1b8] sm:$0xff]
      %v4302 = vld [vmem:[#allocation2 + $0x1c0] sm:$0xff]
      %v4303 = vld [vmem:[#allocation2 + $0x1c8] sm:$0xff]
      %v4304 = vld [vmem:[#allocation2 + $0x1d0] sm:$0xff]
      %v4305 = vld [vmem:[#allocation2 + $0x1d8] sm:$0xff]
      %v4306 = vld [vmem:[#allocation2 + $0x1e0] sm:$0xff]
      %v4307 = vld [vmem:[#allocation2 + $0x1e8] sm:$0xff]
      %v4308 = vld [vmem:[#allocation2 + $0x1f0] sm:$0xff]
      %v4309 = vld [vmem:[#allocation2 + $0x1f8] sm:$0xff]
      %v4310 = vadd.f32 %v4246, %v4087
      %v4311 = vadd.f32 %v4247, %v4089
      %v4312 = vadd.f32 %v4248, %v4092
      %v4313 = vadd.f32 %v4249, %v4094
      %v4314 = vadd.f32 %v4250, %v4097
      %v4315 = vadd.f32 %v4251, %v4099
      %v4316 = vadd.f32 %v4252, %v4102
      %v4317 = vadd.f32 %v4253, %v4104
      %v4318 = vadd.f32 %v4254, %v4107
      %v4319 = vadd.f32 %v4255, %v4109
      %v4320 = vadd.f32 %v4256, %v4112
      %v4321 = vadd.f32 %v4257, %v4114
      %v4322 = vadd.f32 %v4258, %v4117
      %v4323 = vadd.f32 %v4259, %v4119
      %v4324 = vadd.f32 %v4260, %v4122
      %v4325 = vadd.f32 %v4261, %v4124
      %v4326 = vadd.f32 %v4262, %v4127
      %v4327 = vadd.f32 %v4263, %v4129
      %v4328 = vadd.f32 %v4264, %v4132
      %v4329 = vadd.f32 %v4265, %v4134
      %v4330 = vadd.f32 %v4266, %v4137
      %v4331 = vadd.f32 %v4267, %v4139
      %v4332 = vadd.f32 %v4268, %v4142
      %v4333 = vadd.f32 %v4269, %v4144
      %v4334 = vadd.f32 %v4270, %v4147
      %v4335 = vadd.f32 %v4271, %v4149
      %v4336 = vadd.f32 %v4272, %v4152
      %v4337 = vadd.f32 %v4273, %v4154
      %v4338 = vadd.f32 %v4274, %v4157
      %v4339 = vadd.f32 %v4275, %v4159
      %v4340 = vadd.f32 %v4276, %v4162
      %v4341 = vadd.f32 %v4277, %v4164
      %v4342 = vadd.f32 %v4278, %v4167
      %v4343 = vadd.f32 %v4279, %v4169
      %v4344 = vadd.f32 %v4280, %v4172
      %v4345 = vadd.f32 %v4281, %v4174
      %v4346 = vadd.f32 %v4282, %v4177
      %v4347 = vadd.f32 %v4283, %v4179
      %v4348 = vadd.f32 %v4284, %v4182
      %v4349 = vadd.f32 %v4285, %v4184
      %v4350 = vadd.f32 %v4286, %v4187
      %v4351 = vadd.f32 %v4287, %v4189
      %v4352 = vadd.f32 %v4288, %v4192
      %v4353 = vadd.f32 %v4289, %v4194
      %v4354 = vadd.f32 %v4290, %v4197
      %v4355 = vadd.f32 %v4291, %v4199
      %v4356 = vadd.f32 %v4292, %v4202
      %v4357 = vadd.f32 %v4293, %v4204
      %v4358 = vadd.f32 %v4294, %v4207
      %v4359 = vadd.f32 %v4295, %v4209
      %v4360 = vadd.f32 %v4296, %v4212
      %v4361 = vadd.f32 %v4297, %v4214
      %v4362 = vadd.f32 %v4298, %v4217
      %v4363 = vadd.f32 %v4299, %v4219
      %v4364 = vadd.f32 %v4300, %v4222
      %v4365 = vadd.f32 %v4301, %v4224
      %v4366 = vadd.f32 %v4302, %v4227
      %v4367 = vadd.f32 %v4303, %v4229
      %v4368 = vadd.f32 %v4304, %v4232
      %v4369 = vadd.f32 %v4305, %v4234
      %v4370 = vadd.f32 %v4306, %v4237
      %v4371 = vadd.f32 %v4307, %v4239
      %v4372 = vadd.f32 %v4308, %v4242
      %v4373 = vadd.f32 %v4309, %v4244
      %4374 = vst [vmem:[#allocation2] sm:$0xff] %v4310
      %4375 = vst [vmem:[#allocation2 + $0x8] sm:$0xff] %v4311
      %4376 = vst [vmem:[#allocation2 + $0x10] sm:$0xff] %v4312
      %4377 = vst [vmem:[#allocation2 + $0x18] sm:$0xff] %v4313
      %4378 = vst [vmem:[#allocation2 + $0x20] sm:$0xff] %v4314
      %4379 = vst [vmem:[#allocation2 + $0x28] sm:$0xff] %v4315
      %4380 = vst [vmem:[#allocation2 + $0x30] sm:$0xff] %v4316
      %4381 = vst [vmem:[#allocation2 + $0x38] sm:$0xff] %v4317
      %4382 = vst [vmem:[#allocation2 + $0x40] sm:$0xff] %v4318
      %4383 = vst [vmem:[#allocation2 + $0x48] sm:$0xff] %v4319
      %4384 = vst [vmem:[#allocation2 + $0x50] sm:$0xff] %v4320
      %4385 = vst [vmem:[#allocation2 + $0x58] sm:$0xff] %v4321
      %4386 = vst [vmem:[#allocation2 + $0x60] sm:$0xff] %v4322
      %4387 = vst [vmem:[#allocation2 + $0x68] sm:$0xff] %v4323
      %4388 = vst [vmem:[#allocation2 + $0x70] sm:$0xff] %v4324
      %4389 = vst [vmem:[#allocation2 + $0x78] sm:$0xff] %v4325
      %4390 = vst [vmem:[#allocation2 + $0x80] sm:$0xff] %v4326
      %4391 = vst [vmem:[#allocation2 + $0x88] sm:$0xff] %v4327
      %4392 = vst [vmem:[#allocation2 + $0x90] sm:$0xff] %v4328
      %4393 = vst [vmem:[#allocation2 + $0x98] sm:$0xff] %v4329
      %4394 = vst [vmem:[#allocation2 + $0xa0] sm:$0xff] %v4330
      %4395 = vst [vmem:[#allocation2 + $0xa8] sm:$0xff] %v4331
      %4396 = vst [vmem:[#allocation2 + $0xb0] sm:$0xff] %v4332
      %4397 = vst [vmem:[#allocation2 + $0xb8] sm:$0xff] %v4333
      %4398 = vst [vmem:[#allocation2 + $0xc0] sm:$0xff] %v4334
      %4399 = vst [vmem:[#allocation2 + $0xc8] sm:$0xff] %v4335
      %4400 = vst [vmem:[#allocation2 + $0xd0] sm:$0xff] %v4336
      %4401 = vst [vmem:[#allocation2 + $0xd8] sm:$0xff] %v4337
      %4402 = vst [vmem:[#allocation2 + $0xe0] sm:$0xff] %v4338
      %4403 = vst [vmem:[#allocation2 + $0xe8] sm:$0xff] %v4339
      %4404 = vst [vmem:[#allocation2 + $0xf0] sm:$0xff] %v4340
      %4405 = vst [vmem:[#allocation2 + $0xf8] sm:$0xff] %v4341
      %4406 = vst [vmem:[#allocation2 + $0x100] sm:$0xff] %v4342
      %4407 = vst [vmem:[#allocation2 + $0x108] sm:$0xff] %v4343
      %4408 = vst [vmem:[#allocation2 + $0x110] sm:$0xff] %v4344
      %4409 = vst [vmem:[#allocation2 + $0x118] sm:$0xff] %v4345
      %4410 = vst [vmem:[#allocation2 + $0x120] sm:$0xff] %v4346
      %4411 = vst [vmem:[#allocation2 + $0x128] sm:$0xff] %v4347
      %4412 = vst [vmem:[#allocation2 + $0x130] sm:$0xff] %v4348
      %4413 = vst [vmem:[#allocation2 + $0x138] sm:$0xff] %v4349
      %4414 = vst [vmem:[#allocation2 + $0x140] sm:$0xff] %v4350
      %4415 = vst [vmem:[#allocation2 + $0x148] sm:$0xff] %v4351
      %4416 = vst [vmem:[#allocation2 + $0x150] sm:$0xff] %v4352
      %4417 = vst [vmem:[#allocation2 + $0x158] sm:$0xff] %v4353
      %4418 = vst [vmem:[#allocation2 + $0x160] sm:$0xff] %v4354
      %4419 = vst [vmem:[#allocation2 + $0x168] sm:$0xff] %v4355
      %4420 = vst [vmem:[#allocation2 + $0x170] sm:$0xff] %v4356
      %4421 = vst [vmem:[#allocation2 + $0x178] sm:$0xff] %v4357
      %4422 = vst [vmem:[#allocation2 + $0x180] sm:$0xff] %v4358
      %4423 = vst [vmem:[#allocation2 + $0x188] sm:$0xff] %v4359
      %4424 = vst [vmem:[#allocation2 + $0x190] sm:$0xff] %v4360
      %4425 = vst [vmem:[#allocation2 + $0x198] sm:$0xff] %v4361
      %4426 = vst [vmem:[#allocation2 + $0x1a0] sm:$0xff] %v4362
      %4427 = vst [vmem:[#allocation2 + $0x1a8] sm:$0xff] %v4363
      %4428 = vst [vmem:[#allocation2 + $0x1b0] sm:$0xff] %v4364
      %4429 = vst [vmem:[#allocation2 + $0x1b8] sm:$0xff] %v4365
      %4430 = vst [vmem:[#allocation2 + $0x1c0] sm:$0xff] %v4366
      %4431 = vst [vmem:[#allocation2 + $0x1c8] sm:$0xff] %v4367
      %4432 = vst [vmem:[#allocation2 + $0x1d0] sm:$0xff] %v4368
      %4433 = vst [vmem:[#allocation2 + $0x1d8] sm:$0xff] %v4369
      %4434 = vst [vmem:[#allocation2 + $0x1e0] sm:$0xff] %v4370
      %4435 = vst [vmem:[#allocation2 + $0x1e8] sm:$0xff] %v4371
      %4436 = vst [vmem:[#allocation2 + $0x1f0] sm:$0xff] %v4372
      %4437 = vst [vmem:[#allocation2 + $0x1f8] sm:$0xff] %v4373
      %s4438 = scalar_lea.vmem %s4, 384
      %v4439 = vld [vmem:[%s4438] sm:$0xf]
      %v4440 = vld [vmem:[%s4438 + $0x4] sm:$0xf]
      %v4441 = vld [vmem:[%s4438 + $0x8] sm:$0xf]
      %v4442 = vld [vmem:[%s4438 + $0xc] sm:$0xf]
      %v4443 = vld [vmem:[%s4438 + $0x10] sm:$0xf]
      %v4444 = vld [vmem:[%s4438 + $0x14] sm:$0xf]
      %v4445 = vld [vmem:[%s4438 + $0x18] sm:$0xf]
      %v4446 = vld [vmem:[%s4438 + $0x1c] sm:$0xf]
      %v4447 = vld [vmem:[%s4438 + $0x20] sm:$0xf]
      %v4448 = vld [vmem:[%s4438 + $0x24] sm:$0xf]
      %v4449 = vld [vmem:[%s4438 + $0x28] sm:$0xf]
      %v4450 = vld [vmem:[%s4438 + $0x2c] sm:$0xf]
      %v4451 = vld [vmem:[%s4438 + $0x30] sm:$0xf]
      %v4452 = vld [vmem:[%s4438 + $0x34] sm:$0xf]
      %v4453 = vld [vmem:[%s4438 + $0x38] sm:$0xf]
      %v4454 = vld [vmem:[%s4438 + $0x3c] sm:$0xf]
      %v4471 = vunpack.c.l.b16 %v4439
      %v4472 = vunpack.c.l.b16 %v4440
      %v4473 = vunpack.c.l.b16 %v4441
      %v4474 = vunpack.c.l.b16 %v4442
      %v4475 = vunpack.c.l.b16 %v4443
      %v4476 = vunpack.c.l.b16 %v4444
      %v4477 = vunpack.c.l.b16 %v4445
      %v4478 = vunpack.c.l.b16 %v4446
      %v4479 = vunpack.c.l.b16 %v4447
      %v4480 = vunpack.c.l.b16 %v4448
      %v4481 = vunpack.c.l.b16 %v4449
      %v4482 = vunpack.c.l.b16 %v4450
      %v4483 = vunpack.c.l.b16 %v4451
      %v4484 = vunpack.c.l.b16 %v4452
      %v4485 = vunpack.c.l.b16 %v4453
      %v4486 = vunpack.c.l.b16 %v4454
      %v4487 = vpack.c.b16 %v4472, %v4471
      %v4488 = vpack.c.b16 %v4474, %v4473
      %v4489 = vpack.c.b16 %v4476, %v4475
      %v4490 = vpack.c.b16 %v4478, %v4477
      %v4491 = vpack.c.b16 %v4480, %v4479
      %v4492 = vpack.c.b16 %v4482, %v4481
      %v4493 = vpack.c.b16 %v4484, %v4483
      %v4494 = vpack.c.b16 %v4486, %v4485
      %4503 = vmatpush.bf16.msra.mxu0 %v4494
      %4504 = vmatpush.bf16.msra.mxu0 %v4493
      %4505 = vmatpush.bf16.msra.mxu0 %v4492
      %4506 = vmatpush.bf16.msra.mxu0 %v4491
      %4507 = vmatpush.bf16.msra.mxu0 %v4490
      %4508 = vmatpush.bf16.msra.mxu0 %v4489
      %4509 = vmatpush.bf16.msra.mxu0 %v4488
      %4510 = vmatpush.bf16.msra.mxu0 %v4487
      %4511 = vmatmul.bf16.gmra.mxu0 %v1788
      %v4512 = vpop.f32.mrf.mxu0
      %v4513 = vadd.f32 0.0, %v4512
      %v4514 = vpop.f32.mrf.mxu0
      %v4515 = vadd.f32 0.0, %v4514
      %4516 = vmatmul.bf16.gmra.mxu0 %v1789
      %v4517 = vpop.f32.mrf.mxu0
      %v4518 = vadd.f32 0.0, %v4517
      %v4519 = vpop.f32.mrf.mxu0
      %v4520 = vadd.f32 0.0, %v4519
      %4521 = vmatmul.bf16.gmra.mxu0 %v1790
      %v4522 = vpop.f32.mrf.mxu0
      %v4523 = vadd.f32 0.0, %v4522
      %v4524 = vpop.f32.mrf.mxu0
      %v4525 = vadd.f32 0.0, %v4524
      %4526 = vmatmul.bf16.gmra.mxu0 %v1791
      %v4527 = vpop.f32.mrf.mxu0
      %v4528 = vadd.f32 0.0, %v4527
      %v4529 = vpop.f32.mrf.mxu0
      %v4530 = vadd.f32 0.0, %v4529
      %4531 = vmatmul.bf16.gmra.mxu0 %v1792
      %v4532 = vpop.f32.mrf.mxu0
      %v4533 = vadd.f32 0.0, %v4532
      %v4534 = vpop.f32.mrf.mxu0
      %v4535 = vadd.f32 0.0, %v4534
      %4536 = vmatmul.bf16.gmra.mxu0 %v1793
      %v4537 = vpop.f32.mrf.mxu0
      %v4538 = vadd.f32 0.0, %v4537
      %v4539 = vpop.f32.mrf.mxu0
      %v4540 = vadd.f32 0.0, %v4539
      %4541 = vmatmul.bf16.gmra.mxu0 %v1794
      %v4542 = vpop.f32.mrf.mxu0
      %v4543 = vadd.f32 0.0, %v4542
      %v4544 = vpop.f32.mrf.mxu0
      %v4545 = vadd.f32 0.0, %v4544
      %4546 = vmatmul.bf16.gmra.mxu0 %v1795
      %v4547 = vpop.f32.mrf.mxu0
      %v4548 = vadd.f32 0.0, %v4547
      %v4549 = vpop.f32.mrf.mxu0
      %v4550 = vadd.f32 0.0, %v4549
      %4551 = vmatmul.bf16.gmra.mxu0 %v1796
      %v4552 = vpop.f32.mrf.mxu0
      %v4553 = vadd.f32 0.0, %v4552
      %v4554 = vpop.f32.mrf.mxu0
      %v4555 = vadd.f32 0.0, %v4554
      %4556 = vmatmul.bf16.gmra.mxu0 %v1797
      %v4557 = vpop.f32.mrf.mxu0
      %v4558 = vadd.f32 0.0, %v4557
      %v4559 = vpop.f32.mrf.mxu0
      %v4560 = vadd.f32 0.0, %v4559
      %4561 = vmatmul.bf16.gmra.mxu0 %v1798
      %v4562 = vpop.f32.mrf.mxu0
      %v4563 = vadd.f32 0.0, %v4562
      %v4564 = vpop.f32.mrf.mxu0
      %v4565 = vadd.f32 0.0, %v4564
      %4566 = vmatmul.bf16.gmra.mxu0 %v1799
      %v4567 = vpop.f32.mrf.mxu0
      %v4568 = vadd.f32 0.0, %v4567
      %v4569 = vpop.f32.mrf.mxu0
      %v4570 = vadd.f32 0.0, %v4569
      %4571 = vmatmul.bf16.gmra.mxu0 %v1800
      %v4572 = vpop.f32.mrf.mxu0
      %v4573 = vadd.f32 0.0, %v4572
      %v4574 = vpop.f32.mrf.mxu0
      %v4575 = vadd.f32 0.0, %v4574
      %4576 = vmatmul.bf16.gmra.mxu0 %v1801
      %v4577 = vpop.f32.mrf.mxu0
      %v4578 = vadd.f32 0.0, %v4577
      %v4579 = vpop.f32.mrf.mxu0
      %v4580 = vadd.f32 0.0, %v4579
      %4581 = vmatmul.bf16.gmra.mxu0 %v1802
      %v4582 = vpop.f32.mrf.mxu0
      %v4583 = vadd.f32 0.0, %v4582
      %v4584 = vpop.f32.mrf.mxu0
      %v4585 = vadd.f32 0.0, %v4584
      %4586 = vmatmul.bf16.gmra.mxu0 %v1803
      %v4587 = vpop.f32.mrf.mxu0
      %v4588 = vadd.f32 0.0, %v4587
      %v4589 = vpop.f32.mrf.mxu0
      %v4590 = vadd.f32 0.0, %v4589
      %4591 = vmatmul.bf16.gmra.mxu0 %v1804
      %v4592 = vpop.f32.mrf.mxu0
      %v4593 = vadd.f32 0.0, %v4592
      %v4594 = vpop.f32.mrf.mxu0
      %v4595 = vadd.f32 0.0, %v4594
      %4596 = vmatmul.bf16.gmra.mxu0 %v1805
      %v4597 = vpop.f32.mrf.mxu0
      %v4598 = vadd.f32 0.0, %v4597
      %v4599 = vpop.f32.mrf.mxu0
      %v4600 = vadd.f32 0.0, %v4599
      %4601 = vmatmul.bf16.gmra.mxu0 %v1806
      %v4602 = vpop.f32.mrf.mxu0
      %v4603 = vadd.f32 0.0, %v4602
      %v4604 = vpop.f32.mrf.mxu0
      %v4605 = vadd.f32 0.0, %v4604
      %4606 = vmatmul.bf16.gmra.mxu0 %v1807
      %v4607 = vpop.f32.mrf.mxu0
      %v4608 = vadd.f32 0.0, %v4607
      %v4609 = vpop.f32.mrf.mxu0
      %v4610 = vadd.f32 0.0, %v4609
      %4611 = vmatmul.bf16.gmra.mxu0 %v1808
      %v4612 = vpop.f32.mrf.mxu0
      %v4613 = vadd.f32 0.0, %v4612
      %v4614 = vpop.f32.mrf.mxu0
      %v4615 = vadd.f32 0.0, %v4614
      %4616 = vmatmul.bf16.gmra.mxu0 %v1809
      %v4617 = vpop.f32.mrf.mxu0
      %v4618 = vadd.f32 0.0, %v4617
      %v4619 = vpop.f32.mrf.mxu0
      %v4620 = vadd.f32 0.0, %v4619
      %4621 = vmatmul.bf16.gmra.mxu0 %v1810
      %v4622 = vpop.f32.mrf.mxu0
      %v4623 = vadd.f32 0.0, %v4622
      %v4624 = vpop.f32.mrf.mxu0
      %v4625 = vadd.f32 0.0, %v4624
      %4626 = vmatmul.bf16.gmra.mxu0 %v1811
      %v4627 = vpop.f32.mrf.mxu0
      %v4628 = vadd.f32 0.0, %v4627
      %v4629 = vpop.f32.mrf.mxu0
      %v4630 = vadd.f32 0.0, %v4629
      %4631 = vmatmul.bf16.gmra.mxu0 %v1812
      %v4632 = vpop.f32.mrf.mxu0
      %v4633 = vadd.f32 0.0, %v4632
      %v4634 = vpop.f32.mrf.mxu0
      %v4635 = vadd.f32 0.0, %v4634
      %4636 = vmatmul.bf16.gmra.mxu0 %v1813
      %v4637 = vpop.f32.mrf.mxu0
      %v4638 = vadd.f32 0.0, %v4637
      %v4639 = vpop.f32.mrf.mxu0
      %v4640 = vadd.f32 0.0, %v4639
      %4641 = vmatmul.bf16.gmra.mxu0 %v1814
      %v4642 = vpop.f32.mrf.mxu0
      %v4643 = vadd.f32 0.0, %v4642
      %v4644 = vpop.f32.mrf.mxu0
      %v4645 = vadd.f32 0.0, %v4644
      %4646 = vmatmul.bf16.gmra.mxu0 %v1815
      %v4647 = vpop.f32.mrf.mxu0
      %v4648 = vadd.f32 0.0, %v4647
      %v4649 = vpop.f32.mrf.mxu0
      %v4650 = vadd.f32 0.0, %v4649
      %4651 = vmatmul.bf16.gmra.mxu0 %v1816
      %v4652 = vpop.f32.mrf.mxu0
      %v4653 = vadd.f32 0.0, %v4652
      %v4654 = vpop.f32.mrf.mxu0
      %v4655 = vadd.f32 0.0, %v4654
      %4656 = vmatmul.bf16.gmra.mxu0 %v1817
      %v4657 = vpop.f32.mrf.mxu0
      %v4658 = vadd.f32 0.0, %v4657
      %v4659 = vpop.f32.mrf.mxu0
      %v4660 = vadd.f32 0.0, %v4659
      %4661 = vmatmul.bf16.gmra.mxu0 %v1786
      %v4662 = vpop.f32.mrf.mxu0
      %v4663 = vadd.f32 0.0, %v4662
      %v4664 = vpop.f32.mrf.mxu0
      %v4665 = vadd.f32 0.0, %v4664
      %4666 = vmatmul.bf16.gmra.mxu0 %v1787
      %v4667 = vpop.f32.mrf.mxu0
      %v4668 = vadd.f32 0.0, %v4667
      %v4669 = vpop.f32.mrf.mxu0
      %v4670 = vadd.f32 0.0, %v4669
      %4671 = vdwg.mxu0
      %v4672 = vld [vmem:[#allocation2] sm:$0xff]
      %v4673 = vld [vmem:[#allocation2 + $0x8] sm:$0xff]
      %v4674 = vld [vmem:[#allocation2 + $0x10] sm:$0xff]
      %v4675 = vld [vmem:[#allocation2 + $0x18] sm:$0xff]
      %v4676 = vld [vmem:[#allocation2 + $0x20] sm:$0xff]
      %v4677 = vld [vmem:[#allocation2 + $0x28] sm:$0xff]
      %v4678 = vld [vmem:[#allocation2 + $0x30] sm:$0xff]
      %v4679 = vld [vmem:[#allocation2 + $0x38] sm:$0xff]
      %v4680 = vld [vmem:[#allocation2 + $0x40] sm:$0xff]
      %v4681 = vld [vmem:[#allocation2 + $0x48] sm:$0xff]
      %v4682 = vld [vmem:[#allocation2 + $0x50] sm:$0xff]
      %v4683 = vld [vmem:[#allocation2 + $0x58] sm:$0xff]
      %v4684 = vld [vmem:[#allocation2 + $0x60] sm:$0xff]
      %v4685 = vld [vmem:[#allocation2 + $0x68] sm:$0xff]
      %v4686 = vld [vmem:[#allocation2 + $0x70] sm:$0xff]
      %v4687 = vld [vmem:[#allocation2 + $0x78] sm:$0xff]
      %v4688 = vld [vmem:[#allocation2 + $0x80] sm:$0xff]
      %v4689 = vld [vmem:[#allocation2 + $0x88] sm:$0xff]
      %v4690 = vld [vmem:[#allocation2 + $0x90] sm:$0xff]
      %v4691 = vld [vmem:[#allocation2 + $0x98] sm:$0xff]
      %v4692 = vld [vmem:[#allocation2 + $0xa0] sm:$0xff]
      %v4693 = vld [vmem:[#allocation2 + $0xa8] sm:$0xff]
      %v4694 = vld [vmem:[#allocation2 + $0xb0] sm:$0xff]
      %v4695 = vld [vmem:[#allocation2 + $0xb8] sm:$0xff]
      %v4696 = vld [vmem:[#allocation2 + $0xc0] sm:$0xff]
      %v4697 = vld [vmem:[#allocation2 + $0xc8] sm:$0xff]
      %v4698 = vld [vmem:[#allocation2 + $0xd0] sm:$0xff]
      %v4699 = vld [vmem:[#allocation2 + $0xd8] sm:$0xff]
      %v4700 = vld [vmem:[#allocation2 + $0xe0] sm:$0xff]
      %v4701 = vld [vmem:[#allocation2 + $0xe8] sm:$0xff]
      %v4702 = vld [vmem:[#allocation2 + $0xf0] sm:$0xff]
      %v4703 = vld [vmem:[#allocation2 + $0xf8] sm:$0xff]
      %v4704 = vld [vmem:[#allocation2 + $0x100] sm:$0xff]
      %v4705 = vld [vmem:[#allocation2 + $0x108] sm:$0xff]
      %v4706 = vld [vmem:[#allocation2 + $0x110] sm:$0xff]
      %v4707 = vld [vmem:[#allocation2 + $0x118] sm:$0xff]
      %v4708 = vld [vmem:[#allocation2 + $0x120] sm:$0xff]
      %v4709 = vld [vmem:[#allocation2 + $0x128] sm:$0xff]
      %v4710 = vld [vmem:[#allocation2 + $0x130] sm:$0xff]
      %v4711 = vld [vmem:[#allocation2 + $0x138] sm:$0xff]
      %v4712 = vld [vmem:[#allocation2 + $0x140] sm:$0xff]
      %v4713 = vld [vmem:[#allocation2 + $0x148] sm:$0xff]
      %v4714 = vld [vmem:[#allocation2 + $0x150] sm:$0xff]
      %v4715 = vld [vmem:[#allocation2 + $0x158] sm:$0xff]
      %v4716 = vld [vmem:[#allocation2 + $0x160] sm:$0xff]
      %v4717 = vld [vmem:[#allocation2 + $0x168] sm:$0xff]
      %v4718 = vld [vmem:[#allocation2 + $0x170] sm:$0xff]
      %v4719 = vld [vmem:[#allocation2 + $0x178] sm:$0xff]
      %v4720 = vld [vmem:[#allocation2 + $0x180] sm:$0xff]
      %v4721 = vld [vmem:[#allocation2 + $0x188] sm:$0xff]
      %v4722 = vld [vmem:[#allocation2 + $0x190] sm:$0xff]
      %v4723 = vld [vmem:[#allocation2 + $0x198] sm:$0xff]
      %v4724 = vld [vmem:[#allocation2 + $0x1a0] sm:$0xff]
      %v4725 = vld [vmem:[#allocation2 + $0x1a8] sm:$0xff]
      %v4726 = vld [vmem:[#allocation2 + $0x1b0] sm:$0xff]
      %v4727 = vld [vmem:[#allocation2 + $0x1b8] sm:$0xff]
      %v4728 = vld [vmem:[#allocation2 + $0x1c0] sm:$0xff]
      %v4729 = vld [vmem:[#allocation2 + $0x1c8] sm:$0xff]
      %v4730 = vld [vmem:[#allocation2 + $0x1d0] sm:$0xff]
      %v4731 = vld [vmem:[#allocation2 + $0x1d8] sm:$0xff]
      %v4732 = vld [vmem:[#allocation2 + $0x1e0] sm:$0xff]
      %v4733 = vld [vmem:[#allocation2 + $0x1e8] sm:$0xff]
      %v4734 = vld [vmem:[#allocation2 + $0x1f0] sm:$0xff]
      %v4735 = vld [vmem:[#allocation2 + $0x1f8] sm:$0xff]
      %v4736 = vadd.f32 %v4672, %v4513
      %v4737 = vadd.f32 %v4673, %v4515
      %v4738 = vadd.f32 %v4674, %v4518
      %v4739 = vadd.f32 %v4675, %v4520
      %v4740 = vadd.f32 %v4676, %v4523
      %v4741 = vadd.f32 %v4677, %v4525
      %v4742 = vadd.f32 %v4678, %v4528
      %v4743 = vadd.f32 %v4679, %v4530
      %v4744 = vadd.f32 %v4680, %v4533
      %v4745 = vadd.f32 %v4681, %v4535
      %v4746 = vadd.f32 %v4682, %v4538
      %v4747 = vadd.f32 %v4683, %v4540
      %v4748 = vadd.f32 %v4684, %v4543
      %v4749 = vadd.f32 %v4685, %v4545
      %v4750 = vadd.f32 %v4686, %v4548
      %v4751 = vadd.f32 %v4687, %v4550
      %v4752 = vadd.f32 %v4688, %v4553
      %v4753 = vadd.f32 %v4689, %v4555
      %v4754 = vadd.f32 %v4690, %v4558
      %v4755 = vadd.f32 %v4691, %v4560
      %v4756 = vadd.f32 %v4692, %v4563
      %v4757 = vadd.f32 %v4693, %v4565
      %v4758 = vadd.f32 %v4694, %v4568
      %v4759 = vadd.f32 %v4695, %v4570
      %v4760 = vadd.f32 %v4696, %v4573
      %v4761 = vadd.f32 %v4697, %v4575
      %v4762 = vadd.f32 %v4698, %v4578
      %v4763 = vadd.f32 %v4699, %v4580
      %v4764 = vadd.f32 %v4700, %v4583
      %v4765 = vadd.f32 %v4701, %v4585
      %v4766 = vadd.f32 %v4702, %v4588
      %v4767 = vadd.f32 %v4703, %v4590
      %v4768 = vadd.f32 %v4704, %v4593
      %v4769 = vadd.f32 %v4705, %v4595
      %v4770 = vadd.f32 %v4706, %v4598
      %v4771 = vadd.f32 %v4707, %v4600
      %v4772 = vadd.f32 %v4708, %v4603
      %v4773 = vadd.f32 %v4709, %v4605
      %v4774 = vadd.f32 %v4710, %v4608
      %v4775 = vadd.f32 %v4711, %v4610
      %v4776 = vadd.f32 %v4712, %v4613
      %v4777 = vadd.f32 %v4713, %v4615
      %v4778 = vadd.f32 %v4714, %v4618
      %v4779 = vadd.f32 %v4715, %v4620
      %v4780 = vadd.f32 %v4716, %v4623
      %v4781 = vadd.f32 %v4717, %v4625
      %v4782 = vadd.f32 %v4718, %v4628
      %v4783 = vadd.f32 %v4719, %v4630
      %v4784 = vadd.f32 %v4720, %v4633
      %v4785 = vadd.f32 %v4721, %v4635
      %v4786 = vadd.f32 %v4722, %v4638
      %v4787 = vadd.f32 %v4723, %v4640
      %v4788 = vadd.f32 %v4724, %v4643
      %v4789 = vadd.f32 %v4725, %v4645
      %v4790 = vadd.f32 %v4726, %v4648
      %v4791 = vadd.f32 %v4727, %v4650
      %v4792 = vadd.f32 %v4728, %v4653
      %v4793 = vadd.f32 %v4729, %v4655
      %v4794 = vadd.f32 %v4730, %v4658
      %v4795 = vadd.f32 %v4731, %v4660
      %v4796 = vadd.f32 %v4732, %v4663
      %v4797 = vadd.f32 %v4733, %v4665
      %v4798 = vadd.f32 %v4734, %v4668
      %v4799 = vadd.f32 %v4735, %v4670
      %4800 = vst [vmem:[#allocation2] sm:$0xff] %v4736
      %4801 = vst [vmem:[#allocation2 + $0x8] sm:$0xff] %v4737
      %4802 = vst [vmem:[#allocation2 + $0x10] sm:$0xff] %v4738
      %4803 = vst [vmem:[#allocation2 + $0x18] sm:$0xff] %v4739
      %4804 = vst [vmem:[#allocation2 + $0x20] sm:$0xff] %v4740
      %4805 = vst [vmem:[#allocation2 + $0x28] sm:$0xff] %v4741
      %4806 = vst [vmem:[#allocation2 + $0x30] sm:$0xff] %v4742
      %4807 = vst [vmem:[#allocation2 + $0x38] sm:$0xff] %v4743
      %4808 = vst [vmem:[#allocation2 + $0x40] sm:$0xff] %v4744
      %4809 = vst [vmem:[#allocation2 + $0x48] sm:$0xff] %v4745
      %4810 = vst [vmem:[#allocation2 + $0x50] sm:$0xff] %v4746
      %4811 = vst [vmem:[#allocation2 + $0x58] sm:$0xff] %v4747
      %4812 = vst [vmem:[#allocation2 + $0x60] sm:$0xff] %v4748
      %4813 = vst [vmem:[#allocation2 + $0x68] sm:$0xff] %v4749
      %4814 = vst [vmem:[#allocation2 + $0x70] sm:$0xff] %v4750
      %4815 = vst [vmem:[#allocation2 + $0x78] sm:$0xff] %v4751
      %4816 = vst [vmem:[#allocation2 + $0x80] sm:$0xff] %v4752
      %4817 = vst [vmem:[#allocation2 + $0x88] sm:$0xff] %v4753
      %4818 = vst [vmem:[#allocation2 + $0x90] sm:$0xff] %v4754
      %4819 = vst [vmem:[#allocation2 + $0x98] sm:$0xff] %v4755
      %4820 = vst [vmem:[#allocation2 + $0xa0] sm:$0xff] %v4756
      %4821 = vst [vmem:[#allocation2 + $0xa8] sm:$0xff] %v4757
      %4822 = vst [vmem:[#allocation2 + $0xb0] sm:$0xff] %v4758
      %4823 = vst [vmem:[#allocation2 + $0xb8] sm:$0xff] %v4759
      %4824 = vst [vmem:[#allocation2 + $0xc0] sm:$0xff] %v4760
      %4825 = vst [vmem:[#allocation2 + $0xc8] sm:$0xff] %v4761
      %4826 = vst [vmem:[#allocation2 + $0xd0] sm:$0xff] %v4762
      %4827 = vst [vmem:[#allocation2 + $0xd8] sm:$0xff] %v4763
      %4828 = vst [vmem:[#allocation2 + $0xe0] sm:$0xff] %v4764
      %4829 = vst [vmem:[#allocation2 + $0xe8] sm:$0xff] %v4765
      %4830 = vst [vmem:[#allocation2 + $0xf0] sm:$0xff] %v4766
      %4831 = vst [vmem:[#allocation2 + $0xf8] sm:$0xff] %v4767
      %4832 = vst [vmem:[#allocation2 + $0x100] sm:$0xff] %v4768
      %4833 = vst [vmem:[#allocation2 + $0x108] sm:$0xff] %v4769
      %4834 = vst [vmem:[#allocation2 + $0x110] sm:$0xff] %v4770
      %4835 = vst [vmem:[#allocation2 + $0x118] sm:$0xff] %v4771
      %4836 = vst [vmem:[#allocation2 + $0x120] sm:$0xff] %v4772
      %4837 = vst [vmem:[#allocation2 + $0x128] sm:$0xff] %v4773
      %4838 = vst [vmem:[#allocation2 + $0x130] sm:$0xff] %v4774
      %4839 = vst [vmem:[#allocation2 + $0x138] sm:$0xff] %v4775
      %4840 = vst [vmem:[#allocation2 + $0x140] sm:$0xff] %v4776
      %4841 = vst [vmem:[#allocation2 + $0x148] sm:$0xff] %v4777
      %4842 = vst [vmem:[#allocation2 + $0x150] sm:$0xff] %v4778
      %4843 = vst [vmem:[#allocation2 + $0x158] sm:$0xff] %v4779
      %4844 = vst [vmem:[#allocation2 + $0x160] sm:$0xff] %v4780
      %4845 = vst [vmem:[#allocation2 + $0x168] sm:$0xff] %v4781
      %4846 = vst [vmem:[#allocation2 + $0x170] sm:$0xff] %v4782
      %4847 = vst [vmem:[#allocation2 + $0x178] sm:$0xff] %v4783
      %4848 = vst [vmem:[#allocation2 + $0x180] sm:$0xff] %v4784
      %4849 = vst [vmem:[#allocation2 + $0x188] sm:$0xff] %v4785
      %4850 = vst [vmem:[#allocation2 + $0x190] sm:$0xff] %v4786
      %4851 = vst [vmem:[#allocation2 + $0x198] sm:$0xff] %v4787
      %4852 = vst [vmem:[#allocation2 + $0x1a0] sm:$0xff] %v4788
      %4853 = vst [vmem:[#allocation2 + $0x1a8] sm:$0xff] %v4789
      %4854 = vst [vmem:[#allocation2 + $0x1b0] sm:$0xff] %v4790
      %4855 = vst [vmem:[#allocation2 + $0x1b8] sm:$0xff] %v4791
      %4856 = vst [vmem:[#allocation2 + $0x1c0] sm:$0xff] %v4792
      %4857 = vst [vmem:[#allocation2 + $0x1c8] sm:$0xff] %v4793
      %4858 = vst [vmem:[#allocation2 + $0x1d0] sm:$0xff] %v4794
      %4859 = vst [vmem:[#allocation2 + $0x1d8] sm:$0xff] %v4795
      %4860 = vst [vmem:[#allocation2 + $0x1e0] sm:$0xff] %v4796
      %4861 = vst [vmem:[#allocation2 + $0x1e8] sm:$0xff] %v4797
      %4862 = vst [vmem:[#allocation2 + $0x1f0] sm:$0xff] %v4798
      %4863 = vst [vmem:[#allocation2 + $0x1f8] sm:$0xff] %v4799
      %s4864 = scalar_lea.vmem %s4, 448
      %v4865 = vld [vmem:[%s4864] sm:$0xf]
      %v4866 = vld [vmem:[%s4864 + $0x4] sm:$0xf]
      %v4867 = vld [vmem:[%s4864 + $0x8] sm:$0xf]
      %v4868 = vld [vmem:[%s4864 + $0xc] sm:$0xf]
      %v4869 = vld [vmem:[%s4864 + $0x10] sm:$0xf]
      %v4870 = vld [vmem:[%s4864 + $0x14] sm:$0xf]
      %v4871 = vld [vmem:[%s4864 + $0x18] sm:$0xf]
      %v4872 = vld [vmem:[%s4864 + $0x1c] sm:$0xf]
      %v4873 = vld [vmem:[%s4864 + $0x20] sm:$0xf]
      %v4874 = vld [vmem:[%s4864 + $0x24] sm:$0xf]
      %v4875 = vld [vmem:[%s4864 + $0x28] sm:$0xf]
      %v4876 = vld [vmem:[%s4864 + $0x2c] sm:$0xf]
      %v4877 = vld [vmem:[%s4864 + $0x30] sm:$0xf]
      %v4878 = vld [vmem:[%s4864 + $0x34] sm:$0xf]
      %v4879 = vld [vmem:[%s4864 + $0x38] sm:$0xf]
      %v4880 = vld [vmem:[%s4864 + $0x3c] sm:$0xf]
      %v4897 = vunpack.c.l.b16 %v4865
      %v4898 = vunpack.c.l.b16 %v4866
      %v4899 = vunpack.c.l.b16 %v4867
      %v4900 = vunpack.c.l.b16 %v4868
      %v4901 = vunpack.c.l.b16 %v4869
      %v4902 = vunpack.c.l.b16 %v4870
      %v4903 = vunpack.c.l.b16 %v4871
      %v4904 = vunpack.c.l.b16 %v4872
      %v4905 = vunpack.c.l.b16 %v4873
      %v4906 = vunpack.c.l.b16 %v4874
      %v4907 = vunpack.c.l.b16 %v4875
      %v4908 = vunpack.c.l.b16 %v4876
      %v4909 = vunpack.c.l.b16 %v4877
      %v4910 = vunpack.c.l.b16 %v4878
      %v4911 = vunpack.c.l.b16 %v4879
      %v4912 = vunpack.c.l.b16 %v4880
      %v4913 = vpack.c.b16 %v4898, %v4897
      %v4914 = vpack.c.b16 %v4900, %v4899
      %v4915 = vpack.c.b16 %v4902, %v4901
      %v4916 = vpack.c.b16 %v4904, %v4903
      %v4917 = vpack.c.b16 %v4906, %v4905
      %v4918 = vpack.c.b16 %v4908, %v4907
      %v4919 = vpack.c.b16 %v4910, %v4909
      %v4920 = vpack.c.b16 %v4912, %v4911
      %4929 = vmatpush.bf16.msra.mxu0 %v4920
      %4930 = vmatpush.bf16.msra.mxu0 %v4919
      %4931 = vmatpush.bf16.msra.mxu0 %v4918
      %4932 = vmatpush.bf16.msra.mxu0 %v4917
      %4933 = vmatpush.bf16.msra.mxu0 %v4916
      %4934 = vmatpush.bf16.msra.mxu0 %v4915
      %4935 = vmatpush.bf16.msra.mxu0 %v4914
      %4936 = vmatpush.bf16.msra.mxu0 %v4913
      %4937 = vmatmul.bf16.gmra.mxu0 %v2117
      %v4938 = vpop.f32.mrf.mxu0
      %v4939 = vadd.f32 0.0, %v4938
      %v4940 = vpop.f32.mrf.mxu0
      %v4941 = vadd.f32 0.0, %v4940
      %4942 = vmatmul.bf16.gmra.mxu0 %v2118
      %v4943 = vpop.f32.mrf.mxu0
      %v4944 = vadd.f32 0.0, %v4943
      %v4945 = vpop.f32.mrf.mxu0
      %v4946 = vadd.f32 0.0, %v4945
      %4947 = vmatmul.bf16.gmra.mxu0 %v2119
      %v4948 = vpop.f32.mrf.mxu0
      %v4949 = vadd.f32 0.0, %v4948
      %v4950 = vpop.f32.mrf.mxu0
      %v4951 = vadd.f32 0.0, %v4950
      %4952 = vmatmul.bf16.gmra.mxu0 %v2120
      %v4953 = vpop.f32.mrf.mxu0
      %v4954 = vadd.f32 0.0, %v4953
      %v4955 = vpop.f32.mrf.mxu0
      %v4956 = vadd.f32 0.0, %v4955
      %4957 = vmatmul.bf16.gmra.mxu0 %v2121
      %v4958 = vpop.f32.mrf.mxu0
      %v4959 = vadd.f32 0.0, %v4958
      %v4960 = vpop.f32.mrf.mxu0
      %v4961 = vadd.f32 0.0, %v4960
      %4962 = vmatmul.bf16.gmra.mxu0 %v2122
      %v4963 = vpop.f32.mrf.mxu0
      %v4964 = vadd.f32 0.0, %v4963
      %v4965 = vpop.f32.mrf.mxu0
      %v4966 = vadd.f32 0.0, %v4965
      %4967 = vmatmul.bf16.gmra.mxu0 %v2123
      %v4968 = vpop.f32.mrf.mxu0
      %v4969 = vadd.f32 0.0, %v4968
      %v4970 = vpop.f32.mrf.mxu0
      %v4971 = vadd.f32 0.0, %v4970
      %4972 = vmatmul.bf16.gmra.mxu0 %v2124
      %v4973 = vpop.f32.mrf.mxu0
      %v4974 = vadd.f32 0.0, %v4973
      %v4975 = vpop.f32.mrf.mxu0
      %v4976 = vadd.f32 0.0, %v4975
      %4977 = vmatmul.bf16.gmra.mxu0 %v2125
      %v4978 = vpop.f32.mrf.mxu0
      %v4979 = vadd.f32 0.0, %v4978
      %v4980 = vpop.f32.mrf.mxu0
      %v4981 = vadd.f32 0.0, %v4980
      %4982 = vmatmul.bf16.gmra.mxu0 %v2126
      %v4983 = vpop.f32.mrf.mxu0
      %v4984 = vadd.f32 0.0, %v4983
      %v4985 = vpop.f32.mrf.mxu0
      %v4986 = vadd.f32 0.0, %v4985
      %4987 = vmatmul.bf16.gmra.mxu0 %v2127
      %v4988 = vpop.f32.mrf.mxu0
      %v4989 = vadd.f32 0.0, %v4988
      %v4990 = vpop.f32.mrf.mxu0
      %v4991 = vadd.f32 0.0, %v4990
      %4992 = vmatmul.bf16.gmra.mxu0 %v2128
      %v4993 = vpop.f32.mrf.mxu0
      %v4994 = vadd.f32 0.0, %v4993
      %v4995 = vpop.f32.mrf.mxu0
      %v4996 = vadd.f32 0.0, %v4995
      %4997 = vmatmul.bf16.gmra.mxu0 %v2129
      %v4998 = vpop.f32.mrf.mxu0
      %v4999 = vadd.f32 0.0, %v4998
      %v5000 = vpop.f32.mrf.mxu0
      %v5001 = vadd.f32 0.0, %v5000
      %5002 = vmatmul.bf16.gmra.mxu0 %v2130
      %v5003 = vpop.f32.mrf.mxu0
      %v5004 = vadd.f32 0.0, %v5003
      %v5005 = vpop.f32.mrf.mxu0
      %v5006 = vadd.f32 0.0, %v5005
      %5007 = vmatmul.bf16.gmra.mxu0 %v2131
      %v5008 = vpop.f32.mrf.mxu0
      %v5009 = vadd.f32 0.0, %v5008
      %v5010 = vpop.f32.mrf.mxu0
      %v5011 = vadd.f32 0.0, %v5010
      %5012 = vmatmul.bf16.gmra.mxu0 %v2132
      %v5013 = vpop.f32.mrf.mxu0
      %v5014 = vadd.f32 0.0, %v5013
      %v5015 = vpop.f32.mrf.mxu0
      %v5016 = vadd.f32 0.0, %v5015
      %5017 = vmatmul.bf16.gmra.mxu0 %v2133
      %v5018 = vpop.f32.mrf.mxu0
      %v5019 = vadd.f32 0.0, %v5018
      %v5020 = vpop.f32.mrf.mxu0
      %v5021 = vadd.f32 0.0, %v5020
      %5022 = vmatmul.bf16.gmra.mxu0 %v2134
      %v5023 = vpop.f32.mrf.mxu0
      %v5024 = vadd.f32 0.0, %v5023
      %v5025 = vpop.f32.mrf.mxu0
      %v5026 = vadd.f32 0.0, %v5025
      %5027 = vmatmul.bf16.gmra.mxu0 %v2135
      %v5028 = vpop.f32.mrf.mxu0
      %v5029 = vadd.f32 0.0, %v5028
      %v5030 = vpop.f32.mrf.mxu0
      %v5031 = vadd.f32 0.0, %v5030
      %5032 = vmatmul.bf16.gmra.mxu0 %v2136
      %v5033 = vpop.f32.mrf.mxu0
      %v5034 = vadd.f32 0.0, %v5033
      %v5035 = vpop.f32.mrf.mxu0
      %v5036 = vadd.f32 0.0, %v5035
      %5037 = vmatmul.bf16.gmra.mxu0 %v2137
      %v5038 = vpop.f32.mrf.mxu0
      %v5039 = vadd.f32 0.0, %v5038
      %v5040 = vpop.f32.mrf.mxu0
      %v5041 = vadd.f32 0.0, %v5040
      %5042 = vmatmul.bf16.gmra.mxu0 %v2138
      %v5043 = vpop.f32.mrf.mxu0
      %v5044 = vadd.f32 0.0, %v5043
      %v5045 = vpop.f32.mrf.mxu0
      %v5046 = vadd.f32 0.0, %v5045
      %5047 = vmatmul.bf16.gmra.mxu0 %v2139
      %v5048 = vpop.f32.mrf.mxu0
      %v5049 = vadd.f32 0.0, %v5048
      %v5050 = vpop.f32.mrf.mxu0
      %v5051 = vadd.f32 0.0, %v5050
      %5052 = vmatmul.bf16.gmra.mxu0 %v2140
      %v5053 = vpop.f32.mrf.mxu0
      %v5054 = vadd.f32 0.0, %v5053
      %v5055 = vpop.f32.mrf.mxu0
      %v5056 = vadd.f32 0.0, %v5055
      %5057 = vmatmul.bf16.gmra.mxu0 %v2141
      %v5058 = vpop.f32.mrf.mxu0
      %v5059 = vadd.f32 0.0, %v5058
      %v5060 = vpop.f32.mrf.mxu0
      %v5061 = vadd.f32 0.0, %v5060
      %5062 = vmatmul.bf16.gmra.mxu0 %v2142
      %v5063 = vpop.f32.mrf.mxu0
      %v5064 = vadd.f32 0.0, %v5063
      %v5065 = vpop.f32.mrf.mxu0
      %v5066 = vadd.f32 0.0, %v5065
      %5067 = vmatmul.bf16.gmra.mxu0 %v2143
      %v5068 = vpop.f32.mrf.mxu0
      %v5069 = vadd.f32 0.0, %v5068
      %v5070 = vpop.f32.mrf.mxu0
      %v5071 = vadd.f32 0.0, %v5070
      %5072 = vmatmul.bf16.gmra.mxu0 %v2144
      %v5073 = vpop.f32.mrf.mxu0
      %v5074 = vadd.f32 0.0, %v5073
      %v5075 = vpop.f32.mrf.mxu0
      %v5076 = vadd.f32 0.0, %v5075
      %5077 = vmatmul.bf16.gmra.mxu0 %v2145
      %v5078 = vpop.f32.mrf.mxu0
      %v5079 = vadd.f32 0.0, %v5078
      %v5080 = vpop.f32.mrf.mxu0
      %v5081 = vadd.f32 0.0, %v5080
      %5082 = vmatmul.bf16.gmra.mxu0 %v2146
      %v5083 = vpop.f32.mrf.mxu0
      %v5084 = vadd.f32 0.0, %v5083
      %v5085 = vpop.f32.mrf.mxu0
      %v5086 = vadd.f32 0.0, %v5085
      %5087 = vmatmul.bf16.gmra.mxu0 %v2115
      %v5088 = vpop.f32.mrf.mxu0
      %v5089 = vadd.f32 0.0, %v5088
      %v5090 = vpop.f32.mrf.mxu0
      %v5091 = vadd.f32 0.0, %v5090
      %5092 = vmatmul.bf16.gmra.mxu0 %v2116
      %v5093 = vpop.f32.mrf.mxu0
      %v5094 = vadd.f32 0.0, %v5093
      %v5095 = vpop.f32.mrf.mxu0
      %v5096 = vadd.f32 0.0, %v5095
      %5097 = vdwg.mxu0
      %v5098 = vld [vmem:[#allocation2] sm:$0xff]
      %v5099 = vld [vmem:[#allocation2 + $0x8] sm:$0xff]
      %v5100 = vld [vmem:[#allocation2 + $0x10] sm:$0xff]
      %v5101 = vld [vmem:[#allocation2 + $0x18] sm:$0xff]
      %v5102 = vld [vmem:[#allocation2 + $0x20] sm:$0xff]
      %v5103 = vld [vmem:[#allocation2 + $0x28] sm:$0xff]
      %v5104 = vld [vmem:[#allocation2 + $0x30] sm:$0xff]
      %v5105 = vld [vmem:[#allocation2 + $0x38] sm:$0xff]
      %v5106 = vld [vmem:[#allocation2 + $0x40] sm:$0xff]
      %v5107 = vld [vmem:[#allocation2 + $0x48] sm:$0xff]
      %v5108 = vld [vmem:[#allocation2 + $0x50] sm:$0xff]
      %v5109 = vld [vmem:[#allocation2 + $0x58] sm:$0xff]
      %v5110 = vld [vmem:[#allocation2 + $0x60] sm:$0xff]
      %v5111 = vld [vmem:[#allocation2 + $0x68] sm:$0xff]
      %v5112 = vld [vmem:[#allocation2 + $0x70] sm:$0xff]
      %v5113 = vld [vmem:[#allocation2 + $0x78] sm:$0xff]
      %v5114 = vld [vmem:[#allocation2 + $0x80] sm:$0xff]
      %v5115 = vld [vmem:[#allocation2 + $0x88] sm:$0xff]
      %v5116 = vld [vmem:[#allocation2 + $0x90] sm:$0xff]
      %v5117 = vld [vmem:[#allocation2 + $0x98] sm:$0xff]
      %v5118 = vld [vmem:[#allocation2 + $0xa0] sm:$0xff]
      %v5119 = vld [vmem:[#allocation2 + $0xa8] sm:$0xff]
      %v5120 = vld [vmem:[#allocation2 + $0xb0] sm:$0xff]
      %v5121 = vld [vmem:[#allocation2 + $0xb8] sm:$0xff]
      %v5122 = vld [vmem:[#allocation2 + $0xc0] sm:$0xff]
      %v5123 = vld [vmem:[#allocation2 + $0xc8] sm:$0xff]
      %v5124 = vld [vmem:[#allocation2 + $0xd0] sm:$0xff]
      %v5125 = vld [vmem:[#allocation2 + $0xd8] sm:$0xff]
      %v5126 = vld [vmem:[#allocation2 + $0xe0] sm:$0xff]
      %v5127 = vld [vmem:[#allocation2 + $0xe8] sm:$0xff]
      %v5128 = vld [vmem:[#allocation2 + $0xf0] sm:$0xff]
      %v5129 = vld [vmem:[#allocation2 + $0xf8] sm:$0xff]
      %v5130 = vld [vmem:[#allocation2 + $0x100] sm:$0xff]
      %v5131 = vld [vmem:[#allocation2 + $0x108] sm:$0xff]
      %v5132 = vld [vmem:[#allocation2 + $0x110] sm:$0xff]
      %v5133 = vld [vmem:[#allocation2 + $0x118] sm:$0xff]
      %v5134 = vld [vmem:[#allocation2 + $0x120] sm:$0xff]
      %v5135 = vld [vmem:[#allocation2 + $0x128] sm:$0xff]
      %v5136 = vld [vmem:[#allocation2 + $0x130] sm:$0xff]
      %v5137 = vld [vmem:[#allocation2 + $0x138] sm:$0xff]
      %v5138 = vld [vmem:[#allocation2 + $0x140] sm:$0xff]
      %v5139 = vld [vmem:[#allocation2 + $0x148] sm:$0xff]
      %v5140 = vld [vmem:[#allocation2 + $0x150] sm:$0xff]
      %v5141 = vld [vmem:[#allocation2 + $0x158] sm:$0xff]
      %v5142 = vld [vmem:[#allocation2 + $0x160] sm:$0xff]
      %v5143 = vld [vmem:[#allocation2 + $0x168] sm:$0xff]
      %v5144 = vld [vmem:[#allocation2 + $0x170] sm:$0xff]
      %v5145 = vld [vmem:[#allocation2 + $0x178] sm:$0xff]
      %v5146 = vld [vmem:[#allocation2 + $0x180] sm:$0xff]
      %v5147 = vld [vmem:[#allocation2 + $0x188] sm:$0xff]
      %v5148 = vld [vmem:[#allocation2 + $0x190] sm:$0xff]
      %v5149 = vld [vmem:[#allocation2 + $0x198] sm:$0xff]
      %v5150 = vld [vmem:[#allocation2 + $0x1a0] sm:$0xff]
      %v5151 = vld [vmem:[#allocation2 + $0x1a8] sm:$0xff]
      %v5152 = vld [vmem:[#allocation2 + $0x1b0] sm:$0xff]
      %v5153 = vld [vmem:[#allocation2 + $0x1b8] sm:$0xff]
      %v5154 = vld [vmem:[#allocation2 + $0x1c0] sm:$0xff]
      %v5155 = vld [vmem:[#allocation2 + $0x1c8] sm:$0xff]
      %v5156 = vld [vmem:[#allocation2 + $0x1d0] sm:$0xff]
      %v5157 = vld [vmem:[#allocation2 + $0x1d8] sm:$0xff]
      %v5158 = vld [vmem:[#allocation2 + $0x1e0] sm:$0xff]
      %v5159 = vld [vmem:[#allocation2 + $0x1e8] sm:$0xff]
      %v5160 = vld [vmem:[#allocation2 + $0x1f0] sm:$0xff]
      %v5161 = vld [vmem:[#allocation2 + $0x1f8] sm:$0xff]
      %v5162 = vadd.f32 %v5098, %v4939
      %v5163 = vadd.f32 %v5099, %v4941
      %v5164 = vadd.f32 %v5100, %v4944
      %v5165 = vadd.f32 %v5101, %v4946
      %v5166 = vadd.f32 %v5102, %v4949
      %v5167 = vadd.f32 %v5103, %v4951
      %v5168 = vadd.f32 %v5104, %v4954
      %v5169 = vadd.f32 %v5105, %v4956
      %v5170 = vadd.f32 %v5106, %v4959
      %v5171 = vadd.f32 %v5107, %v4961
      %v5172 = vadd.f32 %v5108, %v4964
      %v5173 = vadd.f32 %v5109, %v4966
      %v5174 = vadd.f32 %v5110, %v4969
      %v5175 = vadd.f32 %v5111, %v4971
      %v5176 = vadd.f32 %v5112, %v4974
      %v5177 = vadd.f32 %v5113, %v4976
      %v5178 = vadd.f32 %v5114, %v4979
      %v5179 = vadd.f32 %v5115, %v4981
      %v5180 = vadd.f32 %v5116, %v4984
      %v5181 = vadd.f32 %v5117, %v4986
      %v5182 = vadd.f32 %v5118, %v4989
      %v5183 = vadd.f32 %v5119, %v4991
      %v5184 = vadd.f32 %v5120, %v4994
      %v5185 = vadd.f32 %v5121, %v4996
      %v5186 = vadd.f32 %v5122, %v4999
      %v5187 = vadd.f32 %v5123, %v5001
      %v5188 = vadd.f32 %v5124, %v5004
      %v5189 = vadd.f32 %v5125, %v5006
      %v5190 = vadd.f32 %v5126, %v5009
      %v5191 = vadd.f32 %v5127, %v5011
      %v5192 = vadd.f32 %v5128, %v5014
      %v5193 = vadd.f32 %v5129, %v5016
      %v5194 = vadd.f32 %v5130, %v5019
      %v5195 = vadd.f32 %v5131, %v5021
      %v5196 = vadd.f32 %v5132, %v5024
      %v5197 = vadd.f32 %v5133, %v5026
      %v5198 = vadd.f32 %v5134, %v5029
      %v5199 = vadd.f32 %v5135, %v5031
      %v5200 = vadd.f32 %v5136, %v5034
      %v5201 = vadd.f32 %v5137, %v5036
      %v5202 = vadd.f32 %v5138, %v5039
      %v5203 = vadd.f32 %v5139, %v5041
      %v5204 = vadd.f32 %v5140, %v5044
      %v5205 = vadd.f32 %v5141, %v5046
      %v5206 = vadd.f32 %v5142, %v5049
      %v5207 = vadd.f32 %v5143, %v5051
      %v5208 = vadd.f32 %v5144, %v5054
      %v5209 = vadd.f32 %v5145, %v5056
      %v5210 = vadd.f32 %v5146, %v5059
      %v5211 = vadd.f32 %v5147, %v5061
      %v5212 = vadd.f32 %v5148, %v5064
      %v5213 = vadd.f32 %v5149, %v5066
      %v5214 = vadd.f32 %v5150, %v5069
      %v5215 = vadd.f32 %v5151, %v5071
      %v5216 = vadd.f32 %v5152, %v5074
      %v5217 = vadd.f32 %v5153, %v5076
      %v5218 = vadd.f32 %v5154, %v5079
      %v5219 = vadd.f32 %v5155, %v5081
      %v5220 = vadd.f32 %v5156, %v5084
      %v5221 = vadd.f32 %v5157, %v5086
      %v5222 = vadd.f32 %v5158, %v5089
      %v5223 = vadd.f32 %v5159, %v5091
      %v5224 = vadd.f32 %v5160, %v5094
      %v5225 = vadd.f32 %v5161, %v5096
      %5226 = vst [vmem:[#allocation2] sm:$0xff] %v5162
      %5227 = vst [vmem:[#allocation2 + $0x8] sm:$0xff] %v5163
      %5228 = vst [vmem:[#allocation2 + $0x10] sm:$0xff] %v5164
      %5229 = vst [vmem:[#allocation2 + $0x18] sm:$0xff] %v5165
      %5230 = vst [vmem:[#allocation2 + $0x20] sm:$0xff] %v5166
      %5231 = vst [vmem:[#allocation2 + $0x28] sm:$0xff] %v5167
      %5232 = vst [vmem:[#allocation2 + $0x30] sm:$0xff] %v5168
      %5233 = vst [vmem:[#allocation2 + $0x38] sm:$0xff] %v5169
      %5234 = vst [vmem:[#allocation2 + $0x40] sm:$0xff] %v5170
      %5235 = vst [vmem:[#allocation2 + $0x48] sm:$0xff] %v5171
      %5236 = vst [vmem:[#allocation2 + $0x50] sm:$0xff] %v5172
      %5237 = vst [vmem:[#allocation2 + $0x58] sm:$0xff] %v5173
      %5238 = vst [vmem:[#allocation2 + $0x60] sm:$0xff] %v5174
      %5239 = vst [vmem:[#allocation2 + $0x68] sm:$0xff] %v5175
      %5240 = vst [vmem:[#allocation2 + $0x70] sm:$0xff] %v5176
      %5241 = vst [vmem:[#allocation2 + $0x78] sm:$0xff] %v5177
      %5242 = vst [vmem:[#allocation2 + $0x80] sm:$0xff] %v5178
      %5243 = vst [vmem:[#allocation2 + $0x88] sm:$0xff] %v5179
      %5244 = vst [vmem:[#allocation2 + $0x90] sm:$0xff] %v5180
      %5245 = vst [vmem:[#allocation2 + $0x98] sm:$0xff] %v5181
      %5246 = vst [vmem:[#allocation2 + $0xa0] sm:$0xff] %v5182
      %5247 = vst [vmem:[#allocation2 + $0xa8] sm:$0xff] %v5183
      %5248 = vst [vmem:[#allocation2 + $0xb0] sm:$0xff] %v5184
      %5249 = vst [vmem:[#allocation2 + $0xb8] sm:$0xff] %v5185
      %5250 = vst [vmem:[#allocation2 + $0xc0] sm:$0xff] %v5186
      %5251 = vst [vmem:[#allocation2 + $0xc8] sm:$0xff] %v5187
      %5252 = vst [vmem:[#allocation2 + $0xd0] sm:$0xff] %v5188
      %5253 = vst [vmem:[#allocation2 + $0xd8] sm:$0xff] %v5189
      %5254 = vst [vmem:[#allocation2 + $0xe0] sm:$0xff] %v5190
      %5255 = vst [vmem:[#allocation2 + $0xe8] sm:$0xff] %v5191
      %5256 = vst [vmem:[#allocation2 + $0xf0] sm:$0xff] %v5192
      %5257 = vst [vmem:[#allocation2 + $0xf8] sm:$0xff] %v5193
      %5258 = vst [vmem:[#allocation2 + $0x100] sm:$0xff] %v5194
      %5259 = vst [vmem:[#allocation2 + $0x108] sm:$0xff] %v5195
      %5260 = vst [vmem:[#allocation2 + $0x110] sm:$0xff] %v5196
      %5261 = vst [vmem:[#allocation2 + $0x118] sm:$0xff] %v5197
      %5262 = vst [vmem:[#allocation2 + $0x120] sm:$0xff] %v5198
      %5263 = vst [vmem:[#allocation2 + $0x128] sm:$0xff] %v5199
      %5264 = vst [vmem:[#allocation2 + $0x130] sm:$0xff] %v5200
      %5265 = vst [vmem:[#allocation2 + $0x138] sm:$0xff] %v5201
      %5266 = vst [vmem:[#allocation2 + $0x140] sm:$0xff] %v5202
      %5267 = vst [vmem:[#allocation2 + $0x148] sm:$0xff] %v5203
      %5268 = vst [vmem:[#allocation2 + $0x150] sm:$0xff] %v5204
      %5269 = vst [vmem:[#allocation2 + $0x158] sm:$0xff] %v5205
      %5270 = vst [vmem:[#allocation2 + $0x160] sm:$0xff] %v5206
      %5271 = vst [vmem:[#allocation2 + $0x168] sm:$0xff] %v5207
      %5272 = vst [vmem:[#allocation2 + $0x170] sm:$0xff] %v5208
      %5273 = vst [vmem:[#allocation2 + $0x178] sm:$0xff] %v5209
      %5274 = vst [vmem:[#allocation2 + $0x180] sm:$0xff] %v5210
      %5275 = vst [vmem:[#allocation2 + $0x188] sm:$0xff] %v5211
      %5276 = vst [vmem:[#allocation2 + $0x190] sm:$0xff] %v5212
      %5277 = vst [vmem:[#allocation2 + $0x198] sm:$0xff] %v5213
      %5278 = vst [vmem:[#allocation2 + $0x1a0] sm:$0xff] %v5214
      %5279 = vst [vmem:[#allocation2 + $0x1a8] sm:$0xff] %v5215
      %5280 = vst [vmem:[#allocation2 + $0x1b0] sm:$0xff] %v5216
      %5281 = vst [vmem:[#allocation2 + $0x1b8] sm:$0xff] %v5217
      %5282 = vst [vmem:[#allocation2 + $0x1c0] sm:$0xff] %v5218
      %5283 = vst [vmem:[#allocation2 + $0x1c8] sm:$0xff] %v5219
      %5284 = vst [vmem:[#allocation2 + $0x1d0] sm:$0xff] %v5220
      %5285 = vst [vmem:[#allocation2 + $0x1d8] sm:$0xff] %v5221
      %5286 = vst [vmem:[#allocation2 + $0x1e0] sm:$0xff] %v5222
      %5287 = vst [vmem:[#allocation2 + $0x1e8] sm:$0xff] %v5223
      %5288 = vst [vmem:[#allocation2 + $0x1f0] sm:$0xff] %v5224
      %5289 = vst [vmem:[#allocation2 + $0x1f8] sm:$0xff] %v5225
      %s5290 = scalar_lea.vmem %s4, 512
      %v5291 = vld [vmem:[%s5290] sm:$0xf]
      %v5292 = vld [vmem:[%s5290 + $0x4] sm:$0xf]
      %v5293 = vld [vmem:[%s5290 + $0x8] sm:$0xf]
      %v5294 = vld [vmem:[%s5290 + $0xc] sm:$0xf]
      %v5295 = vld [vmem:[%s5290 + $0x10] sm:$0xf]
      %v5296 = vld [vmem:[%s5290 + $0x14] sm:$0xf]
      %v5297 = vld [vmem:[%s5290 + $0x18] sm:$0xf]
      %v5298 = vld [vmem:[%s5290 + $0x1c] sm:$0xf]
      %v5299 = vld [vmem:[%s5290 + $0x20] sm:$0xf]
      %v5300 = vld [vmem:[%s5290 + $0x24] sm:$0xf]
      %v5301 = vld [vmem:[%s5290 + $0x28] sm:$0xf]
      %v5302 = vld [vmem:[%s5290 + $0x2c] sm:$0xf]
      %v5303 = vld [vmem:[%s5290 + $0x30] sm:$0xf]
      %v5304 = vld [vmem:[%s5290 + $0x34] sm:$0xf]
      %v5305 = vld [vmem:[%s5290 + $0x38] sm:$0xf]
      %v5306 = vld [vmem:[%s5290 + $0x3c] sm:$0xf]
      %v5323 = vunpack.c.l.b16 %v5291
      %v5324 = vunpack.c.l.b16 %v5292
      %v5325 = vunpack.c.l.b16 %v5293
      %v5326 = vunpack.c.l.b16 %v5294
      %v5327 = vunpack.c.l.b16 %v5295
      %v5328 = vunpack.c.l.b16 %v5296
      %v5329 = vunpack.c.l.b16 %v5297
      %v5330 = vunpack.c.l.b16 %v5298
      %v5331 = vunpack.c.l.b16 %v5299
      %v5332 = vunpack.c.l.b16 %v5300
      %v5333 = vunpack.c.l.b16 %v5301
      %v5334 = vunpack.c.l.b16 %v5302
      %v5335 = vunpack.c.l.b16 %v5303
      %v5336 = vunpack.c.l.b16 %v5304
      %v5337 = vunpack.c.l.b16 %v5305
      %v5338 = vunpack.c.l.b16 %v5306
      %v5339 = vpack.c.b16 %v5324, %v5323
      %v5340 = vpack.c.b16 %v5326, %v5325
      %v5341 = vpack.c.b16 %v5328, %v5327
      %v5342 = vpack.c.b16 %v5330, %v5329
      %v5343 = vpack.c.b16 %v5332, %v5331
      %v5344 = vpack.c.b16 %v5334, %v5333
      %v5345 = vpack.c.b16 %v5336, %v5335
      %v5346 = vpack.c.b16 %v5338, %v5337
      %5355 = vmatpush.bf16.msra.mxu0 %v5346
      %5356 = vmatpush.bf16.msra.mxu0 %v5345
      %5357 = vmatpush.bf16.msra.mxu0 %v5344
      %5358 = vmatpush.bf16.msra.mxu0 %v5343
      %5359 = vmatpush.bf16.msra.mxu0 %v5342
      %5360 = vmatpush.bf16.msra.mxu0 %v5341
      %5361 = vmatpush.bf16.msra.mxu0 %v5340
      %5362 = vmatpush.bf16.msra.mxu0 %v5339
      %5363 = vmatmul.bf16.gmra.mxu0 %v2704
      %v5364 = vpop.f32.mrf.mxu0
      %v5365 = vadd.f32 0.0, %v5364
      %v5366 = vpop.f32.mrf.mxu0
      %v5367 = vadd.f32 0.0, %v5366
      %5368 = vmatmul.bf16.gmra.mxu0 %v2705
      %v5369 = vpop.f32.mrf.mxu0
      %v5370 = vadd.f32 0.0, %v5369
      %v5371 = vpop.f32.mrf.mxu0
      %v5372 = vadd.f32 0.0, %v5371
      %5373 = vmatmul.bf16.gmra.mxu0 %v2706
      %v5374 = vpop.f32.mrf.mxu0
      %v5375 = vadd.f32 0.0, %v5374
      %v5376 = vpop.f32.mrf.mxu0
      %v5377 = vadd.f32 0.0, %v5376
      %5378 = vmatmul.bf16.gmra.mxu0 %v2707
      %v5379 = vpop.f32.mrf.mxu0
      %v5380 = vadd.f32 0.0, %v5379
      %v5381 = vpop.f32.mrf.mxu0
      %v5382 = vadd.f32 0.0, %v5381
      %5383 = vmatmul.bf16.gmra.mxu0 %v2708
      %v5384 = vpop.f32.mrf.mxu0
      %v5385 = vadd.f32 0.0, %v5384
      %v5386 = vpop.f32.mrf.mxu0
      %v5387 = vadd.f32 0.0, %v5386
      %5388 = vmatmul.bf16.gmra.mxu0 %v2709
      %v5389 = vpop.f32.mrf.mxu0
      %v5390 = vadd.f32 0.0, %v5389
      %v5391 = vpop.f32.mrf.mxu0
      %v5392 = vadd.f32 0.0, %v5391
      %5393 = vmatmul.bf16.gmra.mxu0 %v2710
      %v5394 = vpop.f32.mrf.mxu0
      %v5395 = vadd.f32 0.0, %v5394
      %v5396 = vpop.f32.mrf.mxu0
      %v5397 = vadd.f32 0.0, %v5396
      %5398 = vmatmul.bf16.gmra.mxu0 %v2711
      %v5399 = vpop.f32.mrf.mxu0
      %v5400 = vadd.f32 0.0, %v5399
      %v5401 = vpop.f32.mrf.mxu0
      %v5402 = vadd.f32 0.0, %v5401
      %5403 = vmatmul.bf16.gmra.mxu0 %v2712
      %v5404 = vpop.f32.mrf.mxu0
      %v5405 = vadd.f32 0.0, %v5404
      %v5406 = vpop.f32.mrf.mxu0
      %v5407 = vadd.f32 0.0, %v5406
      %5408 = vmatmul.bf16.gmra.mxu0 %v2713
      %v5409 = vpop.f32.mrf.mxu0
      %v5410 = vadd.f32 0.0, %v5409
      %v5411 = vpop.f32.mrf.mxu0
      %v5412 = vadd.f32 0.0, %v5411
      %5413 = vmatmul.bf16.gmra.mxu0 %v2714
      %v5414 = vpop.f32.mrf.mxu0
      %v5415 = vadd.f32 0.0, %v5414
      %v5416 = vpop.f32.mrf.mxu0
      %v5417 = vadd.f32 0.0, %v5416
      %5418 = vmatmul.bf16.gmra.mxu0 %v2715
      %v5419 = vpop.f32.mrf.mxu0
      %v5420 = vadd.f32 0.0, %v5419
      %v5421 = vpop.f32.mrf.mxu0
      %v5422 = vadd.f32 0.0, %v5421
      %5423 = vmatmul.bf16.gmra.mxu0 %v2716
      %v5424 = vpop.f32.mrf.mxu0
      %v5425 = vadd.f32 0.0, %v5424
      %v5426 = vpop.f32.mrf.mxu0
      %v5427 = vadd.f32 0.0, %v5426
      %5428 = vmatmul.bf16.gmra.mxu0 %v2717
      %v5429 = vpop.f32.mrf.mxu0
      %v5430 = vadd.f32 0.0, %v5429
      %v5431 = vpop.f32.mrf.mxu0
      %v5432 = vadd.f32 0.0, %v5431
      %5433 = vmatmul.bf16.gmra.mxu0 %v2718
      %v5434 = vpop.f32.mrf.mxu0
      %v5435 = vadd.f32 0.0, %v5434
      %v5436 = vpop.f32.mrf.mxu0
      %v5437 = vadd.f32 0.0, %v5436
      %5438 = vmatmul.bf16.gmra.mxu0 %v2719
      %v5439 = vpop.f32.mrf.mxu0
      %v5440 = vadd.f32 0.0, %v5439
      %v5441 = vpop.f32.mrf.mxu0
      %v5442 = vadd.f32 0.0, %v5441
      %5443 = vmatmul.bf16.gmra.mxu0 %v2720
      %v5444 = vpop.f32.mrf.mxu0
      %v5445 = vadd.f32 0.0, %v5444
      %v5446 = vpop.f32.mrf.mxu0
      %v5447 = vadd.f32 0.0, %v5446
      %5448 = vmatmul.bf16.gmra.mxu0 %v2721
      %v5449 = vpop.f32.mrf.mxu0
      %v5450 = vadd.f32 0.0, %v5449
      %v5451 = vpop.f32.mrf.mxu0
      %v5452 = vadd.f32 0.0, %v5451
      %5453 = vmatmul.bf16.gmra.mxu0 %v2722
      %v5454 = vpop.f32.mrf.mxu0
      %v5455 = vadd.f32 0.0, %v5454
      %v5456 = vpop.f32.mrf.mxu0
      %v5457 = vadd.f32 0.0, %v5456
      %5458 = vmatmul.bf16.gmra.mxu0 %v2723
      %v5459 = vpop.f32.mrf.mxu0
      %v5460 = vadd.f32 0.0, %v5459
      %v5461 = vpop.f32.mrf.mxu0
      %v5462 = vadd.f32 0.0, %v5461
      %5463 = vmatmul.bf16.gmra.mxu0 %v2724
      %v5464 = vpop.f32.mrf.mxu0
      %v5465 = vadd.f32 0.0, %v5464
      %v5466 = vpop.f32.mrf.mxu0
      %v5467 = vadd.f32 0.0, %v5466
      %5468 = vmatmul.bf16.gmra.mxu0 %v2725
      %v5469 = vpop.f32.mrf.mxu0
      %v5470 = vadd.f32 0.0, %v5469
      %v5471 = vpop.f32.mrf.mxu0
      %v5472 = vadd.f32 0.0, %v5471
      %5473 = vmatmul.bf16.gmra.mxu0 %v2726
      %v5474 = vpop.f32.mrf.mxu0
      %v5475 = vadd.f32 0.0, %v5474
      %v5476 = vpop.f32.mrf.mxu0
      %v5477 = vadd.f32 0.0, %v5476
      %5478 = vmatmul.bf16.gmra.mxu0 %v2727
      %v5479 = vpop.f32.mrf.mxu0
      %v5480 = vadd.f32 0.0, %v5479
      %v5481 = vpop.f32.mrf.mxu0
      %v5482 = vadd.f32 0.0, %v5481
      %5483 = vmatmul.bf16.gmra.mxu0 %v2728
      %v5484 = vpop.f32.mrf.mxu0
      %v5485 = vadd.f32 0.0, %v5484
      %v5486 = vpop.f32.mrf.mxu0
      %v5487 = vadd.f32 0.0, %v5486
      %5488 = vmatmul.bf16.gmra.mxu0 %v2729
      %v5489 = vpop.f32.mrf.mxu0
      %v5490 = vadd.f32 0.0, %v5489
      %v5491 = vpop.f32.mrf.mxu0
      %v5492 = vadd.f32 0.0, %v5491
      %5493 = vmatmul.bf16.gmra.mxu0 %v2730
      %v5494 = vpop.f32.mrf.mxu0
      %v5495 = vadd.f32 0.0, %v5494
      %v5496 = vpop.f32.mrf.mxu0
      %v5497 = vadd.f32 0.0, %v5496
      %5498 = vmatmul.bf16.gmra.mxu0 %v2731
      %v5499 = vpop.f32.mrf.mxu0
      %v5500 = vadd.f32 0.0, %v5499
      %v5501 = vpop.f32.mrf.mxu0
      %v5502 = vadd.f32 0.0, %v5501
      %5503 = vmatmul.bf16.gmra.mxu0 %v2732
      %v5504 = vpop.f32.mrf.mxu0
      %v5505 = vadd.f32 0.0, %v5504
      %v5506 = vpop.f32.mrf.mxu0
      %v5507 = vadd.f32 0.0, %v5506
      %5508 = vmatmul.bf16.gmra.mxu0 %v2733
      %v5509 = vpop.f32.mrf.mxu0
      %v5510 = vadd.f32 0.0, %v5509
      %v5511 = vpop.f32.mrf.mxu0
      %v5512 = vadd.f32 0.0, %v5511
      %5513 = vmatmul.bf16.gmra.mxu0 %v2702
      %v5514 = vpop.f32.mrf.mxu0
      %v5515 = vadd.f32 0.0, %v5514
      %v5516 = vpop.f32.mrf.mxu0
      %v5517 = vadd.f32 0.0, %v5516
      %5518 = vmatmul.bf16.gmra.mxu0 %v2703
      %v5519 = vpop.f32.mrf.mxu0
      %v5520 = vadd.f32 0.0, %v5519
      %v5521 = vpop.f32.mrf.mxu0
      %v5522 = vadd.f32 0.0, %v5521
      %5523 = vdwg.mxu0
      %v5524 = vld [vmem:[#allocation2] sm:$0xff]
      %v5525 = vld [vmem:[#allocation2 + $0x8] sm:$0xff]
      %v5526 = vld [vmem:[#allocation2 + $0x10] sm:$0xff]
      %v5527 = vld [vmem:[#allocation2 + $0x18] sm:$0xff]
      %v5528 = vld [vmem:[#allocation2 + $0x20] sm:$0xff]
      %v5529 = vld [vmem:[#allocation2 + $0x28] sm:$0xff]
      %v5530 = vld [vmem:[#allocation2 + $0x30] sm:$0xff]
      %v5531 = vld [vmem:[#allocation2 + $0x38] sm:$0xff]
      %v5532 = vld [vmem:[#allocation2 + $0x40] sm:$0xff]
      %v5533 = vld [vmem:[#allocation2 + $0x48] sm:$0xff]
      %v5534 = vld [vmem:[#allocation2 + $0x50] sm:$0xff]
      %v5535 = vld [vmem:[#allocation2 + $0x58] sm:$0xff]
      %v5536 = vld [vmem:[#allocation2 + $0x60] sm:$0xff]
      %v5537 = vld [vmem:[#allocation2 + $0x68] sm:$0xff]
      %v5538 = vld [vmem:[#allocation2 + $0x70] sm:$0xff]
      %v5539 = vld [vmem:[#allocation2 + $0x78] sm:$0xff]
      %v5540 = vld [vmem:[#allocation2 + $0x80] sm:$0xff]
      %v5541 = vld [vmem:[#allocation2 + $0x88] sm:$0xff]
      %v5542 = vld [vmem:[#allocation2 + $0x90] sm:$0xff]
      %v5543 = vld [vmem:[#allocation2 + $0x98] sm:$0xff]
      %v5544 = vld [vmem:[#allocation2 + $0xa0] sm:$0xff]
      %v5545 = vld [vmem:[#allocation2 + $0xa8] sm:$0xff]
      %v5546 = vld [vmem:[#allocation2 + $0xb0] sm:$0xff]
      %v5547 = vld [vmem:[#allocation2 + $0xb8] sm:$0xff]
      %v5548 = vld [vmem:[#allocation2 + $0xc0] sm:$0xff]
      %v5549 = vld [vmem:[#allocation2 + $0xc8] sm:$0xff]
      %v5550 = vld [vmem:[#allocation2 + $0xd0] sm:$0xff]
      %v5551 = vld [vmem:[#allocation2 + $0xd8] sm:$0xff]
      %v5552 = vld [vmem:[#allocation2 + $0xe0] sm:$0xff]
      %v5553 = vld [vmem:[#allocation2 + $0xe8] sm:$0xff]
      %v5554 = vld [vmem:[#allocation2 + $0xf0] sm:$0xff]
      %v5555 = vld [vmem:[#allocation2 + $0xf8] sm:$0xff]
      %v5556 = vld [vmem:[#allocation2 + $0x100] sm:$0xff]
      %v5557 = vld [vmem:[#allocation2 + $0x108] sm:$0xff]
      %v5558 = vld [vmem:[#allocation2 + $0x110] sm:$0xff]
      %v5559 = vld [vmem:[#allocation2 + $0x118] sm:$0xff]
      %v5560 = vld [vmem:[#allocation2 + $0x120] sm:$0xff]
      %v5561 = vld [vmem:[#allocation2 + $0x128] sm:$0xff]
      %v5562 = vld [vmem:[#allocation2 + $0x130] sm:$0xff]
      %v5563 = vld [vmem:[#allocation2 + $0x138] sm:$0xff]
      %v5564 = vld [vmem:[#allocation2 + $0x140] sm:$0xff]
      %v5565 = vld [vmem:[#allocation2 + $0x148] sm:$0xff]
      %v5566 = vld [vmem:[#allocation2 + $0x150] sm:$0xff]
      %v5567 = vld [vmem:[#allocation2 + $0x158] sm:$0xff]
      %v5568 = vld [vmem:[#allocation2 + $0x160] sm:$0xff]
      %v5569 = vld [vmem:[#allocation2 + $0x168] sm:$0xff]
      %v5570 = vld [vmem:[#allocation2 + $0x170] sm:$0xff]
      %v5571 = vld [vmem:[#allocation2 + $0x178] sm:$0xff]
      %v5572 = vld [vmem:[#allocation2 + $0x180] sm:$0xff]
      %v5573 = vld [vmem:[#allocation2 + $0x188] sm:$0xff]
      %v5574 = vld [vmem:[#allocation2 + $0x190] sm:$0xff]
      %v5575 = vld [vmem:[#allocation2 + $0x198] sm:$0xff]
      %v5576 = vld [vmem:[#allocation2 + $0x1a0] sm:$0xff]
      %v5577 = vld [vmem:[#allocation2 + $0x1a8] sm:$0xff]
      %v5578 = vld [vmem:[#allocation2 + $0x1b0] sm:$0xff]
      %v5579 = vld [vmem:[#allocation2 + $0x1b8] sm:$0xff]
      %v5580 = vld [vmem:[#allocation2 + $0x1c0] sm:$0xff]
      %v5581 = vld [vmem:[#allocation2 + $0x1c8] sm:$0xff]
      %v5582 = vld [vmem:[#allocation2 + $0x1d0] sm:$0xff]
      %v5583 = vld [vmem:[#allocation2 + $0x1d8] sm:$0xff]
      %v5584 = vld [vmem:[#allocation2 + $0x1e0] sm:$0xff]
      %v5585 = vld [vmem:[#allocation2 + $0x1e8] sm:$0xff]
      %v5586 = vld [vmem:[#allocation2 + $0x1f0] sm:$0xff]
      %v5587 = vld [vmem:[#allocation2 + $0x1f8] sm:$0xff]
      %v5588 = vadd.f32 %v5524, %v5365
      %v5589 = vadd.f32 %v5525, %v5367
      %v5590 = vadd.f32 %v5526, %v5370
      %v5591 = vadd.f32 %v5527, %v5372
      %v5592 = vadd.f32 %v5528, %v5375
      %v5593 = vadd.f32 %v5529, %v5377
      %v5594 = vadd.f32 %v5530, %v5380
      %v5595 = vadd.f32 %v5531, %v5382
      %v5596 = vadd.f32 %v5532, %v5385
      %v5597 = vadd.f32 %v5533, %v5387
      %v5598 = vadd.f32 %v5534, %v5390
      %v5599 = vadd.f32 %v5535, %v5392
      %v5600 = vadd.f32 %v5536, %v5395
      %v5601 = vadd.f32 %v5537, %v5397
      %v5602 = vadd.f32 %v5538, %v5400
      %v5603 = vadd.f32 %v5539, %v5402
      %v5604 = vadd.f32 %v5540, %v5405
      %v5605 = vadd.f32 %v5541, %v5407
      %v5606 = vadd.f32 %v5542, %v5410
      %v5607 = vadd.f32 %v5543, %v5412
      %v5608 = vadd.f32 %v5544, %v5415
      %v5609 = vadd.f32 %v5545, %v5417
      %v5610 = vadd.f32 %v5546, %v5420
      %v5611 = vadd.f32 %v5547, %v5422
      %v5612 = vadd.f32 %v5548, %v5425
      %v5613 = vadd.f32 %v5549, %v5427
      %v5614 = vadd.f32 %v5550, %v5430
      %v5615 = vadd.f32 %v5551, %v5432
      %v5616 = vadd.f32 %v5552, %v5435
      %v5617 = vadd.f32 %v5553, %v5437
      %v5618 = vadd.f32 %v5554, %v5440
      %v5619 = vadd.f32 %v5555, %v5442
      %v5620 = vadd.f32 %v5556, %v5445
      %v5621 = vadd.f32 %v5557, %v5447
      %v5622 = vadd.f32 %v5558, %v5450
      %v5623 = vadd.f32 %v5559, %v5452
      %v5624 = vadd.f32 %v5560, %v5455
      %v5625 = vadd.f32 %v5561, %v5457
      %v5626 = vadd.f32 %v5562, %v5460
      %v5627 = vadd.f32 %v5563, %v5462
      %v5628 = vadd.f32 %v5564, %v5465
      %v5629 = vadd.f32 %v5565, %v5467
      %v5630 = vadd.f32 %v5566, %v5470
      %v5631 = vadd.f32 %v5567, %v5472
      %v5632 = vadd.f32 %v5568, %v5475
      %v5633 = vadd.f32 %v5569, %v5477
      %v5634 = vadd.f32 %v5570, %v5480
      %v5635 = vadd.f32 %v5571, %v5482
      %v5636 = vadd.f32 %v5572, %v5485
      %v5637 = vadd.f32 %v5573, %v5487
      %v5638 = vadd.f32 %v5574, %v5490
      %v5639 = vadd.f32 %v5575, %v5492
      %v5640 = vadd.f32 %v5576, %v5495
      %v5641 = vadd.f32 %v5577, %v5497
      %v5642 = vadd.f32 %v5578, %v5500
      %v5643 = vadd.f32 %v5579, %v5502
      %v5644 = vadd.f32 %v5580, %v5505
      %v5645 = vadd.f32 %v5581, %v5507
      %v5646 = vadd.f32 %v5582, %v5510
      %v5647 = vadd.f32 %v5583, %v5512
      %v5648 = vadd.f32 %v5584, %v5515
      %v5649 = vadd.f32 %v5585, %v5517
      %v5650 = vadd.f32 %v5586, %v5520
      %v5651 = vadd.f32 %v5587, %v5522
      %5652 = vst [vmem:[#allocation2] sm:$0xff] %v5588
      %5653 = vst [vmem:[#allocation2 + $0x8] sm:$0xff] %v5589
      %5654 = vst [vmem:[#allocation2 + $0x10] sm:$0xff] %v5590
      %5655 = vst [vmem:[#allocation2 + $0x18] sm:$0xff] %v5591
      %5656 = vst [vmem:[#allocation2 + $0x20] sm:$0xff] %v5592
      %5657 = vst [vmem:[#allocation2 + $0x28] sm:$0xff] %v5593
      %5658 = vst [vmem:[#allocation2 + $0x30] sm:$0xff] %v5594
      %5659 = vst [vmem:[#allocation2 + $0x38] sm:$0xff] %v5595
      %5660 = vst [vmem:[#allocation2 + $0x40] sm:$0xff] %v5596
      %5661 = vst [vmem:[#allocation2 + $0x48] sm:$0xff] %v5597
      %5662 = vst [vmem:[#allocation2 + $0x50] sm:$0xff] %v5598
      %5663 = vst [vmem:[#allocation2 + $0x58] sm:$0xff] %v5599
      %5664 = vst [vmem:[#allocation2 + $0x60] sm:$0xff] %v5600
      %5665 = vst [vmem:[#allocation2 + $0x68] sm:$0xff] %v5601
      %5666 = vst [vmem:[#allocation2 + $0x70] sm:$0xff] %v5602
      %5667 = vst [vmem:[#allocation2 + $0x78] sm:$0xff] %v5603
      %5668 = vst [vmem:[#allocation2 + $0x80] sm:$0xff] %v5604
      %5669 = vst [vmem:[#allocation2 + $0x88] sm:$0xff] %v5605
      %5670 = vst [vmem:[#allocation2 + $0x90] sm:$0xff] %v5606
      %5671 = vst [vmem:[#allocation2 + $0x98] sm:$0xff] %v5607
      %5672 = vst [vmem:[#allocation2 + $0xa0] sm:$0xff] %v5608
      %5673 = vst [vmem:[#allocation2 + $0xa8] sm:$0xff] %v5609
      %5674 = vst [vmem:[#allocation2 + $0xb0] sm:$0xff] %v5610
      %5675 = vst [vmem:[#allocation2 + $0xb8] sm:$0xff] %v5611
      %5676 = vst [vmem:[#allocation2 + $0xc0] sm:$0xff] %v5612
      %5677 = vst [vmem:[#allocation2 + $0xc8] sm:$0xff] %v5613
      %5678 = vst [vmem:[#allocation2 + $0xd0] sm:$0xff] %v5614
      %5679 = vst [vmem:[#allocation2 + $0xd8] sm:$0xff] %v5615
      %5680 = vst [vmem:[#allocation2 + $0xe0] sm:$0xff] %v5616
      %5681 = vst [vmem:[#allocation2 + $0xe8] sm:$0xff] %v5617
      %5682 = vst [vmem:[#allocation2 + $0xf0] sm:$0xff] %v5618
      %5683 = vst [vmem:[#allocation2 + $0xf8] sm:$0xff] %v5619
      %5684 = vst [vmem:[#allocation2 + $0x100] sm:$0xff] %v5620
      %5685 = vst [vmem:[#allocation2 + $0x108] sm:$0xff] %v5621
      %5686 = vst [vmem:[#allocation2 + $0x110] sm:$0xff] %v5622
      %5687 = vst [vmem:[#allocation2 + $0x118] sm:$0xff] %v5623
      %5688 = vst [vmem:[#allocation2 + $0x120] sm:$0xff] %v5624
      %5689 = vst [vmem:[#allocation2 + $0x128] sm:$0xff] %v5625
      %5690 = vst [vmem:[#allocation2 + $0x130] sm:$0xff] %v5626
      %5691 = vst [vmem:[#allocation2 + $0x138] sm:$0xff] %v5627
      %5692 = vst [vmem:[#allocation2 + $0x140] sm:$0xff] %v5628
      %5693 = vst [vmem:[#allocation2 + $0x148] sm:$0xff] %v5629
      %5694 = vst [vmem:[#allocation2 + $0x150] sm:$0xff] %v5630
      %5695 = vst [vmem:[#allocation2 + $0x158] sm:$0xff] %v5631
      %5696 = vst [vmem:[#allocation2 + $0x160] sm:$0xff] %v5632
      %5697 = vst [vmem:[#allocation2 + $0x168] sm:$0xff] %v5633
      %5698 = vst [vmem:[#allocation2 + $0x170] sm:$0xff] %v5634
      %5699 = vst [vmem:[#allocation2 + $0x178] sm:$0xff] %v5635
      %5700 = vst [vmem:[#allocation2 + $0x180] sm:$0xff] %v5636
      %5701 = vst [vmem:[#allocation2 + $0x188] sm:$0xff] %v5637
      %5702 = vst [vmem:[#allocation2 + $0x190] sm:$0xff] %v5638
      %5703 = vst [vmem:[#allocation2 + $0x198] sm:$0xff] %v5639
      %5704 = vst [vmem:[#allocation2 + $0x1a0] sm:$0xff] %v5640
      %5705 = vst [vmem:[#allocation2 + $0x1a8] sm:$0xff] %v5641
      %5706 = vst [vmem:[#allocation2 + $0x1b0] sm:$0xff] %v5642
      %5707 = vst [vmem:[#allocation2 + $0x1b8] sm:$0xff] %v5643
      %5708 = vst [vmem:[#allocation2 + $0x1c0] sm:$0xff] %v5644
      %5709 = vst [vmem:[#allocation2 + $0x1c8] sm:$0xff] %v5645
      %5710 = vst [vmem:[#allocation2 + $0x1d0] sm:$0xff] %v5646
      %5711 = vst [vmem:[#allocation2 + $0x1d8] sm:$0xff] %v5647
      %5712 = vst [vmem:[#allocation2 + $0x1e0] sm:$0xff] %v5648
      %5713 = vst [vmem:[#allocation2 + $0x1e8] sm:$0xff] %v5649
      %5714 = vst [vmem:[#allocation2 + $0x1f0] sm:$0xff] %v5650
      %5715 = vst [vmem:[#allocation2 + $0x1f8] sm:$0xff] %v5651
      %v5716 = vld [vmem:[#allocation2] sm:$0xff]
      %v5717 = vld [vmem:[#allocation2 + $0x8] sm:$0xff]
      %v5718 = vld [vmem:[#allocation2 + $0x10] sm:$0xff]
      %v5719 = vld [vmem:[#allocation2 + $0x18] sm:$0xff]
      %v5720 = vld [vmem:[#allocation2 + $0x20] sm:$0xff]
      %v5721 = vld [vmem:[#allocation2 + $0x28] sm:$0xff]
      %v5722 = vld [vmem:[#allocation2 + $0x30] sm:$0xff]
      %v5723 = vld [vmem:[#allocation2 + $0x38] sm:$0xff]
      %v5724 = vld [vmem:[#allocation2 + $0x40] sm:$0xff]
      %v5725 = vld [vmem:[#allocation2 + $0x48] sm:$0xff]
      %v5726 = vld [vmem:[#allocation2 + $0x50] sm:$0xff]
      %v5727 = vld [vmem:[#allocation2 + $0x58] sm:$0xff]
      %v5728 = vld [vmem:[#allocation2 + $0x60] sm:$0xff]
      %v5729 = vld [vmem:[#allocation2 + $0x68] sm:$0xff]
      %v5730 = vld [vmem:[#allocation2 + $0x70] sm:$0xff]
      %v5731 = vld [vmem:[#allocation2 + $0x78] sm:$0xff]
      %v5732 = vld [vmem:[#allocation2 + $0x80] sm:$0xff]
      %v5733 = vld [vmem:[#allocation2 + $0x88] sm:$0xff]
      %v5734 = vld [vmem:[#allocation2 + $0x90] sm:$0xff]
      %v5735 = vld [vmem:[#allocation2 + $0x98] sm:$0xff]
      %v5736 = vld [vmem:[#allocation2 + $0xa0] sm:$0xff]
      %v5737 = vld [vmem:[#allocation2 + $0xa8] sm:$0xff]
      %v5738 = vld [vmem:[#allocation2 + $0xb0] sm:$0xff]
      %v5739 = vld [vmem:[#allocation2 + $0xb8] sm:$0xff]
      %v5740 = vld [vmem:[#allocation2 + $0xc0] sm:$0xff]
      %v5741 = vld [vmem:[#allocation2 + $0xc8] sm:$0xff]
      %v5742 = vld [vmem:[#allocation2 + $0xd0] sm:$0xff]
      %v5743 = vld [vmem:[#allocation2 + $0xd8] sm:$0xff]
      %v5744 = vld [vmem:[#allocation2 + $0xe0] sm:$0xff]
      %v5745 = vld [vmem:[#allocation2 + $0xe8] sm:$0xff]
      %v5746 = vld [vmem:[#allocation2 + $0xf0] sm:$0xff]
      %v5747 = vld [vmem:[#allocation2 + $0xf8] sm:$0xff]
      %v5748 = vld [vmem:[#allocation2 + $0x100] sm:$0xff]
      %v5749 = vld [vmem:[#allocation2 + $0x108] sm:$0xff]
      %v5750 = vld [vmem:[#allocation2 + $0x110] sm:$0xff]
      %v5751 = vld [vmem:[#allocation2 + $0x118] sm:$0xff]
      %v5752 = vld [vmem:[#allocation2 + $0x120] sm:$0xff]
      %v5753 = vld [vmem:[#allocation2 + $0x128] sm:$0xff]
      %v5754 = vld [vmem:[#allocation2 + $0x130] sm:$0xff]
      %v5755 = vld [vmem:[#allocation2 + $0x138] sm:$0xff]
      %v5756 = vld [vmem:[#allocation2 + $0x140] sm:$0xff]
      %v5757 = vld [vmem:[#allocation2 + $0x148] sm:$0xff]
      %v5758 = vld [vmem:[#allocation2 + $0x150] sm:$0xff]
      %v5759 = vld [vmem:[#allocation2 + $0x158] sm:$0xff]
      %v5760 = vld [vmem:[#allocation2 + $0x160] sm:$0xff]
      %v5761 = vld [vmem:[#allocation2 + $0x168] sm:$0xff]
      %v5762 = vld [vmem:[#allocation2 + $0x170] sm:$0xff]
      %v5763 = vld [vmem:[#allocation2 + $0x178] sm:$0xff]
      %v5764 = vld [vmem:[#allocation2 + $0x180] sm:$0xff]
      %v5765 = vld [vmem:[#allocation2 + $0x188] sm:$0xff]
      %v5766 = vld [vmem:[#allocation2 + $0x190] sm:$0xff]
      %v5767 = vld [vmem:[#allocation2 + $0x198] sm:$0xff]
      %v5768 = vld [vmem:[#allocation2 + $0x1a0] sm:$0xff]
      %v5769 = vld [vmem:[#allocation2 + $0x1a8] sm:$0xff]
      %v5770 = vld [vmem:[#allocation2 + $0x1b0] sm:$0xff]
      %v5771 = vld [vmem:[#allocation2 + $0x1b8] sm:$0xff]
      %v5772 = vld [vmem:[#allocation2 + $0x1c0] sm:$0xff]
      %v5773 = vld [vmem:[#allocation2 + $0x1c8] sm:$0xff]
      %v5774 = vld [vmem:[#allocation2 + $0x1d0] sm:$0xff]
      %v5775 = vld [vmem:[#allocation2 + $0x1d8] sm:$0xff]
      %v5776 = vld [vmem:[#allocation2 + $0x1e0] sm:$0xff]
      %v5777 = vld [vmem:[#allocation2 + $0x1e8] sm:$0xff]
      %v5778 = vld [vmem:[#allocation2 + $0x1f0] sm:$0xff]
      %v5779 = vld [vmem:[#allocation2 + $0x1f8] sm:$0xff]
      %v5780 = vld [vmem:[%s5] sm:$0x1]
      %v5782 = vperm.slane %v5780, 0
      %v5784 = vadd.f32 %v5716, %v5782
      %v5785 = vadd.f32 %v5717, %v5782
      %v5786 = vadd.f32 %v5718, %v5782
      %v5787 = vadd.f32 %v5719, %v5782
      %v5788 = vadd.f32 %v5720, %v5782
      %v5789 = vadd.f32 %v5721, %v5782
      %v5790 = vadd.f32 %v5722, %v5782
      %v5791 = vadd.f32 %v5723, %v5782
      %v5792 = vadd.f32 %v5724, %v5782
      %v5793 = vadd.f32 %v5725, %v5782
      %v5794 = vadd.f32 %v5726, %v5782
      %v5795 = vadd.f32 %v5727, %v5782
      %v5796 = vadd.f32 %v5728, %v5782
      %v5797 = vadd.f32 %v5729, %v5782
      %v5798 = vadd.f32 %v5730, %v5782
      %v5799 = vadd.f32 %v5731, %v5782
      %v5800 = vadd.f32 %v5732, %v5782
      %v5801 = vadd.f32 %v5733, %v5782
      %v5802 = vadd.f32 %v5734, %v5782
      %v5803 = vadd.f32 %v5735, %v5782
      %v5804 = vadd.f32 %v5736, %v5782
      %v5805 = vadd.f32 %v5737, %v5782
      %v5806 = vadd.f32 %v5738, %v5782
      %v5807 = vadd.f32 %v5739, %v5782
      %v5808 = vadd.f32 %v5740, %v5782
      %v5809 = vadd.f32 %v5741, %v5782
      %v5810 = vadd.f32 %v5742, %v5782
      %v5811 = vadd.f32 %v5743, %v5782
      %v5812 = vadd.f32 %v5744, %v5782
      %v5813 = vadd.f32 %v5745, %v5782
      %v5814 = vadd.f32 %v5746, %v5782
      %v5815 = vadd.f32 %v5747, %v5782
      %v5816 = vadd.f32 %v5748, %v5782
      %v5817 = vadd.f32 %v5749, %v5782
      %v5818 = vadd.f32 %v5750, %v5782
      %v5819 = vadd.f32 %v5751, %v5782
      %v5820 = vadd.f32 %v5752, %v5782
      %v5821 = vadd.f32 %v5753, %v5782
      %v5822 = vadd.f32 %v5754, %v5782
      %v5823 = vadd.f32 %v5755, %v5782
      %v5824 = vadd.f32 %v5756, %v5782
      %v5825 = vadd.f32 %v5757, %v5782
      %v5826 = vadd.f32 %v5758, %v5782
      %v5827 = vadd.f32 %v5759, %v5782
      %v5828 = vadd.f32 %v5760, %v5782
      %v5829 = vadd.f32 %v5761, %v5782
      %v5830 = vadd.f32 %v5762, %v5782
      %v5831 = vadd.f32 %v5763, %v5782
      %v5832 = vadd.f32 %v5764, %v5782
      %v5833 = vadd.f32 %v5765, %v5782
      %v5834 = vadd.f32 %v5766, %v5782
      %v5835 = vadd.f32 %v5767, %v5782
      %v5836 = vadd.f32 %v5768, %v5782
      %v5837 = vadd.f32 %v5769, %v5782
      %v5838 = vadd.f32 %v5770, %v5782
      %v5839 = vadd.f32 %v5771, %v5782
      %v5840 = vadd.f32 %v5772, %v5782
      %v5841 = vadd.f32 %v5773, %v5782
      %v5842 = vadd.f32 %v5774, %v5782
      %v5843 = vadd.f32 %v5775, %v5782
      %v5844 = vadd.f32 %v5776, %v5782
      %v5845 = vadd.f32 %v5777, %v5782
      %v5846 = vadd.f32 %v5778, %v5782
      %v5847 = vadd.f32 %v5779, %v5782
      %v5848 = vmax.f32 %v5784, 0.0
      %v5849 = vmax.f32 %v5785, 0.0
      %v5850 = vmax.f32 %v5786, 0.0
      %v5851 = vmax.f32 %v5787, 0.0
      %v5852 = vmax.f32 %v5788, 0.0
      %v5853 = vmax.f32 %v5789, 0.0
      %v5854 = vmax.f32 %v5790, 0.0
      %v5855 = vmax.f32 %v5791, 0.0
      %v5856 = vmax.f32 %v5792, 0.0
      %v5857 = vmax.f32 %v5793, 0.0
      %v5858 = vmax.f32 %v5794, 0.0
      %v5859 = vmax.f32 %v5795, 0.0
      %v5860 = vmax.f32 %v5796, 0.0
      %v5861 = vmax.f32 %v5797, 0.0
      %v5862 = vmax.f32 %v5798, 0.0
      %v5863 = vmax.f32 %v5799, 0.0
      %v5864 = vmax.f32 %v5800, 0.0
      %v5865 = vmax.f32 %v5801, 0.0
      %v5866 = vmax.f32 %v5802, 0.0
      %v5867 = vmax.f32 %v5803, 0.0
      %v5868 = vmax.f32 %v5804, 0.0
      %v5869 = vmax.f32 %v5805, 0.0
      %v5870 = vmax.f32 %v5806, 0.0
      %v5871 = vmax.f32 %v5807, 0.0
      %v5872 = vmax.f32 %v5808, 0.0
      %v5873 = vmax.f32 %v5809, 0.0
      %v5874 = vmax.f32 %v5810, 0.0
      %v5875 = vmax.f32 %v5811, 0.0
      %v5876 = vmax.f32 %v5812, 0.0
      %v5877 = vmax.f32 %v5813, 0.0
      %v5878 = vmax.f32 %v5814, 0.0
      %v5879 = vmax.f32 %v5815, 0.0
      %v5880 = vmax.f32 %v5816, 0.0
      %v5881 = vmax.f32 %v5817, 0.0
      %v5882 = vmax.f32 %v5818, 0.0
      %v5883 = vmax.f32 %v5819, 0.0
      %v5884 = vmax.f32 %v5820, 0.0
      %v5885 = vmax.f32 %v5821, 0.0
      %v5886 = vmax.f32 %v5822, 0.0
      %v5887 = vmax.f32 %v5823, 0.0
      %v5888 = vmax.f32 %v5824, 0.0
      %v5889 = vmax.f32 %v5825, 0.0
      %v5890 = vmax.f32 %v5826, 0.0
      %v5891 = vmax.f32 %v5827, 0.0
      %v5892 = vmax.f32 %v5828, 0.0
      %v5893 = vmax.f32 %v5829, 0.0
      %v5894 = vmax.f32 %v5830, 0.0
      %v5895 = vmax.f32 %v5831, 0.0
      %v5896 = vmax.f32 %v5832, 0.0
      %v5897 = vmax.f32 %v5833, 0.0
      %v5898 = vmax.f32 %v5834, 0.0
      %v5899 = vmax.f32 %v5835, 0.0
      %v5900 = vmax.f32 %v5836, 0.0
      %v5901 = vmax.f32 %v5837, 0.0
      %v5902 = vmax.f32 %v5838, 0.0
      %v5903 = vmax.f32 %v5839, 0.0
      %v5904 = vmax.f32 %v5840, 0.0
      %v5905 = vmax.f32 %v5841, 0.0
      %v5906 = vmax.f32 %v5842, 0.0
      %v5907 = vmax.f32 %v5843, 0.0
      %v5908 = vmax.f32 %v5844, 0.0
      %v5909 = vmax.f32 %v5845, 0.0
      %v5910 = vmax.f32 %v5846, 0.0
      %v5911 = vmax.f32 %v5847, 0.0
      %v5912 = vld [vmem:[%s8] sm:$0xff]
      %v5913 = vld [vmem:[%s8 + $0x8] sm:$0xff]
      %v5914 = vld [vmem:[%s8 + $0x10] sm:$0xff]
      %v5915 = vld [vmem:[%s8 + $0x18] sm:$0xff]
      %v5916 = vld [vmem:[%s8 + $0x20] sm:$0xff]
      %v5917 = vld [vmem:[%s8 + $0x28] sm:$0xff]
      %v5918 = vld [vmem:[%s8 + $0x30] sm:$0xff]
      %v5919 = vld [vmem:[%s8 + $0x38] sm:$0xff]
      %v5920 = vld [vmem:[%s8 + $0x40] sm:$0xff]
      %v5921 = vld [vmem:[%s8 + $0x48] sm:$0xff]
      %v5922 = vld [vmem:[%s8 + $0x50] sm:$0xff]
      %v5923 = vld [vmem:[%s8 + $0x58] sm:$0xff]
      %v5924 = vld [vmem:[%s8 + $0x60] sm:$0xff]
      %v5925 = vld [vmem:[%s8 + $0x68] sm:$0xff]
      %v5926 = vld [vmem:[%s8 + $0x70] sm:$0xff]
      %v5927 = vld [vmem:[%s8 + $0x78] sm:$0xff]
      %v5928 = vld [vmem:[%s8 + $0x80] sm:$0xff]
      %v5929 = vld [vmem:[%s8 + $0x88] sm:$0xff]
      %v5930 = vld [vmem:[%s8 + $0x90] sm:$0xff]
      %v5931 = vld [vmem:[%s8 + $0x98] sm:$0xff]
      %v5932 = vld [vmem:[%s8 + $0xa0] sm:$0xff]
      %v5933 = vld [vmem:[%s8 + $0xa8] sm:$0xff]
      %v5934 = vld [vmem:[%s8 + $0xb0] sm:$0xff]
      %v5935 = vld [vmem:[%s8 + $0xb8] sm:$0xff]
      %v5936 = vld [vmem:[%s8 + $0xc0] sm:$0xff]
      %v5937 = vld [vmem:[%s8 + $0xc8] sm:$0xff]
      %v5938 = vld [vmem:[%s8 + $0xd0] sm:$0xff]
      %v5939 = vld [vmem:[%s8 + $0xd8] sm:$0xff]
      %v5940 = vld [vmem:[%s8 + $0xe0] sm:$0xff]
      %v5941 = vld [vmem:[%s8 + $0xe8] sm:$0xff]
      %v5942 = vld [vmem:[%s8 + $0xf0] sm:$0xff]
      %v5943 = vld [vmem:[%s8 + $0xf8] sm:$0xff]
      %v5944 = vmul.f32 %v5848, %v5912
      %v5945 = vmul.f32 %v5849, %v5913
      %v5946 = vmul.f32 %v5850, %v5914
      %v5947 = vmul.f32 %v5851, %v5915
      %v5948 = vmul.f32 %v5852, %v5916
      %v5949 = vmul.f32 %v5853, %v5917
      %v5950 = vmul.f32 %v5854, %v5918
      %v5951 = vmul.f32 %v5855, %v5919
      %v5952 = vmul.f32 %v5856, %v5920
      %v5953 = vmul.f32 %v5857, %v5921
      %v5954 = vmul.f32 %v5858, %v5922
      %v5955 = vmul.f32 %v5859, %v5923
      %v5956 = vmul.f32 %v5860, %v5924
      %v5957 = vmul.f32 %v5861, %v5925
      %v5958 = vmul.f32 %v5862, %v5926
      %v5959 = vmul.f32 %v5863, %v5927
      %v5960 = vmul.f32 %v5864, %v5928
      %v5961 = vmul.f32 %v5865, %v5929
      %v5962 = vmul.f32 %v5866, %v5930
      %v5963 = vmul.f32 %v5867, %v5931
      %v5964 = vmul.f32 %v5868, %v5932
      %v5965 = vmul.f32 %v5869, %v5933
      %v5966 = vmul.f32 %v5870, %v5934
      %v5967 = vmul.f32 %v5871, %v5935
      %v5968 = vmul.f32 %v5872, %v5936
      %v5969 = vmul.f32 %v5873, %v5937
      %v5970 = vmul.f32 %v5874, %v5938
      %v5971 = vmul.f32 %v5875, %v5939
      %v5972 = vmul.f32 %v5876, %v5940
      %v5973 = vmul.f32 %v5877, %v5941
      %v5974 = vmul.f32 %v5878, %v5942
      %v5975 = vmul.f32 %v5879, %v5943
      %v5976 = vmul.f32 %v5880, %v5912
      %v5977 = vmul.f32 %v5881, %v5913
      %v5978 = vmul.f32 %v5882, %v5914
      %v5979 = vmul.f32 %v5883, %v5915
      %v5980 = vmul.f32 %v5884, %v5916
      %v5981 = vmul.f32 %v5885, %v5917
      %v5982 = vmul.f32 %v5886, %v5918
      %v5983 = vmul.f32 %v5887, %v5919
      %v5984 = vmul.f32 %v5888, %v5920
      %v5985 = vmul.f32 %v5889, %v5921
      %v5986 = vmul.f32 %v5890, %v5922
      %v5987 = vmul.f32 %v5891, %v5923
      %v5988 = vmul.f32 %v5892, %v5924
      %v5989 = vmul.f32 %v5893, %v5925
      %v5990 = vmul.f32 %v5894, %v5926
      %v5991 = vmul.f32 %v5895, %v5927
      %v5992 = vmul.f32 %v5896, %v5928
      %v5993 = vmul.f32 %v5897, %v5929
      %v5994 = vmul.f32 %v5898, %v5930
      %v5995 = vmul.f32 %v5899, %v5931
      %v5996 = vmul.f32 %v5900, %v5932
      %v5997 = vmul.f32 %v5901, %v5933
      %v5998 = vmul.f32 %v5902, %v5934
      %v5999 = vmul.f32 %v5903, %v5935
      %v6000 = vmul.f32 %v5904, %v5936
      %v6001 = vmul.f32 %v5905, %v5937
      %v6002 = vmul.f32 %v5906, %v5938
      %v6003 = vmul.f32 %v5907, %v5939
      %v6004 = vmul.f32 %v5908, %v5940
      %v6005 = vmul.f32 %v5909, %v5941
      %v6006 = vmul.f32 %v5910, %v5942
      %v6007 = vmul.f32 %v5911, %v5943
      %v6008 = vadd.f32 %v5944, %v5945
      %v6009 = vadd.f32 %v6008, %v5946
      %v6010 = vadd.f32 %v6009, %v5947
      %v6011 = vadd.f32 %v6010, %v5948
      %v6012 = vadd.f32 %v6011, %v5949
      %v6013 = vadd.f32 %v6012, %v5950
      %v6014 = vadd.f32 %v6013, %v5951
      %v6015 = vadd.f32 %v6014, %v5952
      %v6016 = vadd.f32 %v6015, %v5953
      %v6017 = vadd.f32 %v6016, %v5954
      %v6018 = vadd.f32 %v6017, %v5955
      %v6019 = vadd.f32 %v6018, %v5956
      %v6020 = vadd.f32 %v6019, %v5957
      %v6021 = vadd.f32 %v6020, %v5958
      %v6022 = vadd.f32 %v6021, %v5959
      %v6023 = vadd.f32 %v6022, %v5960
      %v6024 = vadd.f32 %v6023, %v5961
      %v6025 = vadd.f32 %v6024, %v5962
      %v6026 = vadd.f32 %v6025, %v5963
      %v6027 = vadd.f32 %v6026, %v5964
      %v6028 = vadd.f32 %v6027, %v5965
      %v6029 = vadd.f32 %v6028, %v5966
      %v6030 = vadd.f32 %v6029, %v5967
      %v6031 = vadd.f32 %v6030, %v5968
      %v6032 = vadd.f32 %v6031, %v5969
      %v6033 = vadd.f32 %v6032, %v5970
      %v6034 = vadd.f32 %v6033, %v5971
      %v6035 = vadd.f32 %v6034, %v5972
      %v6036 = vadd.f32 %v6035, %v5973
      %v6037 = vadd.f32 %v6036, %v5974
      %v6038 = vadd.f32 %v6037, %v5975
      %v6039 = vrot.slane %v6038, 4
      %v6040 = vadd.f32 %v6038, %v6039
      %v6041 = vrot.slane %v6040, 2
      %v6042 = vadd.f32 %v6040, %v6041
      %v6043 = vrot.slane %v6042, 1
      %v6044 = vadd.f32 %v6042, %v6043
      %v6045 = vadd.f32 %v5976, %v5977
      %v6046 = vadd.f32 %v6045, %v5978
      %v6047 = vadd.f32 %v6046, %v5979
      %v6048 = vadd.f32 %v6047, %v5980
      %v6049 = vadd.f32 %v6048, %v5981
      %v6050 = vadd.f32 %v6049, %v5982
      %v6051 = vadd.f32 %v6050, %v5983
      %v6052 = vadd.f32 %v6051, %v5984
      %v6053 = vadd.f32 %v6052, %v5985
      %v6054 = vadd.f32 %v6053, %v5986
      %v6055 = vadd.f32 %v6054, %v5987
      %v6056 = vadd.f32 %v6055, %v5988
      %v6057 = vadd.f32 %v6056, %v5989
      %v6058 = vadd.f32 %v6057, %v5990
      %v6059 = vadd.f32 %v6058, %v5991
      %v6060 = vadd.f32 %v6059, %v5992
      %v6061 = vadd.f32 %v6060, %v5993
      %v6062 = vadd.f32 %v6061, %v5994
      %v6063 = vadd.f32 %v6062, %v5995
      %v6064 = vadd.f32 %v6063, %v5996
      %v6065 = vadd.f32 %v6064, %v5997
      %v6066 = vadd.f32 %v6065, %v5998
      %v6067 = vadd.f32 %v6066, %v5999
      %v6068 = vadd.f32 %v6067, %v6000
      %v6069 = vadd.f32 %v6068, %v6001
      %v6070 = vadd.f32 %v6069, %v6002
      %v6071 = vadd.f32 %v6070, %v6003
      %v6072 = vadd.f32 %v6071, %v6004
      %v6073 = vadd.f32 %v6072, %v6005
      %v6074 = vadd.f32 %v6073, %v6006
      %v6075 = vadd.f32 %v6074, %v6007
      %v6076 = vrot.slane %v6075, 4
      %v6077 = vadd.f32 %v6075, %v6076
      %v6078 = vrot.slane %v6077, 2
      %v6079 = vadd.f32 %v6077, %v6078
      %v6080 = vrot.slane %v6079, 1
      %v6081 = vadd.f32 %v6079, %v6080
      %v6082 = vpack.c.bf16 %v5849, %v5848
      %v6083 = vpack.c.bf16 %v5851, %v5850
      %v6084 = vpack.c.bf16 %v5853, %v5852
      %v6085 = vpack.c.bf16 %v5855, %v5854
      %v6086 = vpack.c.bf16 %v5857, %v5856
      %v6087 = vpack.c.bf16 %v5859, %v5858
      %v6088 = vpack.c.bf16 %v5861, %v5860
      %v6089 = vpack.c.bf16 %v5863, %v5862
      %v6090 = vpack.c.bf16 %v5865, %v5864
      %v6091 = vpack.c.bf16 %v5867, %v5866
      %v6092 = vpack.c.bf16 %v5869, %v5868
      %v6093 = vpack.c.bf16 %v5871, %v5870
      %v6094 = vpack.c.bf16 %v5873, %v5872
      %v6095 = vpack.c.bf16 %v5875, %v5874
      %v6096 = vpack.c.bf16 %v5877, %v5876
      %v6097 = vpack.c.bf16 %v5879, %v5878
      %v6098 = vpack.c.bf16 %v5881, %v5880
      %v6099 = vpack.c.bf16 %v5883, %v5882
      %v6100 = vpack.c.bf16 %v5885, %v5884
      %v6101 = vpack.c.bf16 %v5887, %v5886
      %v6102 = vpack.c.bf16 %v5889, %v5888
      %v6103 = vpack.c.bf16 %v5891, %v5890
      %v6104 = vpack.c.bf16 %v5893, %v5892
      %v6105 = vpack.c.bf16 %v5895, %v5894
      %v6106 = vpack.c.bf16 %v5897, %v5896
      %v6107 = vpack.c.bf16 %v5899, %v5898
      %v6108 = vpack.c.bf16 %v5901, %v5900
      %v6109 = vpack.c.bf16 %v5903, %v5902
      %v6110 = vpack.c.bf16 %v5905, %v5904
      %v6111 = vpack.c.bf16 %v5907, %v5906
      %v6112 = vpack.c.bf16 %v5909, %v5908
      %v6113 = vpack.c.bf16 %v5911, %v5910
      %v6114 = vld [vmem:[%s6] sm:$0xff]
      %v6115 = vld [vmem:[%s6 + $0x8] sm:$0xff]
      %v6116 = vld [vmem:[%s6 + $0x10] sm:$0xff]
      %v6117 = vld [vmem:[%s6 + $0x18] sm:$0xff]
      %v6118 = vld [vmem:[%s6 + $0x20] sm:$0xff]
      %v6119 = vld [vmem:[%s6 + $0x28] sm:$0xff]
      %v6120 = vld [vmem:[%s6 + $0x30] sm:$0xff]
      %v6121 = vld [vmem:[%s6 + $0x38] sm:$0xff]
      %v6122 = vld [vmem:[%s6 + $0x40] sm:$0xff]
      %v6123 = vld [vmem:[%s6 + $0x48] sm:$0xff]
      %v6124 = vld [vmem:[%s6 + $0x50] sm:$0xff]
      %v6125 = vld [vmem:[%s6 + $0x58] sm:$0xff]
      %v6126 = vld [vmem:[%s6 + $0x60] sm:$0xff]
      %v6127 = vld [vmem:[%s6 + $0x68] sm:$0xff]
      %v6128 = vld [vmem:[%s6 + $0x70] sm:$0xff]
      %v6129 = vld [vmem:[%s6 + $0x78] sm:$0xff]
      %v6130 = vld [vmem:[%s7] sm:$0x3]
      %v6132 = vperm.slane %v6130, 0
      %v6133 = vperm.slane %v6130, 1
      %v6152 = vunpack.c.l.b16 %v6114
      %v6153 = vunpack.c.h.b16 %v6114
      %v6154 = vunpack.c.l.b16 %v6115
      %v6155 = vunpack.c.h.b16 %v6115
      %v6156 = vunpack.c.l.b16 %v6116
      %v6157 = vunpack.c.h.b16 %v6116
      %v6158 = vunpack.c.l.b16 %v6117
      %v6159 = vunpack.c.h.b16 %v6117
      %v6160 = vunpack.c.l.b16 %v6118
      %v6161 = vunpack.c.h.b16 %v6118
      %v6162 = vunpack.c.l.b16 %v6119
      %v6163 = vunpack.c.h.b16 %v6119
      %v6164 = vunpack.c.l.b16 %v6120
      %v6165 = vunpack.c.h.b16 %v6120
      %v6166 = vunpack.c.l.b16 %v6121
      %v6167 = vunpack.c.h.b16 %v6121
      %v6168 = vunpack.c.l.b16 %v6122
      %v6169 = vunpack.c.h.b16 %v6122
      %v6170 = vunpack.c.l.b16 %v6123
      %v6171 = vunpack.c.h.b16 %v6123
      %v6172 = vunpack.c.l.b16 %v6124
      %v6173 = vunpack.c.h.b16 %v6124
      %v6174 = vunpack.c.l.b16 %v6125
      %v6175 = vunpack.c.h.b16 %v6125
      %v6176 = vunpack.c.l.b16 %v6126
      %v6177 = vunpack.c.h.b16 %v6126
      %v6178 = vunpack.c.l.b16 %v6127
      %v6179 = vunpack.c.h.b16 %v6127
      %v6180 = vunpack.c.l.b16 %v6128
      %v6181 = vunpack.c.h.b16 %v6128
      %v6182 = vunpack.c.l.b16 %v6129
      %v6183 = vunpack.c.h.b16 %v6129
      %v6184 = vpack.c.b16 %v6154, %v6152
      %v6185 = vpack.c.b16 %v6155, %v6153
      %v6186 = vpack.c.b16 %v6158, %v6156
      %v6187 = vpack.c.b16 %v6159, %v6157
      %v6188 = vpack.c.b16 %v6162, %v6160
      %v6189 = vpack.c.b16 %v6163, %v6161
      %v6190 = vpack.c.b16 %v6166, %v6164
      %v6191 = vpack.c.b16 %v6167, %v6165
      %v6192 = vpack.c.b16 %v6170, %v6168
      %v6193 = vpack.c.b16 %v6171, %v6169
      %v6194 = vpack.c.b16 %v6174, %v6172
      %v6195 = vpack.c.b16 %v6175, %v6173
      %v6196 = vpack.c.b16 %v6178, %v6176
      %v6197 = vpack.c.b16 %v6179, %v6177
      %v6198 = vpack.c.b16 %v6182, %v6180
      %v6199 = vpack.c.b16 %v6183, %v6181
      %6216 = vmatpush.bf16.msra.mxu0 %v6198
      %6217 = vmatpush.bf16.msra.mxu0 %v6196
      %6218 = vmatpush.bf16.msra.mxu0 %v6194
      %6219 = vmatpush.bf16.msra.mxu0 %v6192
      %6220 = vmatpush.bf16.msra.mxu0 %v6190
      %6221 = vmatpush.bf16.msra.mxu0 %v6188
      %6222 = vmatpush.bf16.msra.mxu0 %v6186
      %6223 = vmatpush.bf16.msra.mxu0 %v6184
      %6224 = vmatmul.bf16.gmra.mxu0 %v6082
      %v6225 = vpop.f32.mrf.mxu0
      %v6226 = vadd.f32 %v6132, %v6225
      %v6227 = vpop.f32.mrf.mxu0
      %v6228 = vadd.f32 %v6132, %v6227
      %6229 = vmatmul.bf16.gmra.mxu0 %v6083
      %v6230 = vpop.f32.mrf.mxu0
      %v6231 = vadd.f32 %v6132, %v6230
      %v6232 = vpop.f32.mrf.mxu0
      %v6233 = vadd.f32 %v6132, %v6232
      %6234 = vmatmul.bf16.gmra.mxu0 %v6084
      %v6235 = vpop.f32.mrf.mxu0
      %v6236 = vadd.f32 %v6132, %v6235
      %v6237 = vpop.f32.mrf.mxu0
      %v6238 = vadd.f32 %v6132, %v6237
      %6239 = vmatmul.bf16.gmra.mxu0 %v6085
      %v6240 = vpop.f32.mrf.mxu0
      %v6241 = vadd.f32 %v6132, %v6240
      %v6242 = vpop.f32.mrf.mxu0
      %v6243 = vadd.f32 %v6132, %v6242
      %6244 = vmatmul.bf16.gmra.mxu0 %v6086
      %v6245 = vpop.f32.mrf.mxu0
      %v6246 = vadd.f32 %v6132, %v6245
      %v6247 = vpop.f32.mrf.mxu0
      %v6248 = vadd.f32 %v6132, %v6247
      %6249 = vmatmul.bf16.gmra.mxu0 %v6087
      %v6250 = vpop.f32.mrf.mxu0
      %v6251 = vadd.f32 %v6132, %v6250
      %v6252 = vpop.f32.mrf.mxu0
      %v6253 = vadd.f32 %v6132, %v6252
      %6254 = vmatmul.bf16.gmra.mxu0 %v6088
      %v6255 = vpop.f32.mrf.mxu0
      %v6256 = vadd.f32 %v6132, %v6255
      %v6257 = vpop.f32.mrf.mxu0
      %v6258 = vadd.f32 %v6132, %v6257
      %6259 = vmatmul.bf16.gmra.mxu0 %v6089
      %v6260 = vpop.f32.mrf.mxu0
      %v6261 = vadd.f32 %v6132, %v6260
      %v6262 = vpop.f32.mrf.mxu0
      %v6263 = vadd.f32 %v6132, %v6262
      %6264 = vmatmul.bf16.gmra.mxu0 %v6090
      %v6265 = vpop.f32.mrf.mxu0
      %v6266 = vadd.f32 %v6132, %v6265
      %v6267 = vpop.f32.mrf.mxu0
      %v6268 = vadd.f32 %v6132, %v6267
      %6269 = vmatmul.bf16.gmra.mxu0 %v6091
      %v6270 = vpop.f32.mrf.mxu0
      %v6271 = vadd.f32 %v6132, %v6270
      %v6272 = vpop.f32.mrf.mxu0
      %v6273 = vadd.f32 %v6132, %v6272
      %6274 = vmatmul.bf16.gmra.mxu0 %v6092
      %v6275 = vpop.f32.mrf.mxu0
      %v6276 = vadd.f32 %v6132, %v6275
      %v6277 = vpop.f32.mrf.mxu0
      %v6278 = vadd.f32 %v6132, %v6277
      %6279 = vmatmul.bf16.gmra.mxu0 %v6093
      %v6280 = vpop.f32.mrf.mxu0
      %v6281 = vadd.f32 %v6132, %v6280
      %v6282 = vpop.f32.mrf.mxu0
      %v6283 = vadd.f32 %v6132, %v6282
      %6284 = vmatmul.bf16.gmra.mxu0 %v6094
      %v6285 = vpop.f32.mrf.mxu0
      %v6286 = vadd.f32 %v6132, %v6285
      %v6287 = vpop.f32.mrf.mxu0
      %v6288 = vadd.f32 %v6132, %v6287
      %6289 = vmatmul.bf16.gmra.mxu0 %v6095
      %v6290 = vpop.f32.mrf.mxu0
      %v6291 = vadd.f32 %v6132, %v6290
      %v6292 = vpop.f32.mrf.mxu0
      %v6293 = vadd.f32 %v6132, %v6292
      %6294 = vmatmul.bf16.gmra.mxu0 %v6096
      %v6295 = vpop.f32.mrf.mxu0
      %v6296 = vadd.f32 %v6132, %v6295
      %v6297 = vpop.f32.mrf.mxu0
      %v6298 = vadd.f32 %v6132, %v6297
      %6299 = vmatmul.bf16.gmra.mxu0 %v6097
      %v6300 = vpop.f32.mrf.mxu0
      %v6301 = vadd.f32 %v6132, %v6300
      %v6302 = vpop.f32.mrf.mxu0
      %v6303 = vadd.f32 %v6132, %v6302
      %6304 = vmatmul.bf16.gmra.mxu0 %v6098
      %v6305 = vpop.f32.mrf.mxu0
      %v6306 = vadd.f32 %v6132, %v6305
      %v6307 = vpop.f32.mrf.mxu0
      %v6308 = vadd.f32 %v6132, %v6307
      %6309 = vmatmul.bf16.gmra.mxu0 %v6099
      %v6310 = vpop.f32.mrf.mxu0
      %v6311 = vadd.f32 %v6132, %v6310
      %v6312 = vpop.f32.mrf.mxu0
      %v6313 = vadd.f32 %v6132, %v6312
      %6314 = vmatmul.bf16.gmra.mxu0 %v6100
      %v6315 = vpop.f32.mrf.mxu0
      %v6316 = vadd.f32 %v6132, %v6315
      %v6317 = vpop.f32.mrf.mxu0
      %v6318 = vadd.f32 %v6132, %v6317
      %6319 = vmatmul.bf16.gmra.mxu0 %v6101
      %v6320 = vpop.f32.mrf.mxu0
      %v6321 = vadd.f32 %v6132, %v6320
      %v6322 = vpop.f32.mrf.mxu0
      %v6323 = vadd.f32 %v6132, %v6322
      %6324 = vmatmul.bf16.gmra.mxu0 %v6102
      %v6325 = vpop.f32.mrf.mxu0
      %v6326 = vadd.f32 %v6132, %v6325
      %v6327 = vpop.f32.mrf.mxu0
      %v6328 = vadd.f32 %v6132, %v6327
      %6329 = vmatmul.bf16.gmra.mxu0 %v6103
      %v6330 = vpop.f32.mrf.mxu0
      %v6331 = vadd.f32 %v6132, %v6330
      %v6332 = vpop.f32.mrf.mxu0
      %v6333 = vadd.f32 %v6132, %v6332
      %6334 = vmatmul.bf16.gmra.mxu0 %v6104
      %v6335 = vpop.f32.mrf.mxu0
      %v6336 = vadd.f32 %v6132, %v6335
      %v6337 = vpop.f32.mrf.mxu0
      %v6338 = vadd.f32 %v6132, %v6337
      %6339 = vmatmul.bf16.gmra.mxu0 %v6105
      %v6340 = vpop.f32.mrf.mxu0
      %v6341 = vadd.f32 %v6132, %v6340
      %v6342 = vpop.f32.mrf.mxu0
      %v6343 = vadd.f32 %v6132, %v6342
      %6344 = vmatmul.bf16.gmra.mxu0 %v6106
      %v6345 = vpop.f32.mrf.mxu0
      %v6346 = vadd.f32 %v6132, %v6345
      %v6347 = vpop.f32.mrf.mxu0
      %v6348 = vadd.f32 %v6132, %v6347
      %6349 = vmatmul.bf16.gmra.mxu0 %v6107
      %v6350 = vpop.f32.mrf.mxu0
      %v6351 = vadd.f32 %v6132, %v6350
      %v6352 = vpop.f32.mrf.mxu0
      %v6353 = vadd.f32 %v6132, %v6352
      %6354 = vmatmul.bf16.gmra.mxu0 %v6108
      %v6355 = vpop.f32.mrf.mxu0
      %v6356 = vadd.f32 %v6132, %v6355
      %v6357 = vpop.f32.mrf.mxu0
      %v6358 = vadd.f32 %v6132, %v6357
      %6359 = vmatmul.bf16.gmra.mxu0 %v6109
      %v6360 = vpop.f32.mrf.mxu0
      %v6361 = vadd.f32 %v6132, %v6360
      %v6362 = vpop.f32.mrf.mxu0
      %v6363 = vadd.f32 %v6132, %v6362
      %6364 = vmatmul.bf16.gmra.mxu0 %v6110
      %v6365 = vpop.f32.mrf.mxu0
      %v6366 = vadd.f32 %v6132, %v6365
      %v6367 = vpop.f32.mrf.mxu0
      %v6368 = vadd.f32 %v6132, %v6367
      %6369 = vmatmul.bf16.gmra.mxu0 %v6111
      %v6370 = vpop.f32.mrf.mxu0
      %v6371 = vadd.f32 %v6132, %v6370
      %v6372 = vpop.f32.mrf.mxu0
      %v6373 = vadd.f32 %v6132, %v6372
      %6374 = vmatmul.bf16.gmra.mxu0 %v6112
      %v6375 = vpop.f32.mrf.mxu0
      %v6376 = vadd.f32 %v6132, %v6375
      %v6377 = vpop.f32.mrf.mxu0
      %v6378 = vadd.f32 %v6132, %v6377
      %6379 = vmatmul.bf16.gmra.mxu0 %v6113
      %v6380 = vpop.f32.mrf.mxu0
      %v6381 = vadd.f32 %v6132, %v6380
      %v6382 = vpop.f32.mrf.mxu0
      %v6383 = vadd.f32 %v6132, %v6382
      %6384 = vdwg.mxu0
      %6385 = vmatpush.bf16.msra.mxu0 %v6199
      %6386 = vmatpush.bf16.msra.mxu0 %v6197
      %6387 = vmatpush.bf16.msra.mxu0 %v6195
      %6388 = vmatpush.bf16.msra.mxu0 %v6193
      %6389 = vmatpush.bf16.msra.mxu0 %v6191
      %6390 = vmatpush.bf16.msra.mxu0 %v6189
      %6391 = vmatpush.bf16.msra.mxu0 %v6187
      %6392 = vmatpush.bf16.msra.mxu0 %v6185
      %6393 = vmatmul.bf16.gmra.mxu0 %v6082
      %v6394 = vpop.f32.mrf.mxu0
      %v6395 = vadd.f32 %v6133, %v6394
      %v6396 = vpop.f32.mrf.mxu0
      %v6397 = vadd.f32 %v6133, %v6396
      %6398 = vmatmul.bf16.gmra.mxu0 %v6083
      %v6399 = vpop.f32.mrf.mxu0
      %v6400 = vadd.f32 %v6133, %v6399
      %v6401 = vpop.f32.mrf.mxu0
      %v6402 = vadd.f32 %v6133, %v6401
      %6403 = vmatmul.bf16.gmra.mxu0 %v6084
      %v6404 = vpop.f32.mrf.mxu0
      %v6405 = vadd.f32 %v6133, %v6404
      %v6406 = vpop.f32.mrf.mxu0
      %v6407 = vadd.f32 %v6133, %v6406
      %6408 = vmatmul.bf16.gmra.mxu0 %v6085
      %v6409 = vpop.f32.mrf.mxu0
      %v6410 = vadd.f32 %v6133, %v6409
      %v6411 = vpop.f32.mrf.mxu0
      %v6412 = vadd.f32 %v6133, %v6411
      %6413 = vmatmul.bf16.gmra.mxu0 %v6086
      %v6414 = vpop.f32.mrf.mxu0
      %v6415 = vadd.f32 %v6133, %v6414
      %v6416 = vpop.f32.mrf.mxu0
      %v6417 = vadd.f32 %v6133, %v6416
      %6418 = vmatmul.bf16.gmra.mxu0 %v6087
      %v6419 = vpop.f32.mrf.mxu0
      %v6420 = vadd.f32 %v6133, %v6419
      %v6421 = vpop.f32.mrf.mxu0
      %v6422 = vadd.f32 %v6133, %v6421
      %6423 = vmatmul.bf16.gmra.mxu0 %v6088
      %v6424 = vpop.f32.mrf.mxu0
      %v6425 = vadd.f32 %v6133, %v6424
      %v6426 = vpop.f32.mrf.mxu0
      %v6427 = vadd.f32 %v6133, %v6426
      %6428 = vmatmul.bf16.gmra.mxu0 %v6089
      %v6429 = vpop.f32.mrf.mxu0
      %v6430 = vadd.f32 %v6133, %v6429
      %v6431 = vpop.f32.mrf.mxu0
      %v6432 = vadd.f32 %v6133, %v6431
      %6433 = vmatmul.bf16.gmra.mxu0 %v6090
      %v6434 = vpop.f32.mrf.mxu0
      %v6435 = vadd.f32 %v6133, %v6434
      %v6436 = vpop.f32.mrf.mxu0
      %v6437 = vadd.f32 %v6133, %v6436
      %6438 = vmatmul.bf16.gmra.mxu0 %v6091
      %v6439 = vpop.f32.mrf.mxu0
      %v6440 = vadd.f32 %v6133, %v6439
      %v6441 = vpop.f32.mrf.mxu0
      %v6442 = vadd.f32 %v6133, %v6441
      %6443 = vmatmul.bf16.gmra.mxu0 %v6092
      %v6444 = vpop.f32.mrf.mxu0
      %v6445 = vadd.f32 %v6133, %v6444
      %v6446 = vpop.f32.mrf.mxu0
      %v6447 = vadd.f32 %v6133, %v6446
      %6448 = vmatmul.bf16.gmra.mxu0 %v6093
      %v6449 = vpop.f32.mrf.mxu0
      %v6450 = vadd.f32 %v6133, %v6449
      %v6451 = vpop.f32.mrf.mxu0
      %v6452 = vadd.f32 %v6133, %v6451
      %6453 = vmatmul.bf16.gmra.mxu0 %v6094
      %v6454 = vpop.f32.mrf.mxu0
      %v6455 = vadd.f32 %v6133, %v6454
      %v6456 = vpop.f32.mrf.mxu0
      %v6457 = vadd.f32 %v6133, %v6456
      %6458 = vmatmul.bf16.gmra.mxu0 %v6095
      %v6459 = vpop.f32.mrf.mxu0
      %v6460 = vadd.f32 %v6133, %v6459
      %v6461 = vpop.f32.mrf.mxu0
      %v6462 = vadd.f32 %v6133, %v6461
      %6463 = vmatmul.bf16.gmra.mxu0 %v6096
      %v6464 = vpop.f32.mrf.mxu0
      %v6465 = vadd.f32 %v6133, %v6464
      %v6466 = vpop.f32.mrf.mxu0
      %v6467 = vadd.f32 %v6133, %v6466
      %6468 = vmatmul.bf16.gmra.mxu0 %v6097
      %v6469 = vpop.f32.mrf.mxu0
      %v6470 = vadd.f32 %v6133, %v6469
      %v6471 = vpop.f32.mrf.mxu0
      %v6472 = vadd.f32 %v6133, %v6471
      %6473 = vmatmul.bf16.gmra.mxu0 %v6098
      %v6474 = vpop.f32.mrf.mxu0
      %v6475 = vadd.f32 %v6133, %v6474
      %v6476 = vpop.f32.mrf.mxu0
      %v6477 = vadd.f32 %v6133, %v6476
      %6478 = vmatmul.bf16.gmra.mxu0 %v6099
      %v6479 = vpop.f32.mrf.mxu0
      %v6480 = vadd.f32 %v6133, %v6479
      %v6481 = vpop.f32.mrf.mxu0
      %v6482 = vadd.f32 %v6133, %v6481
      %6483 = vmatmul.bf16.gmra.mxu0 %v6100
      %v6484 = vpop.f32.mrf.mxu0
      %v6485 = vadd.f32 %v6133, %v6484
      %v6486 = vpop.f32.mrf.mxu0
      %v6487 = vadd.f32 %v6133, %v6486
      %6488 = vmatmul.bf16.gmra.mxu0 %v6101
      %v6489 = vpop.f32.mrf.mxu0
      %v6490 = vadd.f32 %v6133, %v6489
      %v6491 = vpop.f32.mrf.mxu0
      %v6492 = vadd.f32 %v6133, %v6491
      %6493 = vmatmul.bf16.gmra.mxu0 %v6102
      %v6494 = vpop.f32.mrf.mxu0
      %v6495 = vadd.f32 %v6133, %v6494
      %v6496 = vpop.f32.mrf.mxu0
      %v6497 = vadd.f32 %v6133, %v6496
      %6498 = vmatmul.bf16.gmra.mxu0 %v6103
      %v6499 = vpop.f32.mrf.mxu0
      %v6500 = vadd.f32 %v6133, %v6499
      %v6501 = vpop.f32.mrf.mxu0
      %v6502 = vadd.f32 %v6133, %v6501
      %6503 = vmatmul.bf16.gmra.mxu0 %v6104
      %v6504 = vpop.f32.mrf.mxu0
      %v6505 = vadd.f32 %v6133, %v6504
      %v6506 = vpop.f32.mrf.mxu0
      %v6507 = vadd.f32 %v6133, %v6506
      %6508 = vmatmul.bf16.gmra.mxu0 %v6105
      %v6509 = vpop.f32.mrf.mxu0
      %v6510 = vadd.f32 %v6133, %v6509
      %v6511 = vpop.f32.mrf.mxu0
      %v6512 = vadd.f32 %v6133, %v6511
      %6513 = vmatmul.bf16.gmra.mxu0 %v6106
      %v6514 = vpop.f32.mrf.mxu0
      %v6515 = vadd.f32 %v6133, %v6514
      %v6516 = vpop.f32.mrf.mxu0
      %v6517 = vadd.f32 %v6133, %v6516
      %6518 = vmatmul.bf16.gmra.mxu0 %v6107
      %v6519 = vpop.f32.mrf.mxu0
      %v6520 = vadd.f32 %v6133, %v6519
      %v6521 = vpop.f32.mrf.mxu0
      %v6522 = vadd.f32 %v6133, %v6521
      %6523 = vmatmul.bf16.gmra.mxu0 %v6108
      %v6524 = vpop.f32.mrf.mxu0
      %v6525 = vadd.f32 %v6133, %v6524
      %v6526 = vpop.f32.mrf.mxu0
      %v6527 = vadd.f32 %v6133, %v6526
      %6528 = vmatmul.bf16.gmra.mxu0 %v6109
      %v6529 = vpop.f32.mrf.mxu0
      %v6530 = vadd.f32 %v6133, %v6529
      %v6531 = vpop.f32.mrf.mxu0
      %v6532 = vadd.f32 %v6133, %v6531
      %6533 = vmatmul.bf16.gmra.mxu0 %v6110
      %v6534 = vpop.f32.mrf.mxu0
      %v6535 = vadd.f32 %v6133, %v6534
      %v6536 = vpop.f32.mrf.mxu0
      %v6537 = vadd.f32 %v6133, %v6536
      %6538 = vmatmul.bf16.gmra.mxu0 %v6111
      %v6539 = vpop.f32.mrf.mxu0
      %v6540 = vadd.f32 %v6133, %v6539
      %v6541 = vpop.f32.mrf.mxu0
      %v6542 = vadd.f32 %v6133, %v6541
      %6543 = vmatmul.bf16.gmra.mxu0 %v6112
      %v6544 = vpop.f32.mrf.mxu0
      %v6545 = vadd.f32 %v6133, %v6544
      %v6546 = vpop.f32.mrf.mxu0
      %v6547 = vadd.f32 %v6133, %v6546
      %6548 = vmatmul.bf16.gmra.mxu0 %v6113
      %v6549 = vpop.f32.mrf.mxu0
      %v6550 = vadd.f32 %v6133, %v6549
      %v6551 = vpop.f32.mrf.mxu0
      %v6552 = vadd.f32 %v6133, %v6551
      %6553 = vdwg.mxu0
      %v6554 = vld [vmem:[%s9] sm:$0xff]
      %v6555 = vld [vmem:[%s9 + $0x8] sm:$0xff]
      %v6556 = vld [vmem:[%s9 + $0x10] sm:$0xff]
      %v6557 = vld [vmem:[%s9 + $0x18] sm:$0xff]
      %v6558 = vld [vmem:[%s9 + $0x20] sm:$0xff]
      %v6559 = vld [vmem:[%s9 + $0x28] sm:$0xff]
      %v6560 = vld [vmem:[%s9 + $0x30] sm:$0xff]
      %v6561 = vld [vmem:[%s9 + $0x38] sm:$0xff]
      %v6562 = vld [vmem:[%s9 + $0x40] sm:$0xff]
      %v6563 = vld [vmem:[%s9 + $0x48] sm:$0xff]
      %v6564 = vld [vmem:[%s9 + $0x50] sm:$0xff]
      %v6565 = vld [vmem:[%s9 + $0x58] sm:$0xff]
      %v6566 = vld [vmem:[%s9 + $0x60] sm:$0xff]
      %v6567 = vld [vmem:[%s9 + $0x68] sm:$0xff]
      %v6568 = vld [vmem:[%s9 + $0x70] sm:$0xff]
      %v6569 = vld [vmem:[%s9 + $0x78] sm:$0xff]
      %v6570 = vld [vmem:[%s9 + $0x80] sm:$0xff]
      %v6571 = vld [vmem:[%s9 + $0x88] sm:$0xff]
      %v6572 = vld [vmem:[%s9 + $0x90] sm:$0xff]
      %v6573 = vld [vmem:[%s9 + $0x98] sm:$0xff]
      %v6574 = vld [vmem:[%s9 + $0xa0] sm:$0xff]
      %v6575 = vld [vmem:[%s9 + $0xa8] sm:$0xff]
      %v6576 = vld [vmem:[%s9 + $0xb0] sm:$0xff]
      %v6577 = vld [vmem:[%s9 + $0xb8] sm:$0xff]
      %v6578 = vld [vmem:[%s9 + $0xc0] sm:$0xff]
      %v6579 = vld [vmem:[%s9 + $0xc8] sm:$0xff]
      %v6580 = vld [vmem:[%s9 + $0xd0] sm:$0xff]
      %v6581 = vld [vmem:[%s9 + $0xd8] sm:$0xff]
      %v6582 = vld [vmem:[%s9 + $0xe0] sm:$0xff]
      %v6583 = vld [vmem:[%s9 + $0xe8] sm:$0xff]
      %v6584 = vld [vmem:[%s9 + $0xf0] sm:$0xff]
      %v6585 = vld [vmem:[%s9 + $0xf8] sm:$0xff]
      %v6586 = vld [vmem:[%s9 + $0x100] sm:$0xff]
      %v6587 = vld [vmem:[%s9 + $0x108] sm:$0xff]
      %v6588 = vld [vmem:[%s9 + $0x110] sm:$0xff]
      %v6589 = vld [vmem:[%s9 + $0x118] sm:$0xff]
      %v6590 = vld [vmem:[%s9 + $0x120] sm:$0xff]
      %v6591 = vld [vmem:[%s9 + $0x128] sm:$0xff]
      %v6592 = vld [vmem:[%s9 + $0x130] sm:$0xff]
      %v6593 = vld [vmem:[%s9 + $0x138] sm:$0xff]
      %v6594 = vld [vmem:[%s9 + $0x140] sm:$0xff]
      %v6595 = vld [vmem:[%s9 + $0x148] sm:$0xff]
      %v6596 = vld [vmem:[%s9 + $0x150] sm:$0xff]
      %v6597 = vld [vmem:[%s9 + $0x158] sm:$0xff]
      %v6598 = vld [vmem:[%s9 + $0x160] sm:$0xff]
      %v6599 = vld [vmem:[%s9 + $0x168] sm:$0xff]
      %v6600 = vld [vmem:[%s9 + $0x170] sm:$0xff]
      %v6601 = vld [vmem:[%s9 + $0x178] sm:$0xff]
      %v6602 = vld [vmem:[%s9 + $0x180] sm:$0xff]
      %v6603 = vld [vmem:[%s9 + $0x188] sm:$0xff]
      %v6604 = vld [vmem:[%s9 + $0x190] sm:$0xff]
      %v6605 = vld [vmem:[%s9 + $0x198] sm:$0xff]
      %v6606 = vld [vmem:[%s9 + $0x1a0] sm:$0xff]
      %v6607 = vld [vmem:[%s9 + $0x1a8] sm:$0xff]
      %v6608 = vld [vmem:[%s9 + $0x1b0] sm:$0xff]
      %v6609 = vld [vmem:[%s9 + $0x1b8] sm:$0xff]
      %v6610 = vld [vmem:[%s9 + $0x1c0] sm:$0xff]
      %v6611 = vld [vmem:[%s9 + $0x1c8] sm:$0xff]
      %v6612 = vld [vmem:[%s9 + $0x1d0] sm:$0xff]
      %v6613 = vld [vmem:[%s9 + $0x1d8] sm:$0xff]
      %v6614 = vld [vmem:[%s9 + $0x1e0] sm:$0xff]
      %v6615 = vld [vmem:[%s9 + $0x1e8] sm:$0xff]
      %v6616 = vld [vmem:[%s9 + $0x1f0] sm:$0xff]
      %v6617 = vld [vmem:[%s9 + $0x1f8] sm:$0xff]
      %v6618 = vmul.f32 %v6226, %v6554
      %v6619 = vmul.f32 %v6395, %v6555
      %v6620 = vmul.f32 %v6228, %v6556
      %v6621 = vmul.f32 %v6397, %v6557
      %v6622 = vmul.f32 %v6231, %v6558
      %v6623 = vmul.f32 %v6400, %v6559
      %v6624 = vmul.f32 %v6233, %v6560
      %v6625 = vmul.f32 %v6402, %v6561
      %v6626 = vmul.f32 %v6236, %v6562
      %v6627 = vmul.f32 %v6405, %v6563
      %v6628 = vmul.f32 %v6238, %v6564
      %v6629 = vmul.f32 %v6407, %v6565
      %v6630 = vmul.f32 %v6241, %v6566
      %v6631 = vmul.f32 %v6410, %v6567
      %v6632 = vmul.f32 %v6243, %v6568
      %v6633 = vmul.f32 %v6412, %v6569
      %v6634 = vmul.f32 %v6246, %v6570
      %v6635 = vmul.f32 %v6415, %v6571
      %v6636 = vmul.f32 %v6248, %v6572
      %v6637 = vmul.f32 %v6417, %v6573
      %v6638 = vmul.f32 %v6251, %v6574
      %v6639 = vmul.f32 %v6420, %v6575
      %v6640 = vmul.f32 %v6253, %v6576
      %v6641 = vmul.f32 %v6422, %v6577
      %v6642 = vmul.f32 %v6256, %v6578
      %v6643 = vmul.f32 %v6425, %v6579
      %v6644 = vmul.f32 %v6258, %v6580
      %v6645 = vmul.f32 %v6427, %v6581
      %v6646 = vmul.f32 %v6261, %v6582
      %v6647 = vmul.f32 %v6430, %v6583
      %v6648 = vmul.f32 %v6263, %v6584
      %v6649 = vmul.f32 %v6432, %v6585
      %v6650 = vmul.f32 %v6266, %v6586
      %v6651 = vmul.f32 %v6435, %v6587
      %v6652 = vmul.f32 %v6268, %v6588
      %v6653 = vmul.f32 %v6437, %v6589
      %v6654 = vmul.f32 %v6271, %v6590
      %v6655 = vmul.f32 %v6440, %v6591
      %v6656 = vmul.f32 %v6273, %v6592
      %v6657 = vmul.f32 %v6442, %v6593
      %v6658 = vmul.f32 %v6276, %v6594
      %v6659 = vmul.f32 %v6445, %v6595
      %v6660 = vmul.f32 %v6278, %v6596
      %v6661 = vmul.f32 %v6447, %v6597
      %v6662 = vmul.f32 %v6281, %v6598
      %v6663 = vmul.f32 %v6450, %v6599
      %v6664 = vmul.f32 %v6283, %v6600
      %v6665 = vmul.f32 %v6452, %v6601
      %v6666 = vmul.f32 %v6286, %v6602
      %v6667 = vmul.f32 %v6455, %v6603
      %v6668 = vmul.f32 %v6288, %v6604
      %v6669 = vmul.f32 %v6457, %v6605
      %v6670 = vmul.f32 %v6291, %v6606
      %v6671 = vmul.f32 %v6460, %v6607
      %v6672 = vmul.f32 %v6293, %v6608
      %v6673 = vmul.f32 %v6462, %v6609
      %v6674 = vmul.f32 %v6296, %v6610
      %v6675 = vmul.f32 %v6465, %v6611
      %v6676 = vmul.f32 %v6298, %v6612
      %v6677 = vmul.f32 %v6467, %v6613
      %v6678 = vmul.f32 %v6301, %v6614
      %v6679 = vmul.f32 %v6470, %v6615
      %v6680 = vmul.f32 %v6303, %v6616
      %v6681 = vmul.f32 %v6472, %v6617
      %v6682 = vmul.f32 %v6306, %v6554
      %v6683 = vmul.f32 %v6475, %v6555
      %v6684 = vmul.f32 %v6308, %v6556
      %v6685 = vmul.f32 %v6477, %v6557
      %v6686 = vmul.f32 %v6311, %v6558
      %v6687 = vmul.f32 %v6480, %v6559
      %v6688 = vmul.f32 %v6313, %v6560
      %v6689 = vmul.f32 %v6482, %v6561
      %v6690 = vmul.f32 %v6316, %v6562
      %v6691 = vmul.f32 %v6485, %v6563
      %v6692 = vmul.f32 %v6318, %v6564
      %v6693 = vmul.f32 %v6487, %v6565
      %v6694 = vmul.f32 %v6321, %v6566
      %v6695 = vmul.f32 %v6490, %v6567
      %v6696 = vmul.f32 %v6323, %v6568
      %v6697 = vmul.f32 %v6492, %v6569
      %v6698 = vmul.f32 %v6326, %v6570
      %v6699 = vmul.f32 %v6495, %v6571
      %v6700 = vmul.f32 %v6328, %v6572
      %v6701 = vmul.f32 %v6497, %v6573
      %v6702 = vmul.f32 %v6331, %v6574
      %v6703 = vmul.f32 %v6500, %v6575
      %v6704 = vmul.f32 %v6333, %v6576
      %v6705 = vmul.f32 %v6502, %v6577
      %v6706 = vmul.f32 %v6336, %v6578
      %v6707 = vmul.f32 %v6505, %v6579
      %v6708 = vmul.f32 %v6338, %v6580
      %v6709 = vmul.f32 %v6507, %v6581
      %v6710 = vmul.f32 %v6341, %v6582
      %v6711 = vmul.f32 %v6510, %v6583
      %v6712 = vmul.f32 %v6343, %v6584
      %v6713 = vmul.f32 %v6512, %v6585
      %v6714 = vmul.f32 %v6346, %v6586
      %v6715 = vmul.f32 %v6515, %v6587
      %v6716 = vmul.f32 %v6348, %v6588
      %v6717 = vmul.f32 %v6517, %v6589
      %v6718 = vmul.f32 %v6351, %v6590
      %v6719 = vmul.f32 %v6520, %v6591
      %v6720 = vmul.f32 %v6353, %v6592
      %v6721 = vmul.f32 %v6522, %v6593
      %v6722 = vmul.f32 %v6356, %v6594
      %v6723 = vmul.f32 %v6525, %v6595
      %v6724 = vmul.f32 %v6358, %v6596
      %v6725 = vmul.f32 %v6527, %v6597
      %v6726 = vmul.f32 %v6361, %v6598
      %v6727 = vmul.f32 %v6530, %v6599
      %v6728 = vmul.f32 %v6363, %v6600
      %v6729 = vmul.f32 %v6532, %v6601
      %v6730 = vmul.f32 %v6366, %v6602
      %v6731 = vmul.f32 %v6535, %v6603
      %v6732 = vmul.f32 %v6368, %v6604
      %v6733 = vmul.f32 %v6537, %v6605
      %v6734 = vmul.f32 %v6371, %v6606
      %v6735 = vmul.f32 %v6540, %v6607
      %v6736 = vmul.f32 %v6373, %v6608
      %v6737 = vmul.f32 %v6542, %v6609
      %v6738 = vmul.f32 %v6376, %v6610
      %v6739 = vmul.f32 %v6545, %v6611
      %v6740 = vmul.f32 %v6378, %v6612
      %v6741 = vmul.f32 %v6547, %v6613
      %v6742 = vmul.f32 %v6381, %v6614
      %v6743 = vmul.f32 %v6550, %v6615
      %v6744 = vmul.f32 %v6383, %v6616
      %v6745 = vmul.f32 %v6552, %v6617
      %v6746 = vadd.f32 %v6618, %v6620
      %v6747 = vadd.f32 %v6746, %v6622
      %v6748 = vadd.f32 %v6747, %v6624
      %v6749 = vadd.f32 %v6748, %v6626
      %v6750 = vadd.f32 %v6749, %v6628
      %v6751 = vadd.f32 %v6750, %v6630
      %v6752 = vadd.f32 %v6751, %v6632
      %v6753 = vadd.f32 %v6752, %v6634
      %v6754 = vadd.f32 %v6753, %v6636
      %v6755 = vadd.f32 %v6754, %v6638
      %v6756 = vadd.f32 %v6755, %v6640
      %v6757 = vadd.f32 %v6756, %v6642
      %v6758 = vadd.f32 %v6757, %v6644
      %v6759 = vadd.f32 %v6758, %v6646
      %v6760 = vadd.f32 %v6759, %v6648
      %v6761 = vadd.f32 %v6760, %v6650
      %v6762 = vadd.f32 %v6761, %v6652
      %v6763 = vadd.f32 %v6762, %v6654
      %v6764 = vadd.f32 %v6763, %v6656
      %v6765 = vadd.f32 %v6764, %v6658
      %v6766 = vadd.f32 %v6765, %v6660
      %v6767 = vadd.f32 %v6766, %v6662
      %v6768 = vadd.f32 %v6767, %v6664
      %v6769 = vadd.f32 %v6768, %v6666
      %v6770 = vadd.f32 %v6769, %v6668
      %v6771 = vadd.f32 %v6770, %v6670
      %v6772 = vadd.f32 %v6771, %v6672
      %v6773 = vadd.f32 %v6772, %v6674
      %v6774 = vadd.f32 %v6773, %v6676
      %v6775 = vadd.f32 %v6774, %v6678
      %v6776 = vadd.f32 %v6775, %v6680
      %v6777 = vrot.slane %v6776, 4
      %v6778 = vadd.f32 %v6776, %v6777
      %v6779 = vrot.slane %v6778, 2
      %v6780 = vadd.f32 %v6778, %v6779
      %v6781 = vrot.slane %v6780, 1
      %v6782 = vadd.f32 %v6780, %v6781
      %v6783 = vadd.f32 %v6619, %v6621
      %v6784 = vadd.f32 %v6783, %v6623
      %v6785 = vadd.f32 %v6784, %v6625
      %v6786 = vadd.f32 %v6785, %v6627
      %v6787 = vadd.f32 %v6786, %v6629
      %v6788 = vadd.f32 %v6787, %v6631
      %v6789 = vadd.f32 %v6788, %v6633
      %v6790 = vadd.f32 %v6789, %v6635
      %v6791 = vadd.f32 %v6790, %v6637
      %v6792 = vadd.f32 %v6791, %v6639
      %v6793 = vadd.f32 %v6792, %v6641
      %v6794 = vadd.f32 %v6793, %v6643
      %v6795 = vadd.f32 %v6794, %v6645
      %v6796 = vadd.f32 %v6795, %v6647
      %v6797 = vadd.f32 %v6796, %v6649
      %v6798 = vadd.f32 %v6797, %v6651
      %v6799 = vadd.f32 %v6798, %v6653
      %v6800 = vadd.f32 %v6799, %v6655
      %v6801 = vadd.f32 %v6800, %v6657
      %v6802 = vadd.f32 %v6801, %v6659
      %v6803 = vadd.f32 %v6802, %v6661
      %v6804 = vadd.f32 %v6803, %v6663
      %v6805 = vadd.f32 %v6804, %v6665
      %v6806 = vadd.f32 %v6805, %v6667
      %v6807 = vadd.f32 %v6806, %v6669
      %v6808 = vadd.f32 %v6807, %v6671
      %v6809 = vadd.f32 %v6808, %v6673
      %v6810 = vadd.f32 %v6809, %v6675
      %v6811 = vadd.f32 %v6810, %v6677
      %v6812 = vadd.f32 %v6811, %v6679
      %v6813 = vadd.f32 %v6812, %v6681
      %v6814 = vrot.slane %v6813, 4
      %v6815 = vadd.f32 %v6813, %v6814
      %v6816 = vrot.slane %v6815, 2
      %v6817 = vadd.f32 %v6815, %v6816
      %v6818 = vrot.slane %v6817, 1
      %v6819 = vadd.f32 %v6817, %v6818
      %v6820 = vadd.f32 %v6682, %v6684
      %v6821 = vadd.f32 %v6820, %v6686
      %v6822 = vadd.f32 %v6821, %v6688
      %v6823 = vadd.f32 %v6822, %v6690
      %v6824 = vadd.f32 %v6823, %v6692
      %v6825 = vadd.f32 %v6824, %v6694
      %v6826 = vadd.f32 %v6825, %v6696
      %v6827 = vadd.f32 %v6826, %v6698
      %v6828 = vadd.f32 %v6827, %v6700
      %v6829 = vadd.f32 %v6828, %v6702
      %v6830 = vadd.f32 %v6829, %v6704
      %v6831 = vadd.f32 %v6830, %v6706
      %v6832 = vadd.f32 %v6831, %v6708
      %v6833 = vadd.f32 %v6832, %v6710
      %v6834 = vadd.f32 %v6833, %v6712
      %v6835 = vadd.f32 %v6834, %v6714
      %v6836 = vadd.f32 %v6835, %v6716
      %v6837 = vadd.f32 %v6836, %v6718
      %v6838 = vadd.f32 %v6837, %v6720
      %v6839 = vadd.f32 %v6838, %v6722
      %v6840 = vadd.f32 %v6839, %v6724
      %v6841 = vadd.f32 %v6840, %v6726
      %v6842 = vadd.f32 %v6841, %v6728
      %v6843 = vadd.f32 %v6842, %v6730
      %v6844 = vadd.f32 %v6843, %v6732
      %v6845 = vadd.f32 %v6844, %v6734
      %v6846 = vadd.f32 %v6845, %v6736
      %v6847 = vadd.f32 %v6846, %v6738
      %v6848 = vadd.f32 %v6847, %v6740
      %v6849 = vadd.f32 %v6848, %v6742
      %v6850 = vadd.f32 %v6849, %v6744
      %v6851 = vrot.slane %v6850, 4
      %v6852 = vadd.f32 %v6850, %v6851
      %v6853 = vrot.slane %v6852, 2
      %v6854 = vadd.f32 %v6852, %v6853
      %v6855 = vrot.slane %v6854, 1
      %v6856 = vadd.f32 %v6854, %v6855
      %v6857 = vadd.f32 %v6683, %v6685
      %v6858 = vadd.f32 %v6857, %v6687
      %v6859 = vadd.f32 %v6858, %v6689
      %v6860 = vadd.f32 %v6859, %v6691
      %v6861 = vadd.f32 %v6860, %v6693
      %v6862 = vadd.f32 %v6861, %v6695
      %v6863 = vadd.f32 %v6862, %v6697
      %v6864 = vadd.f32 %v6863, %v6699
      %v6865 = vadd.f32 %v6864, %v6701
      %v6866 = vadd.f32 %v6865, %v6703
      %v6867 = vadd.f32 %v6866, %v6705
      %v6868 = vadd.f32 %v6867, %v6707
      %v6869 = vadd.f32 %v6868, %v6709
      %v6870 = vadd.f32 %v6869, %v6711
      %v6871 = vadd.f32 %v6870, %v6713
      %v6872 = vadd.f32 %v6871, %v6715
      %v6873 = vadd.f32 %v6872, %v6717
      %v6874 = vadd.f32 %v6873, %v6719
      %v6875 = vadd.f32 %v6874, %v6721
      %v6876 = vadd.f32 %v6875, %v6723
      %v6877 = vadd.f32 %v6876, %v6725
      %v6878 = vadd.f32 %v6877, %v6727
      %v6879 = vadd.f32 %v6878, %v6729
      %v6880 = vadd.f32 %v6879, %v6731
      %v6881 = vadd.f32 %v6880, %v6733
      %v6882 = vadd.f32 %v6881, %v6735
      %v6883 = vadd.f32 %v6882, %v6737
      %v6884 = vadd.f32 %v6883, %v6739
      %v6885 = vadd.f32 %v6884, %v6741
      %v6886 = vadd.f32 %v6885, %v6743
      %v6887 = vadd.f32 %v6886, %v6745
      %v6888 = vrot.slane %v6887, 4
      %v6889 = vadd.f32 %v6887, %v6888
      %v6890 = vrot.slane %v6889, 2
      %v6891 = vadd.f32 %v6889, %v6890
      %v6892 = vrot.slane %v6891, 1
      %v6893 = vadd.f32 %v6891, %v6892
      %vm6896 = vcmask 1041409
      %v6897 = vsel %vm6896, %v1654, %v1617
      %v6901 = vsel %vm6896, %v6081, %v6044
      %v6907 = vsel %vm6896, %v6856, %v6782
      %v6908 = vsel %vm6896, %v6893, %v6819
      %v6911 = vld [vmem:[%s10] sm:$0xff]
      %v6912 = vld [vmem:[%s10 + $0x8] sm:$0xff]
      %v6913 = vld [vmem:[%s10 + $0x10] sm:$0xff]
      %v6914 = vld [vmem:[%s10 + $0x18] sm:$0xff]
      %v6915 = vld [vmem:[%s10 + $0x20] sm:$0xff]
      %v6916 = vld [vmem:[%s10 + $0x28] sm:$0xff]
      %v6917 = vld [vmem:[%s10 + $0x30] sm:$0xff]
      %v6918 = vld [vmem:[%s10 + $0x38] sm:$0xff]
      %v6919 = vld [vmem:[%s10 + $0x40] sm:$0xff]
      %v6920 = vld [vmem:[%s10 + $0x48] sm:$0xff]
      %v6921 = vld [vmem:[%s10 + $0x50] sm:$0xff]
      %v6922 = vld [vmem:[%s10 + $0x58] sm:$0xff]
      %v6923 = vld [vmem:[%s10 + $0x60] sm:$0xff]
      %v6924 = vld [vmem:[%s10 + $0x68] sm:$0xff]
      %v6925 = vld [vmem:[%s10 + $0x70] sm:$0xff]
      %v6926 = vld [vmem:[%s10 + $0x78] sm:$0xff]
      %v6927 = vld [vmem:[%s10 + $0x80] sm:$0xff]
      %v6928 = vld [vmem:[%s10 + $0x88] sm:$0xff]
      %v6929 = vld [vmem:[%s10 + $0x90] sm:$0xff]
      %v6930 = vld [vmem:[%s10 + $0x98] sm:$0xff]
      %v6931 = vld [vmem:[%s10 + $0xa0] sm:$0xff]
      %v6932 = vld [vmem:[%s10 + $0xa8] sm:$0xff]
      %v6933 = vld [vmem:[%s10 + $0xb0] sm:$0xff]
      %v6934 = vld [vmem:[%s10 + $0xb8] sm:$0xff]
      %v6935 = vld [vmem:[%s10 + $0xc0] sm:$0xff]
      %v6936 = vld [vmem:[%s10 + $0xc8] sm:$0xff]
      %v6937 = vld [vmem:[%s10 + $0xd0] sm:$0xff]
      %v6938 = vld [vmem:[%s10 + $0xd8] sm:$0xff]
      %v6939 = vld [vmem:[%s10 + $0xe0] sm:$0xff]
      %v6940 = vld [vmem:[%s10 + $0xe8] sm:$0xff]
      %v6941 = vld [vmem:[%s10 + $0xf0] sm:$0xff]
      %v6942 = vld [vmem:[%s10 + $0xf8] sm:$0xff]
      %v6943 = vld [vmem:[%s10 + $0x100] sm:$0xff]
      %v6944 = vld [vmem:[%s10 + $0x108] sm:$0xff]
      %v6945 = vld [vmem:[%s10 + $0x110] sm:$0xff]
      %v6946 = vld [vmem:[%s10 + $0x118] sm:$0xff]
      %v6947 = vld [vmem:[%s10 + $0x120] sm:$0xff]
      %v6948 = vld [vmem:[%s10 + $0x128] sm:$0xff]
      %v6949 = vld [vmem:[%s10 + $0x130] sm:$0xff]
      %v6950 = vld [vmem:[%s10 + $0x138] sm:$0xff]
      %v6951 = vld [vmem:[%s10 + $0x140] sm:$0xff]
      %v6952 = vld [vmem:[%s10 + $0x148] sm:$0xff]
      %v6953 = vld [vmem:[%s10 + $0x150] sm:$0xff]
      %v6954 = vld [vmem:[%s10 + $0x158] sm:$0xff]
      %v6955 = vld [vmem:[%s10 + $0x160] sm:$0xff]
      %v6956 = vld [vmem:[%s10 + $0x168] sm:$0xff]
      %v6957 = vld [vmem:[%s10 + $0x170] sm:$0xff]
      %v6958 = vld [vmem:[%s10 + $0x178] sm:$0xff]
      %v6959 = vld [vmem:[%s10 + $0x180] sm:$0xff]
      %v6960 = vld [vmem:[%s10 + $0x188] sm:$0xff]
      %v6961 = vld [vmem:[%s10 + $0x190] sm:$0xff]
      %v6962 = vld [vmem:[%s10 + $0x198] sm:$0xff]
      %v6963 = vld [vmem:[%s10 + $0x1a0] sm:$0xff]
      %v6964 = vld [vmem:[%s10 + $0x1a8] sm:$0xff]
      %v6965 = vld [vmem:[%s10 + $0x1b0] sm:$0xff]
      %v6966 = vld [vmem:[%s10 + $0x1b8] sm:$0xff]
      %v6967 = vld [vmem:[%s10 + $0x1c0] sm:$0xff]
      %v6968 = vld [vmem:[%s10 + $0x1c8] sm:$0xff]
      %v6969 = vld [vmem:[%s10 + $0x1d0] sm:$0xff]
      %v6970 = vld [vmem:[%s10 + $0x1d8] sm:$0xff]
      %v6971 = vld [vmem:[%s10 + $0x1e0] sm:$0xff]
      %v6972 = vld [vmem:[%s10 + $0x1e8] sm:$0xff]
      %v6973 = vld [vmem:[%s10 + $0x1f0] sm:$0xff]
      %v6974 = vld [vmem:[%s10 + $0x1f8] sm:$0xff]
      %6975 = vmatpush.msra.mxu0 %v6926
      %6976 = vmatpush.msra.mxu0 %v6925
      %6977 = vmatpush.msra.mxu0 %v6924
      %6978 = vmatpush.msra.mxu0 %v6923
      %6979 = vmatpush.msra.mxu0 %v6922
      %6980 = vmatpush.msra.mxu0 %v6921
      %6981 = vmatpush.msra.mxu0 %v6920
      %6982 = vmatpush.msra.mxu0 %v6919
      %6983 = vmatpush.msra.mxu0 %v6918
      %6984 = vmatpush.msra.mxu0 %v6917
      %6985 = vmatpush.msra.mxu0 %v6916
      %6986 = vmatpush.msra.mxu0 %v6915
      %6987 = vmatpush.msra.mxu0 %v6914
      %6988 = vmatpush.msra.mxu0 %v6913
      %6989 = vmatpush.msra.mxu0 %v6912
      %6990 = vmatpush.msra.mxu0 %v6911
      %6991 = vmatmul.f32.gmra.mxu0 %v6897
      %v6992 = vpop.f32.mrf.mxu0
      %v6993 = vadd.f32 0.0, %v6992
      %6994 = vdwg.mxu0
      %6995 = vmatpush.msra.mxu0 %v6942
      %6996 = vmatpush.msra.mxu0 %v6941
      %6997 = vmatpush.msra.mxu0 %v6940
      %6998 = vmatpush.msra.mxu0 %v6939
      %6999 = vmatpush.msra.mxu0 %v6938
      %7000 = vmatpush.msra.mxu0 %v6937
      %7001 = vmatpush.msra.mxu0 %v6936
      %7002 = vmatpush.msra.mxu0 %v6935
      %7003 = vmatpush.msra.mxu0 %v6934
      %7004 = vmatpush.msra.mxu0 %v6933
      %7005 = vmatpush.msra.mxu0 %v6932
      %7006 = vmatpush.msra.mxu0 %v6931
      %7007 = vmatpush.msra.mxu0 %v6930
      %7008 = vmatpush.msra.mxu0 %v6929
      %7009 = vmatpush.msra.mxu0 %v6928
      %7010 = vmatpush.msra.mxu0 %v6927
      %7011 = vmatmul.f32.gmra.mxu0 %v6901
      %v7012 = vpop.f32.mrf.mxu0
      %v7013 = vadd.f32 %v6993, %v7012
      %7014 = vdwg.mxu0
      %7015 = vmatpush.msra.mxu0 %v6958
      %7016 = vmatpush.msra.mxu0 %v6957
      %7017 = vmatpush.msra.mxu0 %v6956
      %7018 = vmatpush.msra.mxu0 %v6955
      %7019 = vmatpush.msra.mxu0 %v6954
      %7020 = vmatpush.msra.mxu0 %v6953
      %7021 = vmatpush.msra.mxu0 %v6952
      %7022 = vmatpush.msra.mxu0 %v6951
      %7023 = vmatpush.msra.mxu0 %v6950
      %7024 = vmatpush.msra.mxu0 %v6949
      %7025 = vmatpush.msra.mxu0 %v6948
      %7026 = vmatpush.msra.mxu0 %v6947
      %7027 = vmatpush.msra.mxu0 %v6946
      %7028 = vmatpush.msra.mxu0 %v6945
      %7029 = vmatpush.msra.mxu0 %v6944
      %7030 = vmatpush.msra.mxu0 %v6943
      %7031 = vmatmul.f32.gmra.mxu0 %v6907
      %v7032 = vpop.f32.mrf.mxu0
      %v7033 = vadd.f32 %v7013, %v7032
      %7034 = vdwg.mxu0
      %7035 = vmatpush.msra.mxu0 %v6974
      %7036 = vmatpush.msra.mxu0 %v6973
      %7037 = vmatpush.msra.mxu0 %v6972
      %7038 = vmatpush.msra.mxu0 %v6971
      %7039 = vmatpush.msra.mxu0 %v6970
      %7040 = vmatpush.msra.mxu0 %v6969
      %7041 = vmatpush.msra.mxu0 %v6968
      %7042 = vmatpush.msra.mxu0 %v6967
      %7043 = vmatpush.msra.mxu0 %v6966
      %7044 = vmatpush.msra.mxu0 %v6965
      %7045 = vmatpush.msra.mxu0 %v6964
      %7046 = vmatpush.msra.mxu0 %v6963
      %7047 = vmatpush.msra.mxu0 %v6962
      %7048 = vmatpush.msra.mxu0 %v6961
      %7049 = vmatpush.msra.mxu0 %v6960
      %7050 = vmatpush.msra.mxu0 %v6959
      %7051 = vmatmul.f32.gmra.mxu0 %v6908
      %v7052 = vpop.f32.mrf.mxu0
      %v7053 = vadd.f32 %v7033, %v7052
      %7054 = vdwg.mxu0
      %v7055 = vmax.f32 %v7053, 0.0
      %v7056 = vld [vmem:[%s11] sm:$0xff]
      %v7057 = vld [vmem:[%s11 + $0x8] sm:$0xff]
      %v7058 = vld [vmem:[%s11 + $0x10] sm:$0xff]
      %v7059 = vld [vmem:[%s11 + $0x18] sm:$0xff]
      %v7060 = vld [vmem:[%s11 + $0x20] sm:$0xff]
      %v7061 = vld [vmem:[%s11 + $0x28] sm:$0xff]
      %v7062 = vld [vmem:[%s11 + $0x30] sm:$0xff]
      %v7063 = vld [vmem:[%s11 + $0x38] sm:$0xff]
      %v7064 = vld [vmem:[%s11 + $0x40] sm:$0xff]
      %v7065 = vld [vmem:[%s11 + $0x48] sm:$0xff]
      %v7066 = vld [vmem:[%s11 + $0x50] sm:$0xff]
      %v7067 = vld [vmem:[%s11 + $0x58] sm:$0xff]
      %v7068 = vld [vmem:[%s11 + $0x60] sm:$0xff]
      %v7069 = vld [vmem:[%s11 + $0x68] sm:$0xff]
      %v7070 = vld [vmem:[%s11 + $0x70] sm:$0xff]
      %v7071 = vld [vmem:[%s11 + $0x78] sm:$0xff]
      %vm7072 = vcmask 261120
      %v7074 = vsel %vm7072, %v7055, 0
      %7076 = vmatpush.msra.mxu0 0.0
      %7077 = vmatpush.msra.mxu0 0.0
      %7078 = vmatpush.msra.mxu0 0.0
      %7079 = vmatpush.msra.mxu0 0.0
      %7080 = vmatpush.msra.mxu0 0.0
      %7081 = vmatpush.msra.mxu0 0.0
      %7082 = vmatpush.msra.mxu0 0.0
      %7083 = vmatpush.msra.mxu0 0.0
      %7084 = vmatpush.msra.mxu0 0.0
      %7085 = vmatpush.msra.mxu0 0.0
      %7086 = vmatpush.msra.mxu0 0.0
      %7087 = vmatpush.msra.mxu0 0.0
      %7088 = vmatpush.msra.mxu0 %v7068
      %7089 = vmatpush.msra.mxu0 %v7064
      %7090 = vmatpush.msra.mxu0 %v7060
      %7091 = vmatpush.msra.mxu0 %v7056
      %7092 = vmatmul.f32.gmra.mxu0 %v7074
      %v7093 = vpop.f32.mrf.mxu0
      %v7094 = vadd.f32 0.0, %v7093
      %7095 = vdwg.mxu0
      %7096 = vmatpush.msra.mxu0 0.0
      %7097 = vmatpush.msra.mxu0 0.0
      %7098 = vmatpush.msra.mxu0 0.0
      %7099 = vmatpush.msra.mxu0 0.0
      %7100 = vmatpush.msra.mxu0 0.0
      %7101 = vmatpush.msra.mxu0 0.0
      %7102 = vmatpush.msra.mxu0 0.0
      %7103 = vmatpush.msra.mxu0 0.0
      %7104 = vmatpush.msra.mxu0 0.0
      %7105 = vmatpush.msra.mxu0 0.0
      %7106 = vmatpush.msra.mxu0 0.0
      %7107 = vmatpush.msra.mxu0 0.0
      %7108 = vmatpush.msra.mxu0 %v7069
      %7109 = vmatpush.msra.mxu0 %v7065
      %7110 = vmatpush.msra.mxu0 %v7061
      %7111 = vmatpush.msra.mxu0 %v7057
      %7112 = vmatmul.f32.gmra.mxu0 %v7074
      %v7113 = vpop.f32.mrf.mxu0
      %v7114 = vadd.f32 0.0, %v7113
      %7115 = vdwg.mxu0
      %7116 = vmatpush.msra.mxu0 0.0
      %7117 = vmatpush.msra.mxu0 0.0
      %7118 = vmatpush.msra.mxu0 0.0
      %7119 = vmatpush.msra.mxu0 0.0
      %7120 = vmatpush.msra.mxu0 0.0
      %7121 = vmatpush.msra.mxu0 0.0
      %7122 = vmatpush.msra.mxu0 0.0
      %7123 = vmatpush.msra.mxu0 0.0
      %7124 = vmatpush.msra.mxu0 0.0
      %7125 = vmatpush.msra.mxu0 0.0
      %7126 = vmatpush.msra.mxu0 0.0
      %7127 = vmatpush.msra.mxu0 0.0
      %7128 = vmatpush.msra.mxu0 %v7070
      %7129 = vmatpush.msra.mxu0 %v7066
      %7130 = vmatpush.msra.mxu0 %v7062
      %7131 = vmatpush.msra.mxu0 %v7058
      %7132 = vmatmul.f32.gmra.mxu0 %v7074
      %v7133 = vpop.f32.mrf.mxu0
      %v7134 = vadd.f32 0.0, %v7133
      %7135 = vdwg.mxu0
      %7136 = vmatpush.msra.mxu0 0.0
      %7137 = vmatpush.msra.mxu0 0.0
      %7138 = vmatpush.msra.mxu0 0.0
      %7139 = vmatpush.msra.mxu0 0.0
      %7140 = vmatpush.msra.mxu0 0.0
      %7141 = vmatpush.msra.mxu0 0.0
      %7142 = vmatpush.msra.mxu0 0.0
      %7143 = vmatpush.msra.mxu0 0.0
      %7144 = vmatpush.msra.mxu0 0.0
      %7145 = vmatpush.msra.mxu0 0.0
      %7146 = vmatpush.msra.mxu0 0.0
      %7147 = vmatpush.msra.mxu0 0.0
      %7148 = vmatpush.msra.mxu0 %v7071
      %7149 = vmatpush.msra.mxu0 %v7067
      %7150 = vmatpush.msra.mxu0 %v7063
      %7151 = vmatpush.msra.mxu0 %v7059
      %7152 = vmatmul.f32.gmra.mxu0 %v7074
      %v7153 = vpop.f32.mrf.mxu0
      %v7154 = vadd.f32 0.0, %v7153
      %7155 = vdwg.mxu0
      %v7156 = vxor.u32 %v7094, 2147483648
      %v7157 = vxor.u32 %v7114, 2147483648
      %v7158 = vxor.u32 %v7134, 2147483648
      %v7159 = vxor.u32 %v7154, 2147483648
      %v7160 = vmul.f32 %v7156, 1.442695
      %v7161 = vpow.pop %v7160
      %v7162 = vmul.f32 %v7157, 1.442695
      %v7163 = vpow.pop %v7162
      %v7164 = vmul.f32 %v7158, 1.442695
      %v7165 = vpow.pop %v7164
      %v7166 = vmul.f32 %v7159, 1.442695
      %v7167 = vpow.pop %v7166
      %v7168 = vadd.f32 %v7161, 1.0
      %v7169 = vadd.f32 %v7163, 1.0
      %v7170 = vadd.f32 %v7165, 1.0
      %v7171 = vadd.f32 %v7167, 1.0
      %v7172 = vrcp.pop %v7168
      %v7173 = vmul.f32 %v7168, %v7172
      %v7174 = vsub.f32 1.0, %v7173
      %v7175 = vmul.f32 %v7172, %v7174
      %v7176 = vadd.f32 %v7172, %v7175
      %vm7177 = vweird.f32 %v7168
      %vm7178 = vweird.f32 %v7172
      %vm7179 = vmor %vm7177, %vm7178
      %v7180 = vsel %vm7179, %v7172, %v7176
      %v7181 = vand.u32 2147483647, %v7168
      %vm7182 = vcmp.eq.f32.partialorder %v7181, 8.507059e+37
      %v7183 = vand.u32 %v7168, 2147483648
      %v7184 = vor.u32 1.1754944e-38, %v7183
      %v7185 = vsel %vm7182, %v7184, %v7180
      %v7186 = vmul.f32 1.0, %v7185
      %v7187 = vrcp.pop %v7169
      %v7188 = vmul.f32 %v7169, %v7187
      %v7189 = vsub.f32 1.0, %v7188
      %v7190 = vmul.f32 %v7187, %v7189
      %v7191 = vadd.f32 %v7187, %v7190
      %vm7192 = vweird.f32 %v7169
      %vm7193 = vweird.f32 %v7187
      %vm7194 = vmor %vm7192, %vm7193
      %v7195 = vsel %vm7194, %v7187, %v7191
      %v7196 = vand.u32 2147483647, %v7169
      %vm7197 = vcmp.eq.f32.partialorder %v7196, 8.507059e+37
      %v7198 = vand.u32 %v7169, 2147483648
      %v7199 = vor.u32 1.1754944e-38, %v7198
      %v7200 = vsel %vm7197, %v7199, %v7195
      %v7201 = vmul.f32 1.0, %v7200
      %v7202 = vrcp.pop %v7170
      %v7203 = vmul.f32 %v7170, %v7202
      %v7204 = vsub.f32 1.0, %v7203
      %v7205 = vmul.f32 %v7202, %v7204
      %v7206 = vadd.f32 %v7202, %v7205
      %vm7207 = vweird.f32 %v7170
      %vm7208 = vweird.f32 %v7202
      %vm7209 = vmor %vm7207, %vm7208
      %v7210 = vsel %vm7209, %v7202, %v7206
      %v7211 = vand.u32 2147483647, %v7170
      %vm7212 = vcmp.eq.f32.partialorder %v7211, 8.507059e+37
      %v7213 = vand.u32 %v7170, 2147483648
      %v7214 = vor.u32 1.1754944e-38, %v7213
      %v7215 = vsel %vm7212, %v7214, %v7210
      %v7216 = vmul.f32 1.0, %v7215
      %v7217 = vrcp.pop %v7171
      %v7218 = vmul.f32 %v7171, %v7217
      %v7219 = vsub.f32 1.0, %v7218
      %v7220 = vmul.f32 %v7217, %v7219
      %v7221 = vadd.f32 %v7217, %v7220
      %vm7222 = vweird.f32 %v7171
      %vm7223 = vweird.f32 %v7217
      %vm7224 = vmor %vm7222, %vm7223
      %v7225 = vsel %vm7224, %v7217, %v7221
      %v7226 = vand.u32 2147483647, %v7171
      %vm7227 = vcmp.eq.f32.partialorder %v7226, 8.507059e+37
      %v7228 = vand.u32 %v7171, 2147483648
      %v7229 = vor.u32 1.1754944e-38, %v7228
      %v7230 = vsel %vm7227, %v7229, %v7225
      %v7231 = vmul.f32 1.0, %v7230
      %v7232 = vld [vmem:[%s12] sm:$0xff]
      %v7233 = vld [vmem:[%s12 + $0x8] sm:$0xff]
      %v7234 = vld [vmem:[%s12 + $0x10] sm:$0xff]
      %v7235 = vld [vmem:[%s12 + $0x18] sm:$0xff]
      %v7236 = vld [vmem:[%s12 + $0x20] sm:$0xff]
      %v7237 = vld [vmem:[%s12 + $0x28] sm:$0xff]
      %v7238 = vld [vmem:[%s12 + $0x30] sm:$0xff]
      %v7239 = vld [vmem:[%s12 + $0x38] sm:$0xff]
      %v7240 = vld [vmem:[%s12 + $0x40] sm:$0xff]
      %v7241 = vld [vmem:[%s12 + $0x48] sm:$0xff]
      %v7242 = vld [vmem:[%s12 + $0x50] sm:$0xff]
      %v7243 = vld [vmem:[%s12 + $0x58] sm:$0xff]
      %v7244 = vld [vmem:[%s12 + $0x60] sm:$0xff]
      %v7245 = vld [vmem:[%s12 + $0x68] sm:$0xff]
      %v7246 = vld [vmem:[%s12 + $0x70] sm:$0xff]
      %v7247 = vld [vmem:[%s12 + $0x78] sm:$0xff]
      %v7248 = vld [vmem:[%s12 + $0x80] sm:$0xff]
      %v7249 = vld [vmem:[%s12 + $0x88] sm:$0xff]
      %v7250 = vld [vmem:[%s12 + $0x90] sm:$0xff]
      %v7251 = vld [vmem:[%s12 + $0x98] sm:$0xff]
      %v7252 = vld [vmem:[%s12 + $0xa0] sm:$0xff]
      %v7253 = vld [vmem:[%s12 + $0xa8] sm:$0xff]
      %v7254 = vld [vmem:[%s12 + $0xb0] sm:$0xff]
      %v7255 = vld [vmem:[%s12 + $0xb8] sm:$0xff]
      %v7256 = vld [vmem:[%s12 + $0xc0] sm:$0xff]
      %v7257 = vld [vmem:[%s12 + $0xc8] sm:$0xff]
      %v7258 = vld [vmem:[%s12 + $0xd0] sm:$0xff]
      %v7259 = vld [vmem:[%s12 + $0xd8] sm:$0xff]
      %v7260 = vld [vmem:[%s12 + $0xe0] sm:$0xff]
      %v7261 = vld [vmem:[%s12 + $0xe8] sm:$0xff]
      %v7262 = vld [vmem:[%s12 + $0xf0] sm:$0xff]
      %v7263 = vld [vmem:[%s12 + $0xf8] sm:$0xff]
      %v7264 = vld [vmem:[%s12 + $0x100] sm:$0xff]
      %v7265 = vld [vmem:[%s12 + $0x108] sm:$0xff]
      %v7266 = vld [vmem:[%s12 + $0x110] sm:$0xff]
      %v7267 = vld [vmem:[%s12 + $0x118] sm:$0xff]
      %v7268 = vld [vmem:[%s12 + $0x120] sm:$0xff]
      %v7269 = vld [vmem:[%s12 + $0x128] sm:$0xff]
      %v7270 = vld [vmem:[%s12 + $0x130] sm:$0xff]
      %v7271 = vld [vmem:[%s12 + $0x138] sm:$0xff]
      %v7272 = vld [vmem:[%s12 + $0x140] sm:$0xff]
      %v7273 = vld [vmem:[%s12 + $0x148] sm:$0xff]
      %v7274 = vld [vmem:[%s12 + $0x150] sm:$0xff]
      %v7275 = vld [vmem:[%s12 + $0x158] sm:$0xff]
      %v7276 = vld [vmem:[%s12 + $0x160] sm:$0xff]
      %v7277 = vld [vmem:[%s12 + $0x168] sm:$0xff]
      %v7278 = vld [vmem:[%s12 + $0x170] sm:$0xff]
      %v7279 = vld [vmem:[%s12 + $0x178] sm:$0xff]
      %v7280 = vld [vmem:[%s12 + $0x180] sm:$0xff]
      %v7281 = vld [vmem:[%s12 + $0x188] sm:$0xff]
      %v7282 = vld [vmem:[%s12 + $0x190] sm:$0xff]
      %v7283 = vld [vmem:[%s12 + $0x198] sm:$0xff]
      %v7284 = vld [vmem:[%s12 + $0x1a0] sm:$0xff]
      %v7285 = vld [vmem:[%s12 + $0x1a8] sm:$0xff]
      %v7286 = vld [vmem:[%s12 + $0x1b0] sm:$0xff]
      %v7287 = vld [vmem:[%s12 + $0x1b8] sm:$0xff]
      %v7288 = vld [vmem:[%s12 + $0x1c0] sm:$0xff]
      %v7289 = vld [vmem:[%s12 + $0x1c8] sm:$0xff]
      %v7290 = vld [vmem:[%s12 + $0x1d0] sm:$0xff]
      %v7291 = vld [vmem:[%s12 + $0x1d8] sm:$0xff]
      %v7292 = vld [vmem:[%s12 + $0x1e0] sm:$0xff]
      %v7293 = vld [vmem:[%s12 + $0x1e8] sm:$0xff]
      %v7294 = vld [vmem:[%s12 + $0x1f0] sm:$0xff]
      %v7295 = vld [vmem:[%s12 + $0x1f8] sm:$0xff]
      %v7296 = vld [vmem:[%s13] sm:$0x1]
      %v7298 = vperm.slane %v7296, 0
      %7300 = vmatpush.msra.mxu0 %v7247
      %7301 = vmatpush.msra.mxu0 %v7246
      %7302 = vmatpush.msra.mxu0 %v7245
      %7303 = vmatpush.msra.mxu0 %v7244
      %7304 = vmatpush.msra.mxu0 %v7243
      %7305 = vmatpush.msra.mxu0 %v7242
      %7306 = vmatpush.msra.mxu0 %v7241
      %7307 = vmatpush.msra.mxu0 %v7240
      %7308 = vmatpush.msra.mxu0 %v7239
      %7309 = vmatpush.msra.mxu0 %v7238
      %7310 = vmatpush.msra.mxu0 %v7237
      %7311 = vmatpush.msra.mxu0 %v7236
      %7312 = vmatpush.msra.mxu0 %v7235
      %7313 = vmatpush.msra.mxu0 %v7234
      %7314 = vmatpush.msra.mxu0 %v7233
      %7315 = vmatpush.msra.mxu0 %v7232
      %7316 = vmatmul.f32.gmra.mxu0 %v7186
      %v7317 = vpop.f32.mrf.mxu0
      %v7318 = vadd.f32 %v7298, %v7317
      %7319 = vdwg.mxu0
      %7320 = vmatpush.msra.mxu0 %v7263
      %7321 = vmatpush.msra.mxu0 %v7262
      %7322 = vmatpush.msra.mxu0 %v7261
      %7323 = vmatpush.msra.mxu0 %v7260
      %7324 = vmatpush.msra.mxu0 %v7259
      %7325 = vmatpush.msra.mxu0 %v7258
      %7326 = vmatpush.msra.mxu0 %v7257
      %7327 = vmatpush.msra.mxu0 %v7256
      %7328 = vmatpush.msra.mxu0 %v7255
      %7329 = vmatpush.msra.mxu0 %v7254
      %7330 = vmatpush.msra.mxu0 %v7253
      %7331 = vmatpush.msra.mxu0 %v7252
      %7332 = vmatpush.msra.mxu0 %v7251
      %7333 = vmatpush.msra.mxu0 %v7250
      %7334 = vmatpush.msra.mxu0 %v7249
      %7335 = vmatpush.msra.mxu0 %v7248
      %7336 = vmatmul.f32.gmra.mxu0 %v7201
      %v7337 = vpop.f32.mrf.mxu0
      %v7338 = vadd.f32 %v7318, %v7337
      %7339 = vdwg.mxu0
      %7340 = vmatpush.msra.mxu0 %v7279
      %7341 = vmatpush.msra.mxu0 %v7278
      %7342 = vmatpush.msra.mxu0 %v7277
      %7343 = vmatpush.msra.mxu0 %v7276
      %7344 = vmatpush.msra.mxu0 %v7275
      %7345 = vmatpush.msra.mxu0 %v7274
      %7346 = vmatpush.msra.mxu0 %v7273
      %7347 = vmatpush.msra.mxu0 %v7272
      %7348 = vmatpush.msra.mxu0 %v7271
      %7349 = vmatpush.msra.mxu0 %v7270
      %7350 = vmatpush.msra.mxu0 %v7269
      %7351 = vmatpush.msra.mxu0 %v7268
      %7352 = vmatpush.msra.mxu0 %v7267
      %7353 = vmatpush.msra.mxu0 %v7266
      %7354 = vmatpush.msra.mxu0 %v7265
      %7355 = vmatpush.msra.mxu0 %v7264
      %7356 = vmatmul.f32.gmra.mxu0 %v7216
      %v7357 = vpop.f32.mrf.mxu0
      %v7358 = vadd.f32 %v7338, %v7357
      %7359 = vdwg.mxu0
      %7360 = vmatpush.msra.mxu0 %v7295
      %7361 = vmatpush.msra.mxu0 %v7294
      %7362 = vmatpush.msra.mxu0 %v7293
      %7363 = vmatpush.msra.mxu0 %v7292
      %7364 = vmatpush.msra.mxu0 %v7291
      %7365 = vmatpush.msra.mxu0 %v7290
      %7366 = vmatpush.msra.mxu0 %v7289
      %7367 = vmatpush.msra.mxu0 %v7288
      %7368 = vmatpush.msra.mxu0 %v7287
      %7369 = vmatpush.msra.mxu0 %v7286
      %7370 = vmatpush.msra.mxu0 %v7285
      %7371 = vmatpush.msra.mxu0 %v7284
      %7372 = vmatpush.msra.mxu0 %v7283
      %7373 = vmatpush.msra.mxu0 %v7282
      %7374 = vmatpush.msra.mxu0 %v7281
      %7375 = vmatpush.msra.mxu0 %v7280
      %7376 = vmatmul.f32.gmra.mxu0 %v7231
      %v7377 = vpop.f32.mrf.mxu0
      %v7378 = vadd.f32 %v7358, %v7377
      %7379 = vdwg.mxu0
      %v7380 = vmax.f32 %v7378, 0.0
      %v7381 = vld [vmem:[%s14] sm:$0xff]
      %v7382 = vld [vmem:[%s14 + $0x8] sm:$0xff]
      %v7383 = vld [vmem:[%s14 + $0x10] sm:$0xff]
      %v7384 = vld [vmem:[%s14 + $0x18] sm:$0xff]
      %vm7385 = vcmask 130048
      %v7387 = vsel %vm7385, %v7380, 0
      %7389 = vmatpush.msra.mxu0 0.0
      %7390 = vmatpush.msra.mxu0 0.0
      %7391 = vmatpush.msra.mxu0 0.0
      %7392 = vmatpush.msra.mxu0 0.0
      %7393 = vmatpush.msra.mxu0 0.0
      %7394 = vmatpush.msra.mxu0 0.0
      %7395 = vmatpush.msra.mxu0 0.0
      %7396 = vmatpush.msra.mxu0 0.0
      %7397 = vmatpush.msra.mxu0 0.0
      %7398 = vmatpush.msra.mxu0 0.0
      %7399 = vmatpush.msra.mxu0 0.0
      %7400 = vmatpush.msra.mxu0 0.0
      %7401 = vmatpush.msra.mxu0 0.0
      %7402 = vmatpush.msra.mxu0 0.0
      %7403 = vmatpush.msra.mxu0 %v7383
      %7404 = vmatpush.msra.mxu0 %v7381
      %7405 = vmatmul.f32.gmra.mxu0 %v7387
      %v7406 = vpop.f32.mrf.mxu0
      %v7407 = vadd.f32 0.0, %v7406
      %7408 = vdwg.mxu0
      %7409 = vmatpush.msra.mxu0 0.0
      %7410 = vmatpush.msra.mxu0 0.0
      %7411 = vmatpush.msra.mxu0 0.0
      %7412 = vmatpush.msra.mxu0 0.0
      %7413 = vmatpush.msra.mxu0 0.0
      %7414 = vmatpush.msra.mxu0 0.0
      %7415 = vmatpush.msra.mxu0 0.0
      %7416 = vmatpush.msra.mxu0 0.0
      %7417 = vmatpush.msra.mxu0 0.0
      %7418 = vmatpush.msra.mxu0 0.0
      %7419 = vmatpush.msra.mxu0 0.0
      %7420 = vmatpush.msra.mxu0 0.0
      %7421 = vmatpush.msra.mxu0 0.0
      %7422 = vmatpush.msra.mxu0 0.0
      %7423 = vmatpush.msra.mxu0 %v7384
      %7424 = vmatpush.msra.mxu0 %v7382
      %7425 = vmatmul.f32.gmra.mxu0 %v7387
      %v7426 = vpop.f32.mrf.mxu0
      %v7427 = vadd.f32 0.0, %v7426
      %7428 = vdwg.mxu0
      %v7429 = vxor.u32 %v7407, 2147483648
      %v7430 = vxor.u32 %v7427, 2147483648
      %v7431 = vmul.f32 %v7429, 1.442695
      %v7432 = vpow.pop %v7431
      %v7433 = vmul.f32 %v7430, 1.442695
      %v7434 = vpow.pop %v7433
      %v7435 = vadd.f32 %v7432, 1.0
      %v7436 = vadd.f32 %v7434, 1.0
      %v7437 = vrcp.pop %v7435
      %v7438 = vmul.f32 %v7435, %v7437
      %v7439 = vsub.f32 1.0, %v7438
      %v7440 = vmul.f32 %v7437, %v7439
      %v7441 = vadd.f32 %v7437, %v7440
      %vm7442 = vweird.f32 %v7435
      %vm7443 = vweird.f32 %v7437
      %vm7444 = vmor %vm7442, %vm7443
      %v7445 = vsel %vm7444, %v7437, %v7441
      %v7446 = vand.u32 2147483647, %v7435
      %vm7447 = vcmp.eq.f32.partialorder %v7446, 8.507059e+37
      %v7448 = vand.u32 %v7435, 2147483648
      %v7449 = vor.u32 1.1754944e-38, %v7448
      %v7450 = vsel %vm7447, %v7449, %v7445
      %v7451 = vmul.f32 1.0, %v7450
      %v7452 = vrcp.pop %v7436
      %v7453 = vmul.f32 %v7436, %v7452
      %v7454 = vsub.f32 1.0, %v7453
      %v7455 = vmul.f32 %v7452, %v7454
      %v7456 = vadd.f32 %v7452, %v7455
      %vm7457 = vweird.f32 %v7436
      %vm7458 = vweird.f32 %v7452
      %vm7459 = vmor %vm7457, %vm7458
      %v7460 = vsel %vm7459, %v7452, %v7456
      %v7461 = vand.u32 2147483647, %v7436
      %vm7462 = vcmp.eq.f32.partialorder %v7461, 8.507059e+37
      %v7463 = vand.u32 %v7436, 2147483648
      %v7464 = vor.u32 1.1754944e-38, %v7463
      %v7465 = vsel %vm7462, %v7464, %v7460
      %v7466 = vmul.f32 1.0, %v7465
      %v7469 = vrot.slane %v7466, 7
      %vm7470 = vcmask 1040384
      %v7471 = vsel %vm7470, %v7451, %v7469
      %v7472 = vsel %vm6896, %v7451, %v7469
      %v7473 = vrot.slane %v7472, 1
      %v7474 = vperm.slane %v7471, 0
      %v7475 = vperm.slane %v7471, 1
      %v7476 = vperm.slane %v7473, 0
      %v7477 = vperm.slane %v7473, 1
      %v7482 = vmul.f32 %v6226, %v7474
      %v7483 = vmul.f32 %v6395, %v7475
      %v7484 = vmul.f32 %v6228, %v7474
      %v7485 = vmul.f32 %v6397, %v7475
      %v7486 = vmul.f32 %v6231, %v7474
      %v7487 = vmul.f32 %v6400, %v7475
      %v7488 = vmul.f32 %v6233, %v7474
      %v7489 = vmul.f32 %v6402, %v7475
      %v7490 = vmul.f32 %v6236, %v7474
      %v7491 = vmul.f32 %v6405, %v7475
      %v7492 = vmul.f32 %v6238, %v7474
      %v7493 = vmul.f32 %v6407, %v7475
      %v7494 = vmul.f32 %v6241, %v7474
      %v7495 = vmul.f32 %v6410, %v7475
      %v7496 = vmul.f32 %v6243, %v7474
      %v7497 = vmul.f32 %v6412, %v7475
      %v7498 = vmul.f32 %v6246, %v7474
      %v7499 = vmul.f32 %v6415, %v7475
      %v7500 = vmul.f32 %v6248, %v7474
      %v7501 = vmul.f32 %v6417, %v7475
      %v7502 = vmul.f32 %v6251, %v7474
      %v7503 = vmul.f32 %v6420, %v7475
      %v7504 = vmul.f32 %v6253, %v7474
      %v7505 = vmul.f32 %v6422, %v7475
      %v7506 = vmul.f32 %v6256, %v7474
      %v7507 = vmul.f32 %v6425, %v7475
      %v7508 = vmul.f32 %v6258, %v7474
      %v7509 = vmul.f32 %v6427, %v7475
      %v7510 = vmul.f32 %v6261, %v7474
      %v7511 = vmul.f32 %v6430, %v7475
      %v7512 = vmul.f32 %v6263, %v7474
      %v7513 = vmul.f32 %v6432, %v7475
      %v7514 = vmul.f32 %v6266, %v7474
      %v7515 = vmul.f32 %v6435, %v7475
      %v7516 = vmul.f32 %v6268, %v7474
      %v7517 = vmul.f32 %v6437, %v7475
      %v7518 = vmul.f32 %v6271, %v7474
      %v7519 = vmul.f32 %v6440, %v7475
      %v7520 = vmul.f32 %v6273, %v7474
      %v7521 = vmul.f32 %v6442, %v7475
      %v7522 = vmul.f32 %v6276, %v7474
      %v7523 = vmul.f32 %v6445, %v7475
      %v7524 = vmul.f32 %v6278, %v7474
      %v7525 = vmul.f32 %v6447, %v7475
      %v7526 = vmul.f32 %v6281, %v7474
      %v7527 = vmul.f32 %v6450, %v7475
      %v7528 = vmul.f32 %v6283, %v7474
      %v7529 = vmul.f32 %v6452, %v7475
      %v7530 = vmul.f32 %v6286, %v7474
      %v7531 = vmul.f32 %v6455, %v7475
      %v7532 = vmul.f32 %v6288, %v7474
      %v7533 = vmul.f32 %v6457, %v7475
      %v7534 = vmul.f32 %v6291, %v7474
      %v7535 = vmul.f32 %v6460, %v7475
      %v7536 = vmul.f32 %v6293, %v7474
      %v7537 = vmul.f32 %v6462, %v7475
      %v7538 = vmul.f32 %v6296, %v7474
      %v7539 = vmul.f32 %v6465, %v7475
      %v7540 = vmul.f32 %v6298, %v7474
      %v7541 = vmul.f32 %v6467, %v7475
      %v7542 = vmul.f32 %v6301, %v7474
      %v7543 = vmul.f32 %v6470, %v7475
      %v7544 = vmul.f32 %v6303, %v7474
      %v7545 = vmul.f32 %v6472, %v7475
      %v7546 = vmul.f32 %v6306, %v7476
      %v7547 = vmul.f32 %v6475, %v7477
      %v7548 = vmul.f32 %v6308, %v7476
      %v7549 = vmul.f32 %v6477, %v7477
      %v7550 = vmul.f32 %v6311, %v7476
      %v7551 = vmul.f32 %v6480, %v7477
      %v7552 = vmul.f32 %v6313, %v7476
      %v7553 = vmul.f32 %v6482, %v7477
      %v7554 = vmul.f32 %v6316, %v7476
      %v7555 = vmul.f32 %v6485, %v7477
      %v7556 = vmul.f32 %v6318, %v7476
      %v7557 = vmul.f32 %v6487, %v7477
      %v7558 = vmul.f32 %v6321, %v7476
      %v7559 = vmul.f32 %v6490, %v7477
      %v7560 = vmul.f32 %v6323, %v7476
      %v7561 = vmul.f32 %v6492, %v7477
      %v7562 = vmul.f32 %v6326, %v7476
      %v7563 = vmul.f32 %v6495, %v7477
      %v7564 = vmul.f32 %v6328, %v7476
      %v7565 = vmul.f32 %v6497, %v7477
      %v7566 = vmul.f32 %v6331, %v7476
      %v7567 = vmul.f32 %v6500, %v7477
      %v7568 = vmul.f32 %v6333, %v7476
      %v7569 = vmul.f32 %v6502, %v7477
      %v7570 = vmul.f32 %v6336, %v7476
      %v7571 = vmul.f32 %v6505, %v7477
      %v7572 = vmul.f32 %v6338, %v7476
      %v7573 = vmul.f32 %v6507, %v7477
      %v7574 = vmul.f32 %v6341, %v7476
      %v7575 = vmul.f32 %v6510, %v7477
      %v7576 = vmul.f32 %v6343, %v7476
      %v7577 = vmul.f32 %v6512, %v7477
      %v7578 = vmul.f32 %v6346, %v7476
      %v7579 = vmul.f32 %v6515, %v7477
      %v7580 = vmul.f32 %v6348, %v7476
      %v7581 = vmul.f32 %v6517, %v7477
      %v7582 = vmul.f32 %v6351, %v7476
      %v7583 = vmul.f32 %v6520, %v7477
      %v7584 = vmul.f32 %v6353, %v7476
      %v7585 = vmul.f32 %v6522, %v7477
      %v7586 = vmul.f32 %v6356, %v7476
      %v7587 = vmul.f32 %v6525, %v7477
      %v7588 = vmul.f32 %v6358, %v7476
      %v7589 = vmul.f32 %v6527, %v7477
      %v7590 = vmul.f32 %v6361, %v7476
      %v7591 = vmul.f32 %v6530, %v7477
      %v7592 = vmul.f32 %v6363, %v7476
      %v7593 = vmul.f32 %v6532, %v7477
      %v7594 = vmul.f32 %v6366, %v7476
      %v7595 = vmul.f32 %v6535, %v7477
      %v7596 = vmul.f32 %v6368, %v7476
      %v7597 = vmul.f32 %v6537, %v7477
      %v7598 = vmul.f32 %v6371, %v7476
      %v7599 = vmul.f32 %v6540, %v7477
      %v7600 = vmul.f32 %v6373, %v7476
      %v7601 = vmul.f32 %v6542, %v7477
      %v7602 = vmul.f32 %v6376, %v7476
      %v7603 = vmul.f32 %v6545, %v7477
      %v7604 = vmul.f32 %v6378, %v7476
      %v7605 = vmul.f32 %v6547, %v7477
      %v7606 = vmul.f32 %v6381, %v7476
      %v7607 = vmul.f32 %v6550, %v7477
      %v7608 = vmul.f32 %v6383, %v7476
      %v7609 = vmul.f32 %v6552, %v7477
      %v7610 = vadd.f32 %v7482, %v503
      %v7611 = vadd.f32 %v7483, %v504
      %v7612 = vadd.f32 %v7484, %v505
      %v7613 = vadd.f32 %v7485, %v506
      %v7614 = vadd.f32 %v7486, %v507
      %v7615 = vadd.f32 %v7487, %v508
      %v7616 = vadd.f32 %v7488, %v509
      %v7617 = vadd.f32 %v7489, %v510
      %v7618 = vadd.f32 %v7490, %v511
      %v7619 = vadd.f32 %v7491, %v512
      %v7620 = vadd.f32 %v7492, %v513
      %v7621 = vadd.f32 %v7493, %v514
      %v7622 = vadd.f32 %v7494, %v515
      %v7623 = vadd.f32 %v7495, %v516
      %v7624 = vadd.f32 %v7496, %v517
      %v7625 = vadd.f32 %v7497, %v518
      %v7626 = vadd.f32 %v7498, %v519
      %v7627 = vadd.f32 %v7499, %v520
      %v7628 = vadd.f32 %v7500, %v521
      %v7629 = vadd.f32 %v7501, %v522
      %v7630 = vadd.f32 %v7502, %v523
      %v7631 = vadd.f32 %v7503, %v524
      %v7632 = vadd.f32 %v7504, %v525
      %v7633 = vadd.f32 %v7505, %v526
      %v7634 = vadd.f32 %v7506, %v527
      %v7635 = vadd.f32 %v7507, %v528
      %v7636 = vadd.f32 %v7508, %v529
      %v7637 = vadd.f32 %v7509, %v530
      %v7638 = vadd.f32 %v7510, %v531
      %v7639 = vadd.f32 %v7511, %v532
      %v7640 = vadd.f32 %v7512, %v533
      %v7641 = vadd.f32 %v7513, %v534
      %v7642 = vadd.f32 %v7514, %v535
      %v7643 = vadd.f32 %v7515, %v536
      %v7644 = vadd.f32 %v7516, %v537
      %v7645 = vadd.f32 %v7517, %v538
      %v7646 = vadd.f32 %v7518, %v539
      %v7647 = vadd.f32 %v7519, %v540
      %v7648 = vadd.f32 %v7520, %v541
      %v7649 = vadd.f32 %v7521, %v542
      %v7650 = vadd.f32 %v7522, %v543
      %v7651 = vadd.f32 %v7523, %v544
      %v7652 = vadd.f32 %v7524, %v545
      %v7653 = vadd.f32 %v7525, %v546
      %v7654 = vadd.f32 %v7526, %v547
      %v7655 = vadd.f32 %v7527, %v548
      %v7656 = vadd.f32 %v7528, %v549
      %v7657 = vadd.f32 %v7529, %v550
      %v7658 = vadd.f32 %v7530, %v551
      %v7659 = vadd.f32 %v7531, %v552
      %v7660 = vadd.f32 %v7532, %v553
      %v7661 = vadd.f32 %v7533, %v554
      %v7662 = vadd.f32 %v7534, %v555
      %v7663 = vadd.f32 %v7535, %v556
      %v7664 = vadd.f32 %v7536, %v557
      %v7665 = vadd.f32 %v7537, %v558
      %v7666 = vadd.f32 %v7538, %v559
      %v7667 = vadd.f32 %v7539, %v560
      %v7668 = vadd.f32 %v7540, %v561
      %v7669 = vadd.f32 %v7541, %v562
      %v7670 = vadd.f32 %v7542, %v563
      %v7671 = vadd.f32 %v7543, %v564
      %v7672 = vadd.f32 %v7544, %v565
      %v7673 = vadd.f32 %v7545, %v566
      %v7674 = vadd.f32 %v7546, %v567
      %v7675 = vadd.f32 %v7547, %v568
      %v7676 = vadd.f32 %v7548, %v569
      %v7677 = vadd.f32 %v7549, %v570
      %v7678 = vadd.f32 %v7550, %v571
      %v7679 = vadd.f32 %v7551, %v572
      %v7680 = vadd.f32 %v7552, %v573
      %v7681 = vadd.f32 %v7553, %v574
      %v7682 = vadd.f32 %v7554, %v575
      %v7683 = vadd.f32 %v7555, %v576
      %v7684 = vadd.f32 %v7556, %v577
      %v7685 = vadd.f32 %v7557, %v578
      %v7686 = vadd.f32 %v7558, %v579
      %v7687 = vadd.f32 %v7559, %v580
      %v7688 = vadd.f32 %v7560, %v581
      %v7689 = vadd.f32 %v7561, %v582
      %v7690 = vadd.f32 %v7562, %v583
      %v7691 = vadd.f32 %v7563, %v584
      %v7692 = vadd.f32 %v7564, %v585
      %v7693 = vadd.f32 %v7565, %v586
      %v7694 = vadd.f32 %v7566, %v587
      %v7695 = vadd.f32 %v7567, %v588
      %v7696 = vadd.f32 %v7568, %v589
      %v7697 = vadd.f32 %v7569, %v590
      %v7698 = vadd.f32 %v7570, %v591
      %v7699 = vadd.f32 %v7571, %v592
      %v7700 = vadd.f32 %v7572, %v593
      %v7701 = vadd.f32 %v7573, %v594
      %v7702 = vadd.f32 %v7574, %v595
      %v7703 = vadd.f32 %v7575, %v596
      %v7704 = vadd.f32 %v7576, %v597
      %v7705 = vadd.f32 %v7577, %v598
      %v7706 = vadd.f32 %v7578, %v599
      %v7707 = vadd.f32 %v7579, %v600
      %v7708 = vadd.f32 %v7580, %v601
      %v7709 = vadd.f32 %v7581, %v602
      %v7710 = vadd.f32 %v7582, %v603
      %v7711 = vadd.f32 %v7583, %v604
      %v7712 = vadd.f32 %v7584, %v605
      %v7713 = vadd.f32 %v7585, %v606
      %v7714 = vadd.f32 %v7586, %v607
      %v7715 = vadd.f32 %v7587, %v608
      %v7716 = vadd.f32 %v7588, %v609
      %v7717 = vadd.f32 %v7589, %v610
      %v7718 = vadd.f32 %v7590, %v611
      %v7719 = vadd.f32 %v7591, %v612
      %v7720 = vadd.f32 %v7592, %v613
      %v7721 = vadd.f32 %v7593, %v614
      %v7722 = vadd.f32 %v7594, %v615
      %v7723 = vadd.f32 %v7595, %v616
      %v7724 = vadd.f32 %v7596, %v617
      %v7725 = vadd.f32 %v7597, %v618
      %v7726 = vadd.f32 %v7598, %v619
      %v7727 = vadd.f32 %v7599, %v620
      %v7728 = vadd.f32 %v7600, %v621
      %v7729 = vadd.f32 %v7601, %v622
      %v7730 = vadd.f32 %v7602, %v623
      %v7731 = vadd.f32 %v7603, %v624
      %v7732 = vadd.f32 %v7604, %v625
      %v7733 = vadd.f32 %v7605, %v626
      %v7734 = vadd.f32 %v7606, %v627
      %v7735 = vadd.f32 %v7607, %v628
      %v7736 = vadd.f32 %v7608, %v629
      %v7737 = vadd.f32 %v7609, %v630
      %v7738 = vmax.f32 %v7610, 0.0
      %v7739 = vmax.f32 %v7611, 0.0
      %v7740 = vmax.f32 %v7612, 0.0
      %v7741 = vmax.f32 %v7613, 0.0
      %v7742 = vmax.f32 %v7614, 0.0
      %v7743 = vmax.f32 %v7615, 0.0
      %v7744 = vmax.f32 %v7616, 0.0
      %v7745 = vmax.f32 %v7617, 0.0
      %v7746 = vmax.f32 %v7618, 0.0
      %v7747 = vmax.f32 %v7619, 0.0
      %v7748 = vmax.f32 %v7620, 0.0
      %v7749 = vmax.f32 %v7621, 0.0
      %v7750 = vmax.f32 %v7622, 0.0
      %v7751 = vmax.f32 %v7623, 0.0
      %v7752 = vmax.f32 %v7624, 0.0
      %v7753 = vmax.f32 %v7625, 0.0
      %v7754 = vmax.f32 %v7626, 0.0
      %v7755 = vmax.f32 %v7627, 0.0
      %v7756 = vmax.f32 %v7628, 0.0
      %v7757 = vmax.f32 %v7629, 0.0
      %v7758 = vmax.f32 %v7630, 0.0
      %v7759 = vmax.f32 %v7631, 0.0
      %v7760 = vmax.f32 %v7632, 0.0
      %v7761 = vmax.f32 %v7633, 0.0
      %v7762 = vmax.f32 %v7634, 0.0
      %v7763 = vmax.f32 %v7635, 0.0
      %v7764 = vmax.f32 %v7636, 0.0
      %v7765 = vmax.f32 %v7637, 0.0
      %v7766 = vmax.f32 %v7638, 0.0
      %v7767 = vmax.f32 %v7639, 0.0
      %v7768 = vmax.f32 %v7640, 0.0
      %v7769 = vmax.f32 %v7641, 0.0
      %v7770 = vmax.f32 %v7642, 0.0
      %v7771 = vmax.f32 %v7643, 0.0
      %v7772 = vmax.f32 %v7644, 0.0
      %v7773 = vmax.f32 %v7645, 0.0
      %v7774 = vmax.f32 %v7646, 0.0
      %v7775 = vmax.f32 %v7647, 0.0
      %v7776 = vmax.f32 %v7648, 0.0
      %v7777 = vmax.f32 %v7649, 0.0
      %v7778 = vmax.f32 %v7650, 0.0
      %v7779 = vmax.f32 %v7651, 0.0
      %v7780 = vmax.f32 %v7652, 0.0
      %v7781 = vmax.f32 %v7653, 0.0
      %v7782 = vmax.f32 %v7654, 0.0
      %v7783 = vmax.f32 %v7655, 0.0
      %v7784 = vmax.f32 %v7656, 0.0
      %v7785 = vmax.f32 %v7657, 0.0
      %v7786 = vmax.f32 %v7658, 0.0
      %v7787 = vmax.f32 %v7659, 0.0
      %v7788 = vmax.f32 %v7660, 0.0
      %v7789 = vmax.f32 %v7661, 0.0
      %v7790 = vmax.f32 %v7662, 0.0
      %v7791 = vmax.f32 %v7663, 0.0
      %v7792 = vmax.f32 %v7664, 0.0
      %v7793 = vmax.f32 %v7665, 0.0
      %v7794 = vmax.f32 %v7666, 0.0
      %v7795 = vmax.f32 %v7667, 0.0
      %v7796 = vmax.f32 %v7668, 0.0
      %v7797 = vmax.f32 %v7669, 0.0
      %v7798 = vmax.f32 %v7670, 0.0
      %v7799 = vmax.f32 %v7671, 0.0
      %v7800 = vmax.f32 %v7672, 0.0
      %v7801 = vmax.f32 %v7673, 0.0
      %v7802 = vmax.f32 %v7674, 0.0
      %v7803 = vmax.f32 %v7675, 0.0
      %v7804 = vmax.f32 %v7676, 0.0
      %v7805 = vmax.f32 %v7677, 0.0
      %v7806 = vmax.f32 %v7678, 0.0
      %v7807 = vmax.f32 %v7679, 0.0
      %v7808 = vmax.f32 %v7680, 0.0
      %v7809 = vmax.f32 %v7681, 0.0
      %v7810 = vmax.f32 %v7682, 0.0
      %v7811 = vmax.f32 %v7683, 0.0
      %v7812 = vmax.f32 %v7684, 0.0
      %v7813 = vmax.f32 %v7685, 0.0
      %v7814 = vmax.f32 %v7686, 0.0
      %v7815 = vmax.f32 %v7687, 0.0
      %v7816 = vmax.f32 %v7688, 0.0
      %v7817 = vmax.f32 %v7689, 0.0
      %v7818 = vmax.f32 %v7690, 0.0
      %v7819 = vmax.f32 %v7691, 0.0
      %v7820 = vmax.f32 %v7692, 0.0
      %v7821 = vmax.f32 %v7693, 0.0
      %v7822 = vmax.f32 %v7694, 0.0
      %v7823 = vmax.f32 %v7695, 0.0
      %v7824 = vmax.f32 %v7696, 0.0
      %v7825 = vmax.f32 %v7697, 0.0
      %v7826 = vmax.f32 %v7698, 0.0
      %v7827 = vmax.f32 %v7699, 0.0
      %v7828 = vmax.f32 %v7700, 0.0
      %v7829 = vmax.f32 %v7701, 0.0
      %v7830 = vmax.f32 %v7702, 0.0
      %v7831 = vmax.f32 %v7703, 0.0
      %v7832 = vmax.f32 %v7704, 0.0
      %v7833 = vmax.f32 %v7705, 0.0
      %v7834 = vmax.f32 %v7706, 0.0
      %v7835 = vmax.f32 %v7707, 0.0
      %v7836 = vmax.f32 %v7708, 0.0
      %v7837 = vmax.f32 %v7709, 0.0
      %v7838 = vmax.f32 %v7710, 0.0
      %v7839 = vmax.f32 %v7711, 0.0
      %v7840 = vmax.f32 %v7712, 0.0
      %v7841 = vmax.f32 %v7713, 0.0
      %v7842 = vmax.f32 %v7714, 0.0
      %v7843 = vmax.f32 %v7715, 0.0
      %v7844 = vmax.f32 %v7716, 0.0
      %v7845 = vmax.f32 %v7717, 0.0
      %v7846 = vmax.f32 %v7718, 0.0
      %v7847 = vmax.f32 %v7719, 0.0
      %v7848 = vmax.f32 %v7720, 0.0
      %v7849 = vmax.f32 %v7721, 0.0
      %v7850 = vmax.f32 %v7722, 0.0
      %v7851 = vmax.f32 %v7723, 0.0
      %v7852 = vmax.f32 %v7724, 0.0
      %v7853 = vmax.f32 %v7725, 0.0
      %v7854 = vmax.f32 %v7726, 0.0
      %v7855 = vmax.f32 %v7727, 0.0
      %v7856 = vmax.f32 %v7728, 0.0
      %v7857 = vmax.f32 %v7729, 0.0
      %v7858 = vmax.f32 %v7730, 0.0
      %v7859 = vmax.f32 %v7731, 0.0
      %v7860 = vmax.f32 %v7732, 0.0
      %v7861 = vmax.f32 %v7733, 0.0
      %v7862 = vmax.f32 %v7734, 0.0
      %v7863 = vmax.f32 %v7735, 0.0
      %v7864 = vmax.f32 %v7736, 0.0
      %v7865 = vmax.f32 %v7737, 0.0
      %7866 = vst [vmem:[%s501] sm:$0xff] %v7738
      %7867 = vst [vmem:[%s501 + $0x8] sm:$0xff] %v7739
      %7868 = vst [vmem:[%s501 + $0x10] sm:$0xff] %v7740
      %7869 = vst [vmem:[%s501 + $0x18] sm:$0xff] %v7741
      %7870 = vst [vmem:[%s501 + $0x20] sm:$0xff] %v7742
      %7871 = vst [vmem:[%s501 + $0x28] sm:$0xff] %v7743
      %7872 = vst [vmem:[%s501 + $0x30] sm:$0xff] %v7744
      %7873 = vst [vmem:[%s501 + $0x38] sm:$0xff] %v7745
      %7874 = vst [vmem:[%s501 + $0x40] sm:$0xff] %v7746
      %7875 = vst [vmem:[%s501 + $0x48] sm:$0xff] %v7747
      %7876 = vst [vmem:[%s501 + $0x50] sm:$0xff] %v7748
      %7877 = vst [vmem:[%s501 + $0x58] sm:$0xff] %v7749
      %7878 = vst [vmem:[%s501 + $0x60] sm:$0xff] %v7750
      %7879 = vst [vmem:[%s501 + $0x68] sm:$0xff] %v7751
      %7880 = vst [vmem:[%s501 + $0x70] sm:$0xff] %v7752
      %7881 = vst [vmem:[%s501 + $0x78] sm:$0xff] %v7753
      %7882 = vst [vmem:[%s501 + $0x80] sm:$0xff] %v7754
      %7883 = vst [vmem:[%s501 + $0x88] sm:$0xff] %v7755
      %7884 = vst [vmem:[%s501 + $0x90] sm:$0xff] %v7756
      %7885 = vst [vmem:[%s501 + $0x98] sm:$0xff] %v7757
      %7886 = vst [vmem:[%s501 + $0xa0] sm:$0xff] %v7758
      %7887 = vst [vmem:[%s501 + $0xa8] sm:$0xff] %v7759
      %7888 = vst [vmem:[%s501 + $0xb0] sm:$0xff] %v7760
      %7889 = vst [vmem:[%s501 + $0xb8] sm:$0xff] %v7761
      %7890 = vst [vmem:[%s501 + $0xc0] sm:$0xff] %v7762
      %7891 = vst [vmem:[%s501 + $0xc8] sm:$0xff] %v7763
      %7892 = vst [vmem:[%s501 + $0xd0] sm:$0xff] %v7764
      %7893 = vst [vmem:[%s501 + $0xd8] sm:$0xff] %v7765
      %7894 = vst [vmem:[%s501 + $0xe0] sm:$0xff] %v7766
      %7895 = vst [vmem:[%s501 + $0xe8] sm:$0xff] %v7767
      %7896 = vst [vmem:[%s501 + $0xf0] sm:$0xff] %v7768
      %7897 = vst [vmem:[%s501 + $0xf8] sm:$0xff] %v7769
      %7898 = vst [vmem:[%s501 + $0x100] sm:$0xff] %v7770
      %7899 = vst [vmem:[%s501 + $0x108] sm:$0xff] %v7771
      %7900 = vst [vmem:[%s501 + $0x110] sm:$0xff] %v7772
      %7901 = vst [vmem:[%s501 + $0x118] sm:$0xff] %v7773
      %7902 = vst [vmem:[%s501 + $0x120] sm:$0xff] %v7774
      %7903 = vst [vmem:[%s501 + $0x128] sm:$0xff] %v7775
      %7904 = vst [vmem:[%s501 + $0x130] sm:$0xff] %v7776
      %7905 = vst [vmem:[%s501 + $0x138] sm:$0xff] %v7777
      %7906 = vst [vmem:[%s501 + $0x140] sm:$0xff] %v7778
      %7907 = vst [vmem:[%s501 + $0x148] sm:$0xff] %v7779
      %7908 = vst [vmem:[%s501 + $0x150] sm:$0xff] %v7780
      %7909 = vst [vmem:[%s501 + $0x158] sm:$0xff] %v7781
      %7910 = vst [vmem:[%s501 + $0x160] sm:$0xff] %v7782
      %7911 = vst [vmem:[%s501 + $0x168] sm:$0xff] %v7783
      %7912 = vst [vmem:[%s501 + $0x170] sm:$0xff] %v7784
      %7913 = vst [vmem:[%s501 + $0x178] sm:$0xff] %v7785
      %7914 = vst [vmem:[%s501 + $0x180] sm:$0xff] %v7786
      %7915 = vst [vmem:[%s501 + $0x188] sm:$0xff] %v7787
      %7916 = vst [vmem:[%s501 + $0x190] sm:$0xff] %v7788
      %7917 = vst [vmem:[%s501 + $0x198] sm:$0xff] %v7789
      %7918 = vst [vmem:[%s501 + $0x1a0] sm:$0xff] %v7790
      %7919 = vst [vmem:[%s501 + $0x1a8] sm:$0xff] %v7791
      %7920 = vst [vmem:[%s501 + $0x1b0] sm:$0xff] %v7792
      %7921 = vst [vmem:[%s501 + $0x1b8] sm:$0xff] %v7793
      %7922 = vst [vmem:[%s501 + $0x1c0] sm:$0xff] %v7794
      %7923 = vst [vmem:[%s501 + $0x1c8] sm:$0xff] %v7795
      %7924 = vst [vmem:[%s501 + $0x1d0] sm:$0xff] %v7796
      %7925 = vst [vmem:[%s501 + $0x1d8] sm:$0xff] %v7797
      %7926 = vst [vmem:[%s501 + $0x1e0] sm:$0xff] %v7798
      %7927 = vst [vmem:[%s501 + $0x1e8] sm:$0xff] %v7799
      %7928 = vst [vmem:[%s501 + $0x1f0] sm:$0xff] %v7800
      %7929 = vst [vmem:[%s501 + $0x1f8] sm:$0xff] %v7801
      %7930 = vst [vmem:[%s501 + $0x200] sm:$0xff] %v7802
      %7931 = vst [vmem:[%s501 + $0x208] sm:$0xff] %v7803
      %7932 = vst [vmem:[%s501 + $0x210] sm:$0xff] %v7804
      %7933 = vst [vmem:[%s501 + $0x218] sm:$0xff] %v7805
      %7934 = vst [vmem:[%s501 + $0x220] sm:$0xff] %v7806
      %7935 = vst [vmem:[%s501 + $0x228] sm:$0xff] %v7807
      %7936 = vst [vmem:[%s501 + $0x230] sm:$0xff] %v7808
      %7937 = vst [vmem:[%s501 + $0x238] sm:$0xff] %v7809
      %7938 = vst [vmem:[%s501 + $0x240] sm:$0xff] %v7810
      %7939 = vst [vmem:[%s501 + $0x248] sm:$0xff] %v7811
      %7940 = vst [vmem:[%s501 + $0x250] sm:$0xff] %v7812
      %7941 = vst [vmem:[%s501 + $0x258] sm:$0xff] %v7813
      %7942 = vst [vmem:[%s501 + $0x260] sm:$0xff] %v7814
      %7943 = vst [vmem:[%s501 + $0x268] sm:$0xff] %v7815
      %7944 = vst [vmem:[%s501 + $0x270] sm:$0xff] %v7816
      %7945 = vst [vmem:[%s501 + $0x278] sm:$0xff] %v7817
      %7946 = vst [vmem:[%s501 + $0x280] sm:$0xff] %v7818
      %7947 = vst [vmem:[%s501 + $0x288] sm:$0xff] %v7819
      %7948 = vst [vmem:[%s501 + $0x290] sm:$0xff] %v7820
      %7949 = vst [vmem:[%s501 + $0x298] sm:$0xff] %v7821
      %7950 = vst [vmem:[%s501 + $0x2a0] sm:$0xff] %v7822
      %7951 = vst [vmem:[%s501 + $0x2a8] sm:$0xff] %v7823
      %7952 = vst [vmem:[%s501 + $0x2b0] sm:$0xff] %v7824
      %7953 = vst [vmem:[%s501 + $0x2b8] sm:$0xff] %v7825
      %7954 = vst [vmem:[%s501 + $0x2c0] sm:$0xff] %v7826
      %7955 = vst [vmem:[%s501 + $0x2c8] sm:$0xff] %v7827
      %7956 = vst [vmem:[%s501 + $0x2d0] sm:$0xff] %v7828
      %7957 = vst [vmem:[%s501 + $0x2d8] sm:$0xff] %v7829
      %7958 = vst [vmem:[%s501 + $0x2e0] sm:$0xff] %v7830
      %7959 = vst [vmem:[%s501 + $0x2e8] sm:$0xff] %v7831
      %7960 = vst [vmem:[%s501 + $0x2f0] sm:$0xff] %v7832
      %7961 = vst [vmem:[%s501 + $0x2f8] sm:$0xff] %v7833
      %7962 = vst [vmem:[%s501 + $0x300] sm:$0xff] %v7834
      %7963 = vst [vmem:[%s501 + $0x308] sm:$0xff] %v7835
      %7964 = vst [vmem:[%s501 + $0x310] sm:$0xff] %v7836
      %7965 = vst [vmem:[%s501 + $0x318] sm:$0xff] %v7837
      %7966 = vst [vmem:[%s501 + $0x320] sm:$0xff] %v7838
      %7967 = vst [vmem:[%s501 + $0x328] sm:$0xff] %v7839
      %7968 = vst [vmem:[%s501 + $0x330] sm:$0xff] %v7840
      %7969 = vst [vmem:[%s501 + $0x338] sm:$0xff] %v7841
      %7970 = vst [vmem:[%s501 + $0x340] sm:$0xff] %v7842
      %7971 = vst [vmem:[%s501 + $0x348] sm:$0xff] %v7843
      %7972 = vst [vmem:[%s501 + $0x350] sm:$0xff] %v7844
      %7973 = vst [vmem:[%s501 + $0x358] sm:$0xff] %v7845
      %7974 = vst [vmem:[%s501 + $0x360] sm:$0xff] %v7846
      %7975 = vst [vmem:[%s501 + $0x368] sm:$0xff] %v7847
      %7976 = vst [vmem:[%s501 + $0x370] sm:$0xff] %v7848
      %7977 = vst [vmem:[%s501 + $0x378] sm:$0xff] %v7849
      %7978 = vst [vmem:[%s501 + $0x380] sm:$0xff] %v7850
      %7979 = vst [vmem:[%s501 + $0x388] sm:$0xff] %v7851
      %7980 = vst [vmem:[%s501 + $0x390] sm:$0xff] %v7852
      %7981 = vst [vmem:[%s501 + $0x398] sm:$0xff] %v7853
      %7982 = vst [vmem:[%s501 + $0x3a0] sm:$0xff] %v7854
      %7983 = vst [vmem:[%s501 + $0x3a8] sm:$0xff] %v7855
      %7984 = vst [vmem:[%s501 + $0x3b0] sm:$0xff] %v7856
      %7985 = vst [vmem:[%s501 + $0x3b8] sm:$0xff] %v7857
      %7986 = vst [vmem:[%s501 + $0x3c0] sm:$0xff] %v7858
      %7987 = vst [vmem:[%s501 + $0x3c8] sm:$0xff] %v7859
      %7988 = vst [vmem:[%s501 + $0x3d0] sm:$0xff] %v7860
      %7989 = vst [vmem:[%s501 + $0x3d8] sm:$0xff] %v7861
      %7990 = vst [vmem:[%s501 + $0x3e0] sm:$0xff] %v7862
      %7991 = vst [vmem:[%s501 + $0x3e8] sm:$0xff] %v7863
      %7992 = vst [vmem:[%s501 + $0x3f0] sm:$0xff] %v7864
      %7993 = vst [vmem:[%s501 + $0x3f8] sm:$0xff] %v7865
      %s7994 = smul.u32 2, %s26
      %p7995 = scmp.lt.s32.totalorder %s7994, 3
      %s7996 = scalar_select %p7995, %s7994, 3
      %s7997 = smul.addr %s7996, 64
      %s7998 = smul.addr %s7997, 8
      %s7999 = scalar_lea.vmem %s15, %s7998
      // Predicated region
      $region81: #{bottleneck_forward.1} parent=79 // pred_check
        %p8000 = pneg %p364
      $region82: #{bottleneck_forward.1} parent=79 // pred_check_branch
        %8002 = sbr.rel (%p8000) target = $region84
      $region83: #{bottleneck_forward.1} parent=79 // pred_region
        %s8003 = smul.u32 2, %s26
      $region84: #{bottleneck_forward.1} parent=79 // pred_fallthru
        _
    $region80: #{bottleneck_forward.1} parent=5 // pred_fallthru
      _
    %p8004 = scmp.le.s32.totalorder 2, %s21
    // Predicated region
    $region85: #{bottleneck_forward.1} parent=5 // pred_check
      %p8005 = pneg %p8004
    $region86: #{bottleneck_forward.1} parent=5 // pred_check_branch
      %8007 = sbr.rel (%p8005) target = $region88
    $region87: #{bottleneck_forward.1} parent=5 // pred_region
      %s8008 = ssub.s32 %s21, 2
      // Predicated region
      $region89: #{bottleneck_forward.1} parent=87 // pred_check
        %p8009 = pneg %p370
      $region90: #{bottleneck_forward.1} parent=87 // pred_check_branch
        %8011 = sbr.rel (%p8009) target = $region92
      $region91: #{bottleneck_forward.1} parent=87 // pred_region
        %s8012 = smul.u32 2, %s27
        %p8013 = scmp.lt.s32.totalorder %s8012, 3
        %s8014 = scalar_select %p8013, %s8012, 3
        %s8015 = smul.addr %s8014, 64
        %s8016 = smul.addr %s8015, 8
        %s8017 = scalar_lea.vmem %s15, %s8016
      $region92: #{bottleneck_forward.1} parent=87 // pred_fallthru
        _
    $region88: #{bottleneck_forward.1} parent=5 // pred_fallthru
      _
  $region6: #{bottleneck_forward.1} parent=0 // loop_footer
    %s25 = sadd.s32 1, %s21
  $region7: #{bottleneck_forward.1} parent=0 // loop_footer_branch
    %20 = sbr.rel target = $region3
  $region8: #{bottleneck_forward.1} parent=0 // loop_exit
    _

</llo_original>
